<compile_context>
chip_gen: v6e
topology: v6e:2x2x1
jax: 0.10.0
libtpu: 0.0.40
codegen_flags: <defaults>
</compile_context>

<pallas_src>
import functools

import jax
import jax.numpy as jnp
import numpy as np
from jax import lax
from jax.experimental import pallas as pl
from jax.experimental.pallas import tpu as pltpu

EMB = 64
CONS_NFEATS = 4
EDGE_NFEATS = 1
VAR_NFEATS = 18
EPS = 1e-5                       # torch.nn.LayerNorm default eps

NODE_TILE = 256                  # row tile (and padding unit) for node-wise kernels
EDGE_TILE = 512                  # edge tile for the bipartite-conv grid axis
VMEM_LIMIT = 48 * 1024 * 1024    # sized against v7x's 64 MiB VMEM


# ---------------------------------------------------------------------------
# in-kernel helpers
# ---------------------------------------------------------------------------
def _layernorm(x, w, b):
    mu = jnp.mean(x, axis=-1, keepdims=True)
    var = jnp.mean((x - mu) ** 2, axis=-1, keepdims=True)
    return (x - mu) * lax.rsqrt(var + EPS) * w + b


# ---------------------------------------------------------------------------
# kernels
# ---------------------------------------------------------------------------
def embedding_kernel(x_ref, lnw_ref, lnb_ref, w1_ref, b1_ref, w2_ref, b2_ref, o_ref):
    # LayerNorm -> Linear -> ReLU -> Linear -> ReLU  (one row tile per grid step)
    xn = _layernorm(x_ref[...], lnw_ref[...], lnb_ref[...])
    h = jnp.maximum(
        jnp.dot(xn, w1_ref[...], preferred_element_type=jnp.float32) + b1_ref[...], 0.0)
    h = jnp.maximum(
        jnp.dot(h, w2_ref[...], preferred_element_type=jnp.float32) + b2_ref[...], 0.0)
    o_ref[...] = h


def bgc_kernel(src_ref, dst_ref,                       # scalar-prefetch (SMEM) edge indices
               left_ref, right_ref,                    # resident node features
               wl_ref, bl_ref, wr_ref,                 # per-node linears (bl includes edge const)
               lnfw_ref, lnfb_ref, wf_ref, bf_ref,     # feature_module_final
               lnpw_ref, lnpb_ref,                     # post_conv LayerNorm
               wo1_ref, bo1_ref, wo2_ref, bo2_ref,     # output_module
               out_ref,
               left_t_ref, right_t_ref, agg_ref, pre_ref, msg_ref,
               *, num_edges, edge_tile):
    t = pl.program_id(0)

    @pl.when(t == 0)
    def _init():
        # per-node linear transforms, computed once and kept resident across edge tiles
        right_t_ref[...] = (jnp.dot(right_ref[...], wl_ref[...],
                                    preferred_element_type=jnp.float32) + bl_ref[...])
        left_t_ref[...] = jnp.dot(left_ref[...], wr_ref[...],
                                  preferred_element_type=jnp.float32)
        agg_ref[...] = jnp.zeros_like(agg_ref)
        pre_ref[...] = jnp.zeros_like(pre_ref)

    base = t * edge_tile
    n_valid = jnp.minimum(edge_tile, num_edges - base)

    # gather: pre[e] = right_t[dst[e]] + left_t[src[e]]   (indices read from SMEM)
    def gather_body(e, carry):
        s = src_ref[base + e]
        d = dst_ref[base + e]
        pre_ref[pl.ds(e, 1), :] = (right_t_ref[pl.ds(d, 1), :]
                                   + left_t_ref[pl.ds(s, 1), :])
        return carry
    lax.fori_loop(0, n_valid, gather_body, 0)

    # per-edge message MLP on the whole tile: LayerNorm -> ReLU -> Linear (MXU)
    h = jnp.maximum(_layernorm(pre_ref[...], lnfw_ref[...], lnfb_ref[...]), 0.0)
    msg_ref[...] = (jnp.dot(h, wf_ref[...], preferred_element_type=jnp.float32)
                    + bf_ref[...])

    # scatter-add into the resident accumulator (only the valid edges of this tile)
    def scatter_body(e, carry):
        d = dst_ref[base + e]
        agg_ref[pl.ds(d, 1), :] = agg_ref[pl.ds(d, 1), :] + msg_ref[pl.ds(e, 1), :]
        return carry
    lax.fori_loop(0, n_valid, scatter_body, 0)

    @pl.when(t == pl.num_programs(0) - 1)
    def _finalize():
        # post_conv LayerNorm, concat with right features, output MLP
        agg_n = _layernorm(agg_ref[...], lnpw_ref[...], lnpb_ref[...])
        cat = jnp.concatenate([agg_n, right_ref[...]], axis=-1)          # (n_right, 128)
        h2 = jnp.maximum(
            jnp.dot(cat, wo1_ref[...], preferred_element_type=jnp.float32) + bo1_ref[...],
            0.0)
        out_ref[...] = (jnp.dot(h2, wo2_ref[...], preferred_element_type=jnp.float32)
                        + bo2_ref[...])


def output_head_kernel(x_ref, w1_ref, b1_ref, w2_ref, o_ref):
    # Linear -> ReLU -> Linear(no bias) -> (tile, 1)
    h = jnp.maximum(
        jnp.dot(x_ref[...], w1_ref[...], preferred_element_type=jnp.float32) + b1_ref[...],
        0.0)
    o_ref[...] = jnp.dot(h, w2_ref[...], preferred_element_type=jnp.float32)


# ---------------------------------------------------------------------------
# wrappers (pallas_call glue)
# ---------------------------------------------------------------------------
def embed(x_pad, p):
    n_pad, nfeat = x_pad.shape
    args = (x_pad, p["ln_w"], p["ln_b"], p["w1"], p["b1"], p["w2"], p["b2"])
    in_specs = [pl.BlockSpec((NODE_TILE, nfeat), lambda i: (i, 0))]
    in_specs += [pl.BlockSpec(a.shape, lambda i: (0, 0)) for a in args[1:]]
    return pl.pallas_call(
        embedding_kernel,
        out_shape=jax.ShapeDtypeStruct((n_pad, EMB), jnp.float32),
        grid=(n_pad // NODE_TILE,),
        in_specs=in_specs,
        out_specs=pl.BlockSpec((NODE_TILE, EMB), lambda i: (i, 0)),
        compiler_params=pltpu.CompilerParams(dimension_semantics=("parallel",)),
    )(*args)


def bipartite_conv(left, right, src_idx, dst_idx, num_edges, p, ln_b_edge):
    n_left = left.shape[0]
    n_right = right.shape[0]
    e_pad = src_idx.shape[0]

    # edge_embedding = LayerNorm(1): normalized value is identically 0, so the edge
    # path reduces to the constant row ln_b * w_edge -> fold into the left bias.
    b_eff = p["b_left"] + ln_b_edge * p["w_edge"]

    tensor_args = (left, right,
                   p["w_left"], b_eff, p["w_right"],
                   p["lnf_w"], p["lnf_b"], p["w_final"], p["b_final"],
                   p["lnp_w"], p["lnp_b"],
                   p["w_out1"], p["b_out1"], p["w_out2"], p["b_out2"])
    in_specs = [pl.BlockSpec(a.shape, lambda t, *_: (0, 0)) for a in tensor_args]

    kernel = functools.partial(bgc_kernel, num_edges=num_edges, edge_tile=EDGE_TILE)

    return pl.pallas_call(
        kernel,
        out_shape=jax.ShapeDtypeStruct((n_right, EMB), jnp.float32),
        grid_spec=pltpu.PrefetchScalarGridSpec(
            num_scalar_prefetch=2,
            grid=(e_pad // EDGE_TILE,),
            in_specs=in_specs,
            out_specs=pl.BlockSpec((n_right, EMB), lambda t, *_: (0, 0)),
            scratch_shapes=[
                pltpu.VMEM((n_left, EMB), jnp.float32),      # left_t  (left @ w_right)
                pltpu.VMEM((n_right, EMB), jnp.float32),     # right_t (right @ w_left + b)
                pltpu.VMEM((n_right, EMB), jnp.float32),     # scatter-add accumulator
                pltpu.VMEM((EDGE_TILE, EMB), jnp.float32),   # gathered per-edge pre-acts
                pltpu.VMEM((EDGE_TILE, EMB), jnp.float32),   # per-edge messages
            ]),
        compiler_params=pltpu.CompilerParams(
            dimension_semantics=("arbitrary",),
            vmem_limit_bytes=VMEM_LIMIT),
    )(src_idx, dst_idx, *tensor_args)


def output_head(x_pad, p):
    n_pad = x_pad.shape[0]
    args = (x_pad, p["w1"], p["b1"], p["w2"])
    in_specs = [pl.BlockSpec((NODE_TILE, EMB), lambda i: (i, 0))]
    in_specs += [pl.BlockSpec(a.shape, lambda i: (0, 0)) for a in args[1:]]
    # TODO(synk): the (n,1) logit column is a masked 1/128-lane store; emit a (1,n)
    # lane-dense slab instead if this head ever becomes a measurable cost.
    return pl.pallas_call(
        output_head_kernel,
        out_shape=jax.ShapeDtypeStruct((n_pad, 1), jnp.float32),
        grid=(n_pad // NODE_TILE,),
        in_specs=in_specs,
        out_specs=pl.BlockSpec((NODE_TILE, 1), lambda i: (i, 0)),
        compiler_params=pltpu.CompilerParams(dimension_semantics=("parallel",)),
    )(*args)


# ---------------------------------------------------------------------------
# parameter initialization (synthetic, deterministic)
# ---------------------------------------------------------------------------
def _linear(key, fan_in, fan_out, bias=True):
    kw, kb = jax.random.split(key)
    scale = 1.0 / jnp.sqrt(jnp.float32(fan_in))
    w = jax.random.uniform(kw, (fan_in, fan_out), jnp.float32, -scale, scale)
    b = (jax.random.uniform(kb, (1, fan_out), jnp.float32, -scale, scale)
         if bias else None)
    return w, b


def _embedding_params(key, nfeat):
    k1, k2 = jax.random.split(key)
    w1, b1 = _linear(k1, nfeat, EMB)
    w2, b2 = _linear(k2, EMB, EMB)
    return dict(ln_w=jnp.ones((1, nfeat), jnp.float32),
                ln_b=jnp.zeros((1, nfeat), jnp.float32),
                w1=w1, b1=b1, w2=w2, b2=b2)


def _bgc_params(key):
    ks = jax.random.split(key, 6)
    w_left, b_left = _linear(ks[0], EMB, EMB)
    w_edge, _ = _linear(ks[1], EDGE_NFEATS, EMB, bias=False)
    w_right, _ = _linear(ks[2], EMB, EMB, bias=False)
    w_final, b_final = _linear(ks[3], EMB, EMB)
    w_out1, b_out1 = _linear(ks[4], 2 * EMB, EMB)
    w_out2, b_out2 = _linear(ks[5], EMB, EMB)
    return dict(
        w_left=w_left, b_left=b_left, w_edge=w_edge, w_right=w_right,
        lnf_w=jnp.ones((1, EMB), jnp.float32), lnf_b=jnp.zeros((1, EMB), jnp.float32),
        w_final=w_final, b_final=b_final,
        lnp_w=jnp.ones((1, EMB), jnp.float32), lnp_b=jnp.zeros((1, EMB), jnp.float32),
        w_out1=w_out1, b_out1=b_out1, w_out2=w_out2, b_out2=b_out2)


def init_params(key):
    ks = jax.random.split(key, 7)
    w1, b1 = _linear(ks[5], EMB, EMB)
    w2, _ = _linear(ks[6], EMB, 1, bias=False)
    return dict(
        cons_embedding=_embedding_params(ks[0], CONS_NFEATS),
        var_embedding=_embedding_params(ks[1], VAR_NFEATS),
        edge_embedding=dict(ln_w=jnp.ones((1, EDGE_NFEATS), jnp.float32),
                            ln_b=jnp.zeros((1, EDGE_NFEATS), jnp.float32)),
        conv_v_to_c=_bgc_params(ks[2]),
        conv_c_to_v=_bgc_params(ks[3]),
        conv_v_to_c2=_bgc_params(jax.random.fold_in(ks[2], 1)),
        conv_c_to_v2=_bgc_params(jax.random.fold_in(ks[3], 1)),
        output_module=dict(w1=w1, b1=b1, w2=w2))


# ---------------------------------------------------------------------------
# full forward (mirrors GNNPolicy_position.forward)
# ---------------------------------------------------------------------------
def _pad_rows(x, mult):
    n = x.shape[0]
    n_pad = ((n + mult - 1) // mult) * mult
    return x if n_pad == n else jnp.pad(x, ((0, n_pad - n), (0, 0)))


def _pad_vec(x, mult):
    n = x.shape[0]
    n_pad = ((n + mult - 1) // mult) * mult
    return x if n_pad == n else jnp.pad(x, (0, n_pad - n))


def gnn_policy_forward(params, constraint_features, edge_indices, edge_features,
                       variable_features):
    n_cons = constraint_features.shape[0]
    n_vars = variable_features.shape[0]
    n_edges = edge_indices.shape[1]
    # edge_embedding = LayerNorm(1) makes the edge values irrelevant (output == ln_b);
    # their constant contribution is folded into each conv's bias below.
    del edge_features

    cons_x = _pad_rows(constraint_features.astype(jnp.float32), NODE_TILE)
    var_x = _pad_rows(variable_features.astype(jnp.float32), NODE_TILE)
    cons_idx = _pad_vec(edge_indices[0].astype(jnp.int32), EDGE_TILE)
    var_idx = _pad_vec(edge_indices[1].astype(jnp.int32), EDGE_TILE)

    cons_e = embed(cons_x, params["cons_embedding"])
    var_e = embed(var_x, params["var_embedding"])

    ln_b_edge = params["edge_embedding"]["ln_b"][0, 0]

    # conv_v_to_c: source = variables (edge_indices[1]), target = constraints (edge_indices[0])
    cons_e = bipartite_conv(var_e, cons_e, var_idx, cons_idx, n_edges,
                            params["conv_v_to_c"], ln_b_edge)
    # conv_c_to_v: source = constraints, target = variables
    var_e = bipartite_conv(cons_e, var_e, cons_idx, var_idx, n_edges,
                           params["conv_c_to_v"], ln_b_edge)
    cons_e = bipartite_conv(var_e, cons_e, var_idx, cons_idx, n_edges,
                            params["conv_v_to_c2"], ln_b_edge)
    var_e = bipartite_conv(cons_e, var_e, cons_idx, var_idx, n_edges,
                           params["conv_c_to_v2"], ln_b_edge)

    logits = output_head(var_e, params["output_module"])[:n_vars, 0]
    return logits, var_e[:n_vars], cons_e[:n_cons]


# ---------------------------------------------------------------------------
# pure-JAX reference (for a fidelity check in __main__)
# ---------------------------------------------------------------------------
def _ref_layernorm(x, w, b):
    mu = x.mean(-1, keepdims=True)
    var = ((x - mu) ** 2).mean(-1, keepdims=True)
    return (x - mu) * lax.rsqrt(var + EPS) * w + b


def _ref_embed(x, p):
    h = _ref_layernorm(x, p["ln_w"], p["ln_b"])
    h = jax.nn.relu(h @ p["w1"] + p["b1"])
    return jax.nn.relu(h @ p["w2"] + p["b2"])


def _ref_conv(left, right, src, dst, edge_e, p):
    right_t = right @ p["w_left"] + p["b_left"]
    left_t = left @ p["w_right"]
    edge_t = edge_e @ p["w_edge"]
    pre = right_t[dst] + left_t[src] + edge_t
    h = jax.nn.relu(_ref_layernorm(pre, p["lnf_w"], p["lnf_b"]))
    msg = h @ p["w_final"] + p["b_final"]
    agg = jnp.zeros_like(right).at[dst].add(msg)
    cat = jnp.concatenate([_ref_layernorm(agg, p["lnp_w"], p["lnp_b"]), right], axis=-1)
    h2 = jax.nn.relu(cat @ p["w_out1"] + p["b_out1"])
    return h2 @ p["w_out2"] + p["b_out2"]


def _ref_forward(params, cons_x, edge_indices, edge_x, var_x):
    cons_e = _ref_embed(cons_x.astype(jnp.float32), params["cons_embedding"])
    var_e = _ref_embed(var_x.astype(jnp.float32), params["var_embedding"])
    pe = params["edge_embedding"]
    edge_e = _ref_layernorm(edge_x.astype(jnp.float32), pe["ln_w"], pe["ln_b"])
    ci, vi = edge_indices[0], edge_indices[1]
    cons_e = _ref_conv(var_e, cons_e, vi, ci, edge_e, params["conv_v_to_c"])
    var_e = _ref_conv(cons_e, var_e, ci, vi, edge_e, params["conv_c_to_v"])
    cons_e = _ref_conv(var_e, cons_e, vi, ci, edge_e, params["conv_v_to_c2"])
    var_e = _ref_conv(cons_e, var_e, ci, vi, edge_e, params["conv_c_to_v2"])
    po = params["output_module"]
    out = (jax.nn.relu(var_e @ po["w1"] + po["b1"]) @ po["w2"])[:, 0]
    return out, var_e, cons_e


# ---------------------------------------------------------------------------
if __name__ == "__main__":
    key = jax.random.PRNGKey(0)
    k_p, k_c, k_v, k_e, k_ic, k_iv = jax.random.split(key, 6)

    n_cons, n_vars, n_edges = 8, 16, 24
    constraint_features = jax.random.normal(k_c, (n_cons, CONS_NFEATS), jnp.float32)
    variable_features = jax.random.normal(k_v, (n_vars, VAR_NFEATS), jnp.float32)
    edge_features = jax.random.normal(k_e, (n_edges, EDGE_NFEATS), jnp.float32)
    edge_indices = jnp.stack([
        jax.random.randint(k_ic, (n_edges,), 0, n_cons, jnp.int32),
        jax.random.randint(k_iv, (n_edges,), 0, n_vars, jnp.int32),
    ], axis=0)

    params = init_params(k_p)

    fwd = jax.jit(gnn_policy_forward)
    out, var_e, cons_e = fwd(params, constraint_features, edge_indices,
                             edge_features, variable_features)
    jax.block_until_ready((out, var_e, cons_e))

    assert out.shape == (n_vars,)
    assert var_e.shape == (n_vars, EMB)
    assert cons_e.shape == (n_cons, EMB)

    ref_out, ref_var, ref_cons = _ref_forward(
        params, constraint_features, edge_indices, edge_features, variable_features)
    np.testing.assert_allclose(np.asarray(out), np.asarray(ref_out), rtol=5e-2, atol=5e-2)
    np.testing.assert_allclose(np.asarray(var_e), np.asarray(ref_var), rtol=5e-2, atol=5e-2)
    np.testing.assert_allclose(np.asarray(cons_e), np.asarray(ref_cons), rtol=5e-2, atol=5e-2)

    print("KERNEL_OK")
</pallas_src>

<mosaic_0001>
module attributes {stable_mosaic.version = 11 : i64} {
  func.func @embedding_kernel(%arg0: i32, %arg1: memref<256x4xf32, #tpu.memory_space<vmem>>, %arg2: memref<1x4xf32, #tpu.memory_space<vmem>>, %arg3: memref<1x4xf32, #tpu.memory_space<vmem>>, %arg4: memref<4x64xf32, #tpu.memory_space<vmem>>, %arg5: memref<1x64xf32, #tpu.memory_space<vmem>>, %arg6: memref<64x64xf32, #tpu.memory_space<vmem>>, %arg7: memref<1x64xf32, #tpu.memory_space<vmem>>, %arg8: memref<256x64xf32, #tpu.memory_space<vmem>>) attributes {dimension_semantics = [#tpu.dimension_semantics<parallel>], iteration_bounds = array<i64: 1>, scalar_prefetch = 0 : i64, scratch_operands = 0 : i64, tpu.core_type = #tpu.core_type<tc>, window_params = [{transform_indices = @transform_0, window_bounds = array<i64: 256, 4>}, {pipeline_mode = #tpu.pipeline_mode<synchronous>, transform_indices = @transform_1, window_bounds = array<i64: 1, 4>}, {pipeline_mode = #tpu.pipeline_mode<synchronous>, transform_indices = @transform_2, window_bounds = array<i64: 1, 4>}, {pipeline_mode = #tpu.pipeline_mode<synchronous>, transform_indices = @transform_3, window_bounds = array<i64: 4, 64>}, {pipeline_mode = #tpu.pipeline_mode<synchronous>, transform_indices = @transform_4, window_bounds = array<i64: 1, 64>}, {pipeline_mode = #tpu.pipeline_mode<synchronous>, transform_indices = @transform_5, window_bounds = array<i64: 64, 64>}, {pipeline_mode = #tpu.pipeline_mode<synchronous>, transform_indices = @transform_6, window_bounds = array<i64: 1, 64>}, {transform_indices = @transform_7, window_bounds = array<i64: 256, 64>}]} {
    %c0 = arith.constant 0 : index
    %c0_0 = arith.constant 0 : index
    %0 = vector.load %arg1[%c0, %c0_0] : memref<256x4xf32, #tpu.memory_space<vmem>>, vector<256x4xf32>
    %c0_1 = arith.constant 0 : index
    %c0_2 = arith.constant 0 : index
    %1 = vector.load %arg2[%c0_1, %c0_2] : memref<1x4xf32, #tpu.memory_space<vmem>>, vector<1x4xf32>
    %c0_3 = arith.constant 0 : index
    %c0_4 = arith.constant 0 : index
    %2 = vector.load %arg3[%c0_3, %c0_4] : memref<1x4xf32, #tpu.memory_space<vmem>>, vector<1x4xf32>
    %cst = arith.constant dense<0.000000e+00> : vector<256xf32>
    %3 = vector.multi_reduction <add>, %0, %cst [1] : vector<256x4xf32> to vector<256xf32>
    %4 = vector.shape_cast %3 : vector<256xf32> to vector<256x1xf32>
    %cst_5 = arith.constant 4.000000e+00 : f32
    %5 = vector.broadcast %cst_5 : f32 to vector<256x1xf32>
    %6 = arith.divf %4, %5 : vector<256x1xf32>
    %7 = vector.broadcast %6 : vector<256x1xf32> to vector<256x4xf32>
    %8 = arith.subf %0, %7 : vector<256x4xf32>
    %9 = arith.mulf %8, %8 : vector<256x4xf32>
    %cst_6 = arith.constant dense<0.000000e+00> : vector<256xf32>
    %10 = vector.multi_reduction <add>, %9, %cst_6 [1] : vector<256x4xf32> to vector<256xf32>
    %11 = vector.shape_cast %10 : vector<256xf32> to vector<256x1xf32>
    %cst_7 = arith.constant 4.000000e+00 : f32
    %12 = vector.broadcast %cst_7 : f32 to vector<256x1xf32>
    %13 = arith.divf %11, %12 : vector<256x1xf32>
    %14 = vector.broadcast %6 : vector<256x1xf32> to vector<256x4xf32>
    %15 = arith.subf %0, %14 : vector<256x4xf32>
    %cst_8 = arith.constant 9.99999974E-6 : f32
    %16 = vector.broadcast %cst_8 : f32 to vector<256x1xf32>
    %17 = arith.addf %13, %16 : vector<256x1xf32>
    %18 = math.rsqrt %17 : vector<256x1xf32>
    %19 = vector.broadcast %18 : vector<256x1xf32> to vector<256x4xf32>
    %20 = arith.mulf %15, %19 : vector<256x4xf32>
    %21 = vector.broadcast %1 : vector<1x4xf32> to vector<256x4xf32>
    %22 = arith.mulf %20, %21 : vector<256x4xf32>
    %23 = vector.broadcast %2 : vector<1x4xf32> to vector<256x4xf32>
    %24 = arith.addf %22, %23 : vector<256x4xf32>
    %c0_9 = arith.constant 0 : index
    %c0_10 = arith.constant 0 : index
    %25 = vector.load %arg4[%c0_9, %c0_10] : memref<4x64xf32, #tpu.memory_space<vmem>>, vector<4x64xf32>
    %cst_11 = arith.constant dense<0.000000e+00> : vector<256x64xf32>
    %26 = tpu.matmul %24, %25, %cst_11 {dimension_numbers = #tpu.dot_dimension_numbers<[1], [0], [0], [1], [0, 0, 1, 1], [], []>} : vector<256x4xf32>, vector<4x64xf32>, vector<256x64xf32> -> vector<256x64xf32>
    %c0_12 = arith.constant 0 : index
    %c0_13 = arith.constant 0 : index
    %27 = vector.load %arg5[%c0_12, %c0_13] : memref<1x64xf32, #tpu.memory_space<vmem>>, vector<1x64xf32>
    %28 = vector.broadcast %27 : vector<1x64xf32> to vector<256x64xf32>
    %29 = arith.addf %26, %28 : vector<256x64xf32>
    %cst_14 = arith.constant 0.000000e+00 : f32
    %30 = vector.broadcast %cst_14 : f32 to vector<256x64xf32>
    %31 = arith.maximumf %29, %30 : vector<256x64xf32>
    %c0_15 = arith.constant 0 : index
    %c0_16 = arith.constant 0 : index
    %32 = vector.load %arg6[%c0_15, %c0_16] : memref<64x64xf32, #tpu.memory_space<vmem>>, vector<64x64xf32>
    %cst_17 = arith.constant dense<0.000000e+00> : vector<256x64xf32>
    %33 = tpu.matmul %31, %32, %cst_17 {dimension_numbers = #tpu.dot_dimension_numbers<[1], [0], [0], [1], [0, 0, 1, 1], [], []>} : vector<256x64xf32>, vector<64x64xf32>, vector<256x64xf32> -> vector<256x64xf32>
    %c0_18 = arith.constant 0 : index
    %c0_19 = arith.constant 0 : index
    %34 = vector.load %arg7[%c0_18, %c0_19] : memref<1x64xf32, #tpu.memory_space<vmem>>, vector<1x64xf32>
    %35 = vector.broadcast %34 : vector<1x64xf32> to vector<256x64xf32>
    %36 = arith.addf %33, %35 : vector<256x64xf32>
    %cst_20 = arith.constant 0.000000e+00 : f32
    %37 = vector.broadcast %cst_20 : f32 to vector<256x64xf32>
    %38 = arith.maximumf %36, %37 : vector<256x64xf32>
    %c0_21 = arith.constant 0 : index
    %c0_22 = arith.constant 0 : index
    %39 = vector.load %arg8[%c0_21, %c0_22] : memref<256x64xf32, #tpu.memory_space<vmem>>, vector<256x64xf32>
    tpu.vector_store %arg8[%c0_21, %c0_22], %38 {strides = array<i32>} : memref<256x64xf32, #tpu.memory_space<vmem>>, vector<256x64xf32>,
    return
  }
  func.func @transform_0(%arg0: i32) -> (i32, i32) {
    %c0_i32 = arith.constant 0 : i32
    %c0_i32_0 = arith.constant 0 : i32
    return %arg0, %c0_i32 : i32, i32
  }
  func.func @transform_1(%arg0: i32) -> (i32, i32) {
    %c0_i32 = arith.constant 0 : i32
    %c0_i32_0 = arith.constant 0 : i32
    %c0_i32_1 = arith.constant 0 : i32
    return %c0_i32, %c0_i32_0 : i32, i32
  }
  func.func @transform_2(%arg0: i32) -> (i32, i32) {
    %c0_i32 = arith.constant 0 : i32
    %c0_i32_0 = arith.constant 0 : i32
    %c0_i32_1 = arith.constant 0 : i32
    return %c0_i32, %c0_i32_0 : i32, i32
  }
  func.func @transform_3(%arg0: i32) -> (i32, i32) {
    %c0_i32 = arith.constant 0 : i32
    %c0_i32_0 = arith.constant 0 : i32
    %c0_i32_1 = arith.constant 0 : i32
    return %c0_i32, %c0_i32_0 : i32, i32
  }
  func.func @transform_4(%arg0: i32) -> (i32, i32) {
    %c0_i32 = arith.constant 0 : i32
    %c0_i32_0 = arith.constant 0 : i32
    %c0_i32_1 = arith.constant 0 : i32
    return %c0_i32, %c0_i32_0 : i32, i32
  }
  func.func @transform_5(%arg0: i32) -> (i32, i32) {
    %c0_i32 = arith.constant 0 : i32
    %c0_i32_0 = arith.constant 0 : i32
    %c0_i32_1 = arith.constant 0 : i32
    return %c0_i32, %c0_i32_0 : i32, i32
  }
  func.func @transform_6(%arg0: i32) -> (i32, i32) {
    %c0_i32 = arith.constant 0 : i32
    %c0_i32_0 = arith.constant 0 : i32
    %c0_i32_1 = arith.constant 0 : i32
    return %c0_i32, %c0_i32_0 : i32, i32
  }
  func.func @transform_7(%arg0: i32) -> (i32, i32) {
    %c0_i32 = arith.constant 0 : i32
    %c0_i32_0 = arith.constant 0 : i32
    return %arg0, %c0_i32 : i32, i32
  }
}

module attributes {stable_mosaic.version = 11 : i64} {
  func.func @bgc_kernel(%arg0: i32, %arg1: memref<512xi32, #tpu.memory_space<smem>>, %arg2: memref<512xi32, #tpu.memory_space<smem>>, %arg3: memref<256x64xf32, #tpu.memory_space<vmem>>, %arg4: memref<256x64xf32, #tpu.memory_space<vmem>>, %arg5: memref<64x64xf32, #tpu.memory_space<vmem>>, %arg6: memref<1x64xf32, #tpu.memory_space<vmem>>, %arg7: memref<64x64xf32, #tpu.memory_space<vmem>>, %arg8: memref<1x64xf32, #tpu.memory_space<vmem>>, %arg9: memref<1x64xf32, #tpu.memory_space<vmem>>, %arg10: memref<64x64xf32, #tpu.memory_space<vmem>>, %arg11: memref<1x64xf32, #tpu.memory_space<vmem>>, %arg12: memref<1x64xf32, #tpu.memory_space<vmem>>, %arg13: memref<1x64xf32, #tpu.memory_space<vmem>>, %arg14: memref<128x64xf32, #tpu.memory_space<vmem>>, %arg15: memref<1x64xf32, #tpu.memory_space<vmem>>, %arg16: memref<64x64xf32, #tpu.memory_space<vmem>>, %arg17: memref<1x64xf32, #tpu.memory_space<vmem>>, %arg18: memref<256x64xf32, #tpu.memory_space<vmem>>, %arg19: memref<256x64xf32, #tpu.memory_space<vmem>>, %arg20: memref<256x64xf32, #tpu.memory_space<vmem>>, %arg21: memref<256x64xf32, #tpu.memory_space<vmem>>, %arg22: memref<512x64xf32, #tpu.memory_space<vmem>>, %arg23: memref<512x64xf32, #tpu.memory_space<vmem>>) attributes {dimension_semantics = [#tpu.dimension_semantics<arbitrary>], iteration_bounds = array<i64: 1>, scalar_prefetch = 2 : i64, scratch_operands = 5 : i64, tpu.core_type = #tpu.core_type<tc>, window_params = [{pipeline_mode = #tpu.pipeline_mode<synchronous>, transform_indices = @transform_0, window_bounds = array<i64: 256, 64>}, {pipeline_mode = #tpu.pipeline_mode<synchronous>, transform_indices = @transform_1, window_bounds = array<i64: 256, 64>}, {pipeline_mode = #tpu.pipeline_mode<synchronous>, transform_indices = @transform_2, window_bounds = array<i64: 64, 64>}, {pipeline_mode = #tpu.pipeline_mode<synchronous>, transform_indices = @transform_3, window_bounds = array<i64: 1, 64>}, {pipeline_mode = #tpu.pipeline_mode<synchronous>, transform_indices = @transform_4, window_bounds = array<i64: 64, 64>}, {pipeline_mode = #tpu.pipeline_mode<synchronous>, transform_indices = @transform_5, window_bounds = array<i64: 1, 64>}, {pipeline_mode = #tpu.pipeline_mode<synchronous>, transform_indices = @transform_6, window_bounds = array<i64: 1, 64>}, {pipeline_mode = #tpu.pipeline_mode<synchronous>, transform_indices = @transform_7, window_bounds = array<i64: 64, 64>}, {pipeline_mode = #tpu.pipeline_mode<synchronous>, transform_indices = @transform_8, window_bounds = array<i64: 1, 64>}, {pipeline_mode = #tpu.pipeline_mode<synchronous>, transform_indices = @transform_9, window_bounds = array<i64: 1, 64>}, {pipeline_mode = #tpu.pipeline_mode<synchronous>, transform_indices = @transform_10, window_bounds = array<i64: 1, 64>}, {pipeline_mode = #tpu.pipeline_mode<synchronous>, transform_indices = @transform_11, window_bounds = array<i64: 128, 64>}, {pipeline_mode = #tpu.pipeline_mode<synchronous>, transform_indices = @transform_12, window_bounds = array<i64: 1, 64>}, {pipeline_mode = #tpu.pipeline_mode<synchronous>, transform_indices = @transform_13, window_bounds = array<i64: 64, 64>}, {pipeline_mode = #tpu.pipeline_mode<synchronous>, transform_indices = @transform_14, window_bounds = array<i64: 1, 64>}, {pipeline_mode = #tpu.pipeline_mode<synchronous>, transform_indices = @transform_15, window_bounds = array<i64: 256, 64>}]} {
    %c0_i32 = arith.constant 0 : i32
    %0 = arith.cmpi eq, %arg0, %c0_i32 : i32
    %1 = arith.extui %0 : i1 to i32
    %c0_i32_0 = arith.constant 0 : i32
    %2 = arith.cmpi ne, %1, %c0_i32_0 : i32
    scf.if %2 {
      %c0_26 = arith.constant 0 : index
      %c0_27 = arith.constant 0 : index
      %46 = vector.load %arg4[%c0_26, %c0_27] : memref<256x64xf32, #tpu.memory_space<vmem>>, vector<256x64xf32>
      %c0_28 = arith.constant 0 : index
      %c0_29 = arith.constant 0 : index
      %47 = vector.load %arg5[%c0_28, %c0_29] : memref<64x64xf32, #tpu.memory_space<vmem>>, vector<64x64xf32>
      %cst_30 = arith.constant dense<0.000000e+00> : vector<256x64xf32>
      %48 = tpu.matmul %46, %47, %cst_30 {dimension_numbers = #tpu.dot_dimension_numbers<[1], [0], [0], [1], [0, 0, 1, 1], [], []>} : vector<256x64xf32>, vector<64x64xf32>, vector<256x64xf32> -> vector<256x64xf32>
      %c0_31 = arith.constant 0 : index
      %c0_32 = arith.constant 0 : index
      %49 = vector.load %arg6[%c0_31, %c0_32] : memref<1x64xf32, #tpu.memory_space<vmem>>, vector<1x64xf32>
      %50 = vector.broadcast %49 : vector<1x64xf32> to vector<256x64xf32>
      %51 = arith.addf %48, %50 : vector<256x64xf32>
      %c0_33 = arith.constant 0 : index
      %c0_34 = arith.constant 0 : index
      %52 = vector.load %arg20[%c0_33, %c0_34] : memref<256x64xf32, #tpu.memory_space<vmem>>, vector<256x64xf32>
      tpu.vector_store %arg20[%c0_33, %c0_34], %51 {strides = array<i32>} : memref<256x64xf32, #tpu.memory_space<vmem>>, vector<256x64xf32>,
      %c0_35 = arith.constant 0 : index
      %c0_36 = arith.constant 0 : index
      %53 = vector.load %arg3[%c0_35, %c0_36] : memref<256x64xf32, #tpu.memory_space<vmem>>, vector<256x64xf32>
      %c0_37 = arith.constant 0 : index
      %c0_38 = arith.constant 0 : index
      %54 = vector.load %arg7[%c0_37, %c0_38] : memref<64x64xf32, #tpu.memory_space<vmem>>, vector<64x64xf32>
      %cst_39 = arith.constant dense<0.000000e+00> : vector<256x64xf32>
      %55 = tpu.matmul %53, %54, %cst_39 {dimension_numbers = #tpu.dot_dimension_numbers<[1], [0], [0], [1], [0, 0, 1, 1], [], []>} : vector<256x64xf32>, vector<64x64xf32>, vector<256x64xf32> -> vector<256x64xf32>
      %c0_40 = arith.constant 0 : index
      %c0_41 = arith.constant 0 : index
      %56 = vector.load %arg19[%c0_40, %c0_41] : memref<256x64xf32, #tpu.memory_space<vmem>>, vector<256x64xf32>
      tpu.vector_store %arg19[%c0_40, %c0_41], %55 {strides = array<i32>} : memref<256x64xf32, #tpu.memory_space<vmem>>, vector<256x64xf32>,
      %cst_42 = arith.constant 0.000000e+00 : f32
      %57 = vector.broadcast %cst_42 : f32 to vector<256x64xf32>
      %c0_43 = arith.constant 0 : index
      %c0_44 = arith.constant 0 : index
      %58 = vector.load %arg21[%c0_43, %c0_44] : memref<256x64xf32, #tpu.memory_space<vmem>>, vector<256x64xf32>
      tpu.vector_store %arg21[%c0_43, %c0_44], %57 {strides = array<i32>} : memref<256x64xf32, #tpu.memory_space<vmem>>, vector<256x64xf32>,
      %cst_45 = arith.constant 0.000000e+00 : f32
      %59 = vector.broadcast %cst_45 : f32 to vector<512x64xf32>
      %c0_46 = arith.constant 0 : index
      %c0_47 = arith.constant 0 : index
      %60 = vector.load %arg22[%c0_46, %c0_47] : memref<512x64xf32, #tpu.memory_space<vmem>>, vector<512x64xf32>
      tpu.vector_store %arg22[%c0_46, %c0_47], %59 {strides = array<i32>} : memref<512x64xf32, #tpu.memory_space<vmem>>, vector<512x64xf32>,
    } else {
    }
    %c512_i32 = arith.constant 512 : i32
    %3 = arith.muli %arg0, %c512_i32 : i32
    %c24_i32 = arith.constant 24 : i32
    %4 = arith.subi %c24_i32, %3 : i32
    %c512_i32_1 = arith.constant 512 : i32
    %5 = arith.minsi %c512_i32_1, %4 : i32
    %c0_i32_2 = arith.constant 0 : i32
    %c0_i32_3 = arith.constant 0 : i32
    %6 = arith.subi %5, %c0_i32_3 : i32
    %7 = arith.addi %c0_i32_3, %6 : i32
    %c1_i32 = arith.constant 1 : i32
    scf.for %arg24 = %c0_i32_3 to %7 step %c1_i32  : i32 {
      %46 = arith.addi %3, %arg24 : i32
      %47 = arith.index_cast %46 : i32 to index
      %48 = memref.load %arg1[%47] : memref<512xi32, #tpu.memory_space<smem>>
      %49 = arith.addi %3, %arg24 : i32
      %50 = arith.index_cast %49 : i32 to index
      %51 = memref.load %arg2[%50] : memref<512xi32, #tpu.memory_space<smem>>
      %52 = arith.index_cast %51 : i32 to index
      %c0_26 = arith.constant 0 : index
      %53 = vector.load %arg20[%52, %c0_26] : memref<256x64xf32, #tpu.memory_space<vmem>>, vector<1x64xf32>
      %54 = arith.index_cast %48 : i32 to index
      %c0_27 = arith.constant 0 : index
      %55 = vector.load %arg19[%54, %c0_27] : memref<256x64xf32, #tpu.memory_space<vmem>>, vector<1x64xf32>
      %56 = arith.addf %53, %55 : vector<1x64xf32>
      %57 = arith.index_cast %arg24 : i32 to index
      %c0_28 = arith.constant 0 : index
      %58 = vector.load %arg22[%57, %c0_28] : memref<512x64xf32, #tpu.memory_space<vmem>>, vector<1x64xf32>
      tpu.vector_store %arg22[%57, %c0_28], %56 {strides = array<i32>} : memref<512x64xf32, #tpu.memory_space<vmem>>, vector<1x64xf32>,
    }
    %c0 = arith.constant 0 : index
    %c0_4 = arith.constant 0 : index
    %8 = vector.load %arg22[%c0, %c0_4] : memref<512x64xf32, #tpu.memory_space<vmem>>, vector<512x64xf32>
    %c0_5 = arith.constant 0 : index
    %c0_6 = arith.constant 0 : index
    %9 = vector.load %arg8[%c0_5, %c0_6] : memref<1x64xf32, #tpu.memory_space<vmem>>, vector<1x64xf32>
    %c0_7 = arith.constant 0 : index
    %c0_8 = arith.constant 0 : index
    %10 = vector.load %arg9[%c0_7, %c0_8] : memref<1x64xf32, #tpu.memory_space<vmem>>, vector<1x64xf32>
    %cst = arith.constant dense<0.000000e+00> : vector<512xf32>
    %11 = vector.multi_reduction <add>, %8, %cst [1] : vector<512x64xf32> to vector<512xf32>
    %12 = vector.shape_cast %11 : vector<512xf32> to vector<512x1xf32>
    %cst_9 = arith.constant 6.400000e+01 : f32
    %13 = vector.broadcast %cst_9 : f32 to vector<512x1xf32>
    %14 = arith.divf %12, %13 : vector<512x1xf32>
    %15 = vector.broadcast %14 : vector<512x1xf32> to vector<512x64xf32>
    %16 = arith.subf %8, %15 : vector<512x64xf32>
    %17 = arith.mulf %16, %16 : vector<512x64xf32>
    %cst_10 = arith.constant dense<0.000000e+00> : vector<512xf32>
    %18 = vector.multi_reduction <add>, %17, %cst_10 [1] : vector<512x64xf32> to vector<512xf32>
    %19 = vector.shape_cast %18 : vector<512xf32> to vector<512x1xf32>
    %cst_11 = arith.constant 6.400000e+01 : f32
    %20 = vector.broadcast %cst_11 : f32 to vector<512x1xf32>
    %21 = arith.divf %19, %20 : vector<512x1xf32>
    %22 = vector.broadcast %14 : vector<512x1xf32> to vector<512x64xf32>
    %23 = arith.subf %8, %22 : vector<512x64xf32>
    %cst_12 = arith.constant 9.99999974E-6 : f32
    %24 = vector.broadcast %cst_12 : f32 to vector<512x1xf32>
    %25 = arith.addf %21, %24 : vector<512x1xf32>
    %26 = math.rsqrt %25 : vector<512x1xf32>
    %27 = vector.broadcast %26 : vector<512x1xf32> to vector<512x64xf32>
    %28 = arith.mulf %23, %27 : vector<512x64xf32>
    %29 = vector.broadcast %9 : vector<1x64xf32> to vector<512x64xf32>
    %30 = arith.mulf %28, %29 : vector<512x64xf32>
    %31 = vector.broadcast %10 : vector<1x64xf32> to vector<512x64xf32>
    %32 = arith.addf %30, %31 : vector<512x64xf32>
    %cst_13 = arith.constant 0.000000e+00 : f32
    %33 = vector.broadcast %cst_13 : f32 to vector<512x64xf32>
    %34 = arith.maximumf %32, %33 : vector<512x64xf32>
    %c0_14 = arith.constant 0 : index
    %c0_15 = arith.constant 0 : index
    %35 = vector.load %arg10[%c0_14, %c0_15] : memref<64x64xf32, #tpu.memory_space<vmem>>, vector<64x64xf32>
    %cst_16 = arith.constant dense<0.000000e+00> : vector<512x64xf32>
    %36 = tpu.matmul %34, %35, %cst_16 {dimension_numbers = #tpu.dot_dimension_numbers<[1], [0], [0], [1], [0, 0, 1, 1], [], []>} : vector<512x64xf32>, vector<64x64xf32>, vector<512x64xf32> -> vector<512x64xf32>
    %c0_17 = arith.constant 0 : index
    %c0_18 = arith.constant 0 : index
    %37 = vector.load %arg11[%c0_17, %c0_18] : memref<1x64xf32, #tpu.memory_space<vmem>>, vector<1x64xf32>
    %38 = vector.broadcast %37 : vector<1x64xf32> to vector<512x64xf32>
    %39 = arith.addf %36, %38 : vector<512x64xf32>
    %c0_19 = arith.constant 0 : index
    %c0_20 = arith.constant 0 : index
    %40 = vector.load %arg23[%c0_19, %c0_20] : memref<512x64xf32, #tpu.memory_space<vmem>>, vector<512x64xf32>
    tpu.vector_store %arg23[%c0_19, %c0_20], %39 {strides = array<i32>} : memref<512x64xf32, #tpu.memory_space<vmem>>, vector<512x64xf32>,
    %c0_i32_21 = arith.constant 0 : i32
    %c0_i32_22 = arith.constant 0 : i32
    %41 = arith.subi %5, %c0_i32_22 : i32
    %42 = arith.addi %c0_i32_22, %41 : i32
    %c1_i32_23 = arith.constant 1 : i32
    scf.for %arg24 = %c0_i32_22 to %42 step %c1_i32_23  : i32 {
      %46 = arith.addi %3, %arg24 : i32
      %47 = arith.index_cast %46 : i32 to index
      %48 = memref.load %arg2[%47] : memref<512xi32, #tpu.memory_space<smem>>
      %49 = arith.index_cast %48 : i32 to index
      %c0_26 = arith.constant 0 : index
      %50 = vector.load %arg21[%49, %c0_26] : memref<256x64xf32, #tpu.memory_space<vmem>>, vector<1x64xf32>
      %51 = arith.index_cast %arg24 : i32 to index
      %c0_27 = arith.constant 0 : index
      %52 = vector.load %arg23[%51, %c0_27] : memref<512x64xf32, #tpu.memory_space<vmem>>, vector<1x64xf32>
      %53 = arith.addf %50, %52 : vector<1x64xf32>
      %54 = arith.index_cast %48 : i32 to index
      %c0_28 = arith.constant 0 : index
      %55 = vector.load %arg21[%54, %c0_28] : memref<256x64xf32, #tpu.memory_space<vmem>>, vector<1x64xf32>
      tpu.vector_store %arg21[%54, %c0_28], %53 {strides = array<i32>} : memref<256x64xf32, #tpu.memory_space<vmem>>, vector<1x64xf32>,
    }
    %c0_i32_24 = arith.constant 0 : i32
    %43 = arith.cmpi eq, %arg0, %c0_i32_24 : i32
    %44 = arith.extui %43 : i1 to i32
    %c0_i32_25 = arith.constant 0 : i32
    %45 = arith.cmpi ne, %44, %c0_i32_25 : i32
    scf.if %45 {
      %c0_26 = arith.constant 0 : index
      %c0_27 = arith.constant 0 : index
      %46 = vector.load %arg21[%c0_26, %c0_27] : memref<256x64xf32, #tpu.memory_space<vmem>>, vector<256x64xf32>
      %c0_28 = arith.constant 0 : index
      %c0_29 = arith.constant 0 : index
      %47 = vector.load %arg12[%c0_28, %c0_29] : memref<1x64xf32, #tpu.memory_space<vmem>>, vector<1x64xf32>
      %c0_30 = arith.constant 0 : index
      %c0_31 = arith.constant 0 : index
      %48 = vector.load %arg13[%c0_30, %c0_31] : memref<1x64xf32, #tpu.memory_space<vmem>>, vector<1x64xf32>
      %cst_32 = arith.constant dense<0.000000e+00> : vector<256xf32>
      %49 = vector.multi_reduction <add>, %46, %cst_32 [1] : vector<256x64xf32> to vector<256xf32>
      %50 = vector.shape_cast %49 : vector<256xf32> to vector<256x1xf32>
      %cst_33 = arith.constant 6.400000e+01 : f32
      %51 = vector.broadcast %cst_33 : f32 to vector<256x1xf32>
      %52 = arith.divf %50, %51 : vector<256x1xf32>
      %53 = vector.broadcast %52 : vector<256x1xf32> to vector<256x64xf32>
      %54 = arith.subf %46, %53 : vector<256x64xf32>
      %55 = arith.mulf %54, %54 : vector<256x64xf32>
      %cst_34 = arith.constant dense<0.000000e+00> : vector<256xf32>
      %56 = vector.multi_reduction <add>, %55, %cst_34 [1] : vector<256x64xf32> to vector<256xf32>
      %57 = vector.shape_cast %56 : vector<256xf32> to vector<256x1xf32>
      %cst_35 = arith.constant 6.400000e+01 : f32
      %58 = vector.broadcast %cst_35 : f32 to vector<256x1xf32>
      %59 = arith.divf %57, %58 : vector<256x1xf32>
      %60 = vector.broadcast %52 : vector<256x1xf32> to vector<256x64xf32>
      %61 = arith.subf %46, %60 : vector<256x64xf32>
      %cst_36 = arith.constant 9.99999974E-6 : f32
      %62 = vector.broadcast %cst_36 : f32 to vector<256x1xf32>
      %63 = arith.addf %59, %62 : vector<256x1xf32>
      %64 = math.rsqrt %63 : vector<256x1xf32>
      %65 = vector.broadcast %64 : vector<256x1xf32> to vector<256x64xf32>
      %66 = arith.mulf %61, %65 : vector<256x64xf32>
      %67 = vector.broadcast %47 : vector<1x64xf32> to vector<256x64xf32>
      %68 = arith.mulf %66, %67 : vector<256x64xf32>
      %69 = vector.broadcast %48 : vector<1x64xf32> to vector<256x64xf32>
      %70 = arith.addf %68, %69 : vector<256x64xf32>
      %c0_37 = arith.constant 0 : index
      %c0_38 = arith.constant 0 : index
      %71 = vector.load %arg4[%c0_37, %c0_38] : memref<256x64xf32, #tpu.memory_space<vmem>>, vector<256x64xf32>
      %72 = tpu.concatenate %70, %71 in 1 : vector<256x64xf32>, vector<256x64xf32> -> vector<256x128xf32>
      %c0_39 = arith.constant 0 : index
      %c0_40 = arith.constant 0 : index
      %73 = vector.load %arg14[%c0_39, %c0_40] : memref<128x64xf32, #tpu.memory_space<vmem>>, vector<128x64xf32>
      %cst_41 = arith.constant dense<0.000000e+00> : vector<256x64xf32>
      %74 = tpu.matmul %72, %73, %cst_41 {dimension_numbers = #tpu.dot_dimension_numbers<[1], [0], [0], [1], [0, 0, 1, 1], [], []>} : vector<256x128xf32>, vector<128x64xf32>, vector<256x64xf32> -> vector<256x64xf32>
      %c0_42 = arith.constant 0 : index
      %c0_43 = arith.constant 0 : index
      %75 = vector.load %arg15[%c0_42, %c0_43] : memref<1x64xf32, #tpu.memory_space<vmem>>, vector<1x64xf32>
      %76 = vector.broadcast %75 : vector<1x64xf32> to vector<256x64xf32>
      %77 = arith.addf %74, %76 : vector<256x64xf32>
      %cst_44 = arith.constant 0.000000e+00 : f32
      %78 = vector.broadcast %cst_44 : f32 to vector<256x64xf32>
      %79 = arith.maximumf %77, %78 : vector<256x64xf32>
      %c0_45 = arith.constant 0 : index
      %c0_46 = arith.constant 0 : index
      %80 = vector.load %arg16[%c0_45, %c0_46] : memref<64x64xf32, #tpu.memory_space<vmem>>, vector<64x64xf32>
      %cst_47 = arith.constant dense<0.000000e+00> : vector<256x64xf32>
      %81 = tpu.matmul %79, %80, %cst_47 {dimension_numbers = #tpu.dot_dimension_numbers<[1], [0], [0], [1], [0, 0, 1, 1], [], []>} : vector<256x64xf32>, vector<64x64xf32>, vector<256x64xf32> -> vector<256x64xf32>
      %c0_48 = arith.constant 0 : index
      %c0_49 = arith.constant 0 : index
      %82 = vector.load %arg17[%c0_48, %c0_49] : memref<1x64xf32, #tpu.memory_space<vmem>>, vector<1x64xf32>
      %83 = vector.broadcast %82 : vector<1x64xf32> to vector<256x64xf32>
      %84 = arith.addf %81, %83 : vector<256x64xf32>
      %c0_50 = arith.constant 0 : index
      %c0_51 = arith.constant 0 : index
      %85 = vector.load %arg18[%c0_50, %c0_51] : memref<256x64xf32, #tpu.memory_space<vmem>>, vector<256x64xf32>
      tpu.vector_store %arg18[%c0_50, %c0_51], %84 {strides = array<i32>} : memref<256x64xf32, #tpu.memory_space<vmem>>, vector<256x64xf32>,
    } else {
    }
    return
  }
  func.func @transform_0(%arg0: i32, %arg1: memref<512xi32, #tpu.memory_space<smem>>, %arg2: memref<512xi32, #tpu.memory_space<smem>>) -> (i32, i32) {
    %c0_i32 = arith.constant 0 : i32
    %c0_i32_0 = arith.constant 0 : i32
    %c0_i32_1 = arith.constant 0 : i32
    return %c0_i32, %c0_i32_0 : i32, i32
  }
  func.func @transform_1(%arg0: i32, %arg1: memref<512xi32, #tpu.memory_space<smem>>, %arg2: memref<512xi32, #tpu.memory_space<smem>>) -> (i32, i32) {
    %c0_i32 = arith.constant 0 : i32
    %c0_i32_0 = arith.constant 0 : i32
    %c0_i32_1 = arith.constant 0 : i32
    return %c0_i32, %c0_i32_0 : i32, i32
  }
  func.func @transform_2(%arg0: i32, %arg1: memref<512xi32, #tpu.memory_space<smem>>, %arg2: memref<512xi32, #tpu.memory_space<smem>>) -> (i32, i32) {
    %c0_i32 = arith.constant 0 : i32
    %c0_i32_0 = arith.constant 0 : i32
    %c0_i32_1 = arith.constant 0 : i32
    return %c0_i32, %c0_i32_0 : i32, i32
  }
  func.func @transform_3(%arg0: i32, %arg1: memref<512xi32, #tpu.memory_space<smem>>, %arg2: memref<512xi32, #tpu.memory_space<smem>>) -> (i32, i32) {
    %c0_i32 = arith.constant 0 : i32
    %c0_i32_0 = arith.constant 0 : i32
    %c0_i32_1 = arith.constant 0 : i32
    return %c0_i32, %c0_i32_0 : i32, i32
  }
  func.func @transform_4(%arg0: i32, %arg1: memref<512xi32, #tpu.memory_space<smem>>, %arg2: memref<512xi32, #tpu.memory_space<smem>>) -> (i32, i32) {
    %c0_i32 = arith.constant 0 : i32
    %c0_i32_0 = arith.constant 0 : i32
    %c0_i32_1 = arith.constant 0 : i32
    return %c0_i32, %c0_i32_0 : i32, i32
  }
  func.func @transform_5(%arg0: i32, %arg1: memref<512xi32, #tpu.memory_space<smem>>, %arg2: memref<512xi32, #tpu.memory_space<smem>>) -> (i32, i32) {
    %c0_i32 = arith.constant 0 : i32
    %c0_i32_0 = arith.constant 0 : i32
    %c0_i32_1 = arith.constant 0 : i32
    return %c0_i32, %c0_i32_0 : i32, i32
  }
  func.func @transform_6(%arg0: i32, %arg1: memref<512xi32, #tpu.memory_space<smem>>, %arg2: memref<512xi32, #tpu.memory_space<smem>>) -> (i32, i32) {
    %c0_i32 = arith.constant 0 : i32
    %c0_i32_0 = arith.constant 0 : i32
    %c0_i32_1 = arith.constant 0 : i32
    return %c0_i32, %c0_i32_0 : i32, i32
  }
  func.func @transform_7(%arg0: i32, %arg1: memref<512xi32, #tpu.memory_space<smem>>, %arg2: memref<512xi32, #tpu.memory_space<smem>>) -> (i32, i32) {
    %c0_i32 = arith.constant 0 : i32
    %c0_i32_0 = arith.constant 0 : i32
    %c0_i32_1 = arith.constant 0 : i32
    return %c0_i32, %c0_i32_0 : i32, i32
  }
  func.func @transform_8(%arg0: i32, %arg1: memref<512xi32, #tpu.memory_space<smem>>, %arg2: memref<512xi32, #tpu.memory_space<smem>>) -> (i32, i32) {
    %c0_i32 = arith.constant 0 : i32
    %c0_i32_0 = arith.constant 0 : i32
    %c0_i32_1 = arith.constant 0 : i32
    return %c0_i32, %c0_i32_0 : i32, i32
  }
  func.func @transform_9(%arg0: i32, %arg1: memref<512xi32, #tpu.memory_space<smem>>, %arg2: memref<512xi32, #tpu.memory_space<smem>>) -> (i32, i32) {
    %c0_i32 = arith.constant 0 : i32
    %c0_i32_0 = arith.constant 0 : i32
    %c0_i32_1 = arith.constant 0 : i32
    return %c0_i32, %c0_i32_0 : i32, i32
  }
  func.func @transform_10(%arg0: i32, %arg1: memref<512xi32, #tpu.memory_space<smem>>, %arg2: memref<512xi32, #tpu.memory_space<smem>>) -> (i32, i32) {
    %c0_i32 = arith.constant 0 : i32
    %c0_i32_0 = arith.constant 0 : i32
    %c0_i32_1 = arith.constant 0 : i32
    return %c0_i32, %c0_i32_0 : i32, i32
  }
  func.func @transform_11(%arg0: i32, %arg1: memref<512xi32, #tpu.memory_space<smem>>, %arg2: memref<512xi32, #tpu.memory_space<smem>>) -> (i32, i32) {
    %c0_i32 = arith.constant 0 : i32
    %c0_i32_0 = arith.constant 0 : i32
    %c0_i32_1 = arith.constant 0 : i32
    return %c0_i32, %c0_i32_0 : i32, i32
  }
  func.func @transform_12(%arg0: i32, %arg1: memref<512xi32, #tpu.memory_space<smem>>, %arg2: memref<512xi32, #tpu.memory_space<smem>>) -> (i32, i32) {
    %c0_i32 = arith.constant 0 : i32
    %c0_i32_0 = arith.constant 0 : i32
    %c0_i32_1 = arith.constant 0 : i32
    return %c0_i32, %c0_i32_0 : i32, i32
  }
  func.func @transform_13(%arg0: i32, %arg1: memref<512xi32, #tpu.memory_space<smem>>, %arg2: memref<512xi32, #tpu.memory_space<smem>>) -> (i32, i32) {
    %c0_i32 = arith.constant 0 : i32
    %c0_i32_0 = arith.constant 0 : i32
    %c0_i32_1 = arith.constant 0 : i32
    return %c0_i32, %c0_i32_0 : i32, i32
  }
  func.func @transform_14(%arg0: i32, %arg1: memref<512xi32, #tpu.memory_space<smem>>, %arg2: memref<512xi32, #tpu.memory_space<smem>>) -> (i32, i32) {
    %c0_i32 = arith.constant 0 : i32
    %c0_i32_0 = arith.constant 0 : i32
    %c0_i32_1 = arith.constant 0 : i32
    return %c0_i32, %c0_i32_0 : i32, i32
  }
  func.func @transform_15(%arg0: i32, %arg1: memref<512xi32, #tpu.memory_space<smem>>, %arg2: memref<512xi32, #tpu.memory_space<smem>>) -> (i32, i32) {
    %c0_i32 = arith.constant 0 : i32
    %c0_i32_0 = arith.constant 0 : i32
    %c0_i32_1 = arith.constant 0 : i32
    return %c0_i32, %c0_i32_0 : i32, i32
  }
}

module attributes {stable_mosaic.version = 11 : i64} {
  func.func @embedding_kernel(%arg0: i32, %arg1: memref<256x18xf32, #tpu.memory_space<vmem>>, %arg2: memref<1x18xf32, #tpu.memory_space<vmem>>, %arg3: memref<1x18xf32, #tpu.memory_space<vmem>>, %arg4: memref<18x64xf32, #tpu.memory_space<vmem>>, %arg5: memref<1x64xf32, #tpu.memory_space<vmem>>, %arg6: memref<64x64xf32, #tpu.memory_space<vmem>>, %arg7: memref<1x64xf32, #tpu.memory_space<vmem>>, %arg8: memref<256x64xf32, #tpu.memory_space<vmem>>) attributes {dimension_semantics = [#tpu.dimension_semantics<parallel>], iteration_bounds = array<i64: 1>, scalar_prefetch = 0 : i64, scratch_operands = 0 : i64, tpu.core_type = #tpu.core_type<tc>, window_params = [{transform_indices = @transform_0, window_bounds = array<i64: 256, 18>}, {pipeline_mode = #tpu.pipeline_mode<synchronous>, transform_indices = @transform_1, window_bounds = array<i64: 1, 18>}, {pipeline_mode = #tpu.pipeline_mode<synchronous>, transform_indices = @transform_2, window_bounds = array<i64: 1, 18>}, {pipeline_mode = #tpu.pipeline_mode<synchronous>, transform_indices = @transform_3, window_bounds = array<i64: 18, 64>}, {pipeline_mode = #tpu.pipeline_mode<synchronous>, transform_indices = @transform_4, window_bounds = array<i64: 1, 64>}, {pipeline_mode = #tpu.pipeline_mode<synchronous>, transform_indices = @transform_5, window_bounds = array<i64: 64, 64>}, {pipeline_mode = #tpu.pipeline_mode<synchronous>, transform_indices = @transform_6, window_bounds = array<i64: 1, 64>}, {transform_indices = @transform_7, window_bounds = array<i64: 256, 64>}]} {
    %c0 = arith.constant 0 : index
    %c0_0 = arith.constant 0 : index
    %0 = vector.load %arg1[%c0, %c0_0] : memref<256x18xf32, #tpu.memory_space<vmem>>, vector<256x18xf32>
    %c0_1 = arith.constant 0 : index
    %c0_2 = arith.constant 0 : index
    %1 = vector.load %arg2[%c0_1, %c0_2] : memref<1x18xf32, #tpu.memory_space<vmem>>, vector<1x18xf32>
    %c0_3 = arith.constant 0 : index
    %c0_4 = arith.constant 0 : index
    %2 = vector.load %arg3[%c0_3, %c0_4] : memref<1x18xf32, #tpu.memory_space<vmem>>, vector<1x18xf32>
    %cst = arith.constant dense<0.000000e+00> : vector<256xf32>
    %3 = vector.multi_reduction <add>, %0, %cst [1] : vector<256x18xf32> to vector<256xf32>
    %4 = vector.shape_cast %3 : vector<256xf32> to vector<256x1xf32>
    %cst_5 = arith.constant 1.800000e+01 : f32
    %5 = vector.broadcast %cst_5 : f32 to vector<256x1xf32>
    %6 = arith.divf %4, %5 : vector<256x1xf32>
    %7 = vector.broadcast %6 : vector<256x1xf32> to vector<256x18xf32>
    %8 = arith.subf %0, %7 : vector<256x18xf32>
    %9 = arith.mulf %8, %8 : vector<256x18xf32>
    %cst_6 = arith.constant dense<0.000000e+00> : vector<256xf32>
    %10 = vector.multi_reduction <add>, %9, %cst_6 [1] : vector<256x18xf32> to vector<256xf32>
    %11 = vector.shape_cast %10 : vector<256xf32> to vector<256x1xf32>
    %cst_7 = arith.constant 1.800000e+01 : f32
    %12 = vector.broadcast %cst_7 : f32 to vector<256x1xf32>
    %13 = arith.divf %11, %12 : vector<256x1xf32>
    %14 = vector.broadcast %6 : vector<256x1xf32> to vector<256x18xf32>
    %15 = arith.subf %0, %14 : vector<256x18xf32>
    %cst_8 = arith.constant 9.99999974E-6 : f32
    %16 = vector.broadcast %cst_8 : f32 to vector<256x1xf32>
    %17 = arith.addf %13, %16 : vector<256x1xf32>
    %18 = math.rsqrt %17 : vector<256x1xf32>
    %19 = vector.broadcast %18 : vector<256x1xf32> to vector<256x18xf32>
    %20 = arith.mulf %15, %19 : vector<256x18xf32>
    %21 = vector.broadcast %1 : vector<1x18xf32> to vector<256x18xf32>
    %22 = arith.mulf %20, %21 : vector<256x18xf32>
    %23 = vector.broadcast %2 : vector<1x18xf32> to vector<256x18xf32>
    %24 = arith.addf %22, %23 : vector<256x18xf32>
    %c0_9 = arith.constant 0 : index
    %c0_10 = arith.constant 0 : index
    %25 = vector.load %arg4[%c0_9, %c0_10] : memref<18x64xf32, #tpu.memory_space<vmem>>, vector<18x64xf32>
    %cst_11 = arith.constant dense<0.000000e+00> : vector<256x64xf32>
    %26 = tpu.matmul %24, %25, %cst_11 {dimension_numbers = #tpu.dot_dimension_numbers<[1], [0], [0], [1], [0, 0, 1, 1], [], []>} : vector<256x18xf32>, vector<18x64xf32>, vector<256x64xf32> -> vector<256x64xf32>
    %c0_12 = arith.constant 0 : index
    %c0_13 = arith.constant 0 : index
    %27 = vector.load %arg5[%c0_12, %c0_13] : memref<1x64xf32, #tpu.memory_space<vmem>>, vector<1x64xf32>
    %28 = vector.broadcast %27 : vector<1x64xf32> to vector<256x64xf32>
    %29 = arith.addf %26, %28 : vector<256x64xf32>
    %cst_14 = arith.constant 0.000000e+00 : f32
    %30 = vector.broadcast %cst_14 : f32 to vector<256x64xf32>
    %31 = arith.maximumf %29, %30 : vector<256x64xf32>
    %c0_15 = arith.constant 0 : index
    %c0_16 = arith.constant 0 : index
    %32 = vector.load %arg6[%c0_15, %c0_16] : memref<64x64xf32, #tpu.memory_space<vmem>>, vector<64x64xf32>
    %cst_17 = arith.constant dense<0.000000e+00> : vector<256x64xf32>
    %33 = tpu.matmul %31, %32, %cst_17 {dimension_numbers = #tpu.dot_dimension_numbers<[1], [0], [0], [1], [0, 0, 1, 1], [], []>} : vector<256x64xf32>, vector<64x64xf32>, vector<256x64xf32> -> vector<256x64xf32>
    %c0_18 = arith.constant 0 : index
    %c0_19 = arith.constant 0 : index
    %34 = vector.load %arg7[%c0_18, %c0_19] : memref<1x64xf32, #tpu.memory_space<vmem>>, vector<1x64xf32>
    %35 = vector.broadcast %34 : vector<1x64xf32> to vector<256x64xf32>
    %36 = arith.addf %33, %35 : vector<256x64xf32>
    %cst_20 = arith.constant 0.000000e+00 : f32
    %37 = vector.broadcast %cst_20 : f32 to vector<256x64xf32>
    %38 = arith.maximumf %36, %37 : vector<256x64xf32>
    %c0_21 = arith.constant 0 : index
    %c0_22 = arith.constant 0 : index
    %39 = vector.load %arg8[%c0_21, %c0_22] : memref<256x64xf32, #tpu.memory_space<vmem>>, vector<256x64xf32>
    tpu.vector_store %arg8[%c0_21, %c0_22], %38 {strides = array<i32>} : memref<256x64xf32, #tpu.memory_space<vmem>>, vector<256x64xf32>,
    return
  }
  func.func @transform_0(%arg0: i32) -> (i32, i32) {
    %c0_i32 = arith.constant 0 : i32
    %c0_i32_0 = arith.constant 0 : i32
    return %arg0, %c0_i32 : i32, i32
  }
  func.func @transform_1(%arg0: i32) -> (i32, i32) {
    %c0_i32 = arith.constant 0 : i32
    %c0_i32_0 = arith.constant 0 : i32
    %c0_i32_1 = arith.constant 0 : i32
    return %c0_i32, %c0_i32_0 : i32, i32
  }
  func.func @transform_2(%arg0: i32) -> (i32, i32) {
    %c0_i32 = arith.constant 0 : i32
    %c0_i32_0 = arith.constant 0 : i32
    %c0_i32_1 = arith.constant 0 : i32
    return %c0_i32, %c0_i32_0 : i32, i32
  }
  func.func @transform_3(%arg0: i32) -> (i32, i32) {
    %c0_i32 = arith.constant 0 : i32
    %c0_i32_0 = arith.constant 0 : i32
    %c0_i32_1 = arith.constant 0 : i32
    return %c0_i32, %c0_i32_0 : i32, i32
  }
  func.func @transform_4(%arg0: i32) -> (i32, i32) {
    %c0_i32 = arith.constant 0 : i32
    %c0_i32_0 = arith.constant 0 : i32
    %c0_i32_1 = arith.constant 0 : i32
    return %c0_i32, %c0_i32_0 : i32, i32
  }
  func.func @transform_5(%arg0: i32) -> (i32, i32) {
    %c0_i32 = arith.constant 0 : i32
    %c0_i32_0 = arith.constant 0 : i32
    %c0_i32_1 = arith.constant 0 : i32
    return %c0_i32, %c0_i32_0 : i32, i32
  }
  func.func @transform_6(%arg0: i32) -> (i32, i32) {
    %c0_i32 = arith.constant 0 : i32
    %c0_i32_0 = arith.constant 0 : i32
    %c0_i32_1 = arith.constant 0 : i32
    return %c0_i32, %c0_i32_0 : i32, i32
  }
  func.func @transform_7(%arg0: i32) -> (i32, i32) {
    %c0_i32 = arith.constant 0 : i32
    %c0_i32_0 = arith.constant 0 : i32
    return %arg0, %c0_i32 : i32, i32
  }
}

module attributes {stable_mosaic.version = 11 : i64} {
  func.func @output_head_kernel(%arg0: i32, %arg1: memref<256x64xf32, #tpu.memory_space<vmem>>, %arg2: memref<64x64xf32, #tpu.memory_space<vmem>>, %arg3: memref<1x64xf32, #tpu.memory_space<vmem>>, %arg4: memref<64x1xf32, #tpu.memory_space<vmem>>, %arg5: memref<256x1xf32, #tpu.memory_space<vmem>>) attributes {dimension_semantics = [#tpu.dimension_semantics<parallel>], iteration_bounds = array<i64: 1>, scalar_prefetch = 0 : i64, scratch_operands = 0 : i64, tpu.core_type = #tpu.core_type<tc>, window_params = [{transform_indices = @transform_0, window_bounds = array<i64: 256, 64>}, {pipeline_mode = #tpu.pipeline_mode<synchronous>, transform_indices = @transform_1, window_bounds = array<i64: 64, 64>}, {pipeline_mode = #tpu.pipeline_mode<synchronous>, transform_indices = @transform_2, window_bounds = array<i64: 1, 64>}, {pipeline_mode = #tpu.pipeline_mode<synchronous>, transform_indices = @transform_3, window_bounds = array<i64: 64, 1>}, {transform_indices = @transform_4, window_bounds = array<i64: 256, 1>}]} {
    %c0 = arith.constant 0 : index
    %c0_0 = arith.constant 0 : index
    %0 = vector.load %arg1[%c0, %c0_0] : memref<256x64xf32, #tpu.memory_space<vmem>>, vector<256x64xf32>
    %c0_1 = arith.constant 0 : index
    %c0_2 = arith.constant 0 : index
    %1 = vector.load %arg2[%c0_1, %c0_2] : memref<64x64xf32, #tpu.memory_space<vmem>>, vector<64x64xf32>
    %cst = arith.constant dense<0.000000e+00> : vector<256x64xf32>
    %2 = tpu.matmul %0, %1, %cst {dimension_numbers = #tpu.dot_dimension_numbers<[1], [0], [0], [1], [0, 0, 1, 1], [], []>} : vector<256x64xf32>, vector<64x64xf32>, vector<256x64xf32> -> vector<256x64xf32>
    %c0_3 = arith.constant 0 : index
    %c0_4 = arith.constant 0 : index
    %3 = vector.load %arg3[%c0_3, %c0_4] : memref<1x64xf32, #tpu.memory_space<vmem>>, vector<1x64xf32>
    %4 = vector.broadcast %3 : vector<1x64xf32> to vector<256x64xf32>
    %5 = arith.addf %2, %4 : vector<256x64xf32>
    %cst_5 = arith.constant 0.000000e+00 : f32
    %6 = vector.broadcast %cst_5 : f32 to vector<256x64xf32>
    %7 = arith.maximumf %5, %6 : vector<256x64xf32>
    %c0_6 = arith.constant 0 : index
    %c0_7 = arith.constant 0 : index
    %8 = vector.load %arg4[%c0_6, %c0_7] : memref<64x1xf32, #tpu.memory_space<vmem>>, vector<64x1xf32>
    %cst_8 = arith.constant dense<0.000000e+00> : vector<256x1xf32>
    %9 = tpu.matmul %7, %8, %cst_8 {dimension_numbers = #tpu.dot_dimension_numbers<[1], [0], [0], [1], [0, 0, 1, 1], [], []>} : vector<256x64xf32>, vector<64x1xf32>, vector<256x1xf32> -> vector<256x1xf32>
    %c0_9 = arith.constant 0 : index
    %c0_10 = arith.constant 0 : index
    %10 = vector.load %arg5[%c0_9, %c0_10] : memref<256x1xf32, #tpu.memory_space<vmem>>, vector<256x1xf32>
    tpu.vector_store %arg5[%c0_9, %c0_10], %9 {strides = array<i32>} : memref<256x1xf32, #tpu.memory_space<vmem>>, vector<256x1xf32>,
    return
  }
  func.func @transform_0(%arg0: i32) -> (i32, i32) {
    %c0_i32 = arith.constant 0 : i32
    %c0_i32_0 = arith.constant 0 : i32
    return %arg0, %c0_i32 : i32, i32
  }
  func.func @transform_1(%arg0: i32) -> (i32, i32) {
    %c0_i32 = arith.constant 0 : i32
    %c0_i32_0 = arith.constant 0 : i32
    %c0_i32_1 = arith.constant 0 : i32
    return %c0_i32, %c0_i32_0 : i32, i32
  }
  func.func @transform_2(%arg0: i32) -> (i32, i32) {
    %c0_i32 = arith.constant 0 : i32
    %c0_i32_0 = arith.constant 0 : i32
    %c0_i32_1 = arith.constant 0 : i32
    return %c0_i32, %c0_i32_0 : i32, i32
  }
  func.func @transform_3(%arg0: i32) -> (i32, i32) {
    %c0_i32 = arith.constant 0 : i32
    %c0_i32_0 = arith.constant 0 : i32
    %c0_i32_1 = arith.constant 0 : i32
    return %c0_i32, %c0_i32_0 : i32, i32
  }
  func.func @transform_4(%arg0: i32) -> (i32, i32) {
    %c0_i32 = arith.constant 0 : i32
    %c0_i32_0 = arith.constant 0 : i32
    return %arg0, %c0_i32 : i32, i32
  }
}

</mosaic_0001>

<llo_original>
// kernel: gnn_policy_forward.13
$region0: #{gnn_policy_forward.13}
  #allocation0 [shape = 'u32[]', space=smem, size = 0x4, offset = 0x4, fixed_abs, tag = 'smem constant byte address 0x4 - core index']
  #allocation1 [shape = 'u32[144,128]{1,0:T(1,128)}', space=vmem, size = 0x12000, scoped, tag = 'internal scratch']
  %s0 = inlined_call_operand.vmem [shape: f32[256,64], index: 0, kind: input, shape index: {}]
  %s1 = inlined_call_operand.vmem [shape: f32[64,64], index: 1, kind: input, shape index: {}]
  %s2 = inlined_call_operand.vmem [shape: f32[1,64], index: 2, kind: input, shape index: {}]
  %s3 = inlined_call_operand.vmem [shape: f32[64,1], index: 3, kind: input, shape index: {}]
  %s4 = inlined_call_operand.vmem [shape: f32[256,1], index: 4, kind: output, shape index: {}]
  %s5 = sld [smem:[#allocation0]]
  $region26: #{gnn_policy_forward.13} parent=0
    _
  %s7 = ssub.s32 1, %s5
  %s8 = scalar_select 0, %s7, %s5
  // Predicated region
  $region2: #{gnn_policy_forward.13} parent=0 // pred_check
    _
  $region3: #{gnn_policy_forward.13} parent=0 // pred_check_branch
    %10 = sbr.rel (0) target = $region5
  $region4: #{gnn_policy_forward.13} parent=0 // pred_region
    _
  $region5: #{gnn_policy_forward.13} parent=0 // pred_fallthru
    _
  // Predicated region
  $region6: #{gnn_policy_forward.13} parent=0 // pred_check
    _
  $region7: #{gnn_policy_forward.13} parent=0 // pred_check_branch
    %12 = sbr.rel (0) target = $region9
  $region8: #{gnn_policy_forward.13} parent=0 // pred_region
    _
  $region9: #{gnn_policy_forward.13} parent=0 // pred_fallthru
    _
  // Predicated region
  $region10: #{gnn_policy_forward.13} parent=0 // pred_check
    _
  $region11: #{gnn_policy_forward.13} parent=0 // pred_check_branch
    %14 = sbr.rel (0) target = $region13
  $region12: #{gnn_policy_forward.13} parent=0 // pred_region
    _
  $region13: #{gnn_policy_forward.13} parent=0 // pred_fallthru
    _
  // Predicated region
  $region14: #{gnn_policy_forward.13} parent=0 // pred_check
    _
  $region15: #{gnn_policy_forward.13} parent=0 // pred_check_branch
    %16 = sbr.rel (0) target = $region17
  $region16: #{gnn_policy_forward.13} parent=0 // pred_region
    _
  $region17: #{gnn_policy_forward.13} parent=0 // pred_fallthru
    _
  %v17 = vld [vmem:[%s0] sm:$0xff]
  %v18 = vld [vmem:[%s0 + $0x8] sm:$0xff]
  %v19 = vld [vmem:[%s0 + $0x10] sm:$0xff]
  %v20 = vld [vmem:[%s0 + $0x18] sm:$0xff]
  %v21 = vld [vmem:[%s0 + $0x20] sm:$0xff]
  %v22 = vld [vmem:[%s0 + $0x28] sm:$0xff]
  %v23 = vld [vmem:[%s0 + $0x30] sm:$0xff]
  %v24 = vld [vmem:[%s0 + $0x38] sm:$0xff]
  %v25 = vld [vmem:[%s0 + $0x40] sm:$0xff]
  %v26 = vld [vmem:[%s0 + $0x48] sm:$0xff]
  %v27 = vld [vmem:[%s0 + $0x50] sm:$0xff]
  %v28 = vld [vmem:[%s0 + $0x58] sm:$0xff]
  %v29 = vld [vmem:[%s0 + $0x60] sm:$0xff]
  %v30 = vld [vmem:[%s0 + $0x68] sm:$0xff]
  %v31 = vld [vmem:[%s0 + $0x70] sm:$0xff]
  %v32 = vld [vmem:[%s0 + $0x78] sm:$0xff]
  %v33 = vld [vmem:[%s0 + $0x80] sm:$0xff]
  %v34 = vld [vmem:[%s0 + $0x88] sm:$0xff]
  %v35 = vld [vmem:[%s0 + $0x90] sm:$0xff]
  %v36 = vld [vmem:[%s0 + $0x98] sm:$0xff]
  %v37 = vld [vmem:[%s0 + $0xa0] sm:$0xff]
  %v38 = vld [vmem:[%s0 + $0xa8] sm:$0xff]
  %v39 = vld [vmem:[%s0 + $0xb0] sm:$0xff]
  %v40 = vld [vmem:[%s0 + $0xb8] sm:$0xff]
  %v41 = vld [vmem:[%s0 + $0xc0] sm:$0xff]
  %v42 = vld [vmem:[%s0 + $0xc8] sm:$0xff]
  %v43 = vld [vmem:[%s0 + $0xd0] sm:$0xff]
  %v44 = vld [vmem:[%s0 + $0xd8] sm:$0xff]
  %v45 = vld [vmem:[%s0 + $0xe0] sm:$0xff]
  %v46 = vld [vmem:[%s0 + $0xe8] sm:$0xff]
  %v47 = vld [vmem:[%s0 + $0xf0] sm:$0xff]
  %v48 = vld [vmem:[%s0 + $0xf8] sm:$0xff]
  %v49 = vld [vmem:[%s1] sm:$0xff]
  %v50 = vld [vmem:[%s1 + $0x8] sm:$0xff]
  %v51 = vld [vmem:[%s1 + $0x10] sm:$0xff]
  %v52 = vld [vmem:[%s1 + $0x18] sm:$0xff]
  %v53 = vld [vmem:[%s1 + $0x20] sm:$0xff]
  %v54 = vld [vmem:[%s1 + $0x28] sm:$0xff]
  %v55 = vld [vmem:[%s1 + $0x30] sm:$0xff]
  %v56 = vld [vmem:[%s1 + $0x38] sm:$0xff]
  %v57 = vld [vmem:[%s2] sm:$0x1]
  %v59 = vlaneseq
  %v60 = vshrl.u32 %v59, 7
  %v61 = vsub.s32 0, %v60
  %v62 = vrot.slane %v57, %v61
  %vm64 = vcmask 523264
  %v66 = vsel %vm64, %v17, 0
  %v69 = vsel %vm64, %v18, 0
  %v72 = vsel %vm64, %v19, 0
  %v75 = vsel %vm64, %v20, 0
  %v78 = vsel %vm64, %v21, 0
  %v81 = vsel %vm64, %v22, 0
  %v84 = vsel %vm64, %v23, 0
  %v87 = vsel %vm64, %v24, 0
  %v90 = vsel %vm64, %v25, 0
  %v93 = vsel %vm64, %v26, 0
  %v96 = vsel %vm64, %v27, 0
  %v99 = vsel %vm64, %v28, 0
  %v102 = vsel %vm64, %v29, 0
  %v105 = vsel %vm64, %v30, 0
  %v108 = vsel %vm64, %v31, 0
  %v111 = vsel %vm64, %v32, 0
  %v114 = vsel %vm64, %v33, 0
  %v117 = vsel %vm64, %v34, 0
  %v120 = vsel %vm64, %v35, 0
  %v123 = vsel %vm64, %v36, 0
  %v126 = vsel %vm64, %v37, 0
  %v129 = vsel %vm64, %v38, 0
  %v132 = vsel %vm64, %v39, 0
  %v135 = vsel %vm64, %v40, 0
  %v138 = vsel %vm64, %v41, 0
  %v141 = vsel %vm64, %v42, 0
  %v144 = vsel %vm64, %v43, 0
  %v147 = vsel %vm64, %v44, 0
  %v150 = vsel %vm64, %v45, 0
  %v153 = vsel %vm64, %v46, 0
  %v156 = vsel %vm64, %v47, 0
  %v159 = vsel %vm64, %v48, 0
  %161 = vmatprep.subr.mxu0 0.0
  %162 = vmatpush1.msra.mxu0 0.0
  %163 = vmatprep.subr.mxu0 0.0
  %164 = vmatpush1.msra.mxu0 0.0
  %165 = vmatprep.subr.mxu0 0.0
  %166 = vmatpush1.msra.mxu0 0.0
  %167 = vmatprep.subr.mxu0 0.0
  %168 = vmatpush1.msra.mxu0 0.0
  %169 = vmatprep.subr.mxu0 0.0
  %170 = vmatpush1.msra.mxu0 0.0
  %171 = vmatprep.subr.mxu0 0.0
  %172 = vmatpush1.msra.mxu0 0.0
  %173 = vmatprep.subr.mxu0 0.0
  %174 = vmatpush1.msra.mxu0 0.0
  %175 = vmatprep.subr.mxu0 0.0
  %176 = vmatpush1.msra.mxu0 0.0
  %177 = vmatprep.subr.mxu0 0.0
  %178 = vmatpush1.msra.mxu0 %v56
  %179 = vmatprep.subr.mxu0 0.0
  %180 = vmatpush1.msra.mxu0 %v55
  %181 = vmatprep.subr.mxu0 0.0
  %182 = vmatpush1.msra.mxu0 %v54
  %183 = vmatprep.subr.mxu0 0.0
  %184 = vmatpush1.msra.mxu0 %v53
  %185 = vmatprep.subr.mxu0 0.0
  %186 = vmatpush1.msra.mxu0 %v52
  %187 = vmatprep.subr.mxu0 0.0
  %188 = vmatpush1.msra.mxu0 %v51
  %189 = vmatprep.subr.mxu0 0.0
  %190 = vmatpush1.msra.mxu0 %v50
  %191 = vmatprep.subr.mxu0 0.0
  %192 = vmatpush1.msra.mxu0 %v49
  %193 = vmatprep.subr.mxu0 0.0
  %194 = vmatpush2.msra.mxu0 0.0
  %195 = vmatprep.subr.mxu0 0.0
  %196 = vmatpush2.msra.mxu0 0.0
  %197 = vmatprep.subr.mxu0 0.0
  %198 = vmatpush2.msra.mxu0 0.0
  %199 = vmatprep.subr.mxu0 0.0
  %200 = vmatpush2.msra.mxu0 0.0
  %201 = vmatprep.subr.mxu0 0.0
  %202 = vmatpush2.msra.mxu0 0.0
  %203 = vmatprep.subr.mxu0 0.0
  %204 = vmatpush2.msra.mxu0 0.0
  %205 = vmatprep.subr.mxu0 0.0
  %206 = vmatpush2.msra.mxu0 0.0
  %207 = vmatprep.subr.mxu0 0.0
  %208 = vmatpush2.msra.mxu0 0.0
  %209 = vmatprep.subr.mxu0 0.0
  %210 = vmatpush2.msra.mxu0 0.0
  %211 = vmatprep.subr.mxu0 0.0
  %212 = vmatpush2.msra.mxu0 0.0
  %213 = vmatprep.subr.mxu0 0.0
  %214 = vmatpush2.msra.mxu0 0.0
  %215 = vmatprep.subr.mxu0 0.0
  %216 = vmatpush2.msra.mxu0 0.0
  %217 = vmatprep.subr.mxu0 0.0
  %218 = vmatpush2.msra.mxu0 0.0
  %219 = vmatprep.subr.mxu0 0.0
  %220 = vmatpush2.msra.mxu0 0.0
  %221 = vmatprep.subr.mxu0 0.0
  %222 = vmatpush2.msra.mxu0 0.0
  %223 = vmatprep.subr.mxu0 0.0
  %224 = vmatpush2.msra.mxu0 0.0
  %225 = vmatprep.mubr.f32.mxu0 0.0
  %226 = vmatmul.mubr.f32.gmra.mxu0 %v66
  %v227 = vpop.f32.mrf.mxu0
  %v228 = vadd.f32 %v62, %v227
  %v229 = vpop.f32.mrf.mxu0
  %230 = vmatprep.mubr.f32.mxu0 0.0
  %231 = vmatmul.mubr.f32.gmra.mxu0 %v69
  %v232 = vpop.f32.mrf.mxu0
  %v233 = vadd.f32 %v62, %v232
  %v234 = vpop.f32.mrf.mxu0
  %235 = vmatprep.mubr.f32.mxu0 0.0
  %236 = vmatmul.mubr.f32.gmra.mxu0 %v72
  %v237 = vpop.f32.mrf.mxu0
  %v238 = vadd.f32 %v62, %v237
  %v239 = vpop.f32.mrf.mxu0
  %240 = vmatprep.mubr.f32.mxu0 0.0
  %241 = vmatmul.mubr.f32.gmra.mxu0 %v75
  %v242 = vpop.f32.mrf.mxu0
  %v243 = vadd.f32 %v62, %v242
  %v244 = vpop.f32.mrf.mxu0
  %245 = vmatprep.mubr.f32.mxu0 0.0
  %246 = vmatmul.mubr.f32.gmra.mxu0 %v78
  %v247 = vpop.f32.mrf.mxu0
  %v248 = vadd.f32 %v62, %v247
  %v249 = vpop.f32.mrf.mxu0
  %250 = vmatprep.mubr.f32.mxu0 0.0
  %251 = vmatmul.mubr.f32.gmra.mxu0 %v81
  %v252 = vpop.f32.mrf.mxu0
  %v253 = vadd.f32 %v62, %v252
  %v254 = vpop.f32.mrf.mxu0
  %255 = vmatprep.mubr.f32.mxu0 0.0
  %256 = vmatmul.mubr.f32.gmra.mxu0 %v84
  %v257 = vpop.f32.mrf.mxu0
  %v258 = vadd.f32 %v62, %v257
  %v259 = vpop.f32.mrf.mxu0
  %260 = vmatprep.mubr.f32.mxu0 0.0
  %261 = vmatmul.mubr.f32.gmra.mxu0 %v87
  %v262 = vpop.f32.mrf.mxu0
  %v263 = vadd.f32 %v62, %v262
  %v264 = vpop.f32.mrf.mxu0
  %265 = vmatprep.mubr.f32.mxu0 0.0
  %266 = vmatmul.mubr.f32.gmra.mxu0 %v90
  %v267 = vpop.f32.mrf.mxu0
  %v268 = vadd.f32 %v62, %v267
  %v269 = vpop.f32.mrf.mxu0
  %270 = vmatprep.mubr.f32.mxu0 0.0
  %271 = vmatmul.mubr.f32.gmra.mxu0 %v93
  %v272 = vpop.f32.mrf.mxu0
  %v273 = vadd.f32 %v62, %v272
  %v274 = vpop.f32.mrf.mxu0
  %275 = vmatprep.mubr.f32.mxu0 0.0
  %276 = vmatmul.mubr.f32.gmra.mxu0 %v96
  %v277 = vpop.f32.mrf.mxu0
  %v278 = vadd.f32 %v62, %v277
  %v279 = vpop.f32.mrf.mxu0
  %280 = vmatprep.mubr.f32.mxu0 0.0
  %281 = vmatmul.mubr.f32.gmra.mxu0 %v99
  %v282 = vpop.f32.mrf.mxu0
  %v283 = vadd.f32 %v62, %v282
  %v284 = vpop.f32.mrf.mxu0
  %285 = vmatprep.mubr.f32.mxu0 0.0
  %286 = vmatmul.mubr.f32.gmra.mxu0 %v102
  %v287 = vpop.f32.mrf.mxu0
  %v288 = vadd.f32 %v62, %v287
  %v289 = vpop.f32.mrf.mxu0
  %290 = vmatprep.mubr.f32.mxu0 0.0
  %291 = vmatmul.mubr.f32.gmra.mxu0 %v105
  %v292 = vpop.f32.mrf.mxu0
  %v293 = vadd.f32 %v62, %v292
  %v294 = vpop.f32.mrf.mxu0
  %295 = vmatprep.mubr.f32.mxu0 0.0
  %296 = vmatmul.mubr.f32.gmra.mxu0 %v108
  %v297 = vpop.f32.mrf.mxu0
  %v298 = vadd.f32 %v62, %v297
  %v299 = vpop.f32.mrf.mxu0
  %300 = vmatprep.mubr.f32.mxu0 0.0
  %301 = vmatmul.mubr.f32.gmra.mxu0 %v111
  %v302 = vpop.f32.mrf.mxu0
  %v303 = vadd.f32 %v62, %v302
  %v304 = vpop.f32.mrf.mxu0
  %305 = vmatprep.mubr.f32.mxu0 0.0
  %306 = vmatmul.mubr.f32.gmra.mxu0 %v114
  %v307 = vpop.f32.mrf.mxu0
  %v308 = vadd.f32 %v62, %v307
  %v309 = vpop.f32.mrf.mxu0
  %310 = vmatprep.mubr.f32.mxu0 0.0
  %311 = vmatmul.mubr.f32.gmra.mxu0 %v117
  %v312 = vpop.f32.mrf.mxu0
  %v313 = vadd.f32 %v62, %v312
  %v314 = vpop.f32.mrf.mxu0
  %315 = vmatprep.mubr.f32.mxu0 0.0
  %316 = vmatmul.mubr.f32.gmra.mxu0 %v120
  %v317 = vpop.f32.mrf.mxu0
  %v318 = vadd.f32 %v62, %v317
  %v319 = vpop.f32.mrf.mxu0
  %320 = vmatprep.mubr.f32.mxu0 0.0
  %321 = vmatmul.mubr.f32.gmra.mxu0 %v123
  %v322 = vpop.f32.mrf.mxu0
  %v323 = vadd.f32 %v62, %v322
  %v324 = vpop.f32.mrf.mxu0
  %325 = vmatprep.mubr.f32.mxu0 0.0
  %326 = vmatmul.mubr.f32.gmra.mxu0 %v126
  %v327 = vpop.f32.mrf.mxu0
  %v328 = vadd.f32 %v62, %v327
  %v329 = vpop.f32.mrf.mxu0
  %330 = vmatprep.mubr.f32.mxu0 0.0
  %331 = vmatmul.mubr.f32.gmra.mxu0 %v129
  %v332 = vpop.f32.mrf.mxu0
  %v333 = vadd.f32 %v62, %v332
  %v334 = vpop.f32.mrf.mxu0
  %335 = vmatprep.mubr.f32.mxu0 0.0
  %336 = vmatmul.mubr.f32.gmra.mxu0 %v132
  %v337 = vpop.f32.mrf.mxu0
  %v338 = vadd.f32 %v62, %v337
  %v339 = vpop.f32.mrf.mxu0
  %340 = vmatprep.mubr.f32.mxu0 0.0
  %341 = vmatmul.mubr.f32.gmra.mxu0 %v135
  %v342 = vpop.f32.mrf.mxu0
  %v343 = vadd.f32 %v62, %v342
  %v344 = vpop.f32.mrf.mxu0
  %345 = vmatprep.mubr.f32.mxu0 0.0
  %346 = vmatmul.mubr.f32.gmra.mxu0 %v138
  %v347 = vpop.f32.mrf.mxu0
  %v348 = vadd.f32 %v62, %v347
  %v349 = vpop.f32.mrf.mxu0
  %350 = vmatprep.mubr.f32.mxu0 0.0
  %351 = vmatmul.mubr.f32.gmra.mxu0 %v141
  %v352 = vpop.f32.mrf.mxu0
  %v353 = vadd.f32 %v62, %v352
  %v354 = vpop.f32.mrf.mxu0
  %355 = vmatprep.mubr.f32.mxu0 0.0
  %356 = vmatmul.mubr.f32.gmra.mxu0 %v144
  %v357 = vpop.f32.mrf.mxu0
  %v358 = vadd.f32 %v62, %v357
  %v359 = vpop.f32.mrf.mxu0
  %360 = vmatprep.mubr.f32.mxu0 0.0
  %361 = vmatmul.mubr.f32.gmra.mxu0 %v147
  %v362 = vpop.f32.mrf.mxu0
  %v363 = vadd.f32 %v62, %v362
  %v364 = vpop.f32.mrf.mxu0
  %365 = vmatprep.mubr.f32.mxu0 0.0
  %366 = vmatmul.mubr.f32.gmra.mxu0 %v150
  %v367 = vpop.f32.mrf.mxu0
  %v368 = vadd.f32 %v62, %v367
  %v369 = vpop.f32.mrf.mxu0
  %370 = vmatprep.mubr.f32.mxu0 0.0
  %371 = vmatmul.mubr.f32.gmra.mxu0 %v153
  %v372 = vpop.f32.mrf.mxu0
  %v373 = vadd.f32 %v62, %v372
  %v374 = vpop.f32.mrf.mxu0
  %375 = vmatprep.mubr.f32.mxu0 0.0
  %376 = vmatmul.mubr.f32.gmra.mxu0 %v156
  %v377 = vpop.f32.mrf.mxu0
  %v378 = vadd.f32 %v62, %v377
  %v379 = vpop.f32.mrf.mxu0
  %380 = vmatprep.mubr.f32.mxu0 0.0
  %381 = vmatmul.mubr.f32.gmra.mxu0 %v159
  %v382 = vpop.f32.mrf.mxu0
  %v383 = vadd.f32 %v62, %v382
  %v384 = vpop.f32.mrf.mxu0
  %385 = vdwg.mxu0
  %v386 = vmax.f32 %v228, 0.0
  %v387 = vmax.f32 %v233, 0.0
  %v388 = vmax.f32 %v238, 0.0
  %v389 = vmax.f32 %v243, 0.0
  %v390 = vmax.f32 %v248, 0.0
  %v391 = vmax.f32 %v253, 0.0
  %v392 = vmax.f32 %v258, 0.0
  %v393 = vmax.f32 %v263, 0.0
  %v394 = vmax.f32 %v268, 0.0
  %v395 = vmax.f32 %v273, 0.0
  %v396 = vmax.f32 %v278, 0.0
  %v397 = vmax.f32 %v283, 0.0
  %v398 = vmax.f32 %v288, 0.0
  %v399 = vmax.f32 %v293, 0.0
  %v400 = vmax.f32 %v298, 0.0
  %v401 = vmax.f32 %v303, 0.0
  %v402 = vmax.f32 %v308, 0.0
  %v403 = vmax.f32 %v313, 0.0
  %v404 = vmax.f32 %v318, 0.0
  %v405 = vmax.f32 %v323, 0.0
  %v406 = vmax.f32 %v328, 0.0
  %v407 = vmax.f32 %v333, 0.0
  %v408 = vmax.f32 %v338, 0.0
  %v409 = vmax.f32 %v343, 0.0
  %v410 = vmax.f32 %v348, 0.0
  %v411 = vmax.f32 %v353, 0.0
  %v412 = vmax.f32 %v358, 0.0
  %v413 = vmax.f32 %v363, 0.0
  %v414 = vmax.f32 %v368, 0.0
  %v415 = vmax.f32 %v373, 0.0
  %v416 = vmax.f32 %v378, 0.0
  %v417 = vmax.f32 %v383, 0.0
  %v418 = vld [vmem:[%s3] sm:$0xff]
  %v419 = vld [vmem:[%s3 + $0x8] sm:$0xff]
  %v420 = vld [vmem:[%s3 + $0x10] sm:$0xff]
  %v421 = vld [vmem:[%s3 + $0x18] sm:$0xff]
  %v422 = vld [vmem:[%s3 + $0x20] sm:$0xff]
  %v423 = vld [vmem:[%s3 + $0x28] sm:$0xff]
  %v424 = vld [vmem:[%s3 + $0x30] sm:$0xff]
  %v425 = vld [vmem:[%s3 + $0x38] sm:$0xff]
  %v427 = vsel %vm64, %v386, 0
  %v430 = vsel %vm64, %v387, 0
  %v433 = vsel %vm64, %v388, 0
  %v436 = vsel %vm64, %v389, 0
  %v439 = vsel %vm64, %v390, 0
  %v442 = vsel %vm64, %v391, 0
  %v445 = vsel %vm64, %v392, 0
  %v448 = vsel %vm64, %v393, 0
  %v451 = vsel %vm64, %v394, 0
  %v454 = vsel %vm64, %v395, 0
  %v457 = vsel %vm64, %v396, 0
  %v460 = vsel %vm64, %v397, 0
  %v463 = vsel %vm64, %v398, 0
  %v466 = vsel %vm64, %v399, 0
  %v469 = vsel %vm64, %v400, 0
  %v472 = vsel %vm64, %v401, 0
  %v475 = vsel %vm64, %v402, 0
  %v478 = vsel %vm64, %v403, 0
  %v481 = vsel %vm64, %v404, 0
  %v484 = vsel %vm64, %v405, 0
  %v487 = vsel %vm64, %v406, 0
  %v490 = vsel %vm64, %v407, 0
  %v493 = vsel %vm64, %v408, 0
  %v496 = vsel %vm64, %v409, 0
  %v499 = vsel %vm64, %v410, 0
  %v502 = vsel %vm64, %v411, 0
  %v505 = vsel %vm64, %v412, 0
  %v508 = vsel %vm64, %v413, 0
  %v511 = vsel %vm64, %v414, 0
  %v514 = vsel %vm64, %v415, 0
  %v517 = vsel %vm64, %v416, 0
  %v520 = vsel %vm64, %v417, 0
  %522 = vmatprep.subr.mxu0 0.0
  %523 = vmatpush1.msra.mxu0 0.0
  %524 = vmatprep.subr.mxu0 0.0
  %525 = vmatpush1.msra.mxu0 0.0
  %526 = vmatprep.subr.mxu0 0.0
  %527 = vmatpush1.msra.mxu0 0.0
  %528 = vmatprep.subr.mxu0 0.0
  %529 = vmatpush1.msra.mxu0 0.0
  %530 = vmatprep.subr.mxu0 0.0
  %531 = vmatpush1.msra.mxu0 0.0
  %532 = vmatprep.subr.mxu0 0.0
  %533 = vmatpush1.msra.mxu0 0.0
  %534 = vmatprep.subr.mxu0 0.0
  %535 = vmatpush1.msra.mxu0 0.0
  %536 = vmatprep.subr.mxu0 0.0
  %537 = vmatpush1.msra.mxu0 0.0
  %538 = vmatprep.subr.mxu0 0.0
  %539 = vmatpush1.msra.mxu0 %v425
  %540 = vmatprep.subr.mxu0 0.0
  %541 = vmatpush1.msra.mxu0 %v424
  %542 = vmatprep.subr.mxu0 0.0
  %543 = vmatpush1.msra.mxu0 %v423
  %544 = vmatprep.subr.mxu0 0.0
  %545 = vmatpush1.msra.mxu0 %v422
  %546 = vmatprep.subr.mxu0 0.0
  %547 = vmatpush1.msra.mxu0 %v421
  %548 = vmatprep.subr.mxu0 0.0
  %549 = vmatpush1.msra.mxu0 %v420
  %550 = vmatprep.subr.mxu0 0.0
  %551 = vmatpush1.msra.mxu0 %v419
  %552 = vmatprep.subr.mxu0 0.0
  %553 = vmatpush1.msra.mxu0 %v418
  %554 = vmatprep.subr.mxu0 0.0
  %555 = vmatpush2.msra.mxu0 0.0
  %556 = vmatprep.subr.mxu0 0.0
  %557 = vmatpush2.msra.mxu0 0.0
  %558 = vmatprep.subr.mxu0 0.0
  %559 = vmatpush2.msra.mxu0 0.0
  %560 = vmatprep.subr.mxu0 0.0
  %561 = vmatpush2.msra.mxu0 0.0
  %562 = vmatprep.subr.mxu0 0.0
  %563 = vmatpush2.msra.mxu0 0.0
  %564 = vmatprep.subr.mxu0 0.0
  %565 = vmatpush2.msra.mxu0 0.0
  %566 = vmatprep.subr.mxu0 0.0
  %567 = vmatpush2.msra.mxu0 0.0
  %568 = vmatprep.subr.mxu0 0.0
  %569 = vmatpush2.msra.mxu0 0.0
  %570 = vmatprep.subr.mxu0 0.0
  %571 = vmatpush2.msra.mxu0 0.0
  %572 = vmatprep.subr.mxu0 0.0
  %573 = vmatpush2.msra.mxu0 0.0
  %574 = vmatprep.subr.mxu0 0.0
  %575 = vmatpush2.msra.mxu0 0.0
  %576 = vmatprep.subr.mxu0 0.0
  %577 = vmatpush2.msra.mxu0 0.0
  %578 = vmatprep.subr.mxu0 0.0
  %579 = vmatpush2.msra.mxu0 0.0
  %580 = vmatprep.subr.mxu0 0.0
  %581 = vmatpush2.msra.mxu0 0.0
  %582 = vmatprep.subr.mxu0 0.0
  %583 = vmatpush2.msra.mxu0 0.0
  %584 = vmatprep.subr.mxu0 0.0
  %585 = vmatpush2.msra.mxu0 0.0
  %586 = vmatprep.mubr.f32.mxu0 0.0
  %587 = vmatmul.mubr.f32.gmra.mxu0 %v427
  %v588 = vpop.f32.mrf.mxu0
  %v589 = vadd.f32 0.0, %v588
  %v590 = vpop.f32.mrf.mxu0
  %591 = vmatprep.mubr.f32.mxu0 0.0
  %592 = vmatmul.mubr.f32.gmra.mxu0 %v430
  %v593 = vpop.f32.mrf.mxu0
  %v594 = vadd.f32 0.0, %v593
  %v595 = vpop.f32.mrf.mxu0
  %596 = vmatprep.mubr.f32.mxu0 0.0
  %597 = vmatmul.mubr.f32.gmra.mxu0 %v433
  %v598 = vpop.f32.mrf.mxu0
  %v599 = vadd.f32 0.0, %v598
  %v600 = vpop.f32.mrf.mxu0
  %601 = vmatprep.mubr.f32.mxu0 0.0
  %602 = vmatmul.mubr.f32.gmra.mxu0 %v436
  %v603 = vpop.f32.mrf.mxu0
  %v604 = vadd.f32 0.0, %v603
  %v605 = vpop.f32.mrf.mxu0
  %606 = vmatprep.mubr.f32.mxu0 0.0
  %607 = vmatmul.mubr.f32.gmra.mxu0 %v439
  %v608 = vpop.f32.mrf.mxu0
  %v609 = vadd.f32 0.0, %v608
  %v610 = vpop.f32.mrf.mxu0
  %611 = vmatprep.mubr.f32.mxu0 0.0
  %612 = vmatmul.mubr.f32.gmra.mxu0 %v442
  %v613 = vpop.f32.mrf.mxu0
  %v614 = vadd.f32 0.0, %v613
  %v615 = vpop.f32.mrf.mxu0
  %616 = vmatprep.mubr.f32.mxu0 0.0
  %617 = vmatmul.mubr.f32.gmra.mxu0 %v445
  %v618 = vpop.f32.mrf.mxu0
  %v619 = vadd.f32 0.0, %v618
  %v620 = vpop.f32.mrf.mxu0
  %621 = vmatprep.mubr.f32.mxu0 0.0
  %622 = vmatmul.mubr.f32.gmra.mxu0 %v448
  %v623 = vpop.f32.mrf.mxu0
  %v624 = vadd.f32 0.0, %v623
  %v625 = vpop.f32.mrf.mxu0
  %626 = vmatprep.mubr.f32.mxu0 0.0
  %627 = vmatmul.mubr.f32.gmra.mxu0 %v451
  %v628 = vpop.f32.mrf.mxu0
  %v629 = vadd.f32 0.0, %v628
  %v630 = vpop.f32.mrf.mxu0
  %631 = vmatprep.mubr.f32.mxu0 0.0
  %632 = vmatmul.mubr.f32.gmra.mxu0 %v454
  %v633 = vpop.f32.mrf.mxu0
  %v634 = vadd.f32 0.0, %v633
  %v635 = vpop.f32.mrf.mxu0
  %636 = vmatprep.mubr.f32.mxu0 0.0
  %637 = vmatmul.mubr.f32.gmra.mxu0 %v457
  %v638 = vpop.f32.mrf.mxu0
  %v639 = vadd.f32 0.0, %v638
  %v640 = vpop.f32.mrf.mxu0
  %641 = vmatprep.mubr.f32.mxu0 0.0
  %642 = vmatmul.mubr.f32.gmra.mxu0 %v460
  %v643 = vpop.f32.mrf.mxu0
  %v644 = vadd.f32 0.0, %v643
  %v645 = vpop.f32.mrf.mxu0
  %646 = vmatprep.mubr.f32.mxu0 0.0
  %647 = vmatmul.mubr.f32.gmra.mxu0 %v463
  %v648 = vpop.f32.mrf.mxu0
  %v649 = vadd.f32 0.0, %v648
  %v650 = vpop.f32.mrf.mxu0
  %651 = vmatprep.mubr.f32.mxu0 0.0
  %652 = vmatmul.mubr.f32.gmra.mxu0 %v466
  %v653 = vpop.f32.mrf.mxu0
  %v654 = vadd.f32 0.0, %v653
  %v655 = vpop.f32.mrf.mxu0
  %656 = vmatprep.mubr.f32.mxu0 0.0
  %657 = vmatmul.mubr.f32.gmra.mxu0 %v469
  %v658 = vpop.f32.mrf.mxu0
  %v659 = vadd.f32 0.0, %v658
  %v660 = vpop.f32.mrf.mxu0
  %661 = vmatprep.mubr.f32.mxu0 0.0
  %662 = vmatmul.mubr.f32.gmra.mxu0 %v472
  %v663 = vpop.f32.mrf.mxu0
  %v664 = vadd.f32 0.0, %v663
  %v665 = vpop.f32.mrf.mxu0
  %666 = vmatprep.mubr.f32.mxu0 0.0
  %667 = vmatmul.mubr.f32.gmra.mxu0 %v475
  %v668 = vpop.f32.mrf.mxu0
  %v669 = vadd.f32 0.0, %v668
  %v670 = vpop.f32.mrf.mxu0
  %671 = vmatprep.mubr.f32.mxu0 0.0
  %672 = vmatmul.mubr.f32.gmra.mxu0 %v478
  %v673 = vpop.f32.mrf.mxu0
  %v674 = vadd.f32 0.0, %v673
  %v675 = vpop.f32.mrf.mxu0
  %676 = vmatprep.mubr.f32.mxu0 0.0
  %677 = vmatmul.mubr.f32.gmra.mxu0 %v481
  %v678 = vpop.f32.mrf.mxu0
  %v679 = vadd.f32 0.0, %v678
  %v680 = vpop.f32.mrf.mxu0
  %681 = vmatprep.mubr.f32.mxu0 0.0
  %682 = vmatmul.mubr.f32.gmra.mxu0 %v484
  %v683 = vpop.f32.mrf.mxu0
  %v684 = vadd.f32 0.0, %v683
  %v685 = vpop.f32.mrf.mxu0
  %686 = vmatprep.mubr.f32.mxu0 0.0
  %687 = vmatmul.mubr.f32.gmra.mxu0 %v487
  %v688 = vpop.f32.mrf.mxu0
  %v689 = vadd.f32 0.0, %v688
  %v690 = vpop.f32.mrf.mxu0
  %691 = vmatprep.mubr.f32.mxu0 0.0
  %692 = vmatmul.mubr.f32.gmra.mxu0 %v490
  %v693 = vpop.f32.mrf.mxu0
  %v694 = vadd.f32 0.0, %v693
  %v695 = vpop.f32.mrf.mxu0
  %696 = vmatprep.mubr.f32.mxu0 0.0
  %697 = vmatmul.mubr.f32.gmra.mxu0 %v493
  %v698 = vpop.f32.mrf.mxu0
  %v699 = vadd.f32 0.0, %v698
  %v700 = vpop.f32.mrf.mxu0
  %701 = vmatprep.mubr.f32.mxu0 0.0
  %702 = vmatmul.mubr.f32.gmra.mxu0 %v496
  %v703 = vpop.f32.mrf.mxu0
  %v704 = vadd.f32 0.0, %v703
  %v705 = vpop.f32.mrf.mxu0
  %706 = vmatprep.mubr.f32.mxu0 0.0
  %707 = vmatmul.mubr.f32.gmra.mxu0 %v499
  %v708 = vpop.f32.mrf.mxu0
  %v709 = vadd.f32 0.0, %v708
  %v710 = vpop.f32.mrf.mxu0
  %711 = vmatprep.mubr.f32.mxu0 0.0
  %712 = vmatmul.mubr.f32.gmra.mxu0 %v502
  %v713 = vpop.f32.mrf.mxu0
  %v714 = vadd.f32 0.0, %v713
  %v715 = vpop.f32.mrf.mxu0
  %716 = vmatprep.mubr.f32.mxu0 0.0
  %717 = vmatmul.mubr.f32.gmra.mxu0 %v505
  %v718 = vpop.f32.mrf.mxu0
  %v719 = vadd.f32 0.0, %v718
  %v720 = vpop.f32.mrf.mxu0
  %721 = vmatprep.mubr.f32.mxu0 0.0
  %722 = vmatmul.mubr.f32.gmra.mxu0 %v508
  %v723 = vpop.f32.mrf.mxu0
  %v724 = vadd.f32 0.0, %v723
  %v725 = vpop.f32.mrf.mxu0
  %726 = vmatprep.mubr.f32.mxu0 0.0
  %727 = vmatmul.mubr.f32.gmra.mxu0 %v511
  %v728 = vpop.f32.mrf.mxu0
  %v729 = vadd.f32 0.0, %v728
  %v730 = vpop.f32.mrf.mxu0
  %731 = vmatprep.mubr.f32.mxu0 0.0
  %732 = vmatmul.mubr.f32.gmra.mxu0 %v514
  %v733 = vpop.f32.mrf.mxu0
  %v734 = vadd.f32 0.0, %v733
  %v735 = vpop.f32.mrf.mxu0
  %736 = vmatprep.mubr.f32.mxu0 0.0
  %737 = vmatmul.mubr.f32.gmra.mxu0 %v517
  %v738 = vpop.f32.mrf.mxu0
  %v739 = vadd.f32 0.0, %v738
  %v740 = vpop.f32.mrf.mxu0
  %741 = vmatprep.mubr.f32.mxu0 0.0
  %742 = vmatmul.mubr.f32.gmra.mxu0 %v520
  %v743 = vpop.f32.mrf.mxu0
  %v744 = vadd.f32 0.0, %v743
  %v745 = vpop.f32.mrf.mxu0
  %746 = vdwg.mxu0
  %vm747 = vcmask 7168
  %748 = vst.msk [vmem:[%s4] sm:$0xff] %vm747, %v589
  %749 = vst.msk [vmem:[%s4 + $0x8] sm:$0xff] %vm747, %v594
  %750 = vst.msk [vmem:[%s4 + $0x10] sm:$0xff] %vm747, %v599
  %751 = vst.msk [vmem:[%s4 + $0x18] sm:$0xff] %vm747, %v604
  %752 = vst.msk [vmem:[%s4 + $0x20] sm:$0xff] %vm747, %v609
  %753 = vst.msk [vmem:[%s4 + $0x28] sm:$0xff] %vm747, %v614
  %754 = vst.msk [vmem:[%s4 + $0x30] sm:$0xff] %vm747, %v619
  %755 = vst.msk [vmem:[%s4 + $0x38] sm:$0xff] %vm747, %v624
  %756 = vst.msk [vmem:[%s4 + $0x40] sm:$0xff] %vm747, %v629
  %757 = vst.msk [vmem:[%s4 + $0x48] sm:$0xff] %vm747, %v634
  %758 = vst.msk [vmem:[%s4 + $0x50] sm:$0xff] %vm747, %v639
  %759 = vst.msk [vmem:[%s4 + $0x58] sm:$0xff] %vm747, %v644
  %760 = vst.msk [vmem:[%s4 + $0x60] sm:$0xff] %vm747, %v649
  %761 = vst.msk [vmem:[%s4 + $0x68] sm:$0xff] %vm747, %v654
  %762 = vst.msk [vmem:[%s4 + $0x70] sm:$0xff] %vm747, %v659
  %763 = vst.msk [vmem:[%s4 + $0x78] sm:$0xff] %vm747, %v664
  %764 = vst.msk [vmem:[%s4 + $0x80] sm:$0xff] %vm747, %v669
  %765 = vst.msk [vmem:[%s4 + $0x88] sm:$0xff] %vm747, %v674
  %766 = vst.msk [vmem:[%s4 + $0x90] sm:$0xff] %vm747, %v679
  %767 = vst.msk [vmem:[%s4 + $0x98] sm:$0xff] %vm747, %v684
  %768 = vst.msk [vmem:[%s4 + $0xa0] sm:$0xff] %vm747, %v689
  %769 = vst.msk [vmem:[%s4 + $0xa8] sm:$0xff] %vm747, %v694
  %770 = vst.msk [vmem:[%s4 + $0xb0] sm:$0xff] %vm747, %v699
  %771 = vst.msk [vmem:[%s4 + $0xb8] sm:$0xff] %vm747, %v704
  %772 = vst.msk [vmem:[%s4 + $0xc0] sm:$0xff] %vm747, %v709
  %773 = vst.msk [vmem:[%s4 + $0xc8] sm:$0xff] %vm747, %v714
  %774 = vst.msk [vmem:[%s4 + $0xd0] sm:$0xff] %vm747, %v719
  %775 = vst.msk [vmem:[%s4 + $0xd8] sm:$0xff] %vm747, %v724
  %776 = vst.msk [vmem:[%s4 + $0xe0] sm:$0xff] %vm747, %v729
  %777 = vst.msk [vmem:[%s4 + $0xe8] sm:$0xff] %vm747, %v734
  %778 = vst.msk [vmem:[%s4 + $0xf0] sm:$0xff] %vm747, %v739
  %779 = vst.msk [vmem:[%s4 + $0xf8] sm:$0xff] %vm747, %v744
  // Predicated region
  $region18: #{gnn_policy_forward.13} parent=0 // pred_check
    _
  $region19: #{gnn_policy_forward.13} parent=0 // pred_check_branch
    %781 = sbr.rel (0) target = $region21
  $region20: #{gnn_policy_forward.13} parent=0 // pred_region
    _
  $region21: #{gnn_policy_forward.13} parent=0 // pred_fallthru
    _
  // Predicated region
  $region22: #{gnn_policy_forward.13} parent=0 // pred_check
    _
  $region23: #{gnn_policy_forward.13} parent=0 // pred_check_branch
    %783 = sbr.rel (0) target = $region25
  $region24: #{gnn_policy_forward.13} parent=0 // pred_region
    _
  $region25: #{gnn_policy_forward.13} parent=0 // pred_fallthru
    _

// kernel: gnn_policy_forward.7
$region0: #{gnn_policy_forward.7}
  #allocation0 [shape = 'u32[]', space=smem, size = 0x4, offset = 0x4, fixed_abs, tag = 'smem constant byte address 0x4 - core index']
  #allocation1 [shape = 'u32[144,128]{1,0:T(1,128)}', space=vmem, size = 0x12000, scoped, tag = 'internal scratch']
  %s0 = inlined_call_operand.vmem [shape: f32[256,4], index: 0, kind: input, shape index: {}]
  %s1 = inlined_call_operand.vmem [shape: f32[1,4], index: 1, kind: input, shape index: {}]
  %s2 = inlined_call_operand.vmem [shape: f32[1,4], index: 2, kind: input, shape index: {}]
  %s3 = inlined_call_operand.vmem [shape: f32[4,64], index: 3, kind: input, shape index: {}]
  %s4 = inlined_call_operand.vmem [shape: f32[1,64], index: 4, kind: input, shape index: {}]
  %s5 = inlined_call_operand.vmem [shape: f32[64,64], index: 5, kind: input, shape index: {}]
  %s6 = inlined_call_operand.vmem [shape: f32[1,64], index: 6, kind: input, shape index: {}]
  %s7 = inlined_call_operand.vmem [shape: f32[256,64], index: 7, kind: output, shape index: {}]
  %s8 = sld [smem:[#allocation0]]
  $region38: #{gnn_policy_forward.7} parent=0
    _
  %s10 = ssub.s32 1, %s8
  %s11 = scalar_select 0, %s10, %s8
  // Predicated region
  $region2: #{gnn_policy_forward.7} parent=0 // pred_check
    _
  $region3: #{gnn_policy_forward.7} parent=0 // pred_check_branch
    %13 = sbr.rel (0) target = $region5
  $region4: #{gnn_policy_forward.7} parent=0 // pred_region
    _
  $region5: #{gnn_policy_forward.7} parent=0 // pred_fallthru
    _
  // Predicated region
  $region6: #{gnn_policy_forward.7} parent=0 // pred_check
    _
  $region7: #{gnn_policy_forward.7} parent=0 // pred_check_branch
    %15 = sbr.rel (0) target = $region9
  $region8: #{gnn_policy_forward.7} parent=0 // pred_region
    _
  $region9: #{gnn_policy_forward.7} parent=0 // pred_fallthru
    _
  // Predicated region
  $region10: #{gnn_policy_forward.7} parent=0 // pred_check
    _
  $region11: #{gnn_policy_forward.7} parent=0 // pred_check_branch
    %17 = sbr.rel (0) target = $region13
  $region12: #{gnn_policy_forward.7} parent=0 // pred_region
    _
  $region13: #{gnn_policy_forward.7} parent=0 // pred_fallthru
    _
  // Predicated region
  $region14: #{gnn_policy_forward.7} parent=0 // pred_check
    _
  $region15: #{gnn_policy_forward.7} parent=0 // pred_check_branch
    %19 = sbr.rel (0) target = $region17
  $region16: #{gnn_policy_forward.7} parent=0 // pred_region
    _
  $region17: #{gnn_policy_forward.7} parent=0 // pred_fallthru
    _
  // Predicated region
  $region18: #{gnn_policy_forward.7} parent=0 // pred_check
    _
  $region19: #{gnn_policy_forward.7} parent=0 // pred_check_branch
    %21 = sbr.rel (0) target = $region21
  $region20: #{gnn_policy_forward.7} parent=0 // pred_region
    _
  $region21: #{gnn_policy_forward.7} parent=0 // pred_fallthru
    _
  // Predicated region
  $region22: #{gnn_policy_forward.7} parent=0 // pred_check
    _
  $region23: #{gnn_policy_forward.7} parent=0 // pred_check_branch
    %23 = sbr.rel (0) target = $region25
  $region24: #{gnn_policy_forward.7} parent=0 // pred_region
    _
  $region25: #{gnn_policy_forward.7} parent=0 // pred_fallthru
    _
  // Predicated region
  $region26: #{gnn_policy_forward.7} parent=0 // pred_check
    _
  $region27: #{gnn_policy_forward.7} parent=0 // pred_check_branch
    %25 = sbr.rel (0) target = $region29
  $region28: #{gnn_policy_forward.7} parent=0 // pred_region
    _
  $region29: #{gnn_policy_forward.7} parent=0 // pred_fallthru
    _
  %v26 = vld [vmem:[%s0] sm:$0xff]
  %v27 = vld [vmem:[%s0 + $0x8] sm:$0xff]
  %v28 = vld [vmem:[%s0 + $0x10] sm:$0xff]
  %v29 = vld [vmem:[%s0 + $0x18] sm:$0xff]
  %v30 = vld [vmem:[%s0 + $0x20] sm:$0xff]
  %v31 = vld [vmem:[%s0 + $0x28] sm:$0xff]
  %v32 = vld [vmem:[%s0 + $0x30] sm:$0xff]
  %v33 = vld [vmem:[%s0 + $0x38] sm:$0xff]
  %v34 = vld [vmem:[%s0 + $0x40] sm:$0xff]
  %v35 = vld [vmem:[%s0 + $0x48] sm:$0xff]
  %v36 = vld [vmem:[%s0 + $0x50] sm:$0xff]
  %v37 = vld [vmem:[%s0 + $0x58] sm:$0xff]
  %v38 = vld [vmem:[%s0 + $0x60] sm:$0xff]
  %v39 = vld [vmem:[%s0 + $0x68] sm:$0xff]
  %v40 = vld [vmem:[%s0 + $0x70] sm:$0xff]
  %v41 = vld [vmem:[%s0 + $0x78] sm:$0xff]
  %v42 = vld [vmem:[%s0 + $0x80] sm:$0xff]
  %v43 = vld [vmem:[%s0 + $0x88] sm:$0xff]
  %v44 = vld [vmem:[%s0 + $0x90] sm:$0xff]
  %v45 = vld [vmem:[%s0 + $0x98] sm:$0xff]
  %v46 = vld [vmem:[%s0 + $0xa0] sm:$0xff]
  %v47 = vld [vmem:[%s0 + $0xa8] sm:$0xff]
  %v48 = vld [vmem:[%s0 + $0xb0] sm:$0xff]
  %v49 = vld [vmem:[%s0 + $0xb8] sm:$0xff]
  %v50 = vld [vmem:[%s0 + $0xc0] sm:$0xff]
  %v51 = vld [vmem:[%s0 + $0xc8] sm:$0xff]
  %v52 = vld [vmem:[%s0 + $0xd0] sm:$0xff]
  %v53 = vld [vmem:[%s0 + $0xd8] sm:$0xff]
  %v54 = vld [vmem:[%s0 + $0xe0] sm:$0xff]
  %v55 = vld [vmem:[%s0 + $0xe8] sm:$0xff]
  %v56 = vld [vmem:[%s0 + $0xf0] sm:$0xff]
  %v57 = vld [vmem:[%s0 + $0xf8] sm:$0xff]
  %v58 = vld [vmem:[%s1] sm:$0x1]
  %v59 = vld [vmem:[%s2] sm:$0x1]
  %vm60 = vcmask 31744
  %v61 = vsel %vm60, %v26, 0.0
  %62 = vadd.xlane.f32.xlu0 %v61
  %v63 = vpop.xlane.xlu0 %62
  %v64 = vsel %vm60, %v27, 0.0
  %65 = vadd.xlane.f32.xlu0 %v64
  %v66 = vpop.xlane.xlu0 %65
  %v67 = vsel %vm60, %v28, 0.0
  %68 = vadd.xlane.f32.xlu0 %v67
  %v69 = vpop.xlane.xlu0 %68
  %v70 = vsel %vm60, %v29, 0.0
  %71 = vadd.xlane.f32.xlu0 %v70
  %v72 = vpop.xlane.xlu0 %71
  %v73 = vsel %vm60, %v30, 0.0
  %74 = vadd.xlane.f32.xlu0 %v73
  %v75 = vpop.xlane.xlu0 %74
  %v76 = vsel %vm60, %v31, 0.0
  %77 = vadd.xlane.f32.xlu0 %v76
  %v78 = vpop.xlane.xlu0 %77
  %v79 = vsel %vm60, %v32, 0.0
  %80 = vadd.xlane.f32.xlu0 %v79
  %v81 = vpop.xlane.xlu0 %80
  %v82 = vsel %vm60, %v33, 0.0
  %83 = vadd.xlane.f32.xlu0 %v82
  %v84 = vpop.xlane.xlu0 %83
  %v85 = vsel %vm60, %v34, 0.0
  %86 = vadd.xlane.f32.xlu0 %v85
  %v87 = vpop.xlane.xlu0 %86
  %v88 = vsel %vm60, %v35, 0.0
  %89 = vadd.xlane.f32.xlu0 %v88
  %v90 = vpop.xlane.xlu0 %89
  %v91 = vsel %vm60, %v36, 0.0
  %92 = vadd.xlane.f32.xlu0 %v91
  %v93 = vpop.xlane.xlu0 %92
  %v94 = vsel %vm60, %v37, 0.0
  %95 = vadd.xlane.f32.xlu0 %v94
  %v96 = vpop.xlane.xlu0 %95
  %v97 = vsel %vm60, %v38, 0.0
  %98 = vadd.xlane.f32.xlu0 %v97
  %v99 = vpop.xlane.xlu0 %98
  %v100 = vsel %vm60, %v39, 0.0
  %101 = vadd.xlane.f32.xlu0 %v100
  %v102 = vpop.xlane.xlu0 %101
  %v103 = vsel %vm60, %v40, 0.0
  %104 = vadd.xlane.f32.xlu0 %v103
  %v105 = vpop.xlane.xlu0 %104
  %v106 = vsel %vm60, %v41, 0.0
  %107 = vadd.xlane.f32.xlu0 %v106
  %v108 = vpop.xlane.xlu0 %107
  %v109 = vsel %vm60, %v42, 0.0
  %110 = vadd.xlane.f32.xlu0 %v109
  %v111 = vpop.xlane.xlu0 %110
  %v112 = vsel %vm60, %v43, 0.0
  %113 = vadd.xlane.f32.xlu0 %v112
  %v114 = vpop.xlane.xlu0 %113
  %v115 = vsel %vm60, %v44, 0.0
  %116 = vadd.xlane.f32.xlu0 %v115
  %v117 = vpop.xlane.xlu0 %116
  %v118 = vsel %vm60, %v45, 0.0
  %119 = vadd.xlane.f32.xlu0 %v118
  %v120 = vpop.xlane.xlu0 %119
  %v121 = vsel %vm60, %v46, 0.0
  %122 = vadd.xlane.f32.xlu0 %v121
  %v123 = vpop.xlane.xlu0 %122
  %v124 = vsel %vm60, %v47, 0.0
  %125 = vadd.xlane.f32.xlu0 %v124
  %v126 = vpop.xlane.xlu0 %125
  %v127 = vsel %vm60, %v48, 0.0
  %128 = vadd.xlane.f32.xlu0 %v127
  %v129 = vpop.xlane.xlu0 %128
  %v130 = vsel %vm60, %v49, 0.0
  %131 = vadd.xlane.f32.xlu0 %v130
  %v132 = vpop.xlane.xlu0 %131
  %v133 = vsel %vm60, %v50, 0.0
  %134 = vadd.xlane.f32.xlu0 %v133
  %v135 = vpop.xlane.xlu0 %134
  %v136 = vsel %vm60, %v51, 0.0
  %137 = vadd.xlane.f32.xlu0 %v136
  %v138 = vpop.xlane.xlu0 %137
  %v139 = vsel %vm60, %v52, 0.0
  %140 = vadd.xlane.f32.xlu0 %v139
  %v141 = vpop.xlane.xlu0 %140
  %v142 = vsel %vm60, %v53, 0.0
  %143 = vadd.xlane.f32.xlu0 %v142
  %v144 = vpop.xlane.xlu0 %143
  %v145 = vsel %vm60, %v54, 0.0
  %146 = vadd.xlane.f32.xlu0 %v145
  %v147 = vpop.xlane.xlu0 %146
  %v148 = vsel %vm60, %v55, 0.0
  %149 = vadd.xlane.f32.xlu0 %v148
  %v150 = vpop.xlane.xlu0 %149
  %v151 = vsel %vm60, %v56, 0.0
  %152 = vadd.xlane.f32.xlu0 %v151
  %v153 = vpop.xlane.xlu0 %152
  %v154 = vsel %vm60, %v57, 0.0
  %155 = vadd.xlane.f32.xlu0 %v154
  %v156 = vpop.xlane.xlu0 %155
  %v157 = vrcp.pop 4.0
  %v158 = vmul.f32 %v63, %v157
  %v159 = vmul.f32 %v66, %v157
  %v160 = vmul.f32 %v69, %v157
  %v161 = vmul.f32 %v72, %v157
  %v162 = vmul.f32 %v75, %v157
  %v163 = vmul.f32 %v78, %v157
  %v164 = vmul.f32 %v81, %v157
  %v165 = vmul.f32 %v84, %v157
  %v166 = vmul.f32 %v87, %v157
  %v167 = vmul.f32 %v90, %v157
  %v168 = vmul.f32 %v93, %v157
  %v169 = vmul.f32 %v96, %v157
  %v170 = vmul.f32 %v99, %v157
  %v171 = vmul.f32 %v102, %v157
  %v172 = vmul.f32 %v105, %v157
  %v173 = vmul.f32 %v108, %v157
  %v174 = vmul.f32 %v111, %v157
  %v175 = vmul.f32 %v114, %v157
  %v176 = vmul.f32 %v117, %v157
  %v177 = vmul.f32 %v120, %v157
  %v178 = vmul.f32 %v123, %v157
  %v179 = vmul.f32 %v126, %v157
  %v180 = vmul.f32 %v129, %v157
  %v181 = vmul.f32 %v132, %v157
  %v182 = vmul.f32 %v135, %v157
  %v183 = vmul.f32 %v138, %v157
  %v184 = vmul.f32 %v141, %v157
  %v185 = vmul.f32 %v144, %v157
  %v186 = vmul.f32 %v147, %v157
  %v187 = vmul.f32 %v150, %v157
  %v188 = vmul.f32 %v153, %v157
  %v189 = vmul.f32 %v156, %v157
  %v190 = vsub.f32 %v26, %v158
  %v191 = vsub.f32 %v27, %v159
  %v192 = vsub.f32 %v28, %v160
  %v193 = vsub.f32 %v29, %v161
  %v194 = vsub.f32 %v30, %v162
  %v195 = vsub.f32 %v31, %v163
  %v196 = vsub.f32 %v32, %v164
  %v197 = vsub.f32 %v33, %v165
  %v198 = vsub.f32 %v34, %v166
  %v199 = vsub.f32 %v35, %v167
  %v200 = vsub.f32 %v36, %v168
  %v201 = vsub.f32 %v37, %v169
  %v202 = vsub.f32 %v38, %v170
  %v203 = vsub.f32 %v39, %v171
  %v204 = vsub.f32 %v40, %v172
  %v205 = vsub.f32 %v41, %v173
  %v206 = vsub.f32 %v42, %v174
  %v207 = vsub.f32 %v43, %v175
  %v208 = vsub.f32 %v44, %v176
  %v209 = vsub.f32 %v45, %v177
  %v210 = vsub.f32 %v46, %v178
  %v211 = vsub.f32 %v47, %v179
  %v212 = vsub.f32 %v48, %v180
  %v213 = vsub.f32 %v49, %v181
  %v214 = vsub.f32 %v50, %v182
  %v215 = vsub.f32 %v51, %v183
  %v216 = vsub.f32 %v52, %v184
  %v217 = vsub.f32 %v53, %v185
  %v218 = vsub.f32 %v54, %v186
  %v219 = vsub.f32 %v55, %v187
  %v220 = vsub.f32 %v56, %v188
  %v221 = vsub.f32 %v57, %v189
  %v222 = vmul.f32 %v190, %v190
  %v223 = vmul.f32 %v191, %v191
  %v224 = vmul.f32 %v192, %v192
  %v225 = vmul.f32 %v193, %v193
  %v226 = vmul.f32 %v194, %v194
  %v227 = vmul.f32 %v195, %v195
  %v228 = vmul.f32 %v196, %v196
  %v229 = vmul.f32 %v197, %v197
  %v230 = vmul.f32 %v198, %v198
  %v231 = vmul.f32 %v199, %v199
  %v232 = vmul.f32 %v200, %v200
  %v233 = vmul.f32 %v201, %v201
  %v234 = vmul.f32 %v202, %v202
  %v235 = vmul.f32 %v203, %v203
  %v236 = vmul.f32 %v204, %v204
  %v237 = vmul.f32 %v205, %v205
  %v238 = vmul.f32 %v206, %v206
  %v239 = vmul.f32 %v207, %v207
  %v240 = vmul.f32 %v208, %v208
  %v241 = vmul.f32 %v209, %v209
  %v242 = vmul.f32 %v210, %v210
  %v243 = vmul.f32 %v211, %v211
  %v244 = vmul.f32 %v212, %v212
  %v245 = vmul.f32 %v213, %v213
  %v246 = vmul.f32 %v214, %v214
  %v247 = vmul.f32 %v215, %v215
  %v248 = vmul.f32 %v216, %v216
  %v249 = vmul.f32 %v217, %v217
  %v250 = vmul.f32 %v218, %v218
  %v251 = vmul.f32 %v219, %v219
  %v252 = vmul.f32 %v220, %v220
  %v253 = vmul.f32 %v221, %v221
  %v254 = vsel %vm60, %v222, 0.0
  %255 = vadd.xlane.f32.xlu0 %v254
  %v256 = vpop.xlane.xlu0 %255
  %v257 = vsel %vm60, %v223, 0.0
  %258 = vadd.xlane.f32.xlu0 %v257
  %v259 = vpop.xlane.xlu0 %258
  %v260 = vsel %vm60, %v224, 0.0
  %261 = vadd.xlane.f32.xlu0 %v260
  %v262 = vpop.xlane.xlu0 %261
  %v263 = vsel %vm60, %v225, 0.0
  %264 = vadd.xlane.f32.xlu0 %v263
  %v265 = vpop.xlane.xlu0 %264
  %v266 = vsel %vm60, %v226, 0.0
  %267 = vadd.xlane.f32.xlu0 %v266
  %v268 = vpop.xlane.xlu0 %267
  %v269 = vsel %vm60, %v227, 0.0
  %270 = vadd.xlane.f32.xlu0 %v269
  %v271 = vpop.xlane.xlu0 %270
  %v272 = vsel %vm60, %v228, 0.0
  %273 = vadd.xlane.f32.xlu0 %v272
  %v274 = vpop.xlane.xlu0 %273
  %v275 = vsel %vm60, %v229, 0.0
  %276 = vadd.xlane.f32.xlu0 %v275
  %v277 = vpop.xlane.xlu0 %276
  %v278 = vsel %vm60, %v230, 0.0
  %279 = vadd.xlane.f32.xlu0 %v278
  %v280 = vpop.xlane.xlu0 %279
  %v281 = vsel %vm60, %v231, 0.0
  %282 = vadd.xlane.f32.xlu0 %v281
  %v283 = vpop.xlane.xlu0 %282
  %v284 = vsel %vm60, %v232, 0.0
  %285 = vadd.xlane.f32.xlu0 %v284
  %v286 = vpop.xlane.xlu0 %285
  %v287 = vsel %vm60, %v233, 0.0
  %288 = vadd.xlane.f32.xlu0 %v287
  %v289 = vpop.xlane.xlu0 %288
  %v290 = vsel %vm60, %v234, 0.0
  %291 = vadd.xlane.f32.xlu0 %v290
  %v292 = vpop.xlane.xlu0 %291
  %v293 = vsel %vm60, %v235, 0.0
  %294 = vadd.xlane.f32.xlu0 %v293
  %v295 = vpop.xlane.xlu0 %294
  %v296 = vsel %vm60, %v236, 0.0
  %297 = vadd.xlane.f32.xlu0 %v296
  %v298 = vpop.xlane.xlu0 %297
  %v299 = vsel %vm60, %v237, 0.0
  %300 = vadd.xlane.f32.xlu0 %v299
  %v301 = vpop.xlane.xlu0 %300
  %v302 = vsel %vm60, %v238, 0.0
  %303 = vadd.xlane.f32.xlu0 %v302
  %v304 = vpop.xlane.xlu0 %303
  %v305 = vsel %vm60, %v239, 0.0
  %306 = vadd.xlane.f32.xlu0 %v305
  %v307 = vpop.xlane.xlu0 %306
  %v308 = vsel %vm60, %v240, 0.0
  %309 = vadd.xlane.f32.xlu0 %v308
  %v310 = vpop.xlane.xlu0 %309
  %v311 = vsel %vm60, %v241, 0.0
  %312 = vadd.xlane.f32.xlu0 %v311
  %v313 = vpop.xlane.xlu0 %312
  %v314 = vsel %vm60, %v242, 0.0
  %315 = vadd.xlane.f32.xlu0 %v314
  %v316 = vpop.xlane.xlu0 %315
  %v317 = vsel %vm60, %v243, 0.0
  %318 = vadd.xlane.f32.xlu0 %v317
  %v319 = vpop.xlane.xlu0 %318
  %v320 = vsel %vm60, %v244, 0.0
  %321 = vadd.xlane.f32.xlu0 %v320
  %v322 = vpop.xlane.xlu0 %321
  %v323 = vsel %vm60, %v245, 0.0
  %324 = vadd.xlane.f32.xlu0 %v323
  %v325 = vpop.xlane.xlu0 %324
  %v326 = vsel %vm60, %v246, 0.0
  %327 = vadd.xlane.f32.xlu0 %v326
  %v328 = vpop.xlane.xlu0 %327
  %v329 = vsel %vm60, %v247, 0.0
  %330 = vadd.xlane.f32.xlu0 %v329
  %v331 = vpop.xlane.xlu0 %330
  %v332 = vsel %vm60, %v248, 0.0
  %333 = vadd.xlane.f32.xlu0 %v332
  %v334 = vpop.xlane.xlu0 %333
  %v335 = vsel %vm60, %v249, 0.0
  %336 = vadd.xlane.f32.xlu0 %v335
  %v337 = vpop.xlane.xlu0 %336
  %v338 = vsel %vm60, %v250, 0.0
  %339 = vadd.xlane.f32.xlu0 %v338
  %v340 = vpop.xlane.xlu0 %339
  %v341 = vsel %vm60, %v251, 0.0
  %342 = vadd.xlane.f32.xlu0 %v341
  %v343 = vpop.xlane.xlu0 %342
  %v344 = vsel %vm60, %v252, 0.0
  %345 = vadd.xlane.f32.xlu0 %v344
  %v346 = vpop.xlane.xlu0 %345
  %v347 = vsel %vm60, %v253, 0.0
  %348 = vadd.xlane.f32.xlu0 %v347
  %v349 = vpop.xlane.xlu0 %348
  %v350 = vmul.f32 %v256, %v157
  %v351 = vmul.f32 %v259, %v157
  %v352 = vmul.f32 %v262, %v157
  %v353 = vmul.f32 %v265, %v157
  %v354 = vmul.f32 %v268, %v157
  %v355 = vmul.f32 %v271, %v157
  %v356 = vmul.f32 %v274, %v157
  %v357 = vmul.f32 %v277, %v157
  %v358 = vmul.f32 %v280, %v157
  %v359 = vmul.f32 %v283, %v157
  %v360 = vmul.f32 %v286, %v157
  %v361 = vmul.f32 %v289, %v157
  %v362 = vmul.f32 %v292, %v157
  %v363 = vmul.f32 %v295, %v157
  %v364 = vmul.f32 %v298, %v157
  %v365 = vmul.f32 %v301, %v157
  %v366 = vmul.f32 %v304, %v157
  %v367 = vmul.f32 %v307, %v157
  %v368 = vmul.f32 %v310, %v157
  %v369 = vmul.f32 %v313, %v157
  %v370 = vmul.f32 %v316, %v157
  %v371 = vmul.f32 %v319, %v157
  %v372 = vmul.f32 %v322, %v157
  %v373 = vmul.f32 %v325, %v157
  %v374 = vmul.f32 %v328, %v157
  %v375 = vmul.f32 %v331, %v157
  %v376 = vmul.f32 %v334, %v157
  %v377 = vmul.f32 %v337, %v157
  %v378 = vmul.f32 %v340, %v157
  %v379 = vmul.f32 %v343, %v157
  %v380 = vmul.f32 %v346, %v157
  %v381 = vmul.f32 %v349, %v157
  %v382 = vadd.f32 %v350, 1e-05
  %v383 = vadd.f32 %v351, 1e-05
  %v384 = vadd.f32 %v352, 1e-05
  %v385 = vadd.f32 %v353, 1e-05
  %v386 = vadd.f32 %v354, 1e-05
  %v387 = vadd.f32 %v355, 1e-05
  %v388 = vadd.f32 %v356, 1e-05
  %v389 = vadd.f32 %v357, 1e-05
  %v390 = vadd.f32 %v358, 1e-05
  %v391 = vadd.f32 %v359, 1e-05
  %v392 = vadd.f32 %v360, 1e-05
  %v393 = vadd.f32 %v361, 1e-05
  %v394 = vadd.f32 %v362, 1e-05
  %v395 = vadd.f32 %v363, 1e-05
  %v396 = vadd.f32 %v364, 1e-05
  %v397 = vadd.f32 %v365, 1e-05
  %v398 = vadd.f32 %v366, 1e-05
  %v399 = vadd.f32 %v367, 1e-05
  %v400 = vadd.f32 %v368, 1e-05
  %v401 = vadd.f32 %v369, 1e-05
  %v402 = vadd.f32 %v370, 1e-05
  %v403 = vadd.f32 %v371, 1e-05
  %v404 = vadd.f32 %v372, 1e-05
  %v405 = vadd.f32 %v373, 1e-05
  %v406 = vadd.f32 %v374, 1e-05
  %v407 = vadd.f32 %v375, 1e-05
  %v408 = vadd.f32 %v376, 1e-05
  %v409 = vadd.f32 %v377, 1e-05
  %v410 = vadd.f32 %v378, 1e-05
  %v411 = vadd.f32 %v379, 1e-05
  %v412 = vadd.f32 %v380, 1e-05
  %v413 = vadd.f32 %v381, 1e-05
  %v414 = vrsqrt.pop %v382
  %v415 = vrsqrt.pop %v383
  %v416 = vrsqrt.pop %v384
  %v417 = vrsqrt.pop %v385
  %v418 = vrsqrt.pop %v386
  %v419 = vrsqrt.pop %v387
  %v420 = vrsqrt.pop %v388
  %v421 = vrsqrt.pop %v389
  %v422 = vrsqrt.pop %v390
  %v423 = vrsqrt.pop %v391
  %v424 = vrsqrt.pop %v392
  %v425 = vrsqrt.pop %v393
  %v426 = vrsqrt.pop %v394
  %v427 = vrsqrt.pop %v395
  %v428 = vrsqrt.pop %v396
  %v429 = vrsqrt.pop %v397
  %v430 = vrsqrt.pop %v398
  %v431 = vrsqrt.pop %v399
  %v432 = vrsqrt.pop %v400
  %v433 = vrsqrt.pop %v401
  %v434 = vrsqrt.pop %v402
  %v435 = vrsqrt.pop %v403
  %v436 = vrsqrt.pop %v404
  %v437 = vrsqrt.pop %v405
  %v438 = vrsqrt.pop %v406
  %v439 = vrsqrt.pop %v407
  %v440 = vrsqrt.pop %v408
  %v441 = vrsqrt.pop %v409
  %v442 = vrsqrt.pop %v410
  %v443 = vrsqrt.pop %v411
  %v444 = vrsqrt.pop %v412
  %v445 = vrsqrt.pop %v413
  %v446 = vmul.f32 %v190, %v414
  %v447 = vmul.f32 %v191, %v415
  %v448 = vmul.f32 %v192, %v416
  %v449 = vmul.f32 %v193, %v417
  %v450 = vmul.f32 %v194, %v418
  %v451 = vmul.f32 %v195, %v419
  %v452 = vmul.f32 %v196, %v420
  %v453 = vmul.f32 %v197, %v421
  %v454 = vmul.f32 %v198, %v422
  %v455 = vmul.f32 %v199, %v423
  %v456 = vmul.f32 %v200, %v424
  %v457 = vmul.f32 %v201, %v425
  %v458 = vmul.f32 %v202, %v426
  %v459 = vmul.f32 %v203, %v427
  %v460 = vmul.f32 %v204, %v428
  %v461 = vmul.f32 %v205, %v429
  %v462 = vmul.f32 %v206, %v430
  %v463 = vmul.f32 %v207, %v431
  %v464 = vmul.f32 %v208, %v432
  %v465 = vmul.f32 %v209, %v433
  %v466 = vmul.f32 %v210, %v434
  %v467 = vmul.f32 %v211, %v435
  %v468 = vmul.f32 %v212, %v436
  %v469 = vmul.f32 %v213, %v437
  %v470 = vmul.f32 %v214, %v438
  %v471 = vmul.f32 %v215, %v439
  %v472 = vmul.f32 %v216, %v440
  %v473 = vmul.f32 %v217, %v441
  %v474 = vmul.f32 %v218, %v442
  %v475 = vmul.f32 %v219, %v443
  %v476 = vmul.f32 %v220, %v444
  %v477 = vmul.f32 %v221, %v445
  %v479 = vlaneseq
  %v480 = vshrl.u32 %v479, 7
  %v481 = vsub.s32 0, %v480
  %v482 = vrot.slane %v58, %v481
  %v484 = vmul.f32 %v446, %v482
  %v485 = vmul.f32 %v447, %v482
  %v486 = vmul.f32 %v448, %v482
  %v487 = vmul.f32 %v449, %v482
  %v488 = vmul.f32 %v450, %v482
  %v489 = vmul.f32 %v451, %v482
  %v490 = vmul.f32 %v452, %v482
  %v491 = vmul.f32 %v453, %v482
  %v492 = vmul.f32 %v454, %v482
  %v493 = vmul.f32 %v455, %v482
  %v494 = vmul.f32 %v456, %v482
  %v495 = vmul.f32 %v457, %v482
  %v496 = vmul.f32 %v458, %v482
  %v497 = vmul.f32 %v459, %v482
  %v498 = vmul.f32 %v460, %v482
  %v499 = vmul.f32 %v461, %v482
  %v500 = vmul.f32 %v462, %v482
  %v501 = vmul.f32 %v463, %v482
  %v502 = vmul.f32 %v464, %v482
  %v503 = vmul.f32 %v465, %v482
  %v504 = vmul.f32 %v466, %v482
  %v505 = vmul.f32 %v467, %v482
  %v506 = vmul.f32 %v468, %v482
  %v507 = vmul.f32 %v469, %v482
  %v508 = vmul.f32 %v470, %v482
  %v509 = vmul.f32 %v471, %v482
  %v510 = vmul.f32 %v472, %v482
  %v511 = vmul.f32 %v473, %v482
  %v512 = vmul.f32 %v474, %v482
  %v513 = vmul.f32 %v475, %v482
  %v514 = vmul.f32 %v476, %v482
  %v515 = vmul.f32 %v477, %v482
  %v517 = vlaneseq
  %v518 = vshrl.u32 %v517, 7
  %v519 = vsub.s32 0, %v518
  %v520 = vrot.slane %v59, %v519
  %v522 = vadd.f32 %v484, %v520
  %v523 = vadd.f32 %v485, %v520
  %v524 = vadd.f32 %v486, %v520
  %v525 = vadd.f32 %v487, %v520
  %v526 = vadd.f32 %v488, %v520
  %v527 = vadd.f32 %v489, %v520
  %v528 = vadd.f32 %v490, %v520
  %v529 = vadd.f32 %v491, %v520
  %v530 = vadd.f32 %v492, %v520
  %v531 = vadd.f32 %v493, %v520
  %v532 = vadd.f32 %v494, %v520
  %v533 = vadd.f32 %v495, %v520
  %v534 = vadd.f32 %v496, %v520
  %v535 = vadd.f32 %v497, %v520
  %v536 = vadd.f32 %v498, %v520
  %v537 = vadd.f32 %v499, %v520
  %v538 = vadd.f32 %v500, %v520
  %v539 = vadd.f32 %v501, %v520
  %v540 = vadd.f32 %v502, %v520
  %v541 = vadd.f32 %v503, %v520
  %v542 = vadd.f32 %v504, %v520
  %v543 = vadd.f32 %v505, %v520
  %v544 = vadd.f32 %v506, %v520
  %v545 = vadd.f32 %v507, %v520
  %v546 = vadd.f32 %v508, %v520
  %v547 = vadd.f32 %v509, %v520
  %v548 = vadd.f32 %v510, %v520
  %v549 = vadd.f32 %v511, %v520
  %v550 = vadd.f32 %v512, %v520
  %v551 = vadd.f32 %v513, %v520
  %v552 = vadd.f32 %v514, %v520
  %v553 = vadd.f32 %v515, %v520
  %v554 = vld [vmem:[%s3] sm:$0xf]
  %v555 = vld [vmem:[%s4] sm:$0x1]
  %v557 = vlaneseq
  %v558 = vshrl.u32 %v557, 7
  %v559 = vsub.s32 0, %v558
  %v560 = vrot.slane %v555, %v559
  %v563 = vsel %vm60, %v522, 0
  %v566 = vsel %vm60, %v523, 0
  %v569 = vsel %vm60, %v524, 0
  %v572 = vsel %vm60, %v525, 0
  %v575 = vsel %vm60, %v526, 0
  %v578 = vsel %vm60, %v527, 0
  %v581 = vsel %vm60, %v528, 0
  %v584 = vsel %vm60, %v529, 0
  %v587 = vsel %vm60, %v530, 0
  %v590 = vsel %vm60, %v531, 0
  %v593 = vsel %vm60, %v532, 0
  %v596 = vsel %vm60, %v533, 0
  %v599 = vsel %vm60, %v534, 0
  %v602 = vsel %vm60, %v535, 0
  %v605 = vsel %vm60, %v536, 0
  %v608 = vsel %vm60, %v537, 0
  %v611 = vsel %vm60, %v538, 0
  %v614 = vsel %vm60, %v539, 0
  %v617 = vsel %vm60, %v540, 0
  %v620 = vsel %vm60, %v541, 0
  %v623 = vsel %vm60, %v542, 0
  %v626 = vsel %vm60, %v543, 0
  %v629 = vsel %vm60, %v544, 0
  %v632 = vsel %vm60, %v545, 0
  %v635 = vsel %vm60, %v546, 0
  %v638 = vsel %vm60, %v547, 0
  %v641 = vsel %vm60, %v548, 0
  %v644 = vsel %vm60, %v549, 0
  %v647 = vsel %vm60, %v550, 0
  %v650 = vsel %vm60, %v551, 0
  %v653 = vsel %vm60, %v552, 0
  %v656 = vsel %vm60, %v553, 0
  %vm658 = vcmask 1043456
  %v660 = vsel %vm658, %v554, 0
  %662 = vmatprep.subr.mxu0 0.0
  %663 = vmatpush1.msra.mxu0 0.0
  %664 = vmatprep.subr.mxu0 0.0
  %665 = vmatpush1.msra.mxu0 0.0
  %666 = vmatprep.subr.mxu0 0.0
  %667 = vmatpush1.msra.mxu0 0.0
  %668 = vmatprep.subr.mxu0 0.0
  %669 = vmatpush1.msra.mxu0 0.0
  %670 = vmatprep.subr.mxu0 0.0
  %671 = vmatpush1.msra.mxu0 0.0
  %672 = vmatprep.subr.mxu0 0.0
  %673 = vmatpush1.msra.mxu0 0.0
  %674 = vmatprep.subr.mxu0 0.0
  %675 = vmatpush1.msra.mxu0 0.0
  %676 = vmatprep.subr.mxu0 0.0
  %677 = vmatpush1.msra.mxu0 0.0
  %678 = vmatprep.subr.mxu0 0.0
  %679 = vmatpush1.msra.mxu0 0.0
  %680 = vmatprep.subr.mxu0 0.0
  %681 = vmatpush1.msra.mxu0 0.0
  %682 = vmatprep.subr.mxu0 0.0
  %683 = vmatpush1.msra.mxu0 0.0
  %684 = vmatprep.subr.mxu0 0.0
  %685 = vmatpush1.msra.mxu0 0.0
  %686 = vmatprep.subr.mxu0 0.0
  %687 = vmatpush1.msra.mxu0 0.0
  %688 = vmatprep.subr.mxu0 0.0
  %689 = vmatpush1.msra.mxu0 0.0
  %690 = vmatprep.subr.mxu0 0.0
  %691 = vmatpush1.msra.mxu0 0.0
  %692 = vmatprep.subr.mxu0 0.0
  %693 = vmatpush1.msra.mxu0 %v660
  %694 = vmatprep.subr.mxu0 0.0
  %695 = vmatpush2.msra.mxu0 0.0
  %696 = vmatprep.subr.mxu0 0.0
  %697 = vmatpush2.msra.mxu0 0.0
  %698 = vmatprep.subr.mxu0 0.0
  %699 = vmatpush2.msra.mxu0 0.0
  %700 = vmatprep.subr.mxu0 0.0
  %701 = vmatpush2.msra.mxu0 0.0
  %702 = vmatprep.subr.mxu0 0.0
  %703 = vmatpush2.msra.mxu0 0.0
  %704 = vmatprep.subr.mxu0 0.0
  %705 = vmatpush2.msra.mxu0 0.0
  %706 = vmatprep.subr.mxu0 0.0
  %707 = vmatpush2.msra.mxu0 0.0
  %708 = vmatprep.subr.mxu0 0.0
  %709 = vmatpush2.msra.mxu0 0.0
  %710 = vmatprep.subr.mxu0 0.0
  %711 = vmatpush2.msra.mxu0 0.0
  %712 = vmatprep.subr.mxu0 0.0
  %713 = vmatpush2.msra.mxu0 0.0
  %714 = vmatprep.subr.mxu0 0.0
  %715 = vmatpush2.msra.mxu0 0.0
  %716 = vmatprep.subr.mxu0 0.0
  %717 = vmatpush2.msra.mxu0 0.0
  %718 = vmatprep.subr.mxu0 0.0
  %719 = vmatpush2.msra.mxu0 0.0
  %720 = vmatprep.subr.mxu0 0.0
  %721 = vmatpush2.msra.mxu0 0.0
  %722 = vmatprep.subr.mxu0 0.0
  %723 = vmatpush2.msra.mxu0 0.0
  %724 = vmatprep.subr.mxu0 0.0
  %725 = vmatpush2.msra.mxu0 0.0
  %726 = vmatprep.mubr.f32.mxu0 0.0
  %727 = vmatmul.mubr.f32.gmra.mxu0 %v563
  %v728 = vpop.f32.mrf.mxu0
  %v729 = vadd.f32 %v560, %v728
  %v730 = vpop.f32.mrf.mxu0
  %731 = vmatprep.mubr.f32.mxu0 0.0
  %732 = vmatmul.mubr.f32.gmra.mxu0 %v566
  %v733 = vpop.f32.mrf.mxu0
  %v734 = vadd.f32 %v560, %v733
  %v735 = vpop.f32.mrf.mxu0
  %736 = vmatprep.mubr.f32.mxu0 0.0
  %737 = vmatmul.mubr.f32.gmra.mxu0 %v569
  %v738 = vpop.f32.mrf.mxu0
  %v739 = vadd.f32 %v560, %v738
  %v740 = vpop.f32.mrf.mxu0
  %741 = vmatprep.mubr.f32.mxu0 0.0
  %742 = vmatmul.mubr.f32.gmra.mxu0 %v572
  %v743 = vpop.f32.mrf.mxu0
  %v744 = vadd.f32 %v560, %v743
  %v745 = vpop.f32.mrf.mxu0
  %746 = vmatprep.mubr.f32.mxu0 0.0
  %747 = vmatmul.mubr.f32.gmra.mxu0 %v575
  %v748 = vpop.f32.mrf.mxu0
  %v749 = vadd.f32 %v560, %v748
  %v750 = vpop.f32.mrf.mxu0
  %751 = vmatprep.mubr.f32.mxu0 0.0
  %752 = vmatmul.mubr.f32.gmra.mxu0 %v578
  %v753 = vpop.f32.mrf.mxu0
  %v754 = vadd.f32 %v560, %v753
  %v755 = vpop.f32.mrf.mxu0
  %756 = vmatprep.mubr.f32.mxu0 0.0
  %757 = vmatmul.mubr.f32.gmra.mxu0 %v581
  %v758 = vpop.f32.mrf.mxu0
  %v759 = vadd.f32 %v560, %v758
  %v760 = vpop.f32.mrf.mxu0
  %761 = vmatprep.mubr.f32.mxu0 0.0
  %762 = vmatmul.mubr.f32.gmra.mxu0 %v584
  %v763 = vpop.f32.mrf.mxu0
  %v764 = vadd.f32 %v560, %v763
  %v765 = vpop.f32.mrf.mxu0
  %766 = vmatprep.mubr.f32.mxu0 0.0
  %767 = vmatmul.mubr.f32.gmra.mxu0 %v587
  %v768 = vpop.f32.mrf.mxu0
  %v769 = vadd.f32 %v560, %v768
  %v770 = vpop.f32.mrf.mxu0
  %771 = vmatprep.mubr.f32.mxu0 0.0
  %772 = vmatmul.mubr.f32.gmra.mxu0 %v590
  %v773 = vpop.f32.mrf.mxu0
  %v774 = vadd.f32 %v560, %v773
  %v775 = vpop.f32.mrf.mxu0
  %776 = vmatprep.mubr.f32.mxu0 0.0
  %777 = vmatmul.mubr.f32.gmra.mxu0 %v593
  %v778 = vpop.f32.mrf.mxu0
  %v779 = vadd.f32 %v560, %v778
  %v780 = vpop.f32.mrf.mxu0
  %781 = vmatprep.mubr.f32.mxu0 0.0
  %782 = vmatmul.mubr.f32.gmra.mxu0 %v596
  %v783 = vpop.f32.mrf.mxu0
  %v784 = vadd.f32 %v560, %v783
  %v785 = vpop.f32.mrf.mxu0
  %786 = vmatprep.mubr.f32.mxu0 0.0
  %787 = vmatmul.mubr.f32.gmra.mxu0 %v599
  %v788 = vpop.f32.mrf.mxu0
  %v789 = vadd.f32 %v560, %v788
  %v790 = vpop.f32.mrf.mxu0
  %791 = vmatprep.mubr.f32.mxu0 0.0
  %792 = vmatmul.mubr.f32.gmra.mxu0 %v602
  %v793 = vpop.f32.mrf.mxu0
  %v794 = vadd.f32 %v560, %v793
  %v795 = vpop.f32.mrf.mxu0
  %796 = vmatprep.mubr.f32.mxu0 0.0
  %797 = vmatmul.mubr.f32.gmra.mxu0 %v605
  %v798 = vpop.f32.mrf.mxu0
  %v799 = vadd.f32 %v560, %v798
  %v800 = vpop.f32.mrf.mxu0
  %801 = vmatprep.mubr.f32.mxu0 0.0
  %802 = vmatmul.mubr.f32.gmra.mxu0 %v608
  %v803 = vpop.f32.mrf.mxu0
  %v804 = vadd.f32 %v560, %v803
  %v805 = vpop.f32.mrf.mxu0
  %806 = vmatprep.mubr.f32.mxu0 0.0
  %807 = vmatmul.mubr.f32.gmra.mxu0 %v611
  %v808 = vpop.f32.mrf.mxu0
  %v809 = vadd.f32 %v560, %v808
  %v810 = vpop.f32.mrf.mxu0
  %811 = vmatprep.mubr.f32.mxu0 0.0
  %812 = vmatmul.mubr.f32.gmra.mxu0 %v614
  %v813 = vpop.f32.mrf.mxu0
  %v814 = vadd.f32 %v560, %v813
  %v815 = vpop.f32.mrf.mxu0
  %816 = vmatprep.mubr.f32.mxu0 0.0
  %817 = vmatmul.mubr.f32.gmra.mxu0 %v617
  %v818 = vpop.f32.mrf.mxu0
  %v819 = vadd.f32 %v560, %v818
  %v820 = vpop.f32.mrf.mxu0
  %821 = vmatprep.mubr.f32.mxu0 0.0
  %822 = vmatmul.mubr.f32.gmra.mxu0 %v620
  %v823 = vpop.f32.mrf.mxu0
  %v824 = vadd.f32 %v560, %v823
  %v825 = vpop.f32.mrf.mxu0
  %826 = vmatprep.mubr.f32.mxu0 0.0
  %827 = vmatmul.mubr.f32.gmra.mxu0 %v623
  %v828 = vpop.f32.mrf.mxu0
  %v829 = vadd.f32 %v560, %v828
  %v830 = vpop.f32.mrf.mxu0
  %831 = vmatprep.mubr.f32.mxu0 0.0
  %832 = vmatmul.mubr.f32.gmra.mxu0 %v626
  %v833 = vpop.f32.mrf.mxu0
  %v834 = vadd.f32 %v560, %v833
  %v835 = vpop.f32.mrf.mxu0
  %836 = vmatprep.mubr.f32.mxu0 0.0
  %837 = vmatmul.mubr.f32.gmra.mxu0 %v629
  %v838 = vpop.f32.mrf.mxu0
  %v839 = vadd.f32 %v560, %v838
  %v840 = vpop.f32.mrf.mxu0
  %841 = vmatprep.mubr.f32.mxu0 0.0
  %842 = vmatmul.mubr.f32.gmra.mxu0 %v632
  %v843 = vpop.f32.mrf.mxu0
  %v844 = vadd.f32 %v560, %v843
  %v845 = vpop.f32.mrf.mxu0
  %846 = vmatprep.mubr.f32.mxu0 0.0
  %847 = vmatmul.mubr.f32.gmra.mxu0 %v635
  %v848 = vpop.f32.mrf.mxu0
  %v849 = vadd.f32 %v560, %v848
  %v850 = vpop.f32.mrf.mxu0
  %851 = vmatprep.mubr.f32.mxu0 0.0
  %852 = vmatmul.mubr.f32.gmra.mxu0 %v638
  %v853 = vpop.f32.mrf.mxu0
  %v854 = vadd.f32 %v560, %v853
  %v855 = vpop.f32.mrf.mxu0
  %856 = vmatprep.mubr.f32.mxu0 0.0
  %857 = vmatmul.mubr.f32.gmra.mxu0 %v641
  %v858 = vpop.f32.mrf.mxu0
  %v859 = vadd.f32 %v560, %v858
  %v860 = vpop.f32.mrf.mxu0
  %861 = vmatprep.mubr.f32.mxu0 0.0
  %862 = vmatmul.mubr.f32.gmra.mxu0 %v644
  %v863 = vpop.f32.mrf.mxu0
  %v864 = vadd.f32 %v560, %v863
  %v865 = vpop.f32.mrf.mxu0
  %866 = vmatprep.mubr.f32.mxu0 0.0
  %867 = vmatmul.mubr.f32.gmra.mxu0 %v647
  %v868 = vpop.f32.mrf.mxu0
  %v869 = vadd.f32 %v560, %v868
  %v870 = vpop.f32.mrf.mxu0
  %871 = vmatprep.mubr.f32.mxu0 0.0
  %872 = vmatmul.mubr.f32.gmra.mxu0 %v650
  %v873 = vpop.f32.mrf.mxu0
  %v874 = vadd.f32 %v560, %v873
  %v875 = vpop.f32.mrf.mxu0
  %876 = vmatprep.mubr.f32.mxu0 0.0
  %877 = vmatmul.mubr.f32.gmra.mxu0 %v653
  %v878 = vpop.f32.mrf.mxu0
  %v879 = vadd.f32 %v560, %v878
  %v880 = vpop.f32.mrf.mxu0
  %881 = vmatprep.mubr.f32.mxu0 0.0
  %882 = vmatmul.mubr.f32.gmra.mxu0 %v656
  %v883 = vpop.f32.mrf.mxu0
  %v884 = vadd.f32 %v560, %v883
  %v885 = vpop.f32.mrf.mxu0
  %886 = vdwg.mxu0
  %v887 = vmax.f32 %v729, 0.0
  %v888 = vmax.f32 %v734, 0.0
  %v889 = vmax.f32 %v739, 0.0
  %v890 = vmax.f32 %v744, 0.0
  %v891 = vmax.f32 %v749, 0.0
  %v892 = vmax.f32 %v754, 0.0
  %v893 = vmax.f32 %v759, 0.0
  %v894 = vmax.f32 %v764, 0.0
  %v895 = vmax.f32 %v769, 0.0
  %v896 = vmax.f32 %v774, 0.0
  %v897 = vmax.f32 %v779, 0.0
  %v898 = vmax.f32 %v784, 0.0
  %v899 = vmax.f32 %v789, 0.0
  %v900 = vmax.f32 %v794, 0.0
  %v901 = vmax.f32 %v799, 0.0
  %v902 = vmax.f32 %v804, 0.0
  %v903 = vmax.f32 %v809, 0.0
  %v904 = vmax.f32 %v814, 0.0
  %v905 = vmax.f32 %v819, 0.0
  %v906 = vmax.f32 %v824, 0.0
  %v907 = vmax.f32 %v829, 0.0
  %v908 = vmax.f32 %v834, 0.0
  %v909 = vmax.f32 %v839, 0.0
  %v910 = vmax.f32 %v844, 0.0
  %v911 = vmax.f32 %v849, 0.0
  %v912 = vmax.f32 %v854, 0.0
  %v913 = vmax.f32 %v859, 0.0
  %v914 = vmax.f32 %v864, 0.0
  %v915 = vmax.f32 %v869, 0.0
  %v916 = vmax.f32 %v874, 0.0
  %v917 = vmax.f32 %v879, 0.0
  %v918 = vmax.f32 %v884, 0.0
  %v919 = vld [vmem:[%s5] sm:$0xff]
  %v920 = vld [vmem:[%s5 + $0x8] sm:$0xff]
  %v921 = vld [vmem:[%s5 + $0x10] sm:$0xff]
  %v922 = vld [vmem:[%s5 + $0x18] sm:$0xff]
  %v923 = vld [vmem:[%s5 + $0x20] sm:$0xff]
  %v924 = vld [vmem:[%s5 + $0x28] sm:$0xff]
  %v925 = vld [vmem:[%s5 + $0x30] sm:$0xff]
  %v926 = vld [vmem:[%s5 + $0x38] sm:$0xff]
  %v927 = vld [vmem:[%s6] sm:$0x1]
  %v929 = vlaneseq
  %v930 = vshrl.u32 %v929, 7
  %v931 = vsub.s32 0, %v930
  %v932 = vrot.slane %v927, %v931
  %vm934 = vcmask 523264
  %v936 = vsel %vm934, %v887, 0
  %v939 = vsel %vm934, %v888, 0
  %v942 = vsel %vm934, %v889, 0
  %v945 = vsel %vm934, %v890, 0
  %v948 = vsel %vm934, %v891, 0
  %v951 = vsel %vm934, %v892, 0
  %v954 = vsel %vm934, %v893, 0
  %v957 = vsel %vm934, %v894, 0
  %v960 = vsel %vm934, %v895, 0
  %v963 = vsel %vm934, %v896, 0
  %v966 = vsel %vm934, %v897, 0
  %v969 = vsel %vm934, %v898, 0
  %v972 = vsel %vm934, %v899, 0
  %v975 = vsel %vm934, %v900, 0
  %v978 = vsel %vm934, %v901, 0
  %v981 = vsel %vm934, %v902, 0
  %v984 = vsel %vm934, %v903, 0
  %v987 = vsel %vm934, %v904, 0
  %v990 = vsel %vm934, %v905, 0
  %v993 = vsel %vm934, %v906, 0
  %v996 = vsel %vm934, %v907, 0
  %v999 = vsel %vm934, %v908, 0
  %v1002 = vsel %vm934, %v909, 0
  %v1005 = vsel %vm934, %v910, 0
  %v1008 = vsel %vm934, %v911, 0
  %v1011 = vsel %vm934, %v912, 0
  %v1014 = vsel %vm934, %v913, 0
  %v1017 = vsel %vm934, %v914, 0
  %v1020 = vsel %vm934, %v915, 0
  %v1023 = vsel %vm934, %v916, 0
  %v1026 = vsel %vm934, %v917, 0
  %v1029 = vsel %vm934, %v918, 0
  %1031 = vmatprep.subr.mxu0 0.0
  %1032 = vmatpush1.msra.mxu0 0.0
  %1033 = vmatprep.subr.mxu0 0.0
  %1034 = vmatpush1.msra.mxu0 0.0
  %1035 = vmatprep.subr.mxu0 0.0
  %1036 = vmatpush1.msra.mxu0 0.0
  %1037 = vmatprep.subr.mxu0 0.0
  %1038 = vmatpush1.msra.mxu0 0.0
  %1039 = vmatprep.subr.mxu0 0.0
  %1040 = vmatpush1.msra.mxu0 0.0
  %1041 = vmatprep.subr.mxu0 0.0
  %1042 = vmatpush1.msra.mxu0 0.0
  %1043 = vmatprep.subr.mxu0 0.0
  %1044 = vmatpush1.msra.mxu0 0.0
  %1045 = vmatprep.subr.mxu0 0.0
  %1046 = vmatpush1.msra.mxu0 0.0
  %1047 = vmatprep.subr.mxu0 0.0
  %1048 = vmatpush1.msra.mxu0 %v926
  %1049 = vmatprep.subr.mxu0 0.0
  %1050 = vmatpush1.msra.mxu0 %v925
  %1051 = vmatprep.subr.mxu0 0.0
  %1052 = vmatpush1.msra.mxu0 %v924
  %1053 = vmatprep.subr.mxu0 0.0
  %1054 = vmatpush1.msra.mxu0 %v923
  %1055 = vmatprep.subr.mxu0 0.0
  %1056 = vmatpush1.msra.mxu0 %v922
  %1057 = vmatprep.subr.mxu0 0.0
  %1058 = vmatpush1.msra.mxu0 %v921
  %1059 = vmatprep.subr.mxu0 0.0
  %1060 = vmatpush1.msra.mxu0 %v920
  %1061 = vmatprep.subr.mxu0 0.0
  %1062 = vmatpush1.msra.mxu0 %v919
  %1063 = vmatprep.subr.mxu0 0.0
  %1064 = vmatpush2.msra.mxu0 0.0
  %1065 = vmatprep.subr.mxu0 0.0
  %1066 = vmatpush2.msra.mxu0 0.0
  %1067 = vmatprep.subr.mxu0 0.0
  %1068 = vmatpush2.msra.mxu0 0.0
  %1069 = vmatprep.subr.mxu0 0.0
  %1070 = vmatpush2.msra.mxu0 0.0
  %1071 = vmatprep.subr.mxu0 0.0
  %1072 = vmatpush2.msra.mxu0 0.0
  %1073 = vmatprep.subr.mxu0 0.0
  %1074 = vmatpush2.msra.mxu0 0.0
  %1075 = vmatprep.subr.mxu0 0.0
  %1076 = vmatpush2.msra.mxu0 0.0
  %1077 = vmatprep.subr.mxu0 0.0
  %1078 = vmatpush2.msra.mxu0 0.0
  %1079 = vmatprep.subr.mxu0 0.0
  %1080 = vmatpush2.msra.mxu0 0.0
  %1081 = vmatprep.subr.mxu0 0.0
  %1082 = vmatpush2.msra.mxu0 0.0
  %1083 = vmatprep.subr.mxu0 0.0
  %1084 = vmatpush2.msra.mxu0 0.0
  %1085 = vmatprep.subr.mxu0 0.0
  %1086 = vmatpush2.msra.mxu0 0.0
  %1087 = vmatprep.subr.mxu0 0.0
  %1088 = vmatpush2.msra.mxu0 0.0
  %1089 = vmatprep.subr.mxu0 0.0
  %1090 = vmatpush2.msra.mxu0 0.0
  %1091 = vmatprep.subr.mxu0 0.0
  %1092 = vmatpush2.msra.mxu0 0.0
  %1093 = vmatprep.subr.mxu0 0.0
  %1094 = vmatpush2.msra.mxu0 0.0
  %1095 = vmatprep.mubr.f32.mxu0 0.0
  %1096 = vmatmul.mubr.f32.gmra.mxu0 %v936
  %v1097 = vpop.f32.mrf.mxu0
  %v1098 = vadd.f32 %v932, %v1097
  %v1099 = vpop.f32.mrf.mxu0
  %1100 = vmatprep.mubr.f32.mxu0 0.0
  %1101 = vmatmul.mubr.f32.gmra.mxu0 %v939
  %v1102 = vpop.f32.mrf.mxu0
  %v1103 = vadd.f32 %v932, %v1102
  %v1104 = vpop.f32.mrf.mxu0
  %1105 = vmatprep.mubr.f32.mxu0 0.0
  %1106 = vmatmul.mubr.f32.gmra.mxu0 %v942
  %v1107 = vpop.f32.mrf.mxu0
  %v1108 = vadd.f32 %v932, %v1107
  %v1109 = vpop.f32.mrf.mxu0
  %1110 = vmatprep.mubr.f32.mxu0 0.0
  %1111 = vmatmul.mubr.f32.gmra.mxu0 %v945
  %v1112 = vpop.f32.mrf.mxu0
  %v1113 = vadd.f32 %v932, %v1112
  %v1114 = vpop.f32.mrf.mxu0
  %1115 = vmatprep.mubr.f32.mxu0 0.0
  %1116 = vmatmul.mubr.f32.gmra.mxu0 %v948
  %v1117 = vpop.f32.mrf.mxu0
  %v1118 = vadd.f32 %v932, %v1117
  %v1119 = vpop.f32.mrf.mxu0
  %1120 = vmatprep.mubr.f32.mxu0 0.0
  %1121 = vmatmul.mubr.f32.gmra.mxu0 %v951
  %v1122 = vpop.f32.mrf.mxu0
  %v1123 = vadd.f32 %v932, %v1122
  %v1124 = vpop.f32.mrf.mxu0
  %1125 = vmatprep.mubr.f32.mxu0 0.0
  %1126 = vmatmul.mubr.f32.gmra.mxu0 %v954
  %v1127 = vpop.f32.mrf.mxu0
  %v1128 = vadd.f32 %v932, %v1127
  %v1129 = vpop.f32.mrf.mxu0
  %1130 = vmatprep.mubr.f32.mxu0 0.0
  %1131 = vmatmul.mubr.f32.gmra.mxu0 %v957
  %v1132 = vpop.f32.mrf.mxu0
  %v1133 = vadd.f32 %v932, %v1132
  %v1134 = vpop.f32.mrf.mxu0
  %1135 = vmatprep.mubr.f32.mxu0 0.0
  %1136 = vmatmul.mubr.f32.gmra.mxu0 %v960
  %v1137 = vpop.f32.mrf.mxu0
  %v1138 = vadd.f32 %v932, %v1137
  %v1139 = vpop.f32.mrf.mxu0
  %1140 = vmatprep.mubr.f32.mxu0 0.0
  %1141 = vmatmul.mubr.f32.gmra.mxu0 %v963
  %v1142 = vpop.f32.mrf.mxu0
  %v1143 = vadd.f32 %v932, %v1142
  %v1144 = vpop.f32.mrf.mxu0
  %1145 = vmatprep.mubr.f32.mxu0 0.0
  %1146 = vmatmul.mubr.f32.gmra.mxu0 %v966
  %v1147 = vpop.f32.mrf.mxu0
  %v1148 = vadd.f32 %v932, %v1147
  %v1149 = vpop.f32.mrf.mxu0
  %1150 = vmatprep.mubr.f32.mxu0 0.0
  %1151 = vmatmul.mubr.f32.gmra.mxu0 %v969
  %v1152 = vpop.f32.mrf.mxu0
  %v1153 = vadd.f32 %v932, %v1152
  %v1154 = vpop.f32.mrf.mxu0
  %1155 = vmatprep.mubr.f32.mxu0 0.0
  %1156 = vmatmul.mubr.f32.gmra.mxu0 %v972
  %v1157 = vpop.f32.mrf.mxu0
  %v1158 = vadd.f32 %v932, %v1157
  %v1159 = vpop.f32.mrf.mxu0
  %1160 = vmatprep.mubr.f32.mxu0 0.0
  %1161 = vmatmul.mubr.f32.gmra.mxu0 %v975
  %v1162 = vpop.f32.mrf.mxu0
  %v1163 = vadd.f32 %v932, %v1162
  %v1164 = vpop.f32.mrf.mxu0
  %1165 = vmatprep.mubr.f32.mxu0 0.0
  %1166 = vmatmul.mubr.f32.gmra.mxu0 %v978
  %v1167 = vpop.f32.mrf.mxu0
  %v1168 = vadd.f32 %v932, %v1167
  %v1169 = vpop.f32.mrf.mxu0
  %1170 = vmatprep.mubr.f32.mxu0 0.0
  %1171 = vmatmul.mubr.f32.gmra.mxu0 %v981
  %v1172 = vpop.f32.mrf.mxu0
  %v1173 = vadd.f32 %v932, %v1172
  %v1174 = vpop.f32.mrf.mxu0
  %1175 = vmatprep.mubr.f32.mxu0 0.0
  %1176 = vmatmul.mubr.f32.gmra.mxu0 %v984
  %v1177 = vpop.f32.mrf.mxu0
  %v1178 = vadd.f32 %v932, %v1177
  %v1179 = vpop.f32.mrf.mxu0
  %1180 = vmatprep.mubr.f32.mxu0 0.0
  %1181 = vmatmul.mubr.f32.gmra.mxu0 %v987
  %v1182 = vpop.f32.mrf.mxu0
  %v1183 = vadd.f32 %v932, %v1182
  %v1184 = vpop.f32.mrf.mxu0
  %1185 = vmatprep.mubr.f32.mxu0 0.0
  %1186 = vmatmul.mubr.f32.gmra.mxu0 %v990
  %v1187 = vpop.f32.mrf.mxu0
  %v1188 = vadd.f32 %v932, %v1187
  %v1189 = vpop.f32.mrf.mxu0
  %1190 = vmatprep.mubr.f32.mxu0 0.0
  %1191 = vmatmul.mubr.f32.gmra.mxu0 %v993
  %v1192 = vpop.f32.mrf.mxu0
  %v1193 = vadd.f32 %v932, %v1192
  %v1194 = vpop.f32.mrf.mxu0
  %1195 = vmatprep.mubr.f32.mxu0 0.0
  %1196 = vmatmul.mubr.f32.gmra.mxu0 %v996
  %v1197 = vpop.f32.mrf.mxu0
  %v1198 = vadd.f32 %v932, %v1197
  %v1199 = vpop.f32.mrf.mxu0
  %1200 = vmatprep.mubr.f32.mxu0 0.0
  %1201 = vmatmul.mubr.f32.gmra.mxu0 %v999
  %v1202 = vpop.f32.mrf.mxu0
  %v1203 = vadd.f32 %v932, %v1202
  %v1204 = vpop.f32.mrf.mxu0
  %1205 = vmatprep.mubr.f32.mxu0 0.0
  %1206 = vmatmul.mubr.f32.gmra.mxu0 %v1002
  %v1207 = vpop.f32.mrf.mxu0
  %v1208 = vadd.f32 %v932, %v1207
  %v1209 = vpop.f32.mrf.mxu0
  %1210 = vmatprep.mubr.f32.mxu0 0.0
  %1211 = vmatmul.mubr.f32.gmra.mxu0 %v1005
  %v1212 = vpop.f32.mrf.mxu0
  %v1213 = vadd.f32 %v932, %v1212
  %v1214 = vpop.f32.mrf.mxu0
  %1215 = vmatprep.mubr.f32.mxu0 0.0
  %1216 = vmatmul.mubr.f32.gmra.mxu0 %v1008
  %v1217 = vpop.f32.mrf.mxu0
  %v1218 = vadd.f32 %v932, %v1217
  %v1219 = vpop.f32.mrf.mxu0
  %1220 = vmatprep.mubr.f32.mxu0 0.0
  %1221 = vmatmul.mubr.f32.gmra.mxu0 %v1011
  %v1222 = vpop.f32.mrf.mxu0
  %v1223 = vadd.f32 %v932, %v1222
  %v1224 = vpop.f32.mrf.mxu0
  %1225 = vmatprep.mubr.f32.mxu0 0.0
  %1226 = vmatmul.mubr.f32.gmra.mxu0 %v1014
  %v1227 = vpop.f32.mrf.mxu0
  %v1228 = vadd.f32 %v932, %v1227
  %v1229 = vpop.f32.mrf.mxu0
  %1230 = vmatprep.mubr.f32.mxu0 0.0
  %1231 = vmatmul.mubr.f32.gmra.mxu0 %v1017
  %v1232 = vpop.f32.mrf.mxu0
  %v1233 = vadd.f32 %v932, %v1232
  %v1234 = vpop.f32.mrf.mxu0
  %1235 = vmatprep.mubr.f32.mxu0 0.0
  %1236 = vmatmul.mubr.f32.gmra.mxu0 %v1020
  %v1237 = vpop.f32.mrf.mxu0
  %v1238 = vadd.f32 %v932, %v1237
  %v1239 = vpop.f32.mrf.mxu0
  %1240 = vmatprep.mubr.f32.mxu0 0.0
  %1241 = vmatmul.mubr.f32.gmra.mxu0 %v1023
  %v1242 = vpop.f32.mrf.mxu0
  %v1243 = vadd.f32 %v932, %v1242
  %v1244 = vpop.f32.mrf.mxu0
  %1245 = vmatprep.mubr.f32.mxu0 0.0
  %1246 = vmatmul.mubr.f32.gmra.mxu0 %v1026
  %v1247 = vpop.f32.mrf.mxu0
  %v1248 = vadd.f32 %v932, %v1247
  %v1249 = vpop.f32.mrf.mxu0
  %1250 = vmatprep.mubr.f32.mxu0 0.0
  %1251 = vmatmul.mubr.f32.gmra.mxu0 %v1029
  %v1252 = vpop.f32.mrf.mxu0
  %v1253 = vadd.f32 %v932, %v1252
  %v1254 = vpop.f32.mrf.mxu0
  %1255 = vdwg.mxu0
  %v1256 = vmax.f32 %v1098, 0.0
  %v1257 = vmax.f32 %v1103, 0.0
  %v1258 = vmax.f32 %v1108, 0.0
  %v1259 = vmax.f32 %v1113, 0.0
  %v1260 = vmax.f32 %v1118, 0.0
  %v1261 = vmax.f32 %v1123, 0.0
  %v1262 = vmax.f32 %v1128, 0.0
  %v1263 = vmax.f32 %v1133, 0.0
  %v1264 = vmax.f32 %v1138, 0.0
  %v1265 = vmax.f32 %v1143, 0.0
  %v1266 = vmax.f32 %v1148, 0.0
  %v1267 = vmax.f32 %v1153, 0.0
  %v1268 = vmax.f32 %v1158, 0.0
  %v1269 = vmax.f32 %v1163, 0.0
  %v1270 = vmax.f32 %v1168, 0.0
  %v1271 = vmax.f32 %v1173, 0.0
  %v1272 = vmax.f32 %v1178, 0.0
  %v1273 = vmax.f32 %v1183, 0.0
  %v1274 = vmax.f32 %v1188, 0.0
  %v1275 = vmax.f32 %v1193, 0.0
  %v1276 = vmax.f32 %v1198, 0.0
  %v1277 = vmax.f32 %v1203, 0.0
  %v1278 = vmax.f32 %v1208, 0.0
  %v1279 = vmax.f32 %v1213, 0.0
  %v1280 = vmax.f32 %v1218, 0.0
  %v1281 = vmax.f32 %v1223, 0.0
  %v1282 = vmax.f32 %v1228, 0.0
  %v1283 = vmax.f32 %v1233, 0.0
  %v1284 = vmax.f32 %v1238, 0.0
  %v1285 = vmax.f32 %v1243, 0.0
  %v1286 = vmax.f32 %v1248, 0.0
  %v1287 = vmax.f32 %v1253, 0.0
  %1288 = vst.msk [vmem:[%s7] sm:$0xff] %vm934, %v1256
  %1289 = vst.msk [vmem:[%s7 + $0x8] sm:$0xff] %vm934, %v1257
  %1290 = vst.msk [vmem:[%s7 + $0x10] sm:$0xff] %vm934, %v1258
  %1291 = vst.msk [vmem:[%s7 + $0x18] sm:$0xff] %vm934, %v1259
  %1292 = vst.msk [vmem:[%s7 + $0x20] sm:$0xff] %vm934, %v1260
  %1293 = vst.msk [vmem:[%s7 + $0x28] sm:$0xff] %vm934, %v1261
  %1294 = vst.msk [vmem:[%s7 + $0x30] sm:$0xff] %vm934, %v1262
  %1295 = vst.msk [vmem:[%s7 + $0x38] sm:$0xff] %vm934, %v1263
  %1296 = vst.msk [vmem:[%s7 + $0x40] sm:$0xff] %vm934, %v1264
  %1297 = vst.msk [vmem:[%s7 + $0x48] sm:$0xff] %vm934, %v1265
  %1298 = vst.msk [vmem:[%s7 + $0x50] sm:$0xff] %vm934, %v1266
  %1299 = vst.msk [vmem:[%s7 + $0x58] sm:$0xff] %vm934, %v1267
  %1300 = vst.msk [vmem:[%s7 + $0x60] sm:$0xff] %vm934, %v1268
  %1301 = vst.msk [vmem:[%s7 + $0x68] sm:$0xff] %vm934, %v1269
  %1302 = vst.msk [vmem:[%s7 + $0x70] sm:$0xff] %vm934, %v1270
  %1303 = vst.msk [vmem:[%s7 + $0x78] sm:$0xff] %vm934, %v1271
  %1304 = vst.msk [vmem:[%s7 + $0x80] sm:$0xff] %vm934, %v1272
  %1305 = vst.msk [vmem:[%s7 + $0x88] sm:$0xff] %vm934, %v1273
  %1306 = vst.msk [vmem:[%s7 + $0x90] sm:$0xff] %vm934, %v1274
  %1307 = vst.msk [vmem:[%s7 + $0x98] sm:$0xff] %vm934, %v1275
  %1308 = vst.msk [vmem:[%s7 + $0xa0] sm:$0xff] %vm934, %v1276
  %1309 = vst.msk [vmem:[%s7 + $0xa8] sm:$0xff] %vm934, %v1277
  %1310 = vst.msk [vmem:[%s7 + $0xb0] sm:$0xff] %vm934, %v1278
  %1311 = vst.msk [vmem:[%s7 + $0xb8] sm:$0xff] %vm934, %v1279
  %1312 = vst.msk [vmem:[%s7 + $0xc0] sm:$0xff] %vm934, %v1280
  %1313 = vst.msk [vmem:[%s7 + $0xc8] sm:$0xff] %vm934, %v1281
  %1314 = vst.msk [vmem:[%s7 + $0xd0] sm:$0xff] %vm934, %v1282
  %1315 = vst.msk [vmem:[%s7 + $0xd8] sm:$0xff] %vm934, %v1283
  %1316 = vst.msk [vmem:[%s7 + $0xe0] sm:$0xff] %vm934, %v1284
  %1317 = vst.msk [vmem:[%s7 + $0xe8] sm:$0xff] %vm934, %v1285
  %1318 = vst.msk [vmem:[%s7 + $0xf0] sm:$0xff] %vm934, %v1286
  %1319 = vst.msk [vmem:[%s7 + $0xf8] sm:$0xff] %vm934, %v1287
  // Predicated region
  $region30: #{gnn_policy_forward.7} parent=0 // pred_check
    _
  $region31: #{gnn_policy_forward.7} parent=0 // pred_check_branch
    %1321 = sbr.rel (0) target = $region33
  $region32: #{gnn_policy_forward.7} parent=0 // pred_region
    _
  $region33: #{gnn_policy_forward.7} parent=0 // pred_fallthru
    _
  // Predicated region
  $region34: #{gnn_policy_forward.7} parent=0 // pred_check
    _
  $region35: #{gnn_policy_forward.7} parent=0 // pred_check_branch
    %1323 = sbr.rel (0) target = $region37
  $region36: #{gnn_policy_forward.7} parent=0 // pred_region
    _
  $region37: #{gnn_policy_forward.7} parent=0 // pred_fallthru
    _

// kernel: gnn_policy_forward.8
$region0: #{gnn_policy_forward.8}
  #allocation0 [shape = 'u32[]', space=smem, size = 0x4, offset = 0x4, fixed_abs, tag = 'smem constant byte address 0x4 - core index']
  #allocation1 [shape = 'u32[144,128]{1,0:T(1,128)}', space=vmem, size = 0x12000, scoped, tag = 'internal scratch']
  %s0 = inlined_call_operand.vmem [shape: f32[256,18], index: 0, kind: input, shape index: {}]
  %s1 = inlined_call_operand.vmem [shape: f32[1,18], index: 1, kind: input, shape index: {}]
  %s2 = inlined_call_operand.vmem [shape: f32[1,18], index: 2, kind: input, shape index: {}]
  %s3 = inlined_call_operand.vmem [shape: f32[18,64], index: 3, kind: input, shape index: {}]
  %s4 = inlined_call_operand.vmem [shape: f32[1,64], index: 4, kind: input, shape index: {}]
  %s5 = inlined_call_operand.vmem [shape: f32[64,64], index: 5, kind: input, shape index: {}]
  %s6 = inlined_call_operand.vmem [shape: f32[1,64], index: 6, kind: input, shape index: {}]
  %s7 = inlined_call_operand.vmem [shape: f32[256,64], index: 7, kind: output, shape index: {}]
  %s8 = sld [smem:[#allocation0]]
  $region38: #{gnn_policy_forward.8} parent=0
    _
  %s10 = ssub.s32 1, %s8
  %s11 = scalar_select 0, %s10, %s8
  // Predicated region
  $region2: #{gnn_policy_forward.8} parent=0 // pred_check
    _
  $region3: #{gnn_policy_forward.8} parent=0 // pred_check_branch
    %13 = sbr.rel (0) target = $region5
  $region4: #{gnn_policy_forward.8} parent=0 // pred_region
    _
  $region5: #{gnn_policy_forward.8} parent=0 // pred_fallthru
    _
  // Predicated region
  $region6: #{gnn_policy_forward.8} parent=0 // pred_check
    _
  $region7: #{gnn_policy_forward.8} parent=0 // pred_check_branch
    %15 = sbr.rel (0) target = $region9
  $region8: #{gnn_policy_forward.8} parent=0 // pred_region
    _
  $region9: #{gnn_policy_forward.8} parent=0 // pred_fallthru
    _
  // Predicated region
  $region10: #{gnn_policy_forward.8} parent=0 // pred_check
    _
  $region11: #{gnn_policy_forward.8} parent=0 // pred_check_branch
    %17 = sbr.rel (0) target = $region13
  $region12: #{gnn_policy_forward.8} parent=0 // pred_region
    _
  $region13: #{gnn_policy_forward.8} parent=0 // pred_fallthru
    _
  // Predicated region
  $region14: #{gnn_policy_forward.8} parent=0 // pred_check
    _
  $region15: #{gnn_policy_forward.8} parent=0 // pred_check_branch
    %19 = sbr.rel (0) target = $region17
  $region16: #{gnn_policy_forward.8} parent=0 // pred_region
    _
  $region17: #{gnn_policy_forward.8} parent=0 // pred_fallthru
    _
  // Predicated region
  $region18: #{gnn_policy_forward.8} parent=0 // pred_check
    _
  $region19: #{gnn_policy_forward.8} parent=0 // pred_check_branch
    %21 = sbr.rel (0) target = $region21
  $region20: #{gnn_policy_forward.8} parent=0 // pred_region
    _
  $region21: #{gnn_policy_forward.8} parent=0 // pred_fallthru
    _
  // Predicated region
  $region22: #{gnn_policy_forward.8} parent=0 // pred_check
    _
  $region23: #{gnn_policy_forward.8} parent=0 // pred_check_branch
    %23 = sbr.rel (0) target = $region25
  $region24: #{gnn_policy_forward.8} parent=0 // pred_region
    _
  $region25: #{gnn_policy_forward.8} parent=0 // pred_fallthru
    _
  // Predicated region
  $region26: #{gnn_policy_forward.8} parent=0 // pred_check
    _
  $region27: #{gnn_policy_forward.8} parent=0 // pred_check_branch
    %25 = sbr.rel (0) target = $region29
  $region28: #{gnn_policy_forward.8} parent=0 // pred_region
    _
  $region29: #{gnn_policy_forward.8} parent=0 // pred_fallthru
    _
  %v26 = vld [vmem:[%s0] sm:$0xff]
  %v27 = vld [vmem:[%s0 + $0x8] sm:$0xff]
  %v28 = vld [vmem:[%s0 + $0x10] sm:$0xff]
  %v29 = vld [vmem:[%s0 + $0x18] sm:$0xff]
  %v30 = vld [vmem:[%s0 + $0x20] sm:$0xff]
  %v31 = vld [vmem:[%s0 + $0x28] sm:$0xff]
  %v32 = vld [vmem:[%s0 + $0x30] sm:$0xff]
  %v33 = vld [vmem:[%s0 + $0x38] sm:$0xff]
  %v34 = vld [vmem:[%s0 + $0x40] sm:$0xff]
  %v35 = vld [vmem:[%s0 + $0x48] sm:$0xff]
  %v36 = vld [vmem:[%s0 + $0x50] sm:$0xff]
  %v37 = vld [vmem:[%s0 + $0x58] sm:$0xff]
  %v38 = vld [vmem:[%s0 + $0x60] sm:$0xff]
  %v39 = vld [vmem:[%s0 + $0x68] sm:$0xff]
  %v40 = vld [vmem:[%s0 + $0x70] sm:$0xff]
  %v41 = vld [vmem:[%s0 + $0x78] sm:$0xff]
  %v42 = vld [vmem:[%s0 + $0x80] sm:$0xff]
  %v43 = vld [vmem:[%s0 + $0x88] sm:$0xff]
  %v44 = vld [vmem:[%s0 + $0x90] sm:$0xff]
  %v45 = vld [vmem:[%s0 + $0x98] sm:$0xff]
  %v46 = vld [vmem:[%s0 + $0xa0] sm:$0xff]
  %v47 = vld [vmem:[%s0 + $0xa8] sm:$0xff]
  %v48 = vld [vmem:[%s0 + $0xb0] sm:$0xff]
  %v49 = vld [vmem:[%s0 + $0xb8] sm:$0xff]
  %v50 = vld [vmem:[%s0 + $0xc0] sm:$0xff]
  %v51 = vld [vmem:[%s0 + $0xc8] sm:$0xff]
  %v52 = vld [vmem:[%s0 + $0xd0] sm:$0xff]
  %v53 = vld [vmem:[%s0 + $0xd8] sm:$0xff]
  %v54 = vld [vmem:[%s0 + $0xe0] sm:$0xff]
  %v55 = vld [vmem:[%s0 + $0xe8] sm:$0xff]
  %v56 = vld [vmem:[%s0 + $0xf0] sm:$0xff]
  %v57 = vld [vmem:[%s0 + $0xf8] sm:$0xff]
  %v58 = vld [vmem:[%s1] sm:$0x1]
  %v59 = vld [vmem:[%s2] sm:$0x1]
  %vm60 = vcmask 146432
  %v61 = vsel %vm60, %v26, 0.0
  %62 = vadd.xlane.f32.xlu0 %v61
  %v63 = vpop.xlane.xlu0 %62
  %v64 = vsel %vm60, %v27, 0.0
  %65 = vadd.xlane.f32.xlu0 %v64
  %v66 = vpop.xlane.xlu0 %65
  %v67 = vsel %vm60, %v28, 0.0
  %68 = vadd.xlane.f32.xlu0 %v67
  %v69 = vpop.xlane.xlu0 %68
  %v70 = vsel %vm60, %v29, 0.0
  %71 = vadd.xlane.f32.xlu0 %v70
  %v72 = vpop.xlane.xlu0 %71
  %v73 = vsel %vm60, %v30, 0.0
  %74 = vadd.xlane.f32.xlu0 %v73
  %v75 = vpop.xlane.xlu0 %74
  %v76 = vsel %vm60, %v31, 0.0
  %77 = vadd.xlane.f32.xlu0 %v76
  %v78 = vpop.xlane.xlu0 %77
  %v79 = vsel %vm60, %v32, 0.0
  %80 = vadd.xlane.f32.xlu0 %v79
  %v81 = vpop.xlane.xlu0 %80
  %v82 = vsel %vm60, %v33, 0.0
  %83 = vadd.xlane.f32.xlu0 %v82
  %v84 = vpop.xlane.xlu0 %83
  %v85 = vsel %vm60, %v34, 0.0
  %86 = vadd.xlane.f32.xlu0 %v85
  %v87 = vpop.xlane.xlu0 %86
  %v88 = vsel %vm60, %v35, 0.0
  %89 = vadd.xlane.f32.xlu0 %v88
  %v90 = vpop.xlane.xlu0 %89
  %v91 = vsel %vm60, %v36, 0.0
  %92 = vadd.xlane.f32.xlu0 %v91
  %v93 = vpop.xlane.xlu0 %92
  %v94 = vsel %vm60, %v37, 0.0
  %95 = vadd.xlane.f32.xlu0 %v94
  %v96 = vpop.xlane.xlu0 %95
  %v97 = vsel %vm60, %v38, 0.0
  %98 = vadd.xlane.f32.xlu0 %v97
  %v99 = vpop.xlane.xlu0 %98
  %v100 = vsel %vm60, %v39, 0.0
  %101 = vadd.xlane.f32.xlu0 %v100
  %v102 = vpop.xlane.xlu0 %101
  %v103 = vsel %vm60, %v40, 0.0
  %104 = vadd.xlane.f32.xlu0 %v103
  %v105 = vpop.xlane.xlu0 %104
  %v106 = vsel %vm60, %v41, 0.0
  %107 = vadd.xlane.f32.xlu0 %v106
  %v108 = vpop.xlane.xlu0 %107
  %v109 = vsel %vm60, %v42, 0.0
  %110 = vadd.xlane.f32.xlu0 %v109
  %v111 = vpop.xlane.xlu0 %110
  %v112 = vsel %vm60, %v43, 0.0
  %113 = vadd.xlane.f32.xlu0 %v112
  %v114 = vpop.xlane.xlu0 %113
  %v115 = vsel %vm60, %v44, 0.0
  %116 = vadd.xlane.f32.xlu0 %v115
  %v117 = vpop.xlane.xlu0 %116
  %v118 = vsel %vm60, %v45, 0.0
  %119 = vadd.xlane.f32.xlu0 %v118
  %v120 = vpop.xlane.xlu0 %119
  %v121 = vsel %vm60, %v46, 0.0
  %122 = vadd.xlane.f32.xlu0 %v121
  %v123 = vpop.xlane.xlu0 %122
  %v124 = vsel %vm60, %v47, 0.0
  %125 = vadd.xlane.f32.xlu0 %v124
  %v126 = vpop.xlane.xlu0 %125
  %v127 = vsel %vm60, %v48, 0.0
  %128 = vadd.xlane.f32.xlu0 %v127
  %v129 = vpop.xlane.xlu0 %128
  %v130 = vsel %vm60, %v49, 0.0
  %131 = vadd.xlane.f32.xlu0 %v130
  %v132 = vpop.xlane.xlu0 %131
  %v133 = vsel %vm60, %v50, 0.0
  %134 = vadd.xlane.f32.xlu0 %v133
  %v135 = vpop.xlane.xlu0 %134
  %v136 = vsel %vm60, %v51, 0.0
  %137 = vadd.xlane.f32.xlu0 %v136
  %v138 = vpop.xlane.xlu0 %137
  %v139 = vsel %vm60, %v52, 0.0
  %140 = vadd.xlane.f32.xlu0 %v139
  %v141 = vpop.xlane.xlu0 %140
  %v142 = vsel %vm60, %v53, 0.0
  %143 = vadd.xlane.f32.xlu0 %v142
  %v144 = vpop.xlane.xlu0 %143
  %v145 = vsel %vm60, %v54, 0.0
  %146 = vadd.xlane.f32.xlu0 %v145
  %v147 = vpop.xlane.xlu0 %146
  %v148 = vsel %vm60, %v55, 0.0
  %149 = vadd.xlane.f32.xlu0 %v148
  %v150 = vpop.xlane.xlu0 %149
  %v151 = vsel %vm60, %v56, 0.0
  %152 = vadd.xlane.f32.xlu0 %v151
  %v153 = vpop.xlane.xlu0 %152
  %v154 = vsel %vm60, %v57, 0.0
  %155 = vadd.xlane.f32.xlu0 %v154
  %v156 = vpop.xlane.xlu0 %155
  %v157 = vrcp.pop 18.0
  %v158 = vmul.f32 %v63, %v157
  %v159 = vmul.f32 %v66, %v157
  %v160 = vmul.f32 %v69, %v157
  %v161 = vmul.f32 %v72, %v157
  %v162 = vmul.f32 %v75, %v157
  %v163 = vmul.f32 %v78, %v157
  %v164 = vmul.f32 %v81, %v157
  %v165 = vmul.f32 %v84, %v157
  %v166 = vmul.f32 %v87, %v157
  %v167 = vmul.f32 %v90, %v157
  %v168 = vmul.f32 %v93, %v157
  %v169 = vmul.f32 %v96, %v157
  %v170 = vmul.f32 %v99, %v157
  %v171 = vmul.f32 %v102, %v157
  %v172 = vmul.f32 %v105, %v157
  %v173 = vmul.f32 %v108, %v157
  %v174 = vmul.f32 %v111, %v157
  %v175 = vmul.f32 %v114, %v157
  %v176 = vmul.f32 %v117, %v157
  %v177 = vmul.f32 %v120, %v157
  %v178 = vmul.f32 %v123, %v157
  %v179 = vmul.f32 %v126, %v157
  %v180 = vmul.f32 %v129, %v157
  %v181 = vmul.f32 %v132, %v157
  %v182 = vmul.f32 %v135, %v157
  %v183 = vmul.f32 %v138, %v157
  %v184 = vmul.f32 %v141, %v157
  %v185 = vmul.f32 %v144, %v157
  %v186 = vmul.f32 %v147, %v157
  %v187 = vmul.f32 %v150, %v157
  %v188 = vmul.f32 %v153, %v157
  %v189 = vmul.f32 %v156, %v157
  %v190 = vsub.f32 %v26, %v158
  %v191 = vsub.f32 %v27, %v159
  %v192 = vsub.f32 %v28, %v160
  %v193 = vsub.f32 %v29, %v161
  %v194 = vsub.f32 %v30, %v162
  %v195 = vsub.f32 %v31, %v163
  %v196 = vsub.f32 %v32, %v164
  %v197 = vsub.f32 %v33, %v165
  %v198 = vsub.f32 %v34, %v166
  %v199 = vsub.f32 %v35, %v167
  %v200 = vsub.f32 %v36, %v168
  %v201 = vsub.f32 %v37, %v169
  %v202 = vsub.f32 %v38, %v170
  %v203 = vsub.f32 %v39, %v171
  %v204 = vsub.f32 %v40, %v172
  %v205 = vsub.f32 %v41, %v173
  %v206 = vsub.f32 %v42, %v174
  %v207 = vsub.f32 %v43, %v175
  %v208 = vsub.f32 %v44, %v176
  %v209 = vsub.f32 %v45, %v177
  %v210 = vsub.f32 %v46, %v178
  %v211 = vsub.f32 %v47, %v179
  %v212 = vsub.f32 %v48, %v180
  %v213 = vsub.f32 %v49, %v181
  %v214 = vsub.f32 %v50, %v182
  %v215 = vsub.f32 %v51, %v183
  %v216 = vsub.f32 %v52, %v184
  %v217 = vsub.f32 %v53, %v185
  %v218 = vsub.f32 %v54, %v186
  %v219 = vsub.f32 %v55, %v187
  %v220 = vsub.f32 %v56, %v188
  %v221 = vsub.f32 %v57, %v189
  %v222 = vmul.f32 %v190, %v190
  %v223 = vmul.f32 %v191, %v191
  %v224 = vmul.f32 %v192, %v192
  %v225 = vmul.f32 %v193, %v193
  %v226 = vmul.f32 %v194, %v194
  %v227 = vmul.f32 %v195, %v195
  %v228 = vmul.f32 %v196, %v196
  %v229 = vmul.f32 %v197, %v197
  %v230 = vmul.f32 %v198, %v198
  %v231 = vmul.f32 %v199, %v199
  %v232 = vmul.f32 %v200, %v200
  %v233 = vmul.f32 %v201, %v201
  %v234 = vmul.f32 %v202, %v202
  %v235 = vmul.f32 %v203, %v203
  %v236 = vmul.f32 %v204, %v204
  %v237 = vmul.f32 %v205, %v205
  %v238 = vmul.f32 %v206, %v206
  %v239 = vmul.f32 %v207, %v207
  %v240 = vmul.f32 %v208, %v208
  %v241 = vmul.f32 %v209, %v209
  %v242 = vmul.f32 %v210, %v210
  %v243 = vmul.f32 %v211, %v211
  %v244 = vmul.f32 %v212, %v212
  %v245 = vmul.f32 %v213, %v213
  %v246 = vmul.f32 %v214, %v214
  %v247 = vmul.f32 %v215, %v215
  %v248 = vmul.f32 %v216, %v216
  %v249 = vmul.f32 %v217, %v217
  %v250 = vmul.f32 %v218, %v218
  %v251 = vmul.f32 %v219, %v219
  %v252 = vmul.f32 %v220, %v220
  %v253 = vmul.f32 %v221, %v221
  %v254 = vsel %vm60, %v222, 0.0
  %255 = vadd.xlane.f32.xlu0 %v254
  %v256 = vpop.xlane.xlu0 %255
  %v257 = vsel %vm60, %v223, 0.0
  %258 = vadd.xlane.f32.xlu0 %v257
  %v259 = vpop.xlane.xlu0 %258
  %v260 = vsel %vm60, %v224, 0.0
  %261 = vadd.xlane.f32.xlu0 %v260
  %v262 = vpop.xlane.xlu0 %261
  %v263 = vsel %vm60, %v225, 0.0
  %264 = vadd.xlane.f32.xlu0 %v263
  %v265 = vpop.xlane.xlu0 %264
  %v266 = vsel %vm60, %v226, 0.0
  %267 = vadd.xlane.f32.xlu0 %v266
  %v268 = vpop.xlane.xlu0 %267
  %v269 = vsel %vm60, %v227, 0.0
  %270 = vadd.xlane.f32.xlu0 %v269
  %v271 = vpop.xlane.xlu0 %270
  %v272 = vsel %vm60, %v228, 0.0
  %273 = vadd.xlane.f32.xlu0 %v272
  %v274 = vpop.xlane.xlu0 %273
  %v275 = vsel %vm60, %v229, 0.0
  %276 = vadd.xlane.f32.xlu0 %v275
  %v277 = vpop.xlane.xlu0 %276
  %v278 = vsel %vm60, %v230, 0.0
  %279 = vadd.xlane.f32.xlu0 %v278
  %v280 = vpop.xlane.xlu0 %279
  %v281 = vsel %vm60, %v231, 0.0
  %282 = vadd.xlane.f32.xlu0 %v281
  %v283 = vpop.xlane.xlu0 %282
  %v284 = vsel %vm60, %v232, 0.0
  %285 = vadd.xlane.f32.xlu0 %v284
  %v286 = vpop.xlane.xlu0 %285
  %v287 = vsel %vm60, %v233, 0.0
  %288 = vadd.xlane.f32.xlu0 %v287
  %v289 = vpop.xlane.xlu0 %288
  %v290 = vsel %vm60, %v234, 0.0
  %291 = vadd.xlane.f32.xlu0 %v290
  %v292 = vpop.xlane.xlu0 %291
  %v293 = vsel %vm60, %v235, 0.0
  %294 = vadd.xlane.f32.xlu0 %v293
  %v295 = vpop.xlane.xlu0 %294
  %v296 = vsel %vm60, %v236, 0.0
  %297 = vadd.xlane.f32.xlu0 %v296
  %v298 = vpop.xlane.xlu0 %297
  %v299 = vsel %vm60, %v237, 0.0
  %300 = vadd.xlane.f32.xlu0 %v299
  %v301 = vpop.xlane.xlu0 %300
  %v302 = vsel %vm60, %v238, 0.0
  %303 = vadd.xlane.f32.xlu0 %v302
  %v304 = vpop.xlane.xlu0 %303
  %v305 = vsel %vm60, %v239, 0.0
  %306 = vadd.xlane.f32.xlu0 %v305
  %v307 = vpop.xlane.xlu0 %306
  %v308 = vsel %vm60, %v240, 0.0
  %309 = vadd.xlane.f32.xlu0 %v308
  %v310 = vpop.xlane.xlu0 %309
  %v311 = vsel %vm60, %v241, 0.0
  %312 = vadd.xlane.f32.xlu0 %v311
  %v313 = vpop.xlane.xlu0 %312
  %v314 = vsel %vm60, %v242, 0.0
  %315 = vadd.xlane.f32.xlu0 %v314
  %v316 = vpop.xlane.xlu0 %315
  %v317 = vsel %vm60, %v243, 0.0
  %318 = vadd.xlane.f32.xlu0 %v317
  %v319 = vpop.xlane.xlu0 %318
  %v320 = vsel %vm60, %v244, 0.0
  %321 = vadd.xlane.f32.xlu0 %v320
  %v322 = vpop.xlane.xlu0 %321
  %v323 = vsel %vm60, %v245, 0.0
  %324 = vadd.xlane.f32.xlu0 %v323
  %v325 = vpop.xlane.xlu0 %324
  %v326 = vsel %vm60, %v246, 0.0
  %327 = vadd.xlane.f32.xlu0 %v326
  %v328 = vpop.xlane.xlu0 %327
  %v329 = vsel %vm60, %v247, 0.0
  %330 = vadd.xlane.f32.xlu0 %v329
  %v331 = vpop.xlane.xlu0 %330
  %v332 = vsel %vm60, %v248, 0.0
  %333 = vadd.xlane.f32.xlu0 %v332
  %v334 = vpop.xlane.xlu0 %333
  %v335 = vsel %vm60, %v249, 0.0
  %336 = vadd.xlane.f32.xlu0 %v335
  %v337 = vpop.xlane.xlu0 %336
  %v338 = vsel %vm60, %v250, 0.0
  %339 = vadd.xlane.f32.xlu0 %v338
  %v340 = vpop.xlane.xlu0 %339
  %v341 = vsel %vm60, %v251, 0.0
  %342 = vadd.xlane.f32.xlu0 %v341
  %v343 = vpop.xlane.xlu0 %342
  %v344 = vsel %vm60, %v252, 0.0
  %345 = vadd.xlane.f32.xlu0 %v344
  %v346 = vpop.xlane.xlu0 %345
  %v347 = vsel %vm60, %v253, 0.0
  %348 = vadd.xlane.f32.xlu0 %v347
  %v349 = vpop.xlane.xlu0 %348
  %v350 = vmul.f32 %v256, %v157
  %v351 = vmul.f32 %v259, %v157
  %v352 = vmul.f32 %v262, %v157
  %v353 = vmul.f32 %v265, %v157
  %v354 = vmul.f32 %v268, %v157
  %v355 = vmul.f32 %v271, %v157
  %v356 = vmul.f32 %v274, %v157
  %v357 = vmul.f32 %v277, %v157
  %v358 = vmul.f32 %v280, %v157
  %v359 = vmul.f32 %v283, %v157
  %v360 = vmul.f32 %v286, %v157
  %v361 = vmul.f32 %v289, %v157
  %v362 = vmul.f32 %v292, %v157
  %v363 = vmul.f32 %v295, %v157
  %v364 = vmul.f32 %v298, %v157
  %v365 = vmul.f32 %v301, %v157
  %v366 = vmul.f32 %v304, %v157
  %v367 = vmul.f32 %v307, %v157
  %v368 = vmul.f32 %v310, %v157
  %v369 = vmul.f32 %v313, %v157
  %v370 = vmul.f32 %v316, %v157
  %v371 = vmul.f32 %v319, %v157
  %v372 = vmul.f32 %v322, %v157
  %v373 = vmul.f32 %v325, %v157
  %v374 = vmul.f32 %v328, %v157
  %v375 = vmul.f32 %v331, %v157
  %v376 = vmul.f32 %v334, %v157
  %v377 = vmul.f32 %v337, %v157
  %v378 = vmul.f32 %v340, %v157
  %v379 = vmul.f32 %v343, %v157
  %v380 = vmul.f32 %v346, %v157
  %v381 = vmul.f32 %v349, %v157
  %v382 = vadd.f32 %v350, 1e-05
  %v383 = vadd.f32 %v351, 1e-05
  %v384 = vadd.f32 %v352, 1e-05
  %v385 = vadd.f32 %v353, 1e-05
  %v386 = vadd.f32 %v354, 1e-05
  %v387 = vadd.f32 %v355, 1e-05
  %v388 = vadd.f32 %v356, 1e-05
  %v389 = vadd.f32 %v357, 1e-05
  %v390 = vadd.f32 %v358, 1e-05
  %v391 = vadd.f32 %v359, 1e-05
  %v392 = vadd.f32 %v360, 1e-05
  %v393 = vadd.f32 %v361, 1e-05
  %v394 = vadd.f32 %v362, 1e-05
  %v395 = vadd.f32 %v363, 1e-05
  %v396 = vadd.f32 %v364, 1e-05
  %v397 = vadd.f32 %v365, 1e-05
  %v398 = vadd.f32 %v366, 1e-05
  %v399 = vadd.f32 %v367, 1e-05
  %v400 = vadd.f32 %v368, 1e-05
  %v401 = vadd.f32 %v369, 1e-05
  %v402 = vadd.f32 %v370, 1e-05
  %v403 = vadd.f32 %v371, 1e-05
  %v404 = vadd.f32 %v372, 1e-05
  %v405 = vadd.f32 %v373, 1e-05
  %v406 = vadd.f32 %v374, 1e-05
  %v407 = vadd.f32 %v375, 1e-05
  %v408 = vadd.f32 %v376, 1e-05
  %v409 = vadd.f32 %v377, 1e-05
  %v410 = vadd.f32 %v378, 1e-05
  %v411 = vadd.f32 %v379, 1e-05
  %v412 = vadd.f32 %v380, 1e-05
  %v413 = vadd.f32 %v381, 1e-05
  %v414 = vrsqrt.pop %v382
  %v415 = vrsqrt.pop %v383
  %v416 = vrsqrt.pop %v384
  %v417 = vrsqrt.pop %v385
  %v418 = vrsqrt.pop %v386
  %v419 = vrsqrt.pop %v387
  %v420 = vrsqrt.pop %v388
  %v421 = vrsqrt.pop %v389
  %v422 = vrsqrt.pop %v390
  %v423 = vrsqrt.pop %v391
  %v424 = vrsqrt.pop %v392
  %v425 = vrsqrt.pop %v393
  %v426 = vrsqrt.pop %v394
  %v427 = vrsqrt.pop %v395
  %v428 = vrsqrt.pop %v396
  %v429 = vrsqrt.pop %v397
  %v430 = vrsqrt.pop %v398
  %v431 = vrsqrt.pop %v399
  %v432 = vrsqrt.pop %v400
  %v433 = vrsqrt.pop %v401
  %v434 = vrsqrt.pop %v402
  %v435 = vrsqrt.pop %v403
  %v436 = vrsqrt.pop %v404
  %v437 = vrsqrt.pop %v405
  %v438 = vrsqrt.pop %v406
  %v439 = vrsqrt.pop %v407
  %v440 = vrsqrt.pop %v408
  %v441 = vrsqrt.pop %v409
  %v442 = vrsqrt.pop %v410
  %v443 = vrsqrt.pop %v411
  %v444 = vrsqrt.pop %v412
  %v445 = vrsqrt.pop %v413
  %v446 = vmul.f32 %v190, %v414
  %v447 = vmul.f32 %v191, %v415
  %v448 = vmul.f32 %v192, %v416
  %v449 = vmul.f32 %v193, %v417
  %v450 = vmul.f32 %v194, %v418
  %v451 = vmul.f32 %v195, %v419
  %v452 = vmul.f32 %v196, %v420
  %v453 = vmul.f32 %v197, %v421
  %v454 = vmul.f32 %v198, %v422
  %v455 = vmul.f32 %v199, %v423
  %v456 = vmul.f32 %v200, %v424
  %v457 = vmul.f32 %v201, %v425
  %v458 = vmul.f32 %v202, %v426
  %v459 = vmul.f32 %v203, %v427
  %v460 = vmul.f32 %v204, %v428
  %v461 = vmul.f32 %v205, %v429
  %v462 = vmul.f32 %v206, %v430
  %v463 = vmul.f32 %v207, %v431
  %v464 = vmul.f32 %v208, %v432
  %v465 = vmul.f32 %v209, %v433
  %v466 = vmul.f32 %v210, %v434
  %v467 = vmul.f32 %v211, %v435
  %v468 = vmul.f32 %v212, %v436
  %v469 = vmul.f32 %v213, %v437
  %v470 = vmul.f32 %v214, %v438
  %v471 = vmul.f32 %v215, %v439
  %v472 = vmul.f32 %v216, %v440
  %v473 = vmul.f32 %v217, %v441
  %v474 = vmul.f32 %v218, %v442
  %v475 = vmul.f32 %v219, %v443
  %v476 = vmul.f32 %v220, %v444
  %v477 = vmul.f32 %v221, %v445
  %v479 = vlaneseq
  %v480 = vshrl.u32 %v479, 7
  %v481 = vsub.s32 0, %v480
  %v482 = vrot.slane %v58, %v481
  %v484 = vmul.f32 %v446, %v482
  %v485 = vmul.f32 %v447, %v482
  %v486 = vmul.f32 %v448, %v482
  %v487 = vmul.f32 %v449, %v482
  %v488 = vmul.f32 %v450, %v482
  %v489 = vmul.f32 %v451, %v482
  %v490 = vmul.f32 %v452, %v482
  %v491 = vmul.f32 %v453, %v482
  %v492 = vmul.f32 %v454, %v482
  %v493 = vmul.f32 %v455, %v482
  %v494 = vmul.f32 %v456, %v482
  %v495 = vmul.f32 %v457, %v482
  %v496 = vmul.f32 %v458, %v482
  %v497 = vmul.f32 %v459, %v482
  %v498 = vmul.f32 %v460, %v482
  %v499 = vmul.f32 %v461, %v482
  %v500 = vmul.f32 %v462, %v482
  %v501 = vmul.f32 %v463, %v482
  %v502 = vmul.f32 %v464, %v482
  %v503 = vmul.f32 %v465, %v482
  %v504 = vmul.f32 %v466, %v482
  %v505 = vmul.f32 %v467, %v482
  %v506 = vmul.f32 %v468, %v482
  %v507 = vmul.f32 %v469, %v482
  %v508 = vmul.f32 %v470, %v482
  %v509 = vmul.f32 %v471, %v482
  %v510 = vmul.f32 %v472, %v482
  %v511 = vmul.f32 %v473, %v482
  %v512 = vmul.f32 %v474, %v482
  %v513 = vmul.f32 %v475, %v482
  %v514 = vmul.f32 %v476, %v482
  %v515 = vmul.f32 %v477, %v482
  %v517 = vlaneseq
  %v518 = vshrl.u32 %v517, 7
  %v519 = vsub.s32 0, %v518
  %v520 = vrot.slane %v59, %v519
  %v522 = vadd.f32 %v484, %v520
  %v523 = vadd.f32 %v485, %v520
  %v524 = vadd.f32 %v486, %v520
  %v525 = vadd.f32 %v487, %v520
  %v526 = vadd.f32 %v488, %v520
  %v527 = vadd.f32 %v489, %v520
  %v528 = vadd.f32 %v490, %v520
  %v529 = vadd.f32 %v491, %v520
  %v530 = vadd.f32 %v492, %v520
  %v531 = vadd.f32 %v493, %v520
  %v532 = vadd.f32 %v494, %v520
  %v533 = vadd.f32 %v495, %v520
  %v534 = vadd.f32 %v496, %v520
  %v535 = vadd.f32 %v497, %v520
  %v536 = vadd.f32 %v498, %v520
  %v537 = vadd.f32 %v499, %v520
  %v538 = vadd.f32 %v500, %v520
  %v539 = vadd.f32 %v501, %v520
  %v540 = vadd.f32 %v502, %v520
  %v541 = vadd.f32 %v503, %v520
  %v542 = vadd.f32 %v504, %v520
  %v543 = vadd.f32 %v505, %v520
  %v544 = vadd.f32 %v506, %v520
  %v545 = vadd.f32 %v507, %v520
  %v546 = vadd.f32 %v508, %v520
  %v547 = vadd.f32 %v509, %v520
  %v548 = vadd.f32 %v510, %v520
  %v549 = vadd.f32 %v511, %v520
  %v550 = vadd.f32 %v512, %v520
  %v551 = vadd.f32 %v513, %v520
  %v552 = vadd.f32 %v514, %v520
  %v553 = vadd.f32 %v515, %v520
  %v554 = vld [vmem:[%s3] sm:$0xff]
  %v555 = vld [vmem:[%s3 + $0x8] sm:$0xff]
  %v556 = vld [vmem:[%s3 + $0x10] sm:$0x3]
  %v557 = vld [vmem:[%s4] sm:$0x1]
  %v559 = vlaneseq
  %v560 = vshrl.u32 %v559, 7
  %v561 = vsub.s32 0, %v560
  %v562 = vrot.slane %v557, %v561
  %v565 = vsel %vm60, %v522, 0
  %v568 = vsel %vm60, %v523, 0
  %v571 = vsel %vm60, %v524, 0
  %v574 = vsel %vm60, %v525, 0
  %v577 = vsel %vm60, %v526, 0
  %v580 = vsel %vm60, %v527, 0
  %v583 = vsel %vm60, %v528, 0
  %v586 = vsel %vm60, %v529, 0
  %v589 = vsel %vm60, %v530, 0
  %v592 = vsel %vm60, %v531, 0
  %v595 = vsel %vm60, %v532, 0
  %v598 = vsel %vm60, %v533, 0
  %v601 = vsel %vm60, %v534, 0
  %v604 = vsel %vm60, %v535, 0
  %v607 = vsel %vm60, %v536, 0
  %v610 = vsel %vm60, %v537, 0
  %v613 = vsel %vm60, %v538, 0
  %v616 = vsel %vm60, %v539, 0
  %v619 = vsel %vm60, %v540, 0
  %v622 = vsel %vm60, %v541, 0
  %v625 = vsel %vm60, %v542, 0
  %v628 = vsel %vm60, %v543, 0
  %v631 = vsel %vm60, %v544, 0
  %v634 = vsel %vm60, %v545, 0
  %v637 = vsel %vm60, %v546, 0
  %v640 = vsel %vm60, %v547, 0
  %v643 = vsel %vm60, %v548, 0
  %v646 = vsel %vm60, %v549, 0
  %v649 = vsel %vm60, %v550, 0
  %v652 = vsel %vm60, %v551, 0
  %v655 = vsel %vm60, %v552, 0
  %v658 = vsel %vm60, %v553, 0
  %vm660 = vcmask 1041408
  %v662 = vsel %vm660, %v556, 0
  %664 = vmatprep.subr.mxu0 0.0
  %665 = vmatpush1.msra.mxu0 0.0
  %666 = vmatprep.subr.mxu0 0.0
  %667 = vmatpush1.msra.mxu0 0.0
  %668 = vmatprep.subr.mxu0 0.0
  %669 = vmatpush1.msra.mxu0 0.0
  %670 = vmatprep.subr.mxu0 0.0
  %671 = vmatpush1.msra.mxu0 0.0
  %672 = vmatprep.subr.mxu0 0.0
  %673 = vmatpush1.msra.mxu0 0.0
  %674 = vmatprep.subr.mxu0 0.0
  %675 = vmatpush1.msra.mxu0 0.0
  %676 = vmatprep.subr.mxu0 0.0
  %677 = vmatpush1.msra.mxu0 0.0
  %678 = vmatprep.subr.mxu0 0.0
  %679 = vmatpush1.msra.mxu0 0.0
  %680 = vmatprep.subr.mxu0 0.0
  %681 = vmatpush1.msra.mxu0 0.0
  %682 = vmatprep.subr.mxu0 0.0
  %683 = vmatpush1.msra.mxu0 0.0
  %684 = vmatprep.subr.mxu0 0.0
  %685 = vmatpush1.msra.mxu0 0.0
  %686 = vmatprep.subr.mxu0 0.0
  %687 = vmatpush1.msra.mxu0 0.0
  %688 = vmatprep.subr.mxu0 0.0
  %689 = vmatpush1.msra.mxu0 0.0
  %690 = vmatprep.subr.mxu0 0.0
  %691 = vmatpush1.msra.mxu0 %v662
  %692 = vmatprep.subr.mxu0 0.0
  %693 = vmatpush1.msra.mxu0 %v555
  %694 = vmatprep.subr.mxu0 0.0
  %695 = vmatpush1.msra.mxu0 %v554
  %696 = vmatprep.subr.mxu0 0.0
  %697 = vmatpush2.msra.mxu0 0.0
  %698 = vmatprep.subr.mxu0 0.0
  %699 = vmatpush2.msra.mxu0 0.0
  %700 = vmatprep.subr.mxu0 0.0
  %701 = vmatpush2.msra.mxu0 0.0
  %702 = vmatprep.subr.mxu0 0.0
  %703 = vmatpush2.msra.mxu0 0.0
  %704 = vmatprep.subr.mxu0 0.0
  %705 = vmatpush2.msra.mxu0 0.0
  %706 = vmatprep.subr.mxu0 0.0
  %707 = vmatpush2.msra.mxu0 0.0
  %708 = vmatprep.subr.mxu0 0.0
  %709 = vmatpush2.msra.mxu0 0.0
  %710 = vmatprep.subr.mxu0 0.0
  %711 = vmatpush2.msra.mxu0 0.0
  %712 = vmatprep.subr.mxu0 0.0
  %713 = vmatpush2.msra.mxu0 0.0
  %714 = vmatprep.subr.mxu0 0.0
  %715 = vmatpush2.msra.mxu0 0.0
  %716 = vmatprep.subr.mxu0 0.0
  %717 = vmatpush2.msra.mxu0 0.0
  %718 = vmatprep.subr.mxu0 0.0
  %719 = vmatpush2.msra.mxu0 0.0
  %720 = vmatprep.subr.mxu0 0.0
  %721 = vmatpush2.msra.mxu0 0.0
  %722 = vmatprep.subr.mxu0 0.0
  %723 = vmatpush2.msra.mxu0 0.0
  %724 = vmatprep.subr.mxu0 0.0
  %725 = vmatpush2.msra.mxu0 0.0
  %726 = vmatprep.subr.mxu0 0.0
  %727 = vmatpush2.msra.mxu0 0.0
  %728 = vmatprep.mubr.f32.mxu0 0.0
  %729 = vmatmul.mubr.f32.gmra.mxu0 %v565
  %v730 = vpop.f32.mrf.mxu0
  %v731 = vadd.f32 %v562, %v730
  %v732 = vpop.f32.mrf.mxu0
  %733 = vmatprep.mubr.f32.mxu0 0.0
  %734 = vmatmul.mubr.f32.gmra.mxu0 %v568
  %v735 = vpop.f32.mrf.mxu0
  %v736 = vadd.f32 %v562, %v735
  %v737 = vpop.f32.mrf.mxu0
  %738 = vmatprep.mubr.f32.mxu0 0.0
  %739 = vmatmul.mubr.f32.gmra.mxu0 %v571
  %v740 = vpop.f32.mrf.mxu0
  %v741 = vadd.f32 %v562, %v740
  %v742 = vpop.f32.mrf.mxu0
  %743 = vmatprep.mubr.f32.mxu0 0.0
  %744 = vmatmul.mubr.f32.gmra.mxu0 %v574
  %v745 = vpop.f32.mrf.mxu0
  %v746 = vadd.f32 %v562, %v745
  %v747 = vpop.f32.mrf.mxu0
  %748 = vmatprep.mubr.f32.mxu0 0.0
  %749 = vmatmul.mubr.f32.gmra.mxu0 %v577
  %v750 = vpop.f32.mrf.mxu0
  %v751 = vadd.f32 %v562, %v750
  %v752 = vpop.f32.mrf.mxu0
  %753 = vmatprep.mubr.f32.mxu0 0.0
  %754 = vmatmul.mubr.f32.gmra.mxu0 %v580
  %v755 = vpop.f32.mrf.mxu0
  %v756 = vadd.f32 %v562, %v755
  %v757 = vpop.f32.mrf.mxu0
  %758 = vmatprep.mubr.f32.mxu0 0.0
  %759 = vmatmul.mubr.f32.gmra.mxu0 %v583
  %v760 = vpop.f32.mrf.mxu0
  %v761 = vadd.f32 %v562, %v760
  %v762 = vpop.f32.mrf.mxu0
  %763 = vmatprep.mubr.f32.mxu0 0.0
  %764 = vmatmul.mubr.f32.gmra.mxu0 %v586
  %v765 = vpop.f32.mrf.mxu0
  %v766 = vadd.f32 %v562, %v765
  %v767 = vpop.f32.mrf.mxu0
  %768 = vmatprep.mubr.f32.mxu0 0.0
  %769 = vmatmul.mubr.f32.gmra.mxu0 %v589
  %v770 = vpop.f32.mrf.mxu0
  %v771 = vadd.f32 %v562, %v770
  %v772 = vpop.f32.mrf.mxu0
  %773 = vmatprep.mubr.f32.mxu0 0.0
  %774 = vmatmul.mubr.f32.gmra.mxu0 %v592
  %v775 = vpop.f32.mrf.mxu0
  %v776 = vadd.f32 %v562, %v775
  %v777 = vpop.f32.mrf.mxu0
  %778 = vmatprep.mubr.f32.mxu0 0.0
  %779 = vmatmul.mubr.f32.gmra.mxu0 %v595
  %v780 = vpop.f32.mrf.mxu0
  %v781 = vadd.f32 %v562, %v780
  %v782 = vpop.f32.mrf.mxu0
  %783 = vmatprep.mubr.f32.mxu0 0.0
  %784 = vmatmul.mubr.f32.gmra.mxu0 %v598
  %v785 = vpop.f32.mrf.mxu0
  %v786 = vadd.f32 %v562, %v785
  %v787 = vpop.f32.mrf.mxu0
  %788 = vmatprep.mubr.f32.mxu0 0.0
  %789 = vmatmul.mubr.f32.gmra.mxu0 %v601
  %v790 = vpop.f32.mrf.mxu0
  %v791 = vadd.f32 %v562, %v790
  %v792 = vpop.f32.mrf.mxu0
  %793 = vmatprep.mubr.f32.mxu0 0.0
  %794 = vmatmul.mubr.f32.gmra.mxu0 %v604
  %v795 = vpop.f32.mrf.mxu0
  %v796 = vadd.f32 %v562, %v795
  %v797 = vpop.f32.mrf.mxu0
  %798 = vmatprep.mubr.f32.mxu0 0.0
  %799 = vmatmul.mubr.f32.gmra.mxu0 %v607
  %v800 = vpop.f32.mrf.mxu0
  %v801 = vadd.f32 %v562, %v800
  %v802 = vpop.f32.mrf.mxu0
  %803 = vmatprep.mubr.f32.mxu0 0.0
  %804 = vmatmul.mubr.f32.gmra.mxu0 %v610
  %v805 = vpop.f32.mrf.mxu0
  %v806 = vadd.f32 %v562, %v805
  %v807 = vpop.f32.mrf.mxu0
  %808 = vmatprep.mubr.f32.mxu0 0.0
  %809 = vmatmul.mubr.f32.gmra.mxu0 %v613
  %v810 = vpop.f32.mrf.mxu0
  %v811 = vadd.f32 %v562, %v810
  %v812 = vpop.f32.mrf.mxu0
  %813 = vmatprep.mubr.f32.mxu0 0.0
  %814 = vmatmul.mubr.f32.gmra.mxu0 %v616
  %v815 = vpop.f32.mrf.mxu0
  %v816 = vadd.f32 %v562, %v815
  %v817 = vpop.f32.mrf.mxu0
  %818 = vmatprep.mubr.f32.mxu0 0.0
  %819 = vmatmul.mubr.f32.gmra.mxu0 %v619
  %v820 = vpop.f32.mrf.mxu0
  %v821 = vadd.f32 %v562, %v820
  %v822 = vpop.f32.mrf.mxu0
  %823 = vmatprep.mubr.f32.mxu0 0.0
  %824 = vmatmul.mubr.f32.gmra.mxu0 %v622
  %v825 = vpop.f32.mrf.mxu0
  %v826 = vadd.f32 %v562, %v825
  %v827 = vpop.f32.mrf.mxu0
  %828 = vmatprep.mubr.f32.mxu0 0.0
  %829 = vmatmul.mubr.f32.gmra.mxu0 %v625
  %v830 = vpop.f32.mrf.mxu0
  %v831 = vadd.f32 %v562, %v830
  %v832 = vpop.f32.mrf.mxu0
  %833 = vmatprep.mubr.f32.mxu0 0.0
  %834 = vmatmul.mubr.f32.gmra.mxu0 %v628
  %v835 = vpop.f32.mrf.mxu0
  %v836 = vadd.f32 %v562, %v835
  %v837 = vpop.f32.mrf.mxu0
  %838 = vmatprep.mubr.f32.mxu0 0.0
  %839 = vmatmul.mubr.f32.gmra.mxu0 %v631
  %v840 = vpop.f32.mrf.mxu0
  %v841 = vadd.f32 %v562, %v840
  %v842 = vpop.f32.mrf.mxu0
  %843 = vmatprep.mubr.f32.mxu0 0.0
  %844 = vmatmul.mubr.f32.gmra.mxu0 %v634
  %v845 = vpop.f32.mrf.mxu0
  %v846 = vadd.f32 %v562, %v845
  %v847 = vpop.f32.mrf.mxu0
  %848 = vmatprep.mubr.f32.mxu0 0.0
  %849 = vmatmul.mubr.f32.gmra.mxu0 %v637
  %v850 = vpop.f32.mrf.mxu0
  %v851 = vadd.f32 %v562, %v850
  %v852 = vpop.f32.mrf.mxu0
  %853 = vmatprep.mubr.f32.mxu0 0.0
  %854 = vmatmul.mubr.f32.gmra.mxu0 %v640
  %v855 = vpop.f32.mrf.mxu0
  %v856 = vadd.f32 %v562, %v855
  %v857 = vpop.f32.mrf.mxu0
  %858 = vmatprep.mubr.f32.mxu0 0.0
  %859 = vmatmul.mubr.f32.gmra.mxu0 %v643
  %v860 = vpop.f32.mrf.mxu0
  %v861 = vadd.f32 %v562, %v860
  %v862 = vpop.f32.mrf.mxu0
  %863 = vmatprep.mubr.f32.mxu0 0.0
  %864 = vmatmul.mubr.f32.gmra.mxu0 %v646
  %v865 = vpop.f32.mrf.mxu0
  %v866 = vadd.f32 %v562, %v865
  %v867 = vpop.f32.mrf.mxu0
  %868 = vmatprep.mubr.f32.mxu0 0.0
  %869 = vmatmul.mubr.f32.gmra.mxu0 %v649
  %v870 = vpop.f32.mrf.mxu0
  %v871 = vadd.f32 %v562, %v870
  %v872 = vpop.f32.mrf.mxu0
  %873 = vmatprep.mubr.f32.mxu0 0.0
  %874 = vmatmul.mubr.f32.gmra.mxu0 %v652
  %v875 = vpop.f32.mrf.mxu0
  %v876 = vadd.f32 %v562, %v875
  %v877 = vpop.f32.mrf.mxu0
  %878 = vmatprep.mubr.f32.mxu0 0.0
  %879 = vmatmul.mubr.f32.gmra.mxu0 %v655
  %v880 = vpop.f32.mrf.mxu0
  %v881 = vadd.f32 %v562, %v880
  %v882 = vpop.f32.mrf.mxu0
  %883 = vmatprep.mubr.f32.mxu0 0.0
  %884 = vmatmul.mubr.f32.gmra.mxu0 %v658
  %v885 = vpop.f32.mrf.mxu0
  %v886 = vadd.f32 %v562, %v885
  %v887 = vpop.f32.mrf.mxu0
  %888 = vdwg.mxu0
  %v889 = vmax.f32 %v731, 0.0
  %v890 = vmax.f32 %v736, 0.0
  %v891 = vmax.f32 %v741, 0.0
  %v892 = vmax.f32 %v746, 0.0
  %v893 = vmax.f32 %v751, 0.0
  %v894 = vmax.f32 %v756, 0.0
  %v895 = vmax.f32 %v761, 0.0
  %v896 = vmax.f32 %v766, 0.0
  %v897 = vmax.f32 %v771, 0.0
  %v898 = vmax.f32 %v776, 0.0
  %v899 = vmax.f32 %v781, 0.0
  %v900 = vmax.f32 %v786, 0.0
  %v901 = vmax.f32 %v791, 0.0
  %v902 = vmax.f32 %v796, 0.0
  %v903 = vmax.f32 %v801, 0.0
  %v904 = vmax.f32 %v806, 0.0
  %v905 = vmax.f32 %v811, 0.0
  %v906 = vmax.f32 %v816, 0.0
  %v907 = vmax.f32 %v821, 0.0
  %v908 = vmax.f32 %v826, 0.0
  %v909 = vmax.f32 %v831, 0.0
  %v910 = vmax.f32 %v836, 0.0
  %v911 = vmax.f32 %v841, 0.0
  %v912 = vmax.f32 %v846, 0.0
  %v913 = vmax.f32 %v851, 0.0
  %v914 = vmax.f32 %v856, 0.0
  %v915 = vmax.f32 %v861, 0.0
  %v916 = vmax.f32 %v866, 0.0
  %v917 = vmax.f32 %v871, 0.0
  %v918 = vmax.f32 %v876, 0.0
  %v919 = vmax.f32 %v881, 0.0
  %v920 = vmax.f32 %v886, 0.0
  %v921 = vld [vmem:[%s5] sm:$0xff]
  %v922 = vld [vmem:[%s5 + $0x8] sm:$0xff]
  %v923 = vld [vmem:[%s5 + $0x10] sm:$0xff]
  %v924 = vld [vmem:[%s5 + $0x18] sm:$0xff]
  %v925 = vld [vmem:[%s5 + $0x20] sm:$0xff]
  %v926 = vld [vmem:[%s5 + $0x28] sm:$0xff]
  %v927 = vld [vmem:[%s5 + $0x30] sm:$0xff]
  %v928 = vld [vmem:[%s5 + $0x38] sm:$0xff]
  %v929 = vld [vmem:[%s6] sm:$0x1]
  %v931 = vlaneseq
  %v932 = vshrl.u32 %v931, 7
  %v933 = vsub.s32 0, %v932
  %v934 = vrot.slane %v929, %v933
  %vm936 = vcmask 523264
  %v938 = vsel %vm936, %v889, 0
  %v941 = vsel %vm936, %v890, 0
  %v944 = vsel %vm936, %v891, 0
  %v947 = vsel %vm936, %v892, 0
  %v950 = vsel %vm936, %v893, 0
  %v953 = vsel %vm936, %v894, 0
  %v956 = vsel %vm936, %v895, 0
  %v959 = vsel %vm936, %v896, 0
  %v962 = vsel %vm936, %v897, 0
  %v965 = vsel %vm936, %v898, 0
  %v968 = vsel %vm936, %v899, 0
  %v971 = vsel %vm936, %v900, 0
  %v974 = vsel %vm936, %v901, 0
  %v977 = vsel %vm936, %v902, 0
  %v980 = vsel %vm936, %v903, 0
  %v983 = vsel %vm936, %v904, 0
  %v986 = vsel %vm936, %v905, 0
  %v989 = vsel %vm936, %v906, 0
  %v992 = vsel %vm936, %v907, 0
  %v995 = vsel %vm936, %v908, 0
  %v998 = vsel %vm936, %v909, 0
  %v1001 = vsel %vm936, %v910, 0
  %v1004 = vsel %vm936, %v911, 0
  %v1007 = vsel %vm936, %v912, 0
  %v1010 = vsel %vm936, %v913, 0
  %v1013 = vsel %vm936, %v914, 0
  %v1016 = vsel %vm936, %v915, 0
  %v1019 = vsel %vm936, %v916, 0
  %v1022 = vsel %vm936, %v917, 0
  %v1025 = vsel %vm936, %v918, 0
  %v1028 = vsel %vm936, %v919, 0
  %v1031 = vsel %vm936, %v920, 0
  %1033 = vmatprep.subr.mxu0 0.0
  %1034 = vmatpush1.msra.mxu0 0.0
  %1035 = vmatprep.subr.mxu0 0.0
  %1036 = vmatpush1.msra.mxu0 0.0
  %1037 = vmatprep.subr.mxu0 0.0
  %1038 = vmatpush1.msra.mxu0 0.0
  %1039 = vmatprep.subr.mxu0 0.0
  %1040 = vmatpush1.msra.mxu0 0.0
  %1041 = vmatprep.subr.mxu0 0.0
  %1042 = vmatpush1.msra.mxu0 0.0
  %1043 = vmatprep.subr.mxu0 0.0
  %1044 = vmatpush1.msra.mxu0 0.0
  %1045 = vmatprep.subr.mxu0 0.0
  %1046 = vmatpush1.msra.mxu0 0.0
  %1047 = vmatprep.subr.mxu0 0.0
  %1048 = vmatpush1.msra.mxu0 0.0
  %1049 = vmatprep.subr.mxu0 0.0
  %1050 = vmatpush1.msra.mxu0 %v928
  %1051 = vmatprep.subr.mxu0 0.0
  %1052 = vmatpush1.msra.mxu0 %v927
  %1053 = vmatprep.subr.mxu0 0.0
  %1054 = vmatpush1.msra.mxu0 %v926
  %1055 = vmatprep.subr.mxu0 0.0
  %1056 = vmatpush1.msra.mxu0 %v925
  %1057 = vmatprep.subr.mxu0 0.0
  %1058 = vmatpush1.msra.mxu0 %v924
  %1059 = vmatprep.subr.mxu0 0.0
  %1060 = vmatpush1.msra.mxu0 %v923
  %1061 = vmatprep.subr.mxu0 0.0
  %1062 = vmatpush1.msra.mxu0 %v922
  %1063 = vmatprep.subr.mxu0 0.0
  %1064 = vmatpush1.msra.mxu0 %v921
  %1065 = vmatprep.subr.mxu0 0.0
  %1066 = vmatpush2.msra.mxu0 0.0
  %1067 = vmatprep.subr.mxu0 0.0
  %1068 = vmatpush2.msra.mxu0 0.0
  %1069 = vmatprep.subr.mxu0 0.0
  %1070 = vmatpush2.msra.mxu0 0.0
  %1071 = vmatprep.subr.mxu0 0.0
  %1072 = vmatpush2.msra.mxu0 0.0
  %1073 = vmatprep.subr.mxu0 0.0
  %1074 = vmatpush2.msra.mxu0 0.0
  %1075 = vmatprep.subr.mxu0 0.0
  %1076 = vmatpush2.msra.mxu0 0.0
  %1077 = vmatprep.subr.mxu0 0.0
  %1078 = vmatpush2.msra.mxu0 0.0
  %1079 = vmatprep.subr.mxu0 0.0
  %1080 = vmatpush2.msra.mxu0 0.0
  %1081 = vmatprep.subr.mxu0 0.0
  %1082 = vmatpush2.msra.mxu0 0.0
  %1083 = vmatprep.subr.mxu0 0.0
  %1084 = vmatpush2.msra.mxu0 0.0
  %1085 = vmatprep.subr.mxu0 0.0
  %1086 = vmatpush2.msra.mxu0 0.0
  %1087 = vmatprep.subr.mxu0 0.0
  %1088 = vmatpush2.msra.mxu0 0.0
  %1089 = vmatprep.subr.mxu0 0.0
  %1090 = vmatpush2.msra.mxu0 0.0
  %1091 = vmatprep.subr.mxu0 0.0
  %1092 = vmatpush2.msra.mxu0 0.0
  %1093 = vmatprep.subr.mxu0 0.0
  %1094 = vmatpush2.msra.mxu0 0.0
  %1095 = vmatprep.subr.mxu0 0.0
  %1096 = vmatpush2.msra.mxu0 0.0
  %1097 = vmatprep.mubr.f32.mxu0 0.0
  %1098 = vmatmul.mubr.f32.gmra.mxu0 %v938
  %v1099 = vpop.f32.mrf.mxu0
  %v1100 = vadd.f32 %v934, %v1099
  %v1101 = vpop.f32.mrf.mxu0
  %1102 = vmatprep.mubr.f32.mxu0 0.0
  %1103 = vmatmul.mubr.f32.gmra.mxu0 %v941
  %v1104 = vpop.f32.mrf.mxu0
  %v1105 = vadd.f32 %v934, %v1104
  %v1106 = vpop.f32.mrf.mxu0
  %1107 = vmatprep.mubr.f32.mxu0 0.0
  %1108 = vmatmul.mubr.f32.gmra.mxu0 %v944
  %v1109 = vpop.f32.mrf.mxu0
  %v1110 = vadd.f32 %v934, %v1109
  %v1111 = vpop.f32.mrf.mxu0
  %1112 = vmatprep.mubr.f32.mxu0 0.0
  %1113 = vmatmul.mubr.f32.gmra.mxu0 %v947
  %v1114 = vpop.f32.mrf.mxu0
  %v1115 = vadd.f32 %v934, %v1114
  %v1116 = vpop.f32.mrf.mxu0
  %1117 = vmatprep.mubr.f32.mxu0 0.0
  %1118 = vmatmul.mubr.f32.gmra.mxu0 %v950
  %v1119 = vpop.f32.mrf.mxu0
  %v1120 = vadd.f32 %v934, %v1119
  %v1121 = vpop.f32.mrf.mxu0
  %1122 = vmatprep.mubr.f32.mxu0 0.0
  %1123 = vmatmul.mubr.f32.gmra.mxu0 %v953
  %v1124 = vpop.f32.mrf.mxu0
  %v1125 = vadd.f32 %v934, %v1124
  %v1126 = vpop.f32.mrf.mxu0
  %1127 = vmatprep.mubr.f32.mxu0 0.0
  %1128 = vmatmul.mubr.f32.gmra.mxu0 %v956
  %v1129 = vpop.f32.mrf.mxu0
  %v1130 = vadd.f32 %v934, %v1129
  %v1131 = vpop.f32.mrf.mxu0
  %1132 = vmatprep.mubr.f32.mxu0 0.0
  %1133 = vmatmul.mubr.f32.gmra.mxu0 %v959
  %v1134 = vpop.f32.mrf.mxu0
  %v1135 = vadd.f32 %v934, %v1134
  %v1136 = vpop.f32.mrf.mxu0
  %1137 = vmatprep.mubr.f32.mxu0 0.0
  %1138 = vmatmul.mubr.f32.gmra.mxu0 %v962
  %v1139 = vpop.f32.mrf.mxu0
  %v1140 = vadd.f32 %v934, %v1139
  %v1141 = vpop.f32.mrf.mxu0
  %1142 = vmatprep.mubr.f32.mxu0 0.0
  %1143 = vmatmul.mubr.f32.gmra.mxu0 %v965
  %v1144 = vpop.f32.mrf.mxu0
  %v1145 = vadd.f32 %v934, %v1144
  %v1146 = vpop.f32.mrf.mxu0
  %1147 = vmatprep.mubr.f32.mxu0 0.0
  %1148 = vmatmul.mubr.f32.gmra.mxu0 %v968
  %v1149 = vpop.f32.mrf.mxu0
  %v1150 = vadd.f32 %v934, %v1149
  %v1151 = vpop.f32.mrf.mxu0
  %1152 = vmatprep.mubr.f32.mxu0 0.0
  %1153 = vmatmul.mubr.f32.gmra.mxu0 %v971
  %v1154 = vpop.f32.mrf.mxu0
  %v1155 = vadd.f32 %v934, %v1154
  %v1156 = vpop.f32.mrf.mxu0
  %1157 = vmatprep.mubr.f32.mxu0 0.0
  %1158 = vmatmul.mubr.f32.gmra.mxu0 %v974
  %v1159 = vpop.f32.mrf.mxu0
  %v1160 = vadd.f32 %v934, %v1159
  %v1161 = vpop.f32.mrf.mxu0
  %1162 = vmatprep.mubr.f32.mxu0 0.0
  %1163 = vmatmul.mubr.f32.gmra.mxu0 %v977
  %v1164 = vpop.f32.mrf.mxu0
  %v1165 = vadd.f32 %v934, %v1164
  %v1166 = vpop.f32.mrf.mxu0
  %1167 = vmatprep.mubr.f32.mxu0 0.0
  %1168 = vmatmul.mubr.f32.gmra.mxu0 %v980
  %v1169 = vpop.f32.mrf.mxu0
  %v1170 = vadd.f32 %v934, %v1169
  %v1171 = vpop.f32.mrf.mxu0
  %1172 = vmatprep.mubr.f32.mxu0 0.0
  %1173 = vmatmul.mubr.f32.gmra.mxu0 %v983
  %v1174 = vpop.f32.mrf.mxu0
  %v1175 = vadd.f32 %v934, %v1174
  %v1176 = vpop.f32.mrf.mxu0
  %1177 = vmatprep.mubr.f32.mxu0 0.0
  %1178 = vmatmul.mubr.f32.gmra.mxu0 %v986
  %v1179 = vpop.f32.mrf.mxu0
  %v1180 = vadd.f32 %v934, %v1179
  %v1181 = vpop.f32.mrf.mxu0
  %1182 = vmatprep.mubr.f32.mxu0 0.0
  %1183 = vmatmul.mubr.f32.gmra.mxu0 %v989
  %v1184 = vpop.f32.mrf.mxu0
  %v1185 = vadd.f32 %v934, %v1184
  %v1186 = vpop.f32.mrf.mxu0
  %1187 = vmatprep.mubr.f32.mxu0 0.0
  %1188 = vmatmul.mubr.f32.gmra.mxu0 %v992
  %v1189 = vpop.f32.mrf.mxu0
  %v1190 = vadd.f32 %v934, %v1189
  %v1191 = vpop.f32.mrf.mxu0
  %1192 = vmatprep.mubr.f32.mxu0 0.0
  %1193 = vmatmul.mubr.f32.gmra.mxu0 %v995
  %v1194 = vpop.f32.mrf.mxu0
  %v1195 = vadd.f32 %v934, %v1194
  %v1196 = vpop.f32.mrf.mxu0
  %1197 = vmatprep.mubr.f32.mxu0 0.0
  %1198 = vmatmul.mubr.f32.gmra.mxu0 %v998
  %v1199 = vpop.f32.mrf.mxu0
  %v1200 = vadd.f32 %v934, %v1199
  %v1201 = vpop.f32.mrf.mxu0
  %1202 = vmatprep.mubr.f32.mxu0 0.0
  %1203 = vmatmul.mubr.f32.gmra.mxu0 %v1001
  %v1204 = vpop.f32.mrf.mxu0
  %v1205 = vadd.f32 %v934, %v1204
  %v1206 = vpop.f32.mrf.mxu0
  %1207 = vmatprep.mubr.f32.mxu0 0.0
  %1208 = vmatmul.mubr.f32.gmra.mxu0 %v1004
  %v1209 = vpop.f32.mrf.mxu0
  %v1210 = vadd.f32 %v934, %v1209
  %v1211 = vpop.f32.mrf.mxu0
  %1212 = vmatprep.mubr.f32.mxu0 0.0
  %1213 = vmatmul.mubr.f32.gmra.mxu0 %v1007
  %v1214 = vpop.f32.mrf.mxu0
  %v1215 = vadd.f32 %v934, %v1214
  %v1216 = vpop.f32.mrf.mxu0
  %1217 = vmatprep.mubr.f32.mxu0 0.0
  %1218 = vmatmul.mubr.f32.gmra.mxu0 %v1010
  %v1219 = vpop.f32.mrf.mxu0
  %v1220 = vadd.f32 %v934, %v1219
  %v1221 = vpop.f32.mrf.mxu0
  %1222 = vmatprep.mubr.f32.mxu0 0.0
  %1223 = vmatmul.mubr.f32.gmra.mxu0 %v1013
  %v1224 = vpop.f32.mrf.mxu0
  %v1225 = vadd.f32 %v934, %v1224
  %v1226 = vpop.f32.mrf.mxu0
  %1227 = vmatprep.mubr.f32.mxu0 0.0
  %1228 = vmatmul.mubr.f32.gmra.mxu0 %v1016
  %v1229 = vpop.f32.mrf.mxu0
  %v1230 = vadd.f32 %v934, %v1229
  %v1231 = vpop.f32.mrf.mxu0
  %1232 = vmatprep.mubr.f32.mxu0 0.0
  %1233 = vmatmul.mubr.f32.gmra.mxu0 %v1019
  %v1234 = vpop.f32.mrf.mxu0
  %v1235 = vadd.f32 %v934, %v1234
  %v1236 = vpop.f32.mrf.mxu0
  %1237 = vmatprep.mubr.f32.mxu0 0.0
  %1238 = vmatmul.mubr.f32.gmra.mxu0 %v1022
  %v1239 = vpop.f32.mrf.mxu0
  %v1240 = vadd.f32 %v934, %v1239
  %v1241 = vpop.f32.mrf.mxu0
  %1242 = vmatprep.mubr.f32.mxu0 0.0
  %1243 = vmatmul.mubr.f32.gmra.mxu0 %v1025
  %v1244 = vpop.f32.mrf.mxu0
  %v1245 = vadd.f32 %v934, %v1244
  %v1246 = vpop.f32.mrf.mxu0
  %1247 = vmatprep.mubr.f32.mxu0 0.0
  %1248 = vmatmul.mubr.f32.gmra.mxu0 %v1028
  %v1249 = vpop.f32.mrf.mxu0
  %v1250 = vadd.f32 %v934, %v1249
  %v1251 = vpop.f32.mrf.mxu0
  %1252 = vmatprep.mubr.f32.mxu0 0.0
  %1253 = vmatmul.mubr.f32.gmra.mxu0 %v1031
  %v1254 = vpop.f32.mrf.mxu0
  %v1255 = vadd.f32 %v934, %v1254
  %v1256 = vpop.f32.mrf.mxu0
  %1257 = vdwg.mxu0
  %v1258 = vmax.f32 %v1100, 0.0
  %v1259 = vmax.f32 %v1105, 0.0
  %v1260 = vmax.f32 %v1110, 0.0
  %v1261 = vmax.f32 %v1115, 0.0
  %v1262 = vmax.f32 %v1120, 0.0
  %v1263 = vmax.f32 %v1125, 0.0
  %v1264 = vmax.f32 %v1130, 0.0
  %v1265 = vmax.f32 %v1135, 0.0
  %v1266 = vmax.f32 %v1140, 0.0
  %v1267 = vmax.f32 %v1145, 0.0
  %v1268 = vmax.f32 %v1150, 0.0
  %v1269 = vmax.f32 %v1155, 0.0
  %v1270 = vmax.f32 %v1160, 0.0
  %v1271 = vmax.f32 %v1165, 0.0
  %v1272 = vmax.f32 %v1170, 0.0
  %v1273 = vmax.f32 %v1175, 0.0
  %v1274 = vmax.f32 %v1180, 0.0
  %v1275 = vmax.f32 %v1185, 0.0
  %v1276 = vmax.f32 %v1190, 0.0
  %v1277 = vmax.f32 %v1195, 0.0
  %v1278 = vmax.f32 %v1200, 0.0
  %v1279 = vmax.f32 %v1205, 0.0
  %v1280 = vmax.f32 %v1210, 0.0
  %v1281 = vmax.f32 %v1215, 0.0
  %v1282 = vmax.f32 %v1220, 0.0
  %v1283 = vmax.f32 %v1225, 0.0
  %v1284 = vmax.f32 %v1230, 0.0
  %v1285 = vmax.f32 %v1235, 0.0
  %v1286 = vmax.f32 %v1240, 0.0
  %v1287 = vmax.f32 %v1245, 0.0
  %v1288 = vmax.f32 %v1250, 0.0
  %v1289 = vmax.f32 %v1255, 0.0
  %1290 = vst.msk [vmem:[%s7] sm:$0xff] %vm936, %v1258
  %1291 = vst.msk [vmem:[%s7 + $0x8] sm:$0xff] %vm936, %v1259
  %1292 = vst.msk [vmem:[%s7 + $0x10] sm:$0xff] %vm936, %v1260
  %1293 = vst.msk [vmem:[%s7 + $0x18] sm:$0xff] %vm936, %v1261
  %1294 = vst.msk [vmem:[%s7 + $0x20] sm:$0xff] %vm936, %v1262
  %1295 = vst.msk [vmem:[%s7 + $0x28] sm:$0xff] %vm936, %v1263
  %1296 = vst.msk [vmem:[%s7 + $0x30] sm:$0xff] %vm936, %v1264
  %1297 = vst.msk [vmem:[%s7 + $0x38] sm:$0xff] %vm936, %v1265
  %1298 = vst.msk [vmem:[%s7 + $0x40] sm:$0xff] %vm936, %v1266
  %1299 = vst.msk [vmem:[%s7 + $0x48] sm:$0xff] %vm936, %v1267
  %1300 = vst.msk [vmem:[%s7 + $0x50] sm:$0xff] %vm936, %v1268
  %1301 = vst.msk [vmem:[%s7 + $0x58] sm:$0xff] %vm936, %v1269
  %1302 = vst.msk [vmem:[%s7 + $0x60] sm:$0xff] %vm936, %v1270
  %1303 = vst.msk [vmem:[%s7 + $0x68] sm:$0xff] %vm936, %v1271
  %1304 = vst.msk [vmem:[%s7 + $0x70] sm:$0xff] %vm936, %v1272
  %1305 = vst.msk [vmem:[%s7 + $0x78] sm:$0xff] %vm936, %v1273
  %1306 = vst.msk [vmem:[%s7 + $0x80] sm:$0xff] %vm936, %v1274
  %1307 = vst.msk [vmem:[%s7 + $0x88] sm:$0xff] %vm936, %v1275
  %1308 = vst.msk [vmem:[%s7 + $0x90] sm:$0xff] %vm936, %v1276
  %1309 = vst.msk [vmem:[%s7 + $0x98] sm:$0xff] %vm936, %v1277
  %1310 = vst.msk [vmem:[%s7 + $0xa0] sm:$0xff] %vm936, %v1278
  %1311 = vst.msk [vmem:[%s7 + $0xa8] sm:$0xff] %vm936, %v1279
  %1312 = vst.msk [vmem:[%s7 + $0xb0] sm:$0xff] %vm936, %v1280
  %1313 = vst.msk [vmem:[%s7 + $0xb8] sm:$0xff] %vm936, %v1281
  %1314 = vst.msk [vmem:[%s7 + $0xc0] sm:$0xff] %vm936, %v1282
  %1315 = vst.msk [vmem:[%s7 + $0xc8] sm:$0xff] %vm936, %v1283
  %1316 = vst.msk [vmem:[%s7 + $0xd0] sm:$0xff] %vm936, %v1284
  %1317 = vst.msk [vmem:[%s7 + $0xd8] sm:$0xff] %vm936, %v1285
  %1318 = vst.msk [vmem:[%s7 + $0xe0] sm:$0xff] %vm936, %v1286
  %1319 = vst.msk [vmem:[%s7 + $0xe8] sm:$0xff] %vm936, %v1287
  %1320 = vst.msk [vmem:[%s7 + $0xf0] sm:$0xff] %vm936, %v1288
  %1321 = vst.msk [vmem:[%s7 + $0xf8] sm:$0xff] %vm936, %v1289
  // Predicated region
  $region30: #{gnn_policy_forward.8} parent=0 // pred_check
    _
  $region31: #{gnn_policy_forward.8} parent=0 // pred_check_branch
    %1323 = sbr.rel (0) target = $region33
  $region32: #{gnn_policy_forward.8} parent=0 // pred_region
    _
  $region33: #{gnn_policy_forward.8} parent=0 // pred_fallthru
    _
  // Predicated region
  $region34: #{gnn_policy_forward.8} parent=0 // pred_check
    _
  $region35: #{gnn_policy_forward.8} parent=0 // pred_check_branch
    %1325 = sbr.rel (0) target = $region37
  $region36: #{gnn_policy_forward.8} parent=0 // pred_region
    _
  $region37: #{gnn_policy_forward.8} parent=0 // pred_fallthru
    _

// kernel: gnn_policy_forward.9
$region0: #{gnn_policy_forward.9}
  #allocation0 [shape = 'u32[]', space=smem, size = 0x4, offset = 0x4, fixed_abs, tag = 'smem constant byte address 0x4 - core index']
  #allocation1 [shape = 'u32[144,128]{1,0:T(1,128)}', space=vmem, size = 0x12000, scoped, tag = 'internal scratch']
  #allocation2 [shape = 'f32[256,64]{1,0:T(8,128)}', space=vmem, size = 0x20000, scoped, tag = 'scratch operand']
  #allocation3 [shape = 'f32[256,64]{1,0:T(8,128)}', space=vmem, size = 0x20000, scoped, tag = 'scratch operand']
  #allocation4 [shape = 'f32[256,64]{1,0:T(8,128)}', space=vmem, size = 0x20000, scoped, tag = 'scratch operand']
  #allocation5 [shape = 'f32[512,64]{1,0:T(8,128)}', space=vmem, size = 0x40000, scoped, tag = 'scratch operand']
  #allocation6 [shape = 'f32[512,64]{1,0:T(8,128)}', space=vmem, size = 0x40000, scoped, tag = 'scratch operand']
  #allocation7 [shape = 's32[1]{0}', space=sflag, size = 0x4, scoped, tag = 'scoped memory for gnn_policy_forward.9']
  #allocation8 [shape = 'u8[2048]{0}', space=smem, size = 0x800, scoped, tag = 'prefetched SMEM operand 0']
  #allocation9 [shape = 'u8[2048]{0}', space=smem, size = 0x800, scoped, tag = 'prefetched SMEM operand 1']
  %s0 = inlined_call_operand.vmem [shape: s32[512], index: 0, kind: input, shape index: {}]
  %s1 = inlined_call_operand.vmem [shape: s32[512], index: 1, kind: input, shape index: {}]
  %s2 = inlined_call_operand.vmem [shape: f32[256,64], index: 2, kind: input, shape index: {}]
  %s3 = inlined_call_operand.vmem [shape: f32[256,64], index: 3, kind: input, shape index: {}]
  %s4 = inlined_call_operand.vmem [shape: f32[64,64], index: 4, kind: input, shape index: {}]
  %s5 = inlined_call_operand.vmem [shape: f32[1,64], index: 5, kind: input, shape index: {}]
  %s6 = inlined_call_operand.vmem [shape: f32[64,64], index: 6, kind: input, shape index: {}]
  %s7 = inlined_call_operand.vmem [shape: f32[1,64], index: 7, kind: input, shape index: {}]
  %s8 = inlined_call_operand.vmem [shape: f32[1,64], index: 8, kind: input, shape index: {}]
  %s9 = inlined_call_operand.vmem [shape: f32[64,64], index: 9, kind: input, shape index: {}]
  %s10 = inlined_call_operand.vmem [shape: f32[1,64], index: 10, kind: input, shape index: {}]
  %s11 = inlined_call_operand.vmem [shape: f32[1,64], index: 11, kind: input, shape index: {}]
  %s12 = inlined_call_operand.vmem [shape: f32[1,64], index: 12, kind: input, shape index: {}]
  %s13 = inlined_call_operand.vmem [shape: f32[128,64], index: 13, kind: input, shape index: {}]
  %s14 = inlined_call_operand.vmem [shape: f32[1,64], index: 14, kind: input, shape index: {}]
  %s15 = inlined_call_operand.vmem [shape: f32[64,64], index: 15, kind: input, shape index: {}]
  %s16 = inlined_call_operand.vmem [shape: f32[1,64], index: 16, kind: input, shape index: {}]
  %s17 = inlined_call_operand.vmem [shape: f32[256,64], index: 17, kind: output, shape index: {}]
  %s18 = sld [smem:[#allocation0]]
  $region92: #{gnn_policy_forward.9} parent=0
    _
  %s20 = ssub.s32 1, %s18
  %s21 = scalar_select 0, %s20, %s18
  %s22 = sshll.u32 %s0, 4
  %s23 = int_to_ptr.vmem [resolvable:$true] %s22
  %25 = dma.vmem_to_smem %s23, 64, [#allocation8], [#allocation7]
  %s26 = sshll.u32 %s1, 4
  %s27 = int_to_ptr.vmem [resolvable:$true] %s26
  %29 = dma.vmem_to_smem %s27, 64, [#allocation9], [#allocation7]
  %30 = dma.done [#allocation7], 128
  %31 = sfence
  // Predicated region
  $region2: #{gnn_policy_forward.9} parent=0 // pred_check
    _
  $region3: #{gnn_policy_forward.9} parent=0 // pred_check_branch
    %33 = sbr.rel (0) target = $region5
  $region4: #{gnn_policy_forward.9} parent=0 // pred_region
    _
  $region5: #{gnn_policy_forward.9} parent=0 // pred_fallthru
    _
  // Predicated region
  $region6: #{gnn_policy_forward.9} parent=0 // pred_check
    _
  $region7: #{gnn_policy_forward.9} parent=0 // pred_check_branch
    %35 = sbr.rel (0) target = $region9
  $region8: #{gnn_policy_forward.9} parent=0 // pred_region
    _
  $region9: #{gnn_policy_forward.9} parent=0 // pred_fallthru
    _
  // Predicated region
  $region10: #{gnn_policy_forward.9} parent=0 // pred_check
    _
  $region11: #{gnn_policy_forward.9} parent=0 // pred_check_branch
    %37 = sbr.rel (0) target = $region13
  $region12: #{gnn_policy_forward.9} parent=0 // pred_region
    _
  $region13: #{gnn_policy_forward.9} parent=0 // pred_fallthru
    _
  // Predicated region
  $region14: #{gnn_policy_forward.9} parent=0 // pred_check
    _
  $region15: #{gnn_policy_forward.9} parent=0 // pred_check_branch
    %39 = sbr.rel (0) target = $region17
  $region16: #{gnn_policy_forward.9} parent=0 // pred_region
    _
  $region17: #{gnn_policy_forward.9} parent=0 // pred_fallthru
    _
  // Predicated region
  $region18: #{gnn_policy_forward.9} parent=0 // pred_check
    _
  $region19: #{gnn_policy_forward.9} parent=0 // pred_check_branch
    %41 = sbr.rel (0) target = $region21
  $region20: #{gnn_policy_forward.9} parent=0 // pred_region
    _
  $region21: #{gnn_policy_forward.9} parent=0 // pred_fallthru
    _
  // Predicated region
  $region22: #{gnn_policy_forward.9} parent=0 // pred_check
    _
  $region23: #{gnn_policy_forward.9} parent=0 // pred_check_branch
    %43 = sbr.rel (0) target = $region25
  $region24: #{gnn_policy_forward.9} parent=0 // pred_region
    _
  $region25: #{gnn_policy_forward.9} parent=0 // pred_fallthru
    _
  // Predicated region
  $region26: #{gnn_policy_forward.9} parent=0 // pred_check
    _
  $region27: #{gnn_policy_forward.9} parent=0 // pred_check_branch
    %45 = sbr.rel (0) target = $region29
  $region28: #{gnn_policy_forward.9} parent=0 // pred_region
    _
  $region29: #{gnn_policy_forward.9} parent=0 // pred_fallthru
    _
  // Predicated region
  $region30: #{gnn_policy_forward.9} parent=0 // pred_check
    _
  $region31: #{gnn_policy_forward.9} parent=0 // pred_check_branch
    %47 = sbr.rel (0) target = $region33
  $region32: #{gnn_policy_forward.9} parent=0 // pred_region
    _
  $region33: #{gnn_policy_forward.9} parent=0 // pred_fallthru
    _
  // Predicated region
  $region34: #{gnn_policy_forward.9} parent=0 // pred_check
    _
  $region35: #{gnn_policy_forward.9} parent=0 // pred_check_branch
    %49 = sbr.rel (0) target = $region37
  $region36: #{gnn_policy_forward.9} parent=0 // pred_region
    _
  $region37: #{gnn_policy_forward.9} parent=0 // pred_fallthru
    _
  // Predicated region
  $region38: #{gnn_policy_forward.9} parent=0 // pred_check
    _
  $region39: #{gnn_policy_forward.9} parent=0 // pred_check_branch
    %51 = sbr.rel (0) target = $region41
  $region40: #{gnn_policy_forward.9} parent=0 // pred_region
    _
  $region41: #{gnn_policy_forward.9} parent=0 // pred_fallthru
    _
  // Predicated region
  $region42: #{gnn_policy_forward.9} parent=0 // pred_check
    _
  $region43: #{gnn_policy_forward.9} parent=0 // pred_check_branch
    %53 = sbr.rel (0) target = $region45
  $region44: #{gnn_policy_forward.9} parent=0 // pred_region
    _
  $region45: #{gnn_policy_forward.9} parent=0 // pred_fallthru
    _
  // Predicated region
  $region46: #{gnn_policy_forward.9} parent=0 // pred_check
    _
  $region47: #{gnn_policy_forward.9} parent=0 // pred_check_branch
    %55 = sbr.rel (0) target = $region49
  $region48: #{gnn_policy_forward.9} parent=0 // pred_region
    _
  $region49: #{gnn_policy_forward.9} parent=0 // pred_fallthru
    _
  // Predicated region
  $region50: #{gnn_policy_forward.9} parent=0 // pred_check
    _
  $region51: #{gnn_policy_forward.9} parent=0 // pred_check_branch
    %57 = sbr.rel (0) target = $region53
  $region52: #{gnn_policy_forward.9} parent=0 // pred_region
    _
  $region53: #{gnn_policy_forward.9} parent=0 // pred_fallthru
    _
  // Predicated region
  $region54: #{gnn_policy_forward.9} parent=0 // pred_check
    _
  $region55: #{gnn_policy_forward.9} parent=0 // pred_check_branch
    %59 = sbr.rel (0) target = $region57
  $region56: #{gnn_policy_forward.9} parent=0 // pred_region
    _
  $region57: #{gnn_policy_forward.9} parent=0 // pred_fallthru
    _
  // Predicated region
  $region58: #{gnn_policy_forward.9} parent=0 // pred_check
    _
  $region59: #{gnn_policy_forward.9} parent=0 // pred_check_branch
    %61 = sbr.rel (0) target = $region61
  $region60: #{gnn_policy_forward.9} parent=0 // pred_region
    _
  $region61: #{gnn_policy_forward.9} parent=0 // pred_fallthru
    _
  %p62 = scmp.eq.s32.totalorder 0, 0
  // Predicated region
  $region62: #{gnn_policy_forward.9} parent=0 // pred_check
    %p63 = pneg %p62
  $region63: #{gnn_policy_forward.9} parent=0 // pred_check_branch
    %65 = sbr.rel (%p63) target = $region65
  $region64: #{gnn_policy_forward.9} parent=0 // pred_region
    %v66 = vld [vmem:[%s3] sm:$0xff]
    %v67 = vld [vmem:[%s3 + $0x8] sm:$0xff]
    %v68 = vld [vmem:[%s3 + $0x10] sm:$0xff]
    %v69 = vld [vmem:[%s3 + $0x18] sm:$0xff]
    %v70 = vld [vmem:[%s3 + $0x20] sm:$0xff]
    %v71 = vld [vmem:[%s3 + $0x28] sm:$0xff]
    %v72 = vld [vmem:[%s3 + $0x30] sm:$0xff]
    %v73 = vld [vmem:[%s3 + $0x38] sm:$0xff]
    %v74 = vld [vmem:[%s3 + $0x40] sm:$0xff]
    %v75 = vld [vmem:[%s3 + $0x48] sm:$0xff]
    %v76 = vld [vmem:[%s3 + $0x50] sm:$0xff]
    %v77 = vld [vmem:[%s3 + $0x58] sm:$0xff]
    %v78 = vld [vmem:[%s3 + $0x60] sm:$0xff]
    %v79 = vld [vmem:[%s3 + $0x68] sm:$0xff]
    %v80 = vld [vmem:[%s3 + $0x70] sm:$0xff]
    %v81 = vld [vmem:[%s3 + $0x78] sm:$0xff]
    %v82 = vld [vmem:[%s3 + $0x80] sm:$0xff]
    %v83 = vld [vmem:[%s3 + $0x88] sm:$0xff]
    %v84 = vld [vmem:[%s3 + $0x90] sm:$0xff]
    %v85 = vld [vmem:[%s3 + $0x98] sm:$0xff]
    %v86 = vld [vmem:[%s3 + $0xa0] sm:$0xff]
    %v87 = vld [vmem:[%s3 + $0xa8] sm:$0xff]
    %v88 = vld [vmem:[%s3 + $0xb0] sm:$0xff]
    %v89 = vld [vmem:[%s3 + $0xb8] sm:$0xff]
    %v90 = vld [vmem:[%s3 + $0xc0] sm:$0xff]
    %v91 = vld [vmem:[%s3 + $0xc8] sm:$0xff]
    %v92 = vld [vmem:[%s3 + $0xd0] sm:$0xff]
    %v93 = vld [vmem:[%s3 + $0xd8] sm:$0xff]
    %v94 = vld [vmem:[%s3 + $0xe0] sm:$0xff]
    %v95 = vld [vmem:[%s3 + $0xe8] sm:$0xff]
    %v96 = vld [vmem:[%s3 + $0xf0] sm:$0xff]
    %v97 = vld [vmem:[%s3 + $0xf8] sm:$0xff]
    %v98 = vld [vmem:[%s4] sm:$0xff]
    %v99 = vld [vmem:[%s4 + $0x8] sm:$0xff]
    %v100 = vld [vmem:[%s4 + $0x10] sm:$0xff]
    %v101 = vld [vmem:[%s4 + $0x18] sm:$0xff]
    %v102 = vld [vmem:[%s4 + $0x20] sm:$0xff]
    %v103 = vld [vmem:[%s4 + $0x28] sm:$0xff]
    %v104 = vld [vmem:[%s4 + $0x30] sm:$0xff]
    %v105 = vld [vmem:[%s4 + $0x38] sm:$0xff]
    %v106 = vld [vmem:[%s5] sm:$0x1]
    %v108 = vlaneseq
    %v109 = vshrl.u32 %v108, 7
    %v110 = vsub.s32 0, %v109
    %v111 = vrot.slane %v106, %v110
    %vm113 = vcmask 523264
    %v115 = vsel %vm113, %v66, 0
    %v118 = vsel %vm113, %v67, 0
    %v121 = vsel %vm113, %v68, 0
    %v124 = vsel %vm113, %v69, 0
    %v127 = vsel %vm113, %v70, 0
    %v130 = vsel %vm113, %v71, 0
    %v133 = vsel %vm113, %v72, 0
    %v136 = vsel %vm113, %v73, 0
    %v139 = vsel %vm113, %v74, 0
    %v142 = vsel %vm113, %v75, 0
    %v145 = vsel %vm113, %v76, 0
    %v148 = vsel %vm113, %v77, 0
    %v151 = vsel %vm113, %v78, 0
    %v154 = vsel %vm113, %v79, 0
    %v157 = vsel %vm113, %v80, 0
    %v160 = vsel %vm113, %v81, 0
    %v163 = vsel %vm113, %v82, 0
    %v166 = vsel %vm113, %v83, 0
    %v169 = vsel %vm113, %v84, 0
    %v172 = vsel %vm113, %v85, 0
    %v175 = vsel %vm113, %v86, 0
    %v178 = vsel %vm113, %v87, 0
    %v181 = vsel %vm113, %v88, 0
    %v184 = vsel %vm113, %v89, 0
    %v187 = vsel %vm113, %v90, 0
    %v190 = vsel %vm113, %v91, 0
    %v193 = vsel %vm113, %v92, 0
    %v196 = vsel %vm113, %v93, 0
    %v199 = vsel %vm113, %v94, 0
    %v202 = vsel %vm113, %v95, 0
    %v205 = vsel %vm113, %v96, 0
    %v208 = vsel %vm113, %v97, 0
    %210 = vmatprep.subr.mxu0 0.0
    %211 = vmatpush1.msra.mxu0 0.0
    %212 = vmatprep.subr.mxu0 0.0
    %213 = vmatpush1.msra.mxu0 0.0
    %214 = vmatprep.subr.mxu0 0.0
    %215 = vmatpush1.msra.mxu0 0.0
    %216 = vmatprep.subr.mxu0 0.0
    %217 = vmatpush1.msra.mxu0 0.0
    %218 = vmatprep.subr.mxu0 0.0
    %219 = vmatpush1.msra.mxu0 0.0
    %220 = vmatprep.subr.mxu0 0.0
    %221 = vmatpush1.msra.mxu0 0.0
    %222 = vmatprep.subr.mxu0 0.0
    %223 = vmatpush1.msra.mxu0 0.0
    %224 = vmatprep.subr.mxu0 0.0
    %225 = vmatpush1.msra.mxu0 0.0
    %226 = vmatprep.subr.mxu0 0.0
    %227 = vmatpush1.msra.mxu0 %v105
    %228 = vmatprep.subr.mxu0 0.0
    %229 = vmatpush1.msra.mxu0 %v104
    %230 = vmatprep.subr.mxu0 0.0
    %231 = vmatpush1.msra.mxu0 %v103
    %232 = vmatprep.subr.mxu0 0.0
    %233 = vmatpush1.msra.mxu0 %v102
    %234 = vmatprep.subr.mxu0 0.0
    %235 = vmatpush1.msra.mxu0 %v101
    %236 = vmatprep.subr.mxu0 0.0
    %237 = vmatpush1.msra.mxu0 %v100
    %238 = vmatprep.subr.mxu0 0.0
    %239 = vmatpush1.msra.mxu0 %v99
    %240 = vmatprep.subr.mxu0 0.0
    %241 = vmatpush1.msra.mxu0 %v98
    %242 = vmatprep.subr.mxu0 0.0
    %243 = vmatpush2.msra.mxu0 0.0
    %244 = vmatprep.subr.mxu0 0.0
    %245 = vmatpush2.msra.mxu0 0.0
    %246 = vmatprep.subr.mxu0 0.0
    %247 = vmatpush2.msra.mxu0 0.0
    %248 = vmatprep.subr.mxu0 0.0
    %249 = vmatpush2.msra.mxu0 0.0
    %250 = vmatprep.subr.mxu0 0.0
    %251 = vmatpush2.msra.mxu0 0.0
    %252 = vmatprep.subr.mxu0 0.0
    %253 = vmatpush2.msra.mxu0 0.0
    %254 = vmatprep.subr.mxu0 0.0
    %255 = vmatpush2.msra.mxu0 0.0
    %256 = vmatprep.subr.mxu0 0.0
    %257 = vmatpush2.msra.mxu0 0.0
    %258 = vmatprep.subr.mxu0 0.0
    %259 = vmatpush2.msra.mxu0 0.0
    %260 = vmatprep.subr.mxu0 0.0
    %261 = vmatpush2.msra.mxu0 0.0
    %262 = vmatprep.subr.mxu0 0.0
    %263 = vmatpush2.msra.mxu0 0.0
    %264 = vmatprep.subr.mxu0 0.0
    %265 = vmatpush2.msra.mxu0 0.0
    %266 = vmatprep.subr.mxu0 0.0
    %267 = vmatpush2.msra.mxu0 0.0
    %268 = vmatprep.subr.mxu0 0.0
    %269 = vmatpush2.msra.mxu0 0.0
    %270 = vmatprep.subr.mxu0 0.0
    %271 = vmatpush2.msra.mxu0 0.0
    %272 = vmatprep.subr.mxu0 0.0
    %273 = vmatpush2.msra.mxu0 0.0
    %274 = vmatprep.mubr.f32.mxu0 0.0
    %275 = vmatmul.mubr.f32.gmra.mxu0 %v115
    %v276 = vpop.f32.mrf.mxu0
    %v277 = vadd.f32 %v111, %v276
    %v278 = vpop.f32.mrf.mxu0
    %279 = vmatprep.mubr.f32.mxu0 0.0
    %280 = vmatmul.mubr.f32.gmra.mxu0 %v118
    %v281 = vpop.f32.mrf.mxu0
    %v282 = vadd.f32 %v111, %v281
    %v283 = vpop.f32.mrf.mxu0
    %284 = vmatprep.mubr.f32.mxu0 0.0
    %285 = vmatmul.mubr.f32.gmra.mxu0 %v121
    %v286 = vpop.f32.mrf.mxu0
    %v287 = vadd.f32 %v111, %v286
    %v288 = vpop.f32.mrf.mxu0
    %289 = vmatprep.mubr.f32.mxu0 0.0
    %290 = vmatmul.mubr.f32.gmra.mxu0 %v124
    %v291 = vpop.f32.mrf.mxu0
    %v292 = vadd.f32 %v111, %v291
    %v293 = vpop.f32.mrf.mxu0
    %294 = vmatprep.mubr.f32.mxu0 0.0
    %295 = vmatmul.mubr.f32.gmra.mxu0 %v127
    %v296 = vpop.f32.mrf.mxu0
    %v297 = vadd.f32 %v111, %v296
    %v298 = vpop.f32.mrf.mxu0
    %299 = vmatprep.mubr.f32.mxu0 0.0
    %300 = vmatmul.mubr.f32.gmra.mxu0 %v130
    %v301 = vpop.f32.mrf.mxu0
    %v302 = vadd.f32 %v111, %v301
    %v303 = vpop.f32.mrf.mxu0
    %304 = vmatprep.mubr.f32.mxu0 0.0
    %305 = vmatmul.mubr.f32.gmra.mxu0 %v133
    %v306 = vpop.f32.mrf.mxu0
    %v307 = vadd.f32 %v111, %v306
    %v308 = vpop.f32.mrf.mxu0
    %309 = vmatprep.mubr.f32.mxu0 0.0
    %310 = vmatmul.mubr.f32.gmra.mxu0 %v136
    %v311 = vpop.f32.mrf.mxu0
    %v312 = vadd.f32 %v111, %v311
    %v313 = vpop.f32.mrf.mxu0
    %314 = vmatprep.mubr.f32.mxu0 0.0
    %315 = vmatmul.mubr.f32.gmra.mxu0 %v139
    %v316 = vpop.f32.mrf.mxu0
    %v317 = vadd.f32 %v111, %v316
    %v318 = vpop.f32.mrf.mxu0
    %319 = vmatprep.mubr.f32.mxu0 0.0
    %320 = vmatmul.mubr.f32.gmra.mxu0 %v142
    %v321 = vpop.f32.mrf.mxu0
    %v322 = vadd.f32 %v111, %v321
    %v323 = vpop.f32.mrf.mxu0
    %324 = vmatprep.mubr.f32.mxu0 0.0
    %325 = vmatmul.mubr.f32.gmra.mxu0 %v145
    %v326 = vpop.f32.mrf.mxu0
    %v327 = vadd.f32 %v111, %v326
    %v328 = vpop.f32.mrf.mxu0
    %329 = vmatprep.mubr.f32.mxu0 0.0
    %330 = vmatmul.mubr.f32.gmra.mxu0 %v148
    %v331 = vpop.f32.mrf.mxu0
    %v332 = vadd.f32 %v111, %v331
    %v333 = vpop.f32.mrf.mxu0
    %334 = vmatprep.mubr.f32.mxu0 0.0
    %335 = vmatmul.mubr.f32.gmra.mxu0 %v151
    %v336 = vpop.f32.mrf.mxu0
    %v337 = vadd.f32 %v111, %v336
    %v338 = vpop.f32.mrf.mxu0
    %339 = vmatprep.mubr.f32.mxu0 0.0
    %340 = vmatmul.mubr.f32.gmra.mxu0 %v154
    %v341 = vpop.f32.mrf.mxu0
    %v342 = vadd.f32 %v111, %v341
    %v343 = vpop.f32.mrf.mxu0
    %344 = vmatprep.mubr.f32.mxu0 0.0
    %345 = vmatmul.mubr.f32.gmra.mxu0 %v157
    %v346 = vpop.f32.mrf.mxu0
    %v347 = vadd.f32 %v111, %v346
    %v348 = vpop.f32.mrf.mxu0
    %349 = vmatprep.mubr.f32.mxu0 0.0
    %350 = vmatmul.mubr.f32.gmra.mxu0 %v160
    %v351 = vpop.f32.mrf.mxu0
    %v352 = vadd.f32 %v111, %v351
    %v353 = vpop.f32.mrf.mxu0
    %354 = vmatprep.mubr.f32.mxu0 0.0
    %355 = vmatmul.mubr.f32.gmra.mxu0 %v163
    %v356 = vpop.f32.mrf.mxu0
    %v357 = vadd.f32 %v111, %v356
    %v358 = vpop.f32.mrf.mxu0
    %359 = vmatprep.mubr.f32.mxu0 0.0
    %360 = vmatmul.mubr.f32.gmra.mxu0 %v166
    %v361 = vpop.f32.mrf.mxu0
    %v362 = vadd.f32 %v111, %v361
    %v363 = vpop.f32.mrf.mxu0
    %364 = vmatprep.mubr.f32.mxu0 0.0
    %365 = vmatmul.mubr.f32.gmra.mxu0 %v169
    %v366 = vpop.f32.mrf.mxu0
    %v367 = vadd.f32 %v111, %v366
    %v368 = vpop.f32.mrf.mxu0
    %369 = vmatprep.mubr.f32.mxu0 0.0
    %370 = vmatmul.mubr.f32.gmra.mxu0 %v172
    %v371 = vpop.f32.mrf.mxu0
    %v372 = vadd.f32 %v111, %v371
    %v373 = vpop.f32.mrf.mxu0
    %374 = vmatprep.mubr.f32.mxu0 0.0
    %375 = vmatmul.mubr.f32.gmra.mxu0 %v175
    %v376 = vpop.f32.mrf.mxu0
    %v377 = vadd.f32 %v111, %v376
    %v378 = vpop.f32.mrf.mxu0
    %379 = vmatprep.mubr.f32.mxu0 0.0
    %380 = vmatmul.mubr.f32.gmra.mxu0 %v178
    %v381 = vpop.f32.mrf.mxu0
    %v382 = vadd.f32 %v111, %v381
    %v383 = vpop.f32.mrf.mxu0
    %384 = vmatprep.mubr.f32.mxu0 0.0
    %385 = vmatmul.mubr.f32.gmra.mxu0 %v181
    %v386 = vpop.f32.mrf.mxu0
    %v387 = vadd.f32 %v111, %v386
    %v388 = vpop.f32.mrf.mxu0
    %389 = vmatprep.mubr.f32.mxu0 0.0
    %390 = vmatmul.mubr.f32.gmra.mxu0 %v184
    %v391 = vpop.f32.mrf.mxu0
    %v392 = vadd.f32 %v111, %v391
    %v393 = vpop.f32.mrf.mxu0
    %394 = vmatprep.mubr.f32.mxu0 0.0
    %395 = vmatmul.mubr.f32.gmra.mxu0 %v187
    %v396 = vpop.f32.mrf.mxu0
    %v397 = vadd.f32 %v111, %v396
    %v398 = vpop.f32.mrf.mxu0
    %399 = vmatprep.mubr.f32.mxu0 0.0
    %400 = vmatmul.mubr.f32.gmra.mxu0 %v190
    %v401 = vpop.f32.mrf.mxu0
    %v402 = vadd.f32 %v111, %v401
    %v403 = vpop.f32.mrf.mxu0
    %404 = vmatprep.mubr.f32.mxu0 0.0
    %405 = vmatmul.mubr.f32.gmra.mxu0 %v193
    %v406 = vpop.f32.mrf.mxu0
    %v407 = vadd.f32 %v111, %v406
    %v408 = vpop.f32.mrf.mxu0
    %409 = vmatprep.mubr.f32.mxu0 0.0
    %410 = vmatmul.mubr.f32.gmra.mxu0 %v196
    %v411 = vpop.f32.mrf.mxu0
    %v412 = vadd.f32 %v111, %v411
    %v413 = vpop.f32.mrf.mxu0
    %414 = vmatprep.mubr.f32.mxu0 0.0
    %415 = vmatmul.mubr.f32.gmra.mxu0 %v199
    %v416 = vpop.f32.mrf.mxu0
    %v417 = vadd.f32 %v111, %v416
    %v418 = vpop.f32.mrf.mxu0
    %419 = vmatprep.mubr.f32.mxu0 0.0
    %420 = vmatmul.mubr.f32.gmra.mxu0 %v202
    %v421 = vpop.f32.mrf.mxu0
    %v422 = vadd.f32 %v111, %v421
    %v423 = vpop.f32.mrf.mxu0
    %424 = vmatprep.mubr.f32.mxu0 0.0
    %425 = vmatmul.mubr.f32.gmra.mxu0 %v205
    %v426 = vpop.f32.mrf.mxu0
    %v427 = vadd.f32 %v111, %v426
    %v428 = vpop.f32.mrf.mxu0
    %429 = vmatprep.mubr.f32.mxu0 0.0
    %430 = vmatmul.mubr.f32.gmra.mxu0 %v208
    %v431 = vpop.f32.mrf.mxu0
    %v432 = vadd.f32 %v111, %v431
    %v433 = vpop.f32.mrf.mxu0
    %434 = vdwg.mxu0
    %435 = vst.msk [vmem:[#allocation3] sm:$0xff] %vm113, %v277
    %436 = vst.msk [vmem:[#allocation3 + $0x8] sm:$0xff] %vm113, %v282
    %437 = vst.msk [vmem:[#allocation3 + $0x10] sm:$0xff] %vm113, %v287
    %438 = vst.msk [vmem:[#allocation3 + $0x18] sm:$0xff] %vm113, %v292
    %439 = vst.msk [vmem:[#allocation3 + $0x20] sm:$0xff] %vm113, %v297
    %440 = vst.msk [vmem:[#allocation3 + $0x28] sm:$0xff] %vm113, %v302
    %441 = vst.msk [vmem:[#allocation3 + $0x30] sm:$0xff] %vm113, %v307
    %442 = vst.msk [vmem:[#allocation3 + $0x38] sm:$0xff] %vm113, %v312
    %443 = vst.msk [vmem:[#allocation3 + $0x40] sm:$0xff] %vm113, %v317
    %444 = vst.msk [vmem:[#allocation3 + $0x48] sm:$0xff] %vm113, %v322
    %445 = vst.msk [vmem:[#allocation3 + $0x50] sm:$0xff] %vm113, %v327
    %446 = vst.msk [vmem:[#allocation3 + $0x58] sm:$0xff] %vm113, %v332
    %447 = vst.msk [vmem:[#allocation3 + $0x60] sm:$0xff] %vm113, %v337
    %448 = vst.msk [vmem:[#allocation3 + $0x68] sm:$0xff] %vm113, %v342
    %449 = vst.msk [vmem:[#allocation3 + $0x70] sm:$0xff] %vm113, %v347
    %450 = vst.msk [vmem:[#allocation3 + $0x78] sm:$0xff] %vm113, %v352
    %451 = vst.msk [vmem:[#allocation3 + $0x80] sm:$0xff] %vm113, %v357
    %452 = vst.msk [vmem:[#allocation3 + $0x88] sm:$0xff] %vm113, %v362
    %453 = vst.msk [vmem:[#allocation3 + $0x90] sm:$0xff] %vm113, %v367
    %454 = vst.msk [vmem:[#allocation3 + $0x98] sm:$0xff] %vm113, %v372
    %455 = vst.msk [vmem:[#allocation3 + $0xa0] sm:$0xff] %vm113, %v377
    %456 = vst.msk [vmem:[#allocation3 + $0xa8] sm:$0xff] %vm113, %v382
    %457 = vst.msk [vmem:[#allocation3 + $0xb0] sm:$0xff] %vm113, %v387
    %458 = vst.msk [vmem:[#allocation3 + $0xb8] sm:$0xff] %vm113, %v392
    %459 = vst.msk [vmem:[#allocation3 + $0xc0] sm:$0xff] %vm113, %v397
    %460 = vst.msk [vmem:[#allocation3 + $0xc8] sm:$0xff] %vm113, %v402
    %461 = vst.msk [vmem:[#allocation3 + $0xd0] sm:$0xff] %vm113, %v407
    %462 = vst.msk [vmem:[#allocation3 + $0xd8] sm:$0xff] %vm113, %v412
    %463 = vst.msk [vmem:[#allocation3 + $0xe0] sm:$0xff] %vm113, %v417
    %464 = vst.msk [vmem:[#allocation3 + $0xe8] sm:$0xff] %vm113, %v422
    %465 = vst.msk [vmem:[#allocation3 + $0xf0] sm:$0xff] %vm113, %v427
    %466 = vst.msk [vmem:[#allocation3 + $0xf8] sm:$0xff] %vm113, %v432
    %v467 = vld [vmem:[%s2] sm:$0xff]
    %v468 = vld [vmem:[%s2 + $0x8] sm:$0xff]
    %v469 = vld [vmem:[%s2 + $0x10] sm:$0xff]
    %v470 = vld [vmem:[%s2 + $0x18] sm:$0xff]
    %v471 = vld [vmem:[%s2 + $0x20] sm:$0xff]
    %v472 = vld [vmem:[%s2 + $0x28] sm:$0xff]
    %v473 = vld [vmem:[%s2 + $0x30] sm:$0xff]
    %v474 = vld [vmem:[%s2 + $0x38] sm:$0xff]
    %v475 = vld [vmem:[%s2 + $0x40] sm:$0xff]
    %v476 = vld [vmem:[%s2 + $0x48] sm:$0xff]
    %v477 = vld [vmem:[%s2 + $0x50] sm:$0xff]
    %v478 = vld [vmem:[%s2 + $0x58] sm:$0xff]
    %v479 = vld [vmem:[%s2 + $0x60] sm:$0xff]
    %v480 = vld [vmem:[%s2 + $0x68] sm:$0xff]
    %v481 = vld [vmem:[%s2 + $0x70] sm:$0xff]
    %v482 = vld [vmem:[%s2 + $0x78] sm:$0xff]
    %v483 = vld [vmem:[%s2 + $0x80] sm:$0xff]
    %v484 = vld [vmem:[%s2 + $0x88] sm:$0xff]
    %v485 = vld [vmem:[%s2 + $0x90] sm:$0xff]
    %v486 = vld [vmem:[%s2 + $0x98] sm:$0xff]
    %v487 = vld [vmem:[%s2 + $0xa0] sm:$0xff]
    %v488 = vld [vmem:[%s2 + $0xa8] sm:$0xff]
    %v489 = vld [vmem:[%s2 + $0xb0] sm:$0xff]
    %v490 = vld [vmem:[%s2 + $0xb8] sm:$0xff]
    %v491 = vld [vmem:[%s2 + $0xc0] sm:$0xff]
    %v492 = vld [vmem:[%s2 + $0xc8] sm:$0xff]
    %v493 = vld [vmem:[%s2 + $0xd0] sm:$0xff]
    %v494 = vld [vmem:[%s2 + $0xd8] sm:$0xff]
    %v495 = vld [vmem:[%s2 + $0xe0] sm:$0xff]
    %v496 = vld [vmem:[%s2 + $0xe8] sm:$0xff]
    %v497 = vld [vmem:[%s2 + $0xf0] sm:$0xff]
    %v498 = vld [vmem:[%s2 + $0xf8] sm:$0xff]
    %v499 = vld [vmem:[%s6] sm:$0xff]
    %v500 = vld [vmem:[%s6 + $0x8] sm:$0xff]
    %v501 = vld [vmem:[%s6 + $0x10] sm:$0xff]
    %v502 = vld [vmem:[%s6 + $0x18] sm:$0xff]
    %v503 = vld [vmem:[%s6 + $0x20] sm:$0xff]
    %v504 = vld [vmem:[%s6 + $0x28] sm:$0xff]
    %v505 = vld [vmem:[%s6 + $0x30] sm:$0xff]
    %v506 = vld [vmem:[%s6 + $0x38] sm:$0xff]
    %v508 = vsel %vm113, %v467, 0
    %v511 = vsel %vm113, %v468, 0
    %v514 = vsel %vm113, %v469, 0
    %v517 = vsel %vm113, %v470, 0
    %v520 = vsel %vm113, %v471, 0
    %v523 = vsel %vm113, %v472, 0
    %v526 = vsel %vm113, %v473, 0
    %v529 = vsel %vm113, %v474, 0
    %v532 = vsel %vm113, %v475, 0
    %v535 = vsel %vm113, %v476, 0
    %v538 = vsel %vm113, %v477, 0
    %v541 = vsel %vm113, %v478, 0
    %v544 = vsel %vm113, %v479, 0
    %v547 = vsel %vm113, %v480, 0
    %v550 = vsel %vm113, %v481, 0
    %v553 = vsel %vm113, %v482, 0
    %v556 = vsel %vm113, %v483, 0
    %v559 = vsel %vm113, %v484, 0
    %v562 = vsel %vm113, %v485, 0
    %v565 = vsel %vm113, %v486, 0
    %v568 = vsel %vm113, %v487, 0
    %v571 = vsel %vm113, %v488, 0
    %v574 = vsel %vm113, %v489, 0
    %v577 = vsel %vm113, %v490, 0
    %v580 = vsel %vm113, %v491, 0
    %v583 = vsel %vm113, %v492, 0
    %v586 = vsel %vm113, %v493, 0
    %v589 = vsel %vm113, %v494, 0
    %v592 = vsel %vm113, %v495, 0
    %v595 = vsel %vm113, %v496, 0
    %v598 = vsel %vm113, %v497, 0
    %v601 = vsel %vm113, %v498, 0
    %603 = vmatprep.subr.mxu0 0.0
    %604 = vmatpush1.msra.mxu0 0.0
    %605 = vmatprep.subr.mxu0 0.0
    %606 = vmatpush1.msra.mxu0 0.0
    %607 = vmatprep.subr.mxu0 0.0
    %608 = vmatpush1.msra.mxu0 0.0
    %609 = vmatprep.subr.mxu0 0.0
    %610 = vmatpush1.msra.mxu0 0.0
    %611 = vmatprep.subr.mxu0 0.0
    %612 = vmatpush1.msra.mxu0 0.0
    %613 = vmatprep.subr.mxu0 0.0
    %614 = vmatpush1.msra.mxu0 0.0
    %615 = vmatprep.subr.mxu0 0.0
    %616 = vmatpush1.msra.mxu0 0.0
    %617 = vmatprep.subr.mxu0 0.0
    %618 = vmatpush1.msra.mxu0 0.0
    %619 = vmatprep.subr.mxu0 0.0
    %620 = vmatpush1.msra.mxu0 %v506
    %621 = vmatprep.subr.mxu0 0.0
    %622 = vmatpush1.msra.mxu0 %v505
    %623 = vmatprep.subr.mxu0 0.0
    %624 = vmatpush1.msra.mxu0 %v504
    %625 = vmatprep.subr.mxu0 0.0
    %626 = vmatpush1.msra.mxu0 %v503
    %627 = vmatprep.subr.mxu0 0.0
    %628 = vmatpush1.msra.mxu0 %v502
    %629 = vmatprep.subr.mxu0 0.0
    %630 = vmatpush1.msra.mxu0 %v501
    %631 = vmatprep.subr.mxu0 0.0
    %632 = vmatpush1.msra.mxu0 %v500
    %633 = vmatprep.subr.mxu0 0.0
    %634 = vmatpush1.msra.mxu0 %v499
    %635 = vmatprep.subr.mxu0 0.0
    %636 = vmatpush2.msra.mxu0 0.0
    %637 = vmatprep.subr.mxu0 0.0
    %638 = vmatpush2.msra.mxu0 0.0
    %639 = vmatprep.subr.mxu0 0.0
    %640 = vmatpush2.msra.mxu0 0.0
    %641 = vmatprep.subr.mxu0 0.0
    %642 = vmatpush2.msra.mxu0 0.0
    %643 = vmatprep.subr.mxu0 0.0
    %644 = vmatpush2.msra.mxu0 0.0
    %645 = vmatprep.subr.mxu0 0.0
    %646 = vmatpush2.msra.mxu0 0.0
    %647 = vmatprep.subr.mxu0 0.0
    %648 = vmatpush2.msra.mxu0 0.0
    %649 = vmatprep.subr.mxu0 0.0
    %650 = vmatpush2.msra.mxu0 0.0
    %651 = vmatprep.subr.mxu0 0.0
    %652 = vmatpush2.msra.mxu0 0.0
    %653 = vmatprep.subr.mxu0 0.0
    %654 = vmatpush2.msra.mxu0 0.0
    %655 = vmatprep.subr.mxu0 0.0
    %656 = vmatpush2.msra.mxu0 0.0
    %657 = vmatprep.subr.mxu0 0.0
    %658 = vmatpush2.msra.mxu0 0.0
    %659 = vmatprep.subr.mxu0 0.0
    %660 = vmatpush2.msra.mxu0 0.0
    %661 = vmatprep.subr.mxu0 0.0
    %662 = vmatpush2.msra.mxu0 0.0
    %663 = vmatprep.subr.mxu0 0.0
    %664 = vmatpush2.msra.mxu0 0.0
    %665 = vmatprep.subr.mxu0 0.0
    %666 = vmatpush2.msra.mxu0 0.0
    %667 = vmatprep.mubr.f32.mxu0 0.0
    %668 = vmatmul.mubr.f32.gmra.mxu0 %v508
    %v669 = vpop.f32.mrf.mxu0
    %v670 = vadd.f32 0.0, %v669
    %v671 = vpop.f32.mrf.mxu0
    %672 = vmatprep.mubr.f32.mxu0 0.0
    %673 = vmatmul.mubr.f32.gmra.mxu0 %v511
    %v674 = vpop.f32.mrf.mxu0
    %v675 = vadd.f32 0.0, %v674
    %v676 = vpop.f32.mrf.mxu0
    %677 = vmatprep.mubr.f32.mxu0 0.0
    %678 = vmatmul.mubr.f32.gmra.mxu0 %v514
    %v679 = vpop.f32.mrf.mxu0
    %v680 = vadd.f32 0.0, %v679
    %v681 = vpop.f32.mrf.mxu0
    %682 = vmatprep.mubr.f32.mxu0 0.0
    %683 = vmatmul.mubr.f32.gmra.mxu0 %v517
    %v684 = vpop.f32.mrf.mxu0
    %v685 = vadd.f32 0.0, %v684
    %v686 = vpop.f32.mrf.mxu0
    %687 = vmatprep.mubr.f32.mxu0 0.0
    %688 = vmatmul.mubr.f32.gmra.mxu0 %v520
    %v689 = vpop.f32.mrf.mxu0
    %v690 = vadd.f32 0.0, %v689
    %v691 = vpop.f32.mrf.mxu0
    %692 = vmatprep.mubr.f32.mxu0 0.0
    %693 = vmatmul.mubr.f32.gmra.mxu0 %v523
    %v694 = vpop.f32.mrf.mxu0
    %v695 = vadd.f32 0.0, %v694
    %v696 = vpop.f32.mrf.mxu0
    %697 = vmatprep.mubr.f32.mxu0 0.0
    %698 = vmatmul.mubr.f32.gmra.mxu0 %v526
    %v699 = vpop.f32.mrf.mxu0
    %v700 = vadd.f32 0.0, %v699
    %v701 = vpop.f32.mrf.mxu0
    %702 = vmatprep.mubr.f32.mxu0 0.0
    %703 = vmatmul.mubr.f32.gmra.mxu0 %v529
    %v704 = vpop.f32.mrf.mxu0
    %v705 = vadd.f32 0.0, %v704
    %v706 = vpop.f32.mrf.mxu0
    %707 = vmatprep.mubr.f32.mxu0 0.0
    %708 = vmatmul.mubr.f32.gmra.mxu0 %v532
    %v709 = vpop.f32.mrf.mxu0
    %v710 = vadd.f32 0.0, %v709
    %v711 = vpop.f32.mrf.mxu0
    %712 = vmatprep.mubr.f32.mxu0 0.0
    %713 = vmatmul.mubr.f32.gmra.mxu0 %v535
    %v714 = vpop.f32.mrf.mxu0
    %v715 = vadd.f32 0.0, %v714
    %v716 = vpop.f32.mrf.mxu0
    %717 = vmatprep.mubr.f32.mxu0 0.0
    %718 = vmatmul.mubr.f32.gmra.mxu0 %v538
    %v719 = vpop.f32.mrf.mxu0
    %v720 = vadd.f32 0.0, %v719
    %v721 = vpop.f32.mrf.mxu0
    %722 = vmatprep.mubr.f32.mxu0 0.0
    %723 = vmatmul.mubr.f32.gmra.mxu0 %v541
    %v724 = vpop.f32.mrf.mxu0
    %v725 = vadd.f32 0.0, %v724
    %v726 = vpop.f32.mrf.mxu0
    %727 = vmatprep.mubr.f32.mxu0 0.0
    %728 = vmatmul.mubr.f32.gmra.mxu0 %v544
    %v729 = vpop.f32.mrf.mxu0
    %v730 = vadd.f32 0.0, %v729
    %v731 = vpop.f32.mrf.mxu0
    %732 = vmatprep.mubr.f32.mxu0 0.0
    %733 = vmatmul.mubr.f32.gmra.mxu0 %v547
    %v734 = vpop.f32.mrf.mxu0
    %v735 = vadd.f32 0.0, %v734
    %v736 = vpop.f32.mrf.mxu0
    %737 = vmatprep.mubr.f32.mxu0 0.0
    %738 = vmatmul.mubr.f32.gmra.mxu0 %v550
    %v739 = vpop.f32.mrf.mxu0
    %v740 = vadd.f32 0.0, %v739
    %v741 = vpop.f32.mrf.mxu0
    %742 = vmatprep.mubr.f32.mxu0 0.0
    %743 = vmatmul.mubr.f32.gmra.mxu0 %v553
    %v744 = vpop.f32.mrf.mxu0
    %v745 = vadd.f32 0.0, %v744
    %v746 = vpop.f32.mrf.mxu0
    %747 = vmatprep.mubr.f32.mxu0 0.0
    %748 = vmatmul.mubr.f32.gmra.mxu0 %v556
    %v749 = vpop.f32.mrf.mxu0
    %v750 = vadd.f32 0.0, %v749
    %v751 = vpop.f32.mrf.mxu0
    %752 = vmatprep.mubr.f32.mxu0 0.0
    %753 = vmatmul.mubr.f32.gmra.mxu0 %v559
    %v754 = vpop.f32.mrf.mxu0
    %v755 = vadd.f32 0.0, %v754
    %v756 = vpop.f32.mrf.mxu0
    %757 = vmatprep.mubr.f32.mxu0 0.0
    %758 = vmatmul.mubr.f32.gmra.mxu0 %v562
    %v759 = vpop.f32.mrf.mxu0
    %v760 = vadd.f32 0.0, %v759
    %v761 = vpop.f32.mrf.mxu0
    %762 = vmatprep.mubr.f32.mxu0 0.0
    %763 = vmatmul.mubr.f32.gmra.mxu0 %v565
    %v764 = vpop.f32.mrf.mxu0
    %v765 = vadd.f32 0.0, %v764
    %v766 = vpop.f32.mrf.mxu0
    %767 = vmatprep.mubr.f32.mxu0 0.0
    %768 = vmatmul.mubr.f32.gmra.mxu0 %v568
    %v769 = vpop.f32.mrf.mxu0
    %v770 = vadd.f32 0.0, %v769
    %v771 = vpop.f32.mrf.mxu0
    %772 = vmatprep.mubr.f32.mxu0 0.0
    %773 = vmatmul.mubr.f32.gmra.mxu0 %v571
    %v774 = vpop.f32.mrf.mxu0
    %v775 = vadd.f32 0.0, %v774
    %v776 = vpop.f32.mrf.mxu0
    %777 = vmatprep.mubr.f32.mxu0 0.0
    %778 = vmatmul.mubr.f32.gmra.mxu0 %v574
    %v779 = vpop.f32.mrf.mxu0
    %v780 = vadd.f32 0.0, %v779
    %v781 = vpop.f32.mrf.mxu0
    %782 = vmatprep.mubr.f32.mxu0 0.0
    %783 = vmatmul.mubr.f32.gmra.mxu0 %v577
    %v784 = vpop.f32.mrf.mxu0
    %v785 = vadd.f32 0.0, %v784
    %v786 = vpop.f32.mrf.mxu0
    %787 = vmatprep.mubr.f32.mxu0 0.0
    %788 = vmatmul.mubr.f32.gmra.mxu0 %v580
    %v789 = vpop.f32.mrf.mxu0
    %v790 = vadd.f32 0.0, %v789
    %v791 = vpop.f32.mrf.mxu0
    %792 = vmatprep.mubr.f32.mxu0 0.0
    %793 = vmatmul.mubr.f32.gmra.mxu0 %v583
    %v794 = vpop.f32.mrf.mxu0
    %v795 = vadd.f32 0.0, %v794
    %v796 = vpop.f32.mrf.mxu0
    %797 = vmatprep.mubr.f32.mxu0 0.0
    %798 = vmatmul.mubr.f32.gmra.mxu0 %v586
    %v799 = vpop.f32.mrf.mxu0
    %v800 = vadd.f32 0.0, %v799
    %v801 = vpop.f32.mrf.mxu0
    %802 = vmatprep.mubr.f32.mxu0 0.0
    %803 = vmatmul.mubr.f32.gmra.mxu0 %v589
    %v804 = vpop.f32.mrf.mxu0
    %v805 = vadd.f32 0.0, %v804
    %v806 = vpop.f32.mrf.mxu0
    %807 = vmatprep.mubr.f32.mxu0 0.0
    %808 = vmatmul.mubr.f32.gmra.mxu0 %v592
    %v809 = vpop.f32.mrf.mxu0
    %v810 = vadd.f32 0.0, %v809
    %v811 = vpop.f32.mrf.mxu0
    %812 = vmatprep.mubr.f32.mxu0 0.0
    %813 = vmatmul.mubr.f32.gmra.mxu0 %v595
    %v814 = vpop.f32.mrf.mxu0
    %v815 = vadd.f32 0.0, %v814
    %v816 = vpop.f32.mrf.mxu0
    %817 = vmatprep.mubr.f32.mxu0 0.0
    %818 = vmatmul.mubr.f32.gmra.mxu0 %v598
    %v819 = vpop.f32.mrf.mxu0
    %v820 = vadd.f32 0.0, %v819
    %v821 = vpop.f32.mrf.mxu0
    %822 = vmatprep.mubr.f32.mxu0 0.0
    %823 = vmatmul.mubr.f32.gmra.mxu0 %v601
    %v824 = vpop.f32.mrf.mxu0
    %v825 = vadd.f32 0.0, %v824
    %v826 = vpop.f32.mrf.mxu0
    %827 = vdwg.mxu0
    %828 = vst.msk [vmem:[#allocation2] sm:$0xff] %vm113, %v670
    %829 = vst.msk [vmem:[#allocation2 + $0x8] sm:$0xff] %vm113, %v675
    %830 = vst.msk [vmem:[#allocation2 + $0x10] sm:$0xff] %vm113, %v680
    %831 = vst.msk [vmem:[#allocation2 + $0x18] sm:$0xff] %vm113, %v685
    %832 = vst.msk [vmem:[#allocation2 + $0x20] sm:$0xff] %vm113, %v690
    %833 = vst.msk [vmem:[#allocation2 + $0x28] sm:$0xff] %vm113, %v695
    %834 = vst.msk [vmem:[#allocation2 + $0x30] sm:$0xff] %vm113, %v700
    %835 = vst.msk [vmem:[#allocation2 + $0x38] sm:$0xff] %vm113, %v705
    %836 = vst.msk [vmem:[#allocation2 + $0x40] sm:$0xff] %vm113, %v710
    %837 = vst.msk [vmem:[#allocation2 + $0x48] sm:$0xff] %vm113, %v715
    %838 = vst.msk [vmem:[#allocation2 + $0x50] sm:$0xff] %vm113, %v720
    %839 = vst.msk [vmem:[#allocation2 + $0x58] sm:$0xff] %vm113, %v725
    %840 = vst.msk [vmem:[#allocation2 + $0x60] sm:$0xff] %vm113, %v730
    %841 = vst.msk [vmem:[#allocation2 + $0x68] sm:$0xff] %vm113, %v735
    %842 = vst.msk [vmem:[#allocation2 + $0x70] sm:$0xff] %vm113, %v740
    %843 = vst.msk [vmem:[#allocation2 + $0x78] sm:$0xff] %vm113, %v745
    %844 = vst.msk [vmem:[#allocation2 + $0x80] sm:$0xff] %vm113, %v750
    %845 = vst.msk [vmem:[#allocation2 + $0x88] sm:$0xff] %vm113, %v755
    %846 = vst.msk [vmem:[#allocation2 + $0x90] sm:$0xff] %vm113, %v760
    %847 = vst.msk [vmem:[#allocation2 + $0x98] sm:$0xff] %vm113, %v765
    %848 = vst.msk [vmem:[#allocation2 + $0xa0] sm:$0xff] %vm113, %v770
    %849 = vst.msk [vmem:[#allocation2 + $0xa8] sm:$0xff] %vm113, %v775
    %850 = vst.msk [vmem:[#allocation2 + $0xb0] sm:$0xff] %vm113, %v780
    %851 = vst.msk [vmem:[#allocation2 + $0xb8] sm:$0xff] %vm113, %v785
    %852 = vst.msk [vmem:[#allocation2 + $0xc0] sm:$0xff] %vm113, %v790
    %853 = vst.msk [vmem:[#allocation2 + $0xc8] sm:$0xff] %vm113, %v795
    %854 = vst.msk [vmem:[#allocation2 + $0xd0] sm:$0xff] %vm113, %v800
    %855 = vst.msk [vmem:[#allocation2 + $0xd8] sm:$0xff] %vm113, %v805
    %856 = vst.msk [vmem:[#allocation2 + $0xe0] sm:$0xff] %vm113, %v810
    %857 = vst.msk [vmem:[#allocation2 + $0xe8] sm:$0xff] %vm113, %v815
    %858 = vst.msk [vmem:[#allocation2 + $0xf0] sm:$0xff] %vm113, %v820
    %859 = vst.msk [vmem:[#allocation2 + $0xf8] sm:$0xff] %vm113, %v825
    %860 = vst.msk [vmem:[#allocation4] sm:$0xff] %vm113, 0.0
    %861 = vst.msk [vmem:[#allocation4 + $0x8] sm:$0xff] %vm113, 0.0
    %862 = vst.msk [vmem:[#allocation4 + $0x10] sm:$0xff] %vm113, 0.0
    %863 = vst.msk [vmem:[#allocation4 + $0x18] sm:$0xff] %vm113, 0.0
    %864 = vst.msk [vmem:[#allocation4 + $0x20] sm:$0xff] %vm113, 0.0
    %865 = vst.msk [vmem:[#allocation4 + $0x28] sm:$0xff] %vm113, 0.0
    %866 = vst.msk [vmem:[#allocation4 + $0x30] sm:$0xff] %vm113, 0.0
    %867 = vst.msk [vmem:[#allocation4 + $0x38] sm:$0xff] %vm113, 0.0
    %868 = vst.msk [vmem:[#allocation4 + $0x40] sm:$0xff] %vm113, 0.0
    %869 = vst.msk [vmem:[#allocation4 + $0x48] sm:$0xff] %vm113, 0.0
    %870 = vst.msk [vmem:[#allocation4 + $0x50] sm:$0xff] %vm113, 0.0
    %871 = vst.msk [vmem:[#allocation4 + $0x58] sm:$0xff] %vm113, 0.0
    %872 = vst.msk [vmem:[#allocation4 + $0x60] sm:$0xff] %vm113, 0.0
    %873 = vst.msk [vmem:[#allocation4 + $0x68] sm:$0xff] %vm113, 0.0
    %874 = vst.msk [vmem:[#allocation4 + $0x70] sm:$0xff] %vm113, 0.0
    %875 = vst.msk [vmem:[#allocation4 + $0x78] sm:$0xff] %vm113, 0.0
    %876 = vst.msk [vmem:[#allocation4 + $0x80] sm:$0xff] %vm113, 0.0
    %877 = vst.msk [vmem:[#allocation4 + $0x88] sm:$0xff] %vm113, 0.0
    %878 = vst.msk [vmem:[#allocation4 + $0x90] sm:$0xff] %vm113, 0.0
    %879 = vst.msk [vmem:[#allocation4 + $0x98] sm:$0xff] %vm113, 0.0
    %880 = vst.msk [vmem:[#allocation4 + $0xa0] sm:$0xff] %vm113, 0.0
    %881 = vst.msk [vmem:[#allocation4 + $0xa8] sm:$0xff] %vm113, 0.0
    %882 = vst.msk [vmem:[#allocation4 + $0xb0] sm:$0xff] %vm113, 0.0
    %883 = vst.msk [vmem:[#allocation4 + $0xb8] sm:$0xff] %vm113, 0.0
    %884 = vst.msk [vmem:[#allocation4 + $0xc0] sm:$0xff] %vm113, 0.0
    %885 = vst.msk [vmem:[#allocation4 + $0xc8] sm:$0xff] %vm113, 0.0
    %886 = vst.msk [vmem:[#allocation4 + $0xd0] sm:$0xff] %vm113, 0.0
    %887 = vst.msk [vmem:[#allocation4 + $0xd8] sm:$0xff] %vm113, 0.0
    %888 = vst.msk [vmem:[#allocation4 + $0xe0] sm:$0xff] %vm113, 0.0
    %889 = vst.msk [vmem:[#allocation4 + $0xe8] sm:$0xff] %vm113, 0.0
    %890 = vst.msk [vmem:[#allocation4 + $0xf0] sm:$0xff] %vm113, 0.0
    %891 = vst.msk [vmem:[#allocation4 + $0xf8] sm:$0xff] %vm113, 0.0
    %892 = vst.msk [vmem:[#allocation5] sm:$0xff] %vm113, 0.0
    %893 = vst.msk [vmem:[#allocation5 + $0x8] sm:$0xff] %vm113, 0.0
    %894 = vst.msk [vmem:[#allocation5 + $0x10] sm:$0xff] %vm113, 0.0
    %895 = vst.msk [vmem:[#allocation5 + $0x18] sm:$0xff] %vm113, 0.0
    %896 = vst.msk [vmem:[#allocation5 + $0x20] sm:$0xff] %vm113, 0.0
    %897 = vst.msk [vmem:[#allocation5 + $0x28] sm:$0xff] %vm113, 0.0
    %898 = vst.msk [vmem:[#allocation5 + $0x30] sm:$0xff] %vm113, 0.0
    %899 = vst.msk [vmem:[#allocation5 + $0x38] sm:$0xff] %vm113, 0.0
    %900 = vst.msk [vmem:[#allocation5 + $0x40] sm:$0xff] %vm113, 0.0
    %901 = vst.msk [vmem:[#allocation5 + $0x48] sm:$0xff] %vm113, 0.0
    %902 = vst.msk [vmem:[#allocation5 + $0x50] sm:$0xff] %vm113, 0.0
    %903 = vst.msk [vmem:[#allocation5 + $0x58] sm:$0xff] %vm113, 0.0
    %904 = vst.msk [vmem:[#allocation5 + $0x60] sm:$0xff] %vm113, 0.0
    %905 = vst.msk [vmem:[#allocation5 + $0x68] sm:$0xff] %vm113, 0.0
    %906 = vst.msk [vmem:[#allocation5 + $0x70] sm:$0xff] %vm113, 0.0
    %907 = vst.msk [vmem:[#allocation5 + $0x78] sm:$0xff] %vm113, 0.0
    %908 = vst.msk [vmem:[#allocation5 + $0x80] sm:$0xff] %vm113, 0.0
    %909 = vst.msk [vmem:[#allocation5 + $0x88] sm:$0xff] %vm113, 0.0
    %910 = vst.msk [vmem:[#allocation5 + $0x90] sm:$0xff] %vm113, 0.0
    %911 = vst.msk [vmem:[#allocation5 + $0x98] sm:$0xff] %vm113, 0.0
    %912 = vst.msk [vmem:[#allocation5 + $0xa0] sm:$0xff] %vm113, 0.0
    %913 = vst.msk [vmem:[#allocation5 + $0xa8] sm:$0xff] %vm113, 0.0
    %914 = vst.msk [vmem:[#allocation5 + $0xb0] sm:$0xff] %vm113, 0.0
    %915 = vst.msk [vmem:[#allocation5 + $0xb8] sm:$0xff] %vm113, 0.0
    %916 = vst.msk [vmem:[#allocation5 + $0xc0] sm:$0xff] %vm113, 0.0
    %917 = vst.msk [vmem:[#allocation5 + $0xc8] sm:$0xff] %vm113, 0.0
    %918 = vst.msk [vmem:[#allocation5 + $0xd0] sm:$0xff] %vm113, 0.0
    %919 = vst.msk [vmem:[#allocation5 + $0xd8] sm:$0xff] %vm113, 0.0
    %920 = vst.msk [vmem:[#allocation5 + $0xe0] sm:$0xff] %vm113, 0.0
    %921 = vst.msk [vmem:[#allocation5 + $0xe8] sm:$0xff] %vm113, 0.0
    %922 = vst.msk [vmem:[#allocation5 + $0xf0] sm:$0xff] %vm113, 0.0
    %923 = vst.msk [vmem:[#allocation5 + $0xf8] sm:$0xff] %vm113, 0.0
    %924 = vst.msk [vmem:[#allocation5 + $0x100] sm:$0xff] %vm113, 0.0
    %925 = vst.msk [vmem:[#allocation5 + $0x108] sm:$0xff] %vm113, 0.0
    %926 = vst.msk [vmem:[#allocation5 + $0x110] sm:$0xff] %vm113, 0.0
    %927 = vst.msk [vmem:[#allocation5 + $0x118] sm:$0xff] %vm113, 0.0
    %928 = vst.msk [vmem:[#allocation5 + $0x120] sm:$0xff] %vm113, 0.0
    %929 = vst.msk [vmem:[#allocation5 + $0x128] sm:$0xff] %vm113, 0.0
    %930 = vst.msk [vmem:[#allocation5 + $0x130] sm:$0xff] %vm113, 0.0
    %931 = vst.msk [vmem:[#allocation5 + $0x138] sm:$0xff] %vm113, 0.0
    %932 = vst.msk [vmem:[#allocation5 + $0x140] sm:$0xff] %vm113, 0.0
    %933 = vst.msk [vmem:[#allocation5 + $0x148] sm:$0xff] %vm113, 0.0
    %934 = vst.msk [vmem:[#allocation5 + $0x150] sm:$0xff] %vm113, 0.0
    %935 = vst.msk [vmem:[#allocation5 + $0x158] sm:$0xff] %vm113, 0.0
    %936 = vst.msk [vmem:[#allocation5 + $0x160] sm:$0xff] %vm113, 0.0
    %937 = vst.msk [vmem:[#allocation5 + $0x168] sm:$0xff] %vm113, 0.0
    %938 = vst.msk [vmem:[#allocation5 + $0x170] sm:$0xff] %vm113, 0.0
    %939 = vst.msk [vmem:[#allocation5 + $0x178] sm:$0xff] %vm113, 0.0
    %940 = vst.msk [vmem:[#allocation5 + $0x180] sm:$0xff] %vm113, 0.0
    %941 = vst.msk [vmem:[#allocation5 + $0x188] sm:$0xff] %vm113, 0.0
    %942 = vst.msk [vmem:[#allocation5 + $0x190] sm:$0xff] %vm113, 0.0
    %943 = vst.msk [vmem:[#allocation5 + $0x198] sm:$0xff] %vm113, 0.0
    %944 = vst.msk [vmem:[#allocation5 + $0x1a0] sm:$0xff] %vm113, 0.0
    %945 = vst.msk [vmem:[#allocation5 + $0x1a8] sm:$0xff] %vm113, 0.0
    %946 = vst.msk [vmem:[#allocation5 + $0x1b0] sm:$0xff] %vm113, 0.0
    %947 = vst.msk [vmem:[#allocation5 + $0x1b8] sm:$0xff] %vm113, 0.0
    %948 = vst.msk [vmem:[#allocation5 + $0x1c0] sm:$0xff] %vm113, 0.0
    %949 = vst.msk [vmem:[#allocation5 + $0x1c8] sm:$0xff] %vm113, 0.0
    %950 = vst.msk [vmem:[#allocation5 + $0x1d0] sm:$0xff] %vm113, 0.0
    %951 = vst.msk [vmem:[#allocation5 + $0x1d8] sm:$0xff] %vm113, 0.0
    %952 = vst.msk [vmem:[#allocation5 + $0x1e0] sm:$0xff] %vm113, 0.0
    %953 = vst.msk [vmem:[#allocation5 + $0x1e8] sm:$0xff] %vm113, 0.0
    %954 = vst.msk [vmem:[#allocation5 + $0x1f0] sm:$0xff] %vm113, 0.0
    %955 = vst.msk [vmem:[#allocation5 + $0x1f8] sm:$0xff] %vm113, 0.0
  $region65: #{gnn_policy_forward.9} parent=0 // pred_fallthru
    _
  %s956 = smul.u32 0, 512
  %s957 = ssub.s32 24, %s956
  %p958 = scmp.lt.s32.totalorder %s957, 512
  %s959 = scalar_select %p958, %s957, 512
  // While loop
  $region66: #{gnn_policy_forward.9} parent=0 // loop_pre_header
    _
  $region67: #{gnn_policy_forward.9} parent=0 // loop_header
    %s961 = sphi 0, %s963
    %p962 = scmp.ge.s32.totalorder %s961, %s959
  $region68: #{gnn_policy_forward.9} parent=0 // loop_header_branch
    %965 = sbr.rel (%p962) target = $region72
  $region69: #{gnn_policy_forward.9} parent=0 // loop_body
    %s966 = sadd.s32 %s956, %s961
    %s967 = sld [smem:[#allocation8 + %s966]]
    %s968 = sld [smem:[#allocation9 + %s966]]
    %s969 = scalar_lea.vmem [#allocation3], %s968
    %v970 = vld [vmem:[%s969] sm:$0x1]
    %s971 = scalar_lea.vmem [#allocation2], %s967
    %v972 = vld [vmem:[%s971] sm:$0x1]
    %v973 = vadd.f32 %v970, %v972
    %s974 = scalar_lea.vmem [#allocation5], %s961
    %vm975 = vcmask 516096
    %976 = vst.msk [vmem:[%s974] sm:$0x1] %vm975, %v973
  $region70: #{gnn_policy_forward.9} parent=0 // loop_footer
    %s963 = sadd.s32 %s961, 1
  $region71: #{gnn_policy_forward.9} parent=0 // loop_footer_branch
    %960 = sbr.rel target = $region67
  $region72: #{gnn_policy_forward.9} parent=0 // loop_exit
    _
  %v977 = vld [vmem:[#allocation5] sm:$0xff]
  %v978 = vld [vmem:[#allocation5 + $0x8] sm:$0xff]
  %v979 = vld [vmem:[#allocation5 + $0x10] sm:$0xff]
  %v980 = vld [vmem:[#allocation5 + $0x18] sm:$0xff]
  %v981 = vld [vmem:[#allocation5 + $0x20] sm:$0xff]
  %v982 = vld [vmem:[#allocation5 + $0x28] sm:$0xff]
  %v983 = vld [vmem:[#allocation5 + $0x30] sm:$0xff]
  %v984 = vld [vmem:[#allocation5 + $0x38] sm:$0xff]
  %v985 = vld [vmem:[#allocation5 + $0x40] sm:$0xff]
  %v986 = vld [vmem:[#allocation5 + $0x48] sm:$0xff]
  %v987 = vld [vmem:[#allocation5 + $0x50] sm:$0xff]
  %v988 = vld [vmem:[#allocation5 + $0x58] sm:$0xff]
  %v989 = vld [vmem:[#allocation5 + $0x60] sm:$0xff]
  %v990 = vld [vmem:[#allocation5 + $0x68] sm:$0xff]
  %v991 = vld [vmem:[#allocation5 + $0x70] sm:$0xff]
  %v992 = vld [vmem:[#allocation5 + $0x78] sm:$0xff]
  %v993 = vld [vmem:[#allocation5 + $0x80] sm:$0xff]
  %v994 = vld [vmem:[#allocation5 + $0x88] sm:$0xff]
  %v995 = vld [vmem:[#allocation5 + $0x90] sm:$0xff]
  %v996 = vld [vmem:[#allocation5 + $0x98] sm:$0xff]
  %v997 = vld [vmem:[#allocation5 + $0xa0] sm:$0xff]
  %v998 = vld [vmem:[#allocation5 + $0xa8] sm:$0xff]
  %v999 = vld [vmem:[#allocation5 + $0xb0] sm:$0xff]
  %v1000 = vld [vmem:[#allocation5 + $0xb8] sm:$0xff]
  %v1001 = vld [vmem:[#allocation5 + $0xc0] sm:$0xff]
  %v1002 = vld [vmem:[#allocation5 + $0xc8] sm:$0xff]
  %v1003 = vld [vmem:[#allocation5 + $0xd0] sm:$0xff]
  %v1004 = vld [vmem:[#allocation5 + $0xd8] sm:$0xff]
  %v1005 = vld [vmem:[#allocation5 + $0xe0] sm:$0xff]
  %v1006 = vld [vmem:[#allocation5 + $0xe8] sm:$0xff]
  %v1007 = vld [vmem:[#allocation5 + $0xf0] sm:$0xff]
  %v1008 = vld [vmem:[#allocation5 + $0xf8] sm:$0xff]
  %v1009 = vld [vmem:[#allocation5 + $0x100] sm:$0xff]
  %v1010 = vld [vmem:[#allocation5 + $0x108] sm:$0xff]
  %v1011 = vld [vmem:[#allocation5 + $0x110] sm:$0xff]
  %v1012 = vld [vmem:[#allocation5 + $0x118] sm:$0xff]
  %v1013 = vld [vmem:[#allocation5 + $0x120] sm:$0xff]
  %v1014 = vld [vmem:[#allocation5 + $0x128] sm:$0xff]
  %v1015 = vld [vmem:[#allocation5 + $0x130] sm:$0xff]
  %v1016 = vld [vmem:[#allocation5 + $0x138] sm:$0xff]
  %v1017 = vld [vmem:[#allocation5 + $0x140] sm:$0xff]
  %v1018 = vld [vmem:[#allocation5 + $0x148] sm:$0xff]
  %v1019 = vld [vmem:[#allocation5 + $0x150] sm:$0xff]
  %v1020 = vld [vmem:[#allocation5 + $0x158] sm:$0xff]
  %v1021 = vld [vmem:[#allocation5 + $0x160] sm:$0xff]
  %v1022 = vld [vmem:[#allocation5 + $0x168] sm:$0xff]
  %v1023 = vld [vmem:[#allocation5 + $0x170] sm:$0xff]
  %v1024 = vld [vmem:[#allocation5 + $0x178] sm:$0xff]
  %v1025 = vld [vmem:[#allocation5 + $0x180] sm:$0xff]
  %v1026 = vld [vmem:[#allocation5 + $0x188] sm:$0xff]
  %v1027 = vld [vmem:[#allocation5 + $0x190] sm:$0xff]
  %v1028 = vld [vmem:[#allocation5 + $0x198] sm:$0xff]
  %v1029 = vld [vmem:[#allocation5 + $0x1a0] sm:$0xff]
  %v1030 = vld [vmem:[#allocation5 + $0x1a8] sm:$0xff]
  %v1031 = vld [vmem:[#allocation5 + $0x1b0] sm:$0xff]
  %v1032 = vld [vmem:[#allocation5 + $0x1b8] sm:$0xff]
  %v1033 = vld [vmem:[#allocation5 + $0x1c0] sm:$0xff]
  %v1034 = vld [vmem:[#allocation5 + $0x1c8] sm:$0xff]
  %v1035 = vld [vmem:[#allocation5 + $0x1d0] sm:$0xff]
  %v1036 = vld [vmem:[#allocation5 + $0x1d8] sm:$0xff]
  %v1037 = vld [vmem:[#allocation5 + $0x1e0] sm:$0xff]
  %v1038 = vld [vmem:[#allocation5 + $0x1e8] sm:$0xff]
  %v1039 = vld [vmem:[#allocation5 + $0x1f0] sm:$0xff]
  %v1040 = vld [vmem:[#allocation5 + $0x1f8] sm:$0xff]
  %v1041 = vld [vmem:[%s7] sm:$0x1]
  %v1042 = vld [vmem:[%s8] sm:$0x1]
  %vm1043 = vcmask 523264
  %v1044 = vsel %vm1043, %v977, 0.0
  %1045 = vadd.xlane.f32.xlu0 %v1044
  %v1046 = vpop.xlane.xlu0 %1045
  %v1047 = vsel %vm1043, %v978, 0.0
  %1048 = vadd.xlane.f32.xlu0 %v1047
  %v1049 = vpop.xlane.xlu0 %1048
  %v1050 = vsel %vm1043, %v979, 0.0
  %1051 = vadd.xlane.f32.xlu0 %v1050
  %v1052 = vpop.xlane.xlu0 %1051
  %v1053 = vsel %vm1043, %v980, 0.0
  %1054 = vadd.xlane.f32.xlu0 %v1053
  %v1055 = vpop.xlane.xlu0 %1054
  %v1056 = vsel %vm1043, %v981, 0.0
  %1057 = vadd.xlane.f32.xlu0 %v1056
  %v1058 = vpop.xlane.xlu0 %1057
  %v1059 = vsel %vm1043, %v982, 0.0
  %1060 = vadd.xlane.f32.xlu0 %v1059
  %v1061 = vpop.xlane.xlu0 %1060
  %v1062 = vsel %vm1043, %v983, 0.0
  %1063 = vadd.xlane.f32.xlu0 %v1062
  %v1064 = vpop.xlane.xlu0 %1063
  %v1065 = vsel %vm1043, %v984, 0.0
  %1066 = vadd.xlane.f32.xlu0 %v1065
  %v1067 = vpop.xlane.xlu0 %1066
  %v1068 = vsel %vm1043, %v985, 0.0
  %1069 = vadd.xlane.f32.xlu0 %v1068
  %v1070 = vpop.xlane.xlu0 %1069
  %v1071 = vsel %vm1043, %v986, 0.0
  %1072 = vadd.xlane.f32.xlu0 %v1071
  %v1073 = vpop.xlane.xlu0 %1072
  %v1074 = vsel %vm1043, %v987, 0.0
  %1075 = vadd.xlane.f32.xlu0 %v1074
  %v1076 = vpop.xlane.xlu0 %1075
  %v1077 = vsel %vm1043, %v988, 0.0
  %1078 = vadd.xlane.f32.xlu0 %v1077
  %v1079 = vpop.xlane.xlu0 %1078
  %v1080 = vsel %vm1043, %v989, 0.0
  %1081 = vadd.xlane.f32.xlu0 %v1080
  %v1082 = vpop.xlane.xlu0 %1081
  %v1083 = vsel %vm1043, %v990, 0.0
  %1084 = vadd.xlane.f32.xlu0 %v1083
  %v1085 = vpop.xlane.xlu0 %1084
  %v1086 = vsel %vm1043, %v991, 0.0
  %1087 = vadd.xlane.f32.xlu0 %v1086
  %v1088 = vpop.xlane.xlu0 %1087
  %v1089 = vsel %vm1043, %v992, 0.0
  %1090 = vadd.xlane.f32.xlu0 %v1089
  %v1091 = vpop.xlane.xlu0 %1090
  %v1092 = vsel %vm1043, %v993, 0.0
  %1093 = vadd.xlane.f32.xlu0 %v1092
  %v1094 = vpop.xlane.xlu0 %1093
  %v1095 = vsel %vm1043, %v994, 0.0
  %1096 = vadd.xlane.f32.xlu0 %v1095
  %v1097 = vpop.xlane.xlu0 %1096
  %v1098 = vsel %vm1043, %v995, 0.0
  %1099 = vadd.xlane.f32.xlu0 %v1098
  %v1100 = vpop.xlane.xlu0 %1099
  %v1101 = vsel %vm1043, %v996, 0.0
  %1102 = vadd.xlane.f32.xlu0 %v1101
  %v1103 = vpop.xlane.xlu0 %1102
  %v1104 = vsel %vm1043, %v997, 0.0
  %1105 = vadd.xlane.f32.xlu0 %v1104
  %v1106 = vpop.xlane.xlu0 %1105
  %v1107 = vsel %vm1043, %v998, 0.0
  %1108 = vadd.xlane.f32.xlu0 %v1107
  %v1109 = vpop.xlane.xlu0 %1108
  %v1110 = vsel %vm1043, %v999, 0.0
  %1111 = vadd.xlane.f32.xlu0 %v1110
  %v1112 = vpop.xlane.xlu0 %1111
  %v1113 = vsel %vm1043, %v1000, 0.0
  %1114 = vadd.xlane.f32.xlu0 %v1113
  %v1115 = vpop.xlane.xlu0 %1114
  %v1116 = vsel %vm1043, %v1001, 0.0
  %1117 = vadd.xlane.f32.xlu0 %v1116
  %v1118 = vpop.xlane.xlu0 %1117
  %v1119 = vsel %vm1043, %v1002, 0.0
  %1120 = vadd.xlane.f32.xlu0 %v1119
  %v1121 = vpop.xlane.xlu0 %1120
  %v1122 = vsel %vm1043, %v1003, 0.0
  %1123 = vadd.xlane.f32.xlu0 %v1122
  %v1124 = vpop.xlane.xlu0 %1123
  %v1125 = vsel %vm1043, %v1004, 0.0
  %1126 = vadd.xlane.f32.xlu0 %v1125
  %v1127 = vpop.xlane.xlu0 %1126
  %v1128 = vsel %vm1043, %v1005, 0.0
  %1129 = vadd.xlane.f32.xlu0 %v1128
  %v1130 = vpop.xlane.xlu0 %1129
  %v1131 = vsel %vm1043, %v1006, 0.0
  %1132 = vadd.xlane.f32.xlu0 %v1131
  %v1133 = vpop.xlane.xlu0 %1132
  %v1134 = vsel %vm1043, %v1007, 0.0
  %1135 = vadd.xlane.f32.xlu0 %v1134
  %v1136 = vpop.xlane.xlu0 %1135
  %v1137 = vsel %vm1043, %v1008, 0.0
  %1138 = vadd.xlane.f32.xlu0 %v1137
  %v1139 = vpop.xlane.xlu0 %1138
  %v1140 = vsel %vm1043, %v1009, 0.0
  %1141 = vadd.xlane.f32.xlu0 %v1140
  %v1142 = vpop.xlane.xlu0 %1141
  %v1143 = vsel %vm1043, %v1010, 0.0
  %1144 = vadd.xlane.f32.xlu0 %v1143
  %v1145 = vpop.xlane.xlu0 %1144
  %v1146 = vsel %vm1043, %v1011, 0.0
  %1147 = vadd.xlane.f32.xlu0 %v1146
  %v1148 = vpop.xlane.xlu0 %1147
  %v1149 = vsel %vm1043, %v1012, 0.0
  %1150 = vadd.xlane.f32.xlu0 %v1149
  %v1151 = vpop.xlane.xlu0 %1150
  %v1152 = vsel %vm1043, %v1013, 0.0
  %1153 = vadd.xlane.f32.xlu0 %v1152
  %v1154 = vpop.xlane.xlu0 %1153
  %v1155 = vsel %vm1043, %v1014, 0.0
  %1156 = vadd.xlane.f32.xlu0 %v1155
  %v1157 = vpop.xlane.xlu0 %1156
  %v1158 = vsel %vm1043, %v1015, 0.0
  %1159 = vadd.xlane.f32.xlu0 %v1158
  %v1160 = vpop.xlane.xlu0 %1159
  %v1161 = vsel %vm1043, %v1016, 0.0
  %1162 = vadd.xlane.f32.xlu0 %v1161
  %v1163 = vpop.xlane.xlu0 %1162
  %v1164 = vsel %vm1043, %v1017, 0.0
  %1165 = vadd.xlane.f32.xlu0 %v1164
  %v1166 = vpop.xlane.xlu0 %1165
  %v1167 = vsel %vm1043, %v1018, 0.0
  %1168 = vadd.xlane.f32.xlu0 %v1167
  %v1169 = vpop.xlane.xlu0 %1168
  %v1170 = vsel %vm1043, %v1019, 0.0
  %1171 = vadd.xlane.f32.xlu0 %v1170
  %v1172 = vpop.xlane.xlu0 %1171
  %v1173 = vsel %vm1043, %v1020, 0.0
  %1174 = vadd.xlane.f32.xlu0 %v1173
  %v1175 = vpop.xlane.xlu0 %1174
  %v1176 = vsel %vm1043, %v1021, 0.0
  %1177 = vadd.xlane.f32.xlu0 %v1176
  %v1178 = vpop.xlane.xlu0 %1177
  %v1179 = vsel %vm1043, %v1022, 0.0
  %1180 = vadd.xlane.f32.xlu0 %v1179
  %v1181 = vpop.xlane.xlu0 %1180
  %v1182 = vsel %vm1043, %v1023, 0.0
  %1183 = vadd.xlane.f32.xlu0 %v1182
  %v1184 = vpop.xlane.xlu0 %1183
  %v1185 = vsel %vm1043, %v1024, 0.0
  %1186 = vadd.xlane.f32.xlu0 %v1185
  %v1187 = vpop.xlane.xlu0 %1186
  %v1188 = vsel %vm1043, %v1025, 0.0
  %1189 = vadd.xlane.f32.xlu0 %v1188
  %v1190 = vpop.xlane.xlu0 %1189
  %v1191 = vsel %vm1043, %v1026, 0.0
  %1192 = vadd.xlane.f32.xlu0 %v1191
  %v1193 = vpop.xlane.xlu0 %1192
  %v1194 = vsel %vm1043, %v1027, 0.0
  %1195 = vadd.xlane.f32.xlu0 %v1194
  %v1196 = vpop.xlane.xlu0 %1195
  %v1197 = vsel %vm1043, %v1028, 0.0
  %1198 = vadd.xlane.f32.xlu0 %v1197
  %v1199 = vpop.xlane.xlu0 %1198
  %v1200 = vsel %vm1043, %v1029, 0.0
  %1201 = vadd.xlane.f32.xlu0 %v1200
  %v1202 = vpop.xlane.xlu0 %1201
  %v1203 = vsel %vm1043, %v1030, 0.0
  %1204 = vadd.xlane.f32.xlu0 %v1203
  %v1205 = vpop.xlane.xlu0 %1204
  %v1206 = vsel %vm1043, %v1031, 0.0
  %1207 = vadd.xlane.f32.xlu0 %v1206
  %v1208 = vpop.xlane.xlu0 %1207
  %v1209 = vsel %vm1043, %v1032, 0.0
  %1210 = vadd.xlane.f32.xlu0 %v1209
  %v1211 = vpop.xlane.xlu0 %1210
  %v1212 = vsel %vm1043, %v1033, 0.0
  %1213 = vadd.xlane.f32.xlu0 %v1212
  %v1214 = vpop.xlane.xlu0 %1213
  %v1215 = vsel %vm1043, %v1034, 0.0
  %1216 = vadd.xlane.f32.xlu0 %v1215
  %v1217 = vpop.xlane.xlu0 %1216
  %v1218 = vsel %vm1043, %v1035, 0.0
  %1219 = vadd.xlane.f32.xlu0 %v1218
  %v1220 = vpop.xlane.xlu0 %1219
  %v1221 = vsel %vm1043, %v1036, 0.0
  %1222 = vadd.xlane.f32.xlu0 %v1221
  %v1223 = vpop.xlane.xlu0 %1222
  %v1224 = vsel %vm1043, %v1037, 0.0
  %1225 = vadd.xlane.f32.xlu0 %v1224
  %v1226 = vpop.xlane.xlu0 %1225
  %v1227 = vsel %vm1043, %v1038, 0.0
  %1228 = vadd.xlane.f32.xlu0 %v1227
  %v1229 = vpop.xlane.xlu0 %1228
  %v1230 = vsel %vm1043, %v1039, 0.0
  %1231 = vadd.xlane.f32.xlu0 %v1230
  %v1232 = vpop.xlane.xlu0 %1231
  %v1233 = vsel %vm1043, %v1040, 0.0
  %1234 = vadd.xlane.f32.xlu0 %v1233
  %v1235 = vpop.xlane.xlu0 %1234
  %v1236 = vrcp.pop 64.0
  %v1237 = vmul.f32 %v1046, %v1236
  %v1238 = vmul.f32 %v1049, %v1236
  %v1239 = vmul.f32 %v1052, %v1236
  %v1240 = vmul.f32 %v1055, %v1236
  %v1241 = vmul.f32 %v1058, %v1236
  %v1242 = vmul.f32 %v1061, %v1236
  %v1243 = vmul.f32 %v1064, %v1236
  %v1244 = vmul.f32 %v1067, %v1236
  %v1245 = vmul.f32 %v1070, %v1236
  %v1246 = vmul.f32 %v1073, %v1236
  %v1247 = vmul.f32 %v1076, %v1236
  %v1248 = vmul.f32 %v1079, %v1236
  %v1249 = vmul.f32 %v1082, %v1236
  %v1250 = vmul.f32 %v1085, %v1236
  %v1251 = vmul.f32 %v1088, %v1236
  %v1252 = vmul.f32 %v1091, %v1236
  %v1253 = vmul.f32 %v1094, %v1236
  %v1254 = vmul.f32 %v1097, %v1236
  %v1255 = vmul.f32 %v1100, %v1236
  %v1256 = vmul.f32 %v1103, %v1236
  %v1257 = vmul.f32 %v1106, %v1236
  %v1258 = vmul.f32 %v1109, %v1236
  %v1259 = vmul.f32 %v1112, %v1236
  %v1260 = vmul.f32 %v1115, %v1236
  %v1261 = vmul.f32 %v1118, %v1236
  %v1262 = vmul.f32 %v1121, %v1236
  %v1263 = vmul.f32 %v1124, %v1236
  %v1264 = vmul.f32 %v1127, %v1236
  %v1265 = vmul.f32 %v1130, %v1236
  %v1266 = vmul.f32 %v1133, %v1236
  %v1267 = vmul.f32 %v1136, %v1236
  %v1268 = vmul.f32 %v1139, %v1236
  %v1269 = vmul.f32 %v1142, %v1236
  %v1270 = vmul.f32 %v1145, %v1236
  %v1271 = vmul.f32 %v1148, %v1236
  %v1272 = vmul.f32 %v1151, %v1236
  %v1273 = vmul.f32 %v1154, %v1236
  %v1274 = vmul.f32 %v1157, %v1236
  %v1275 = vmul.f32 %v1160, %v1236
  %v1276 = vmul.f32 %v1163, %v1236
  %v1277 = vmul.f32 %v1166, %v1236
  %v1278 = vmul.f32 %v1169, %v1236
  %v1279 = vmul.f32 %v1172, %v1236
  %v1280 = vmul.f32 %v1175, %v1236
  %v1281 = vmul.f32 %v1178, %v1236
  %v1282 = vmul.f32 %v1181, %v1236
  %v1283 = vmul.f32 %v1184, %v1236
  %v1284 = vmul.f32 %v1187, %v1236
  %v1285 = vmul.f32 %v1190, %v1236
  %v1286 = vmul.f32 %v1193, %v1236
  %v1287 = vmul.f32 %v1196, %v1236
  %v1288 = vmul.f32 %v1199, %v1236
  %v1289 = vmul.f32 %v1202, %v1236
  %v1290 = vmul.f32 %v1205, %v1236
  %v1291 = vmul.f32 %v1208, %v1236
  %v1292 = vmul.f32 %v1211, %v1236
  %v1293 = vmul.f32 %v1214, %v1236
  %v1294 = vmul.f32 %v1217, %v1236
  %v1295 = vmul.f32 %v1220, %v1236
  %v1296 = vmul.f32 %v1223, %v1236
  %v1297 = vmul.f32 %v1226, %v1236
  %v1298 = vmul.f32 %v1229, %v1236
  %v1299 = vmul.f32 %v1232, %v1236
  %v1300 = vmul.f32 %v1235, %v1236
  %v1301 = vsub.f32 %v977, %v1237
  %v1302 = vsub.f32 %v978, %v1238
  %v1303 = vsub.f32 %v979, %v1239
  %v1304 = vsub.f32 %v980, %v1240
  %v1305 = vsub.f32 %v981, %v1241
  %v1306 = vsub.f32 %v982, %v1242
  %v1307 = vsub.f32 %v983, %v1243
  %v1308 = vsub.f32 %v984, %v1244
  %v1309 = vsub.f32 %v985, %v1245
  %v1310 = vsub.f32 %v986, %v1246
  %v1311 = vsub.f32 %v987, %v1247
  %v1312 = vsub.f32 %v988, %v1248
  %v1313 = vsub.f32 %v989, %v1249
  %v1314 = vsub.f32 %v990, %v1250
  %v1315 = vsub.f32 %v991, %v1251
  %v1316 = vsub.f32 %v992, %v1252
  %v1317 = vsub.f32 %v993, %v1253
  %v1318 = vsub.f32 %v994, %v1254
  %v1319 = vsub.f32 %v995, %v1255
  %v1320 = vsub.f32 %v996, %v1256
  %v1321 = vsub.f32 %v997, %v1257
  %v1322 = vsub.f32 %v998, %v1258
  %v1323 = vsub.f32 %v999, %v1259
  %v1324 = vsub.f32 %v1000, %v1260
  %v1325 = vsub.f32 %v1001, %v1261
  %v1326 = vsub.f32 %v1002, %v1262
  %v1327 = vsub.f32 %v1003, %v1263
  %v1328 = vsub.f32 %v1004, %v1264
  %v1329 = vsub.f32 %v1005, %v1265
  %v1330 = vsub.f32 %v1006, %v1266
  %v1331 = vsub.f32 %v1007, %v1267
  %v1332 = vsub.f32 %v1008, %v1268
  %v1333 = vsub.f32 %v1009, %v1269
  %v1334 = vsub.f32 %v1010, %v1270
  %v1335 = vsub.f32 %v1011, %v1271
  %v1336 = vsub.f32 %v1012, %v1272
  %v1337 = vsub.f32 %v1013, %v1273
  %v1338 = vsub.f32 %v1014, %v1274
  %v1339 = vsub.f32 %v1015, %v1275
  %v1340 = vsub.f32 %v1016, %v1276
  %v1341 = vsub.f32 %v1017, %v1277
  %v1342 = vsub.f32 %v1018, %v1278
  %v1343 = vsub.f32 %v1019, %v1279
  %v1344 = vsub.f32 %v1020, %v1280
  %v1345 = vsub.f32 %v1021, %v1281
  %v1346 = vsub.f32 %v1022, %v1282
  %v1347 = vsub.f32 %v1023, %v1283
  %v1348 = vsub.f32 %v1024, %v1284
  %v1349 = vsub.f32 %v1025, %v1285
  %v1350 = vsub.f32 %v1026, %v1286
  %v1351 = vsub.f32 %v1027, %v1287
  %v1352 = vsub.f32 %v1028, %v1288
  %v1353 = vsub.f32 %v1029, %v1289
  %v1354 = vsub.f32 %v1030, %v1290
  %v1355 = vsub.f32 %v1031, %v1291
  %v1356 = vsub.f32 %v1032, %v1292
  %v1357 = vsub.f32 %v1033, %v1293
  %v1358 = vsub.f32 %v1034, %v1294
  %v1359 = vsub.f32 %v1035, %v1295
  %v1360 = vsub.f32 %v1036, %v1296
  %v1361 = vsub.f32 %v1037, %v1297
  %v1362 = vsub.f32 %v1038, %v1298
  %v1363 = vsub.f32 %v1039, %v1299
  %v1364 = vsub.f32 %v1040, %v1300
  %v1365 = vmul.f32 %v1301, %v1301
  %v1366 = vmul.f32 %v1302, %v1302
  %v1367 = vmul.f32 %v1303, %v1303
  %v1368 = vmul.f32 %v1304, %v1304
  %v1369 = vmul.f32 %v1305, %v1305
  %v1370 = vmul.f32 %v1306, %v1306
  %v1371 = vmul.f32 %v1307, %v1307
  %v1372 = vmul.f32 %v1308, %v1308
  %v1373 = vmul.f32 %v1309, %v1309
  %v1374 = vmul.f32 %v1310, %v1310
  %v1375 = vmul.f32 %v1311, %v1311
  %v1376 = vmul.f32 %v1312, %v1312
  %v1377 = vmul.f32 %v1313, %v1313
  %v1378 = vmul.f32 %v1314, %v1314
  %v1379 = vmul.f32 %v1315, %v1315
  %v1380 = vmul.f32 %v1316, %v1316
  %v1381 = vmul.f32 %v1317, %v1317
  %v1382 = vmul.f32 %v1318, %v1318
  %v1383 = vmul.f32 %v1319, %v1319
  %v1384 = vmul.f32 %v1320, %v1320
  %v1385 = vmul.f32 %v1321, %v1321
  %v1386 = vmul.f32 %v1322, %v1322
  %v1387 = vmul.f32 %v1323, %v1323
  %v1388 = vmul.f32 %v1324, %v1324
  %v1389 = vmul.f32 %v1325, %v1325
  %v1390 = vmul.f32 %v1326, %v1326
  %v1391 = vmul.f32 %v1327, %v1327
  %v1392 = vmul.f32 %v1328, %v1328
  %v1393 = vmul.f32 %v1329, %v1329
  %v1394 = vmul.f32 %v1330, %v1330
  %v1395 = vmul.f32 %v1331, %v1331
  %v1396 = vmul.f32 %v1332, %v1332
  %v1397 = vmul.f32 %v1333, %v1333
  %v1398 = vmul.f32 %v1334, %v1334
  %v1399 = vmul.f32 %v1335, %v1335
  %v1400 = vmul.f32 %v1336, %v1336
  %v1401 = vmul.f32 %v1337, %v1337
  %v1402 = vmul.f32 %v1338, %v1338
  %v1403 = vmul.f32 %v1339, %v1339
  %v1404 = vmul.f32 %v1340, %v1340
  %v1405 = vmul.f32 %v1341, %v1341
  %v1406 = vmul.f32 %v1342, %v1342
  %v1407 = vmul.f32 %v1343, %v1343
  %v1408 = vmul.f32 %v1344, %v1344
  %v1409 = vmul.f32 %v1345, %v1345
  %v1410 = vmul.f32 %v1346, %v1346
  %v1411 = vmul.f32 %v1347, %v1347
  %v1412 = vmul.f32 %v1348, %v1348
  %v1413 = vmul.f32 %v1349, %v1349
  %v1414 = vmul.f32 %v1350, %v1350
  %v1415 = vmul.f32 %v1351, %v1351
  %v1416 = vmul.f32 %v1352, %v1352
  %v1417 = vmul.f32 %v1353, %v1353
  %v1418 = vmul.f32 %v1354, %v1354
  %v1419 = vmul.f32 %v1355, %v1355
  %v1420 = vmul.f32 %v1356, %v1356
  %v1421 = vmul.f32 %v1357, %v1357
  %v1422 = vmul.f32 %v1358, %v1358
  %v1423 = vmul.f32 %v1359, %v1359
  %v1424 = vmul.f32 %v1360, %v1360
  %v1425 = vmul.f32 %v1361, %v1361
  %v1426 = vmul.f32 %v1362, %v1362
  %v1427 = vmul.f32 %v1363, %v1363
  %v1428 = vmul.f32 %v1364, %v1364
  %v1429 = vsel %vm1043, %v1365, 0.0
  %1430 = vadd.xlane.f32.xlu0 %v1429
  %v1431 = vpop.xlane.xlu0 %1430
  %v1432 = vsel %vm1043, %v1366, 0.0
  %1433 = vadd.xlane.f32.xlu0 %v1432
  %v1434 = vpop.xlane.xlu0 %1433
  %v1435 = vsel %vm1043, %v1367, 0.0
  %1436 = vadd.xlane.f32.xlu0 %v1435
  %v1437 = vpop.xlane.xlu0 %1436
  %v1438 = vsel %vm1043, %v1368, 0.0
  %1439 = vadd.xlane.f32.xlu0 %v1438
  %v1440 = vpop.xlane.xlu0 %1439
  %v1441 = vsel %vm1043, %v1369, 0.0
  %1442 = vadd.xlane.f32.xlu0 %v1441
  %v1443 = vpop.xlane.xlu0 %1442
  %v1444 = vsel %vm1043, %v1370, 0.0
  %1445 = vadd.xlane.f32.xlu0 %v1444
  %v1446 = vpop.xlane.xlu0 %1445
  %v1447 = vsel %vm1043, %v1371, 0.0
  %1448 = vadd.xlane.f32.xlu0 %v1447
  %v1449 = vpop.xlane.xlu0 %1448
  %v1450 = vsel %vm1043, %v1372, 0.0
  %1451 = vadd.xlane.f32.xlu0 %v1450
  %v1452 = vpop.xlane.xlu0 %1451
  %v1453 = vsel %vm1043, %v1373, 0.0
  %1454 = vadd.xlane.f32.xlu0 %v1453
  %v1455 = vpop.xlane.xlu0 %1454
  %v1456 = vsel %vm1043, %v1374, 0.0
  %1457 = vadd.xlane.f32.xlu0 %v1456
  %v1458 = vpop.xlane.xlu0 %1457
  %v1459 = vsel %vm1043, %v1375, 0.0
  %1460 = vadd.xlane.f32.xlu0 %v1459
  %v1461 = vpop.xlane.xlu0 %1460
  %v1462 = vsel %vm1043, %v1376, 0.0
  %1463 = vadd.xlane.f32.xlu0 %v1462
  %v1464 = vpop.xlane.xlu0 %1463
  %v1465 = vsel %vm1043, %v1377, 0.0
  %1466 = vadd.xlane.f32.xlu0 %v1465
  %v1467 = vpop.xlane.xlu0 %1466
  %v1468 = vsel %vm1043, %v1378, 0.0
  %1469 = vadd.xlane.f32.xlu0 %v1468
  %v1470 = vpop.xlane.xlu0 %1469
  %v1471 = vsel %vm1043, %v1379, 0.0
  %1472 = vadd.xlane.f32.xlu0 %v1471
  %v1473 = vpop.xlane.xlu0 %1472
  %v1474 = vsel %vm1043, %v1380, 0.0
  %1475 = vadd.xlane.f32.xlu0 %v1474
  %v1476 = vpop.xlane.xlu0 %1475
  %v1477 = vsel %vm1043, %v1381, 0.0
  %1478 = vadd.xlane.f32.xlu0 %v1477
  %v1479 = vpop.xlane.xlu0 %1478
  %v1480 = vsel %vm1043, %v1382, 0.0
  %1481 = vadd.xlane.f32.xlu0 %v1480
  %v1482 = vpop.xlane.xlu0 %1481
  %v1483 = vsel %vm1043, %v1383, 0.0
  %1484 = vadd.xlane.f32.xlu0 %v1483
  %v1485 = vpop.xlane.xlu0 %1484
  %v1486 = vsel %vm1043, %v1384, 0.0
  %1487 = vadd.xlane.f32.xlu0 %v1486
  %v1488 = vpop.xlane.xlu0 %1487
  %v1489 = vsel %vm1043, %v1385, 0.0
  %1490 = vadd.xlane.f32.xlu0 %v1489
  %v1491 = vpop.xlane.xlu0 %1490
  %v1492 = vsel %vm1043, %v1386, 0.0
  %1493 = vadd.xlane.f32.xlu0 %v1492
  %v1494 = vpop.xlane.xlu0 %1493
  %v1495 = vsel %vm1043, %v1387, 0.0
  %1496 = vadd.xlane.f32.xlu0 %v1495
  %v1497 = vpop.xlane.xlu0 %1496
  %v1498 = vsel %vm1043, %v1388, 0.0
  %1499 = vadd.xlane.f32.xlu0 %v1498
  %v1500 = vpop.xlane.xlu0 %1499
  %v1501 = vsel %vm1043, %v1389, 0.0
  %1502 = vadd.xlane.f32.xlu0 %v1501
  %v1503 = vpop.xlane.xlu0 %1502
  %v1504 = vsel %vm1043, %v1390, 0.0
  %1505 = vadd.xlane.f32.xlu0 %v1504
  %v1506 = vpop.xlane.xlu0 %1505
  %v1507 = vsel %vm1043, %v1391, 0.0
  %1508 = vadd.xlane.f32.xlu0 %v1507
  %v1509 = vpop.xlane.xlu0 %1508
  %v1510 = vsel %vm1043, %v1392, 0.0
  %1511 = vadd.xlane.f32.xlu0 %v1510
  %v1512 = vpop.xlane.xlu0 %1511
  %v1513 = vsel %vm1043, %v1393, 0.0
  %1514 = vadd.xlane.f32.xlu0 %v1513
  %v1515 = vpop.xlane.xlu0 %1514
  %v1516 = vsel %vm1043, %v1394, 0.0
  %1517 = vadd.xlane.f32.xlu0 %v1516
  %v1518 = vpop.xlane.xlu0 %1517
  %v1519 = vsel %vm1043, %v1395, 0.0
  %1520 = vadd.xlane.f32.xlu0 %v1519
  %v1521 = vpop.xlane.xlu0 %1520
  %v1522 = vsel %vm1043, %v1396, 0.0
  %1523 = vadd.xlane.f32.xlu0 %v1522
  %v1524 = vpop.xlane.xlu0 %1523
  %v1525 = vsel %vm1043, %v1397, 0.0
  %1526 = vadd.xlane.f32.xlu0 %v1525
  %v1527 = vpop.xlane.xlu0 %1526
  %v1528 = vsel %vm1043, %v1398, 0.0
  %1529 = vadd.xlane.f32.xlu0 %v1528
  %v1530 = vpop.xlane.xlu0 %1529
  %v1531 = vsel %vm1043, %v1399, 0.0
  %1532 = vadd.xlane.f32.xlu0 %v1531
  %v1533 = vpop.xlane.xlu0 %1532
  %v1534 = vsel %vm1043, %v1400, 0.0
  %1535 = vadd.xlane.f32.xlu0 %v1534
  %v1536 = vpop.xlane.xlu0 %1535
  %v1537 = vsel %vm1043, %v1401, 0.0
  %1538 = vadd.xlane.f32.xlu0 %v1537
  %v1539 = vpop.xlane.xlu0 %1538
  %v1540 = vsel %vm1043, %v1402, 0.0
  %1541 = vadd.xlane.f32.xlu0 %v1540
  %v1542 = vpop.xlane.xlu0 %1541
  %v1543 = vsel %vm1043, %v1403, 0.0
  %1544 = vadd.xlane.f32.xlu0 %v1543
  %v1545 = vpop.xlane.xlu0 %1544
  %v1546 = vsel %vm1043, %v1404, 0.0
  %1547 = vadd.xlane.f32.xlu0 %v1546
  %v1548 = vpop.xlane.xlu0 %1547
  %v1549 = vsel %vm1043, %v1405, 0.0
  %1550 = vadd.xlane.f32.xlu0 %v1549
  %v1551 = vpop.xlane.xlu0 %1550
  %v1552 = vsel %vm1043, %v1406, 0.0
  %1553 = vadd.xlane.f32.xlu0 %v1552
  %v1554 = vpop.xlane.xlu0 %1553
  %v1555 = vsel %vm1043, %v1407, 0.0
  %1556 = vadd.xlane.f32.xlu0 %v1555
  %v1557 = vpop.xlane.xlu0 %1556
  %v1558 = vsel %vm1043, %v1408, 0.0
  %1559 = vadd.xlane.f32.xlu0 %v1558
  %v1560 = vpop.xlane.xlu0 %1559
  %v1561 = vsel %vm1043, %v1409, 0.0
  %1562 = vadd.xlane.f32.xlu0 %v1561
  %v1563 = vpop.xlane.xlu0 %1562
  %v1564 = vsel %vm1043, %v1410, 0.0
  %1565 = vadd.xlane.f32.xlu0 %v1564
  %v1566 = vpop.xlane.xlu0 %1565
  %v1567 = vsel %vm1043, %v1411, 0.0
  %1568 = vadd.xlane.f32.xlu0 %v1567
  %v1569 = vpop.xlane.xlu0 %1568
  %v1570 = vsel %vm1043, %v1412, 0.0
  %1571 = vadd.xlane.f32.xlu0 %v1570
  %v1572 = vpop.xlane.xlu0 %1571
  %v1573 = vsel %vm1043, %v1413, 0.0
  %1574 = vadd.xlane.f32.xlu0 %v1573
  %v1575 = vpop.xlane.xlu0 %1574
  %v1576 = vsel %vm1043, %v1414, 0.0
  %1577 = vadd.xlane.f32.xlu0 %v1576
  %v1578 = vpop.xlane.xlu0 %1577
  %v1579 = vsel %vm1043, %v1415, 0.0
  %1580 = vadd.xlane.f32.xlu0 %v1579
  %v1581 = vpop.xlane.xlu0 %1580
  %v1582 = vsel %vm1043, %v1416, 0.0
  %1583 = vadd.xlane.f32.xlu0 %v1582
  %v1584 = vpop.xlane.xlu0 %1583
  %v1585 = vsel %vm1043, %v1417, 0.0
  %1586 = vadd.xlane.f32.xlu0 %v1585
  %v1587 = vpop.xlane.xlu0 %1586
  %v1588 = vsel %vm1043, %v1418, 0.0
  %1589 = vadd.xlane.f32.xlu0 %v1588
  %v1590 = vpop.xlane.xlu0 %1589
  %v1591 = vsel %vm1043, %v1419, 0.0
  %1592 = vadd.xlane.f32.xlu0 %v1591
  %v1593 = vpop.xlane.xlu0 %1592
  %v1594 = vsel %vm1043, %v1420, 0.0
  %1595 = vadd.xlane.f32.xlu0 %v1594
  %v1596 = vpop.xlane.xlu0 %1595
  %v1597 = vsel %vm1043, %v1421, 0.0
  %1598 = vadd.xlane.f32.xlu0 %v1597
  %v1599 = vpop.xlane.xlu0 %1598
  %v1600 = vsel %vm1043, %v1422, 0.0
  %1601 = vadd.xlane.f32.xlu0 %v1600
  %v1602 = vpop.xlane.xlu0 %1601
  %v1603 = vsel %vm1043, %v1423, 0.0
  %1604 = vadd.xlane.f32.xlu0 %v1603
  %v1605 = vpop.xlane.xlu0 %1604
  %v1606 = vsel %vm1043, %v1424, 0.0
  %1607 = vadd.xlane.f32.xlu0 %v1606
  %v1608 = vpop.xlane.xlu0 %1607
  %v1609 = vsel %vm1043, %v1425, 0.0
  %1610 = vadd.xlane.f32.xlu0 %v1609
  %v1611 = vpop.xlane.xlu0 %1610
  %v1612 = vsel %vm1043, %v1426, 0.0
  %1613 = vadd.xlane.f32.xlu0 %v1612
  %v1614 = vpop.xlane.xlu0 %1613
  %v1615 = vsel %vm1043, %v1427, 0.0
  %1616 = vadd.xlane.f32.xlu0 %v1615
  %v1617 = vpop.xlane.xlu0 %1616
  %v1618 = vsel %vm1043, %v1428, 0.0
  %1619 = vadd.xlane.f32.xlu0 %v1618
  %v1620 = vpop.xlane.xlu0 %1619
  %v1621 = vmul.f32 %v1431, %v1236
  %v1622 = vmul.f32 %v1434, %v1236
  %v1623 = vmul.f32 %v1437, %v1236
  %v1624 = vmul.f32 %v1440, %v1236
  %v1625 = vmul.f32 %v1443, %v1236
  %v1626 = vmul.f32 %v1446, %v1236
  %v1627 = vmul.f32 %v1449, %v1236
  %v1628 = vmul.f32 %v1452, %v1236
  %v1629 = vmul.f32 %v1455, %v1236
  %v1630 = vmul.f32 %v1458, %v1236
  %v1631 = vmul.f32 %v1461, %v1236
  %v1632 = vmul.f32 %v1464, %v1236
  %v1633 = vmul.f32 %v1467, %v1236
  %v1634 = vmul.f32 %v1470, %v1236
  %v1635 = vmul.f32 %v1473, %v1236
  %v1636 = vmul.f32 %v1476, %v1236
  %v1637 = vmul.f32 %v1479, %v1236
  %v1638 = vmul.f32 %v1482, %v1236
  %v1639 = vmul.f32 %v1485, %v1236
  %v1640 = vmul.f32 %v1488, %v1236
  %v1641 = vmul.f32 %v1491, %v1236
  %v1642 = vmul.f32 %v1494, %v1236
  %v1643 = vmul.f32 %v1497, %v1236
  %v1644 = vmul.f32 %v1500, %v1236
  %v1645 = vmul.f32 %v1503, %v1236
  %v1646 = vmul.f32 %v1506, %v1236
  %v1647 = vmul.f32 %v1509, %v1236
  %v1648 = vmul.f32 %v1512, %v1236
  %v1649 = vmul.f32 %v1515, %v1236
  %v1650 = vmul.f32 %v1518, %v1236
  %v1651 = vmul.f32 %v1521, %v1236
  %v1652 = vmul.f32 %v1524, %v1236
  %v1653 = vmul.f32 %v1527, %v1236
  %v1654 = vmul.f32 %v1530, %v1236
  %v1655 = vmul.f32 %v1533, %v1236
  %v1656 = vmul.f32 %v1536, %v1236
  %v1657 = vmul.f32 %v1539, %v1236
  %v1658 = vmul.f32 %v1542, %v1236
  %v1659 = vmul.f32 %v1545, %v1236
  %v1660 = vmul.f32 %v1548, %v1236
  %v1661 = vmul.f32 %v1551, %v1236
  %v1662 = vmul.f32 %v1554, %v1236
  %v1663 = vmul.f32 %v1557, %v1236
  %v1664 = vmul.f32 %v1560, %v1236
  %v1665 = vmul.f32 %v1563, %v1236
  %v1666 = vmul.f32 %v1566, %v1236
  %v1667 = vmul.f32 %v1569, %v1236
  %v1668 = vmul.f32 %v1572, %v1236
  %v1669 = vmul.f32 %v1575, %v1236
  %v1670 = vmul.f32 %v1578, %v1236
  %v1671 = vmul.f32 %v1581, %v1236
  %v1672 = vmul.f32 %v1584, %v1236
  %v1673 = vmul.f32 %v1587, %v1236
  %v1674 = vmul.f32 %v1590, %v1236
  %v1675 = vmul.f32 %v1593, %v1236
  %v1676 = vmul.f32 %v1596, %v1236
  %v1677 = vmul.f32 %v1599, %v1236
  %v1678 = vmul.f32 %v1602, %v1236
  %v1679 = vmul.f32 %v1605, %v1236
  %v1680 = vmul.f32 %v1608, %v1236
  %v1681 = vmul.f32 %v1611, %v1236
  %v1682 = vmul.f32 %v1614, %v1236
  %v1683 = vmul.f32 %v1617, %v1236
  %v1684 = vmul.f32 %v1620, %v1236
  %v1685 = vadd.f32 %v1621, 1e-05
  %v1686 = vadd.f32 %v1622, 1e-05
  %v1687 = vadd.f32 %v1623, 1e-05
  %v1688 = vadd.f32 %v1624, 1e-05
  %v1689 = vadd.f32 %v1625, 1e-05
  %v1690 = vadd.f32 %v1626, 1e-05
  %v1691 = vadd.f32 %v1627, 1e-05
  %v1692 = vadd.f32 %v1628, 1e-05
  %v1693 = vadd.f32 %v1629, 1e-05
  %v1694 = vadd.f32 %v1630, 1e-05
  %v1695 = vadd.f32 %v1631, 1e-05
  %v1696 = vadd.f32 %v1632, 1e-05
  %v1697 = vadd.f32 %v1633, 1e-05
  %v1698 = vadd.f32 %v1634, 1e-05
  %v1699 = vadd.f32 %v1635, 1e-05
  %v1700 = vadd.f32 %v1636, 1e-05
  %v1701 = vadd.f32 %v1637, 1e-05
  %v1702 = vadd.f32 %v1638, 1e-05
  %v1703 = vadd.f32 %v1639, 1e-05
  %v1704 = vadd.f32 %v1640, 1e-05
  %v1705 = vadd.f32 %v1641, 1e-05
  %v1706 = vadd.f32 %v1642, 1e-05
  %v1707 = vadd.f32 %v1643, 1e-05
  %v1708 = vadd.f32 %v1644, 1e-05
  %v1709 = vadd.f32 %v1645, 1e-05
  %v1710 = vadd.f32 %v1646, 1e-05
  %v1711 = vadd.f32 %v1647, 1e-05
  %v1712 = vadd.f32 %v1648, 1e-05
  %v1713 = vadd.f32 %v1649, 1e-05
  %v1714 = vadd.f32 %v1650, 1e-05
  %v1715 = vadd.f32 %v1651, 1e-05
  %v1716 = vadd.f32 %v1652, 1e-05
  %v1717 = vadd.f32 %v1653, 1e-05
  %v1718 = vadd.f32 %v1654, 1e-05
  %v1719 = vadd.f32 %v1655, 1e-05
  %v1720 = vadd.f32 %v1656, 1e-05
  %v1721 = vadd.f32 %v1657, 1e-05
  %v1722 = vadd.f32 %v1658, 1e-05
  %v1723 = vadd.f32 %v1659, 1e-05
  %v1724 = vadd.f32 %v1660, 1e-05
  %v1725 = vadd.f32 %v1661, 1e-05
  %v1726 = vadd.f32 %v1662, 1e-05
  %v1727 = vadd.f32 %v1663, 1e-05
  %v1728 = vadd.f32 %v1664, 1e-05
  %v1729 = vadd.f32 %v1665, 1e-05
  %v1730 = vadd.f32 %v1666, 1e-05
  %v1731 = vadd.f32 %v1667, 1e-05
  %v1732 = vadd.f32 %v1668, 1e-05
  %v1733 = vadd.f32 %v1669, 1e-05
  %v1734 = vadd.f32 %v1670, 1e-05
  %v1735 = vadd.f32 %v1671, 1e-05
  %v1736 = vadd.f32 %v1672, 1e-05
  %v1737 = vadd.f32 %v1673, 1e-05
  %v1738 = vadd.f32 %v1674, 1e-05
  %v1739 = vadd.f32 %v1675, 1e-05
  %v1740 = vadd.f32 %v1676, 1e-05
  %v1741 = vadd.f32 %v1677, 1e-05
  %v1742 = vadd.f32 %v1678, 1e-05
  %v1743 = vadd.f32 %v1679, 1e-05
  %v1744 = vadd.f32 %v1680, 1e-05
  %v1745 = vadd.f32 %v1681, 1e-05
  %v1746 = vadd.f32 %v1682, 1e-05
  %v1747 = vadd.f32 %v1683, 1e-05
  %v1748 = vadd.f32 %v1684, 1e-05
  %v1749 = vrsqrt.pop %v1685
  %v1750 = vrsqrt.pop %v1686
  %v1751 = vrsqrt.pop %v1687
  %v1752 = vrsqrt.pop %v1688
  %v1753 = vrsqrt.pop %v1689
  %v1754 = vrsqrt.pop %v1690
  %v1755 = vrsqrt.pop %v1691
  %v1756 = vrsqrt.pop %v1692
  %v1757 = vrsqrt.pop %v1693
  %v1758 = vrsqrt.pop %v1694
  %v1759 = vrsqrt.pop %v1695
  %v1760 = vrsqrt.pop %v1696
  %v1761 = vrsqrt.pop %v1697
  %v1762 = vrsqrt.pop %v1698
  %v1763 = vrsqrt.pop %v1699
  %v1764 = vrsqrt.pop %v1700
  %v1765 = vrsqrt.pop %v1701
  %v1766 = vrsqrt.pop %v1702
  %v1767 = vrsqrt.pop %v1703
  %v1768 = vrsqrt.pop %v1704
  %v1769 = vrsqrt.pop %v1705
  %v1770 = vrsqrt.pop %v1706
  %v1771 = vrsqrt.pop %v1707
  %v1772 = vrsqrt.pop %v1708
  %v1773 = vrsqrt.pop %v1709
  %v1774 = vrsqrt.pop %v1710
  %v1775 = vrsqrt.pop %v1711
  %v1776 = vrsqrt.pop %v1712
  %v1777 = vrsqrt.pop %v1713
  %v1778 = vrsqrt.pop %v1714
  %v1779 = vrsqrt.pop %v1715
  %v1780 = vrsqrt.pop %v1716
  %v1781 = vrsqrt.pop %v1717
  %v1782 = vrsqrt.pop %v1718
  %v1783 = vrsqrt.pop %v1719
  %v1784 = vrsqrt.pop %v1720
  %v1785 = vrsqrt.pop %v1721
  %v1786 = vrsqrt.pop %v1722
  %v1787 = vrsqrt.pop %v1723
  %v1788 = vrsqrt.pop %v1724
  %v1789 = vrsqrt.pop %v1725
  %v1790 = vrsqrt.pop %v1726
  %v1791 = vrsqrt.pop %v1727
  %v1792 = vrsqrt.pop %v1728
  %v1793 = vrsqrt.pop %v1729
  %v1794 = vrsqrt.pop %v1730
  %v1795 = vrsqrt.pop %v1731
  %v1796 = vrsqrt.pop %v1732
  %v1797 = vrsqrt.pop %v1733
  %v1798 = vrsqrt.pop %v1734
  %v1799 = vrsqrt.pop %v1735
  %v1800 = vrsqrt.pop %v1736
  %v1801 = vrsqrt.pop %v1737
  %v1802 = vrsqrt.pop %v1738
  %v1803 = vrsqrt.pop %v1739
  %v1804 = vrsqrt.pop %v1740
  %v1805 = vrsqrt.pop %v1741
  %v1806 = vrsqrt.pop %v1742
  %v1807 = vrsqrt.pop %v1743
  %v1808 = vrsqrt.pop %v1744
  %v1809 = vrsqrt.pop %v1745
  %v1810 = vrsqrt.pop %v1746
  %v1811 = vrsqrt.pop %v1747
  %v1812 = vrsqrt.pop %v1748
  %v1813 = vmul.f32 %v1301, %v1749
  %v1814 = vmul.f32 %v1302, %v1750
  %v1815 = vmul.f32 %v1303, %v1751
  %v1816 = vmul.f32 %v1304, %v1752
  %v1817 = vmul.f32 %v1305, %v1753
  %v1818 = vmul.f32 %v1306, %v1754
  %v1819 = vmul.f32 %v1307, %v1755
  %v1820 = vmul.f32 %v1308, %v1756
  %v1821 = vmul.f32 %v1309, %v1757
  %v1822 = vmul.f32 %v1310, %v1758
  %v1823 = vmul.f32 %v1311, %v1759
  %v1824 = vmul.f32 %v1312, %v1760
  %v1825 = vmul.f32 %v1313, %v1761
  %v1826 = vmul.f32 %v1314, %v1762
  %v1827 = vmul.f32 %v1315, %v1763
  %v1828 = vmul.f32 %v1316, %v1764
  %v1829 = vmul.f32 %v1317, %v1765
  %v1830 = vmul.f32 %v1318, %v1766
  %v1831 = vmul.f32 %v1319, %v1767
  %v1832 = vmul.f32 %v1320, %v1768
  %v1833 = vmul.f32 %v1321, %v1769
  %v1834 = vmul.f32 %v1322, %v1770
  %v1835 = vmul.f32 %v1323, %v1771
  %v1836 = vmul.f32 %v1324, %v1772
  %v1837 = vmul.f32 %v1325, %v1773
  %v1838 = vmul.f32 %v1326, %v1774
  %v1839 = vmul.f32 %v1327, %v1775
  %v1840 = vmul.f32 %v1328, %v1776
  %v1841 = vmul.f32 %v1329, %v1777
  %v1842 = vmul.f32 %v1330, %v1778
  %v1843 = vmul.f32 %v1331, %v1779
  %v1844 = vmul.f32 %v1332, %v1780
  %v1845 = vmul.f32 %v1333, %v1781
  %v1846 = vmul.f32 %v1334, %v1782
  %v1847 = vmul.f32 %v1335, %v1783
  %v1848 = vmul.f32 %v1336, %v1784
  %v1849 = vmul.f32 %v1337, %v1785
  %v1850 = vmul.f32 %v1338, %v1786
  %v1851 = vmul.f32 %v1339, %v1787
  %v1852 = vmul.f32 %v1340, %v1788
  %v1853 = vmul.f32 %v1341, %v1789
  %v1854 = vmul.f32 %v1342, %v1790
  %v1855 = vmul.f32 %v1343, %v1791
  %v1856 = vmul.f32 %v1344, %v1792
  %v1857 = vmul.f32 %v1345, %v1793
  %v1858 = vmul.f32 %v1346, %v1794
  %v1859 = vmul.f32 %v1347, %v1795
  %v1860 = vmul.f32 %v1348, %v1796
  %v1861 = vmul.f32 %v1349, %v1797
  %v1862 = vmul.f32 %v1350, %v1798
  %v1863 = vmul.f32 %v1351, %v1799
  %v1864 = vmul.f32 %v1352, %v1800
  %v1865 = vmul.f32 %v1353, %v1801
  %v1866 = vmul.f32 %v1354, %v1802
  %v1867 = vmul.f32 %v1355, %v1803
  %v1868 = vmul.f32 %v1356, %v1804
  %v1869 = vmul.f32 %v1357, %v1805
  %v1870 = vmul.f32 %v1358, %v1806
  %v1871 = vmul.f32 %v1359, %v1807
  %v1872 = vmul.f32 %v1360, %v1808
  %v1873 = vmul.f32 %v1361, %v1809
  %v1874 = vmul.f32 %v1362, %v1810
  %v1875 = vmul.f32 %v1363, %v1811
  %v1876 = vmul.f32 %v1364, %v1812
  %v1878 = vlaneseq
  %v1879 = vshrl.u32 %v1878, 7
  %v1880 = vsub.s32 0, %v1879
  %v1881 = vrot.slane %v1041, %v1880
  %v1883 = vmul.f32 %v1813, %v1881
  %v1884 = vmul.f32 %v1814, %v1881
  %v1885 = vmul.f32 %v1815, %v1881
  %v1886 = vmul.f32 %v1816, %v1881
  %v1887 = vmul.f32 %v1817, %v1881
  %v1888 = vmul.f32 %v1818, %v1881
  %v1889 = vmul.f32 %v1819, %v1881
  %v1890 = vmul.f32 %v1820, %v1881
  %v1891 = vmul.f32 %v1821, %v1881
  %v1892 = vmul.f32 %v1822, %v1881
  %v1893 = vmul.f32 %v1823, %v1881
  %v1894 = vmul.f32 %v1824, %v1881
  %v1895 = vmul.f32 %v1825, %v1881
  %v1896 = vmul.f32 %v1826, %v1881
  %v1897 = vmul.f32 %v1827, %v1881
  %v1898 = vmul.f32 %v1828, %v1881
  %v1899 = vmul.f32 %v1829, %v1881
  %v1900 = vmul.f32 %v1830, %v1881
  %v1901 = vmul.f32 %v1831, %v1881
  %v1902 = vmul.f32 %v1832, %v1881
  %v1903 = vmul.f32 %v1833, %v1881
  %v1904 = vmul.f32 %v1834, %v1881
  %v1905 = vmul.f32 %v1835, %v1881
  %v1906 = vmul.f32 %v1836, %v1881
  %v1907 = vmul.f32 %v1837, %v1881
  %v1908 = vmul.f32 %v1838, %v1881
  %v1909 = vmul.f32 %v1839, %v1881
  %v1910 = vmul.f32 %v1840, %v1881
  %v1911 = vmul.f32 %v1841, %v1881
  %v1912 = vmul.f32 %v1842, %v1881
  %v1913 = vmul.f32 %v1843, %v1881
  %v1914 = vmul.f32 %v1844, %v1881
  %v1915 = vmul.f32 %v1845, %v1881
  %v1916 = vmul.f32 %v1846, %v1881
  %v1917 = vmul.f32 %v1847, %v1881
  %v1918 = vmul.f32 %v1848, %v1881
  %v1919 = vmul.f32 %v1849, %v1881
  %v1920 = vmul.f32 %v1850, %v1881
  %v1921 = vmul.f32 %v1851, %v1881
  %v1922 = vmul.f32 %v1852, %v1881
  %v1923 = vmul.f32 %v1853, %v1881
  %v1924 = vmul.f32 %v1854, %v1881
  %v1925 = vmul.f32 %v1855, %v1881
  %v1926 = vmul.f32 %v1856, %v1881
  %v1927 = vmul.f32 %v1857, %v1881
  %v1928 = vmul.f32 %v1858, %v1881
  %v1929 = vmul.f32 %v1859, %v1881
  %v1930 = vmul.f32 %v1860, %v1881
  %v1931 = vmul.f32 %v1861, %v1881
  %v1932 = vmul.f32 %v1862, %v1881
  %v1933 = vmul.f32 %v1863, %v1881
  %v1934 = vmul.f32 %v1864, %v1881
  %v1935 = vmul.f32 %v1865, %v1881
  %v1936 = vmul.f32 %v1866, %v1881
  %v1937 = vmul.f32 %v1867, %v1881
  %v1938 = vmul.f32 %v1868, %v1881
  %v1939 = vmul.f32 %v1869, %v1881
  %v1940 = vmul.f32 %v1870, %v1881
  %v1941 = vmul.f32 %v1871, %v1881
  %v1942 = vmul.f32 %v1872, %v1881
  %v1943 = vmul.f32 %v1873, %v1881
  %v1944 = vmul.f32 %v1874, %v1881
  %v1945 = vmul.f32 %v1875, %v1881
  %v1946 = vmul.f32 %v1876, %v1881
  %v1948 = vlaneseq
  %v1949 = vshrl.u32 %v1948, 7
  %v1950 = vsub.s32 0, %v1949
  %v1951 = vrot.slane %v1042, %v1950
  %v1953 = vadd.f32 %v1883, %v1951
  %v1954 = vadd.f32 %v1884, %v1951
  %v1955 = vadd.f32 %v1885, %v1951
  %v1956 = vadd.f32 %v1886, %v1951
  %v1957 = vadd.f32 %v1887, %v1951
  %v1958 = vadd.f32 %v1888, %v1951
  %v1959 = vadd.f32 %v1889, %v1951
  %v1960 = vadd.f32 %v1890, %v1951
  %v1961 = vadd.f32 %v1891, %v1951
  %v1962 = vadd.f32 %v1892, %v1951
  %v1963 = vadd.f32 %v1893, %v1951
  %v1964 = vadd.f32 %v1894, %v1951
  %v1965 = vadd.f32 %v1895, %v1951
  %v1966 = vadd.f32 %v1896, %v1951
  %v1967 = vadd.f32 %v1897, %v1951
  %v1968 = vadd.f32 %v1898, %v1951
  %v1969 = vadd.f32 %v1899, %v1951
  %v1970 = vadd.f32 %v1900, %v1951
  %v1971 = vadd.f32 %v1901, %v1951
  %v1972 = vadd.f32 %v1902, %v1951
  %v1973 = vadd.f32 %v1903, %v1951
  %v1974 = vadd.f32 %v1904, %v1951
  %v1975 = vadd.f32 %v1905, %v1951
  %v1976 = vadd.f32 %v1906, %v1951
  %v1977 = vadd.f32 %v1907, %v1951
  %v1978 = vadd.f32 %v1908, %v1951
  %v1979 = vadd.f32 %v1909, %v1951
  %v1980 = vadd.f32 %v1910, %v1951
  %v1981 = vadd.f32 %v1911, %v1951
  %v1982 = vadd.f32 %v1912, %v1951
  %v1983 = vadd.f32 %v1913, %v1951
  %v1984 = vadd.f32 %v1914, %v1951
  %v1985 = vadd.f32 %v1915, %v1951
  %v1986 = vadd.f32 %v1916, %v1951
  %v1987 = vadd.f32 %v1917, %v1951
  %v1988 = vadd.f32 %v1918, %v1951
  %v1989 = vadd.f32 %v1919, %v1951
  %v1990 = vadd.f32 %v1920, %v1951
  %v1991 = vadd.f32 %v1921, %v1951
  %v1992 = vadd.f32 %v1922, %v1951
  %v1993 = vadd.f32 %v1923, %v1951
  %v1994 = vadd.f32 %v1924, %v1951
  %v1995 = vadd.f32 %v1925, %v1951
  %v1996 = vadd.f32 %v1926, %v1951
  %v1997 = vadd.f32 %v1927, %v1951
  %v1998 = vadd.f32 %v1928, %v1951
  %v1999 = vadd.f32 %v1929, %v1951
  %v2000 = vadd.f32 %v1930, %v1951
  %v2001 = vadd.f32 %v1931, %v1951
  %v2002 = vadd.f32 %v1932, %v1951
  %v2003 = vadd.f32 %v1933, %v1951
  %v2004 = vadd.f32 %v1934, %v1951
  %v2005 = vadd.f32 %v1935, %v1951
  %v2006 = vadd.f32 %v1936, %v1951
  %v2007 = vadd.f32 %v1937, %v1951
  %v2008 = vadd.f32 %v1938, %v1951
  %v2009 = vadd.f32 %v1939, %v1951
  %v2010 = vadd.f32 %v1940, %v1951
  %v2011 = vadd.f32 %v1941, %v1951
  %v2012 = vadd.f32 %v1942, %v1951
  %v2013 = vadd.f32 %v1943, %v1951
  %v2014 = vadd.f32 %v1944, %v1951
  %v2015 = vadd.f32 %v1945, %v1951
  %v2016 = vadd.f32 %v1946, %v1951
  %v2017 = vmax.f32 %v1953, 0.0
  %v2018 = vmax.f32 %v1954, 0.0
  %v2019 = vmax.f32 %v1955, 0.0
  %v2020 = vmax.f32 %v1956, 0.0
  %v2021 = vmax.f32 %v1957, 0.0
  %v2022 = vmax.f32 %v1958, 0.0
  %v2023 = vmax.f32 %v1959, 0.0
  %v2024 = vmax.f32 %v1960, 0.0
  %v2025 = vmax.f32 %v1961, 0.0
  %v2026 = vmax.f32 %v1962, 0.0
  %v2027 = vmax.f32 %v1963, 0.0
  %v2028 = vmax.f32 %v1964, 0.0
  %v2029 = vmax.f32 %v1965, 0.0
  %v2030 = vmax.f32 %v1966, 0.0
  %v2031 = vmax.f32 %v1967, 0.0
  %v2032 = vmax.f32 %v1968, 0.0
  %v2033 = vmax.f32 %v1969, 0.0
  %v2034 = vmax.f32 %v1970, 0.0
  %v2035 = vmax.f32 %v1971, 0.0
  %v2036 = vmax.f32 %v1972, 0.0
  %v2037 = vmax.f32 %v1973, 0.0
  %v2038 = vmax.f32 %v1974, 0.0
  %v2039 = vmax.f32 %v1975, 0.0
  %v2040 = vmax.f32 %v1976, 0.0
  %v2041 = vmax.f32 %v1977, 0.0
  %v2042 = vmax.f32 %v1978, 0.0
  %v2043 = vmax.f32 %v1979, 0.0
  %v2044 = vmax.f32 %v1980, 0.0
  %v2045 = vmax.f32 %v1981, 0.0
  %v2046 = vmax.f32 %v1982, 0.0
  %v2047 = vmax.f32 %v1983, 0.0
  %v2048 = vmax.f32 %v1984, 0.0
  %v2049 = vmax.f32 %v1985, 0.0
  %v2050 = vmax.f32 %v1986, 0.0
  %v2051 = vmax.f32 %v1987, 0.0
  %v2052 = vmax.f32 %v1988, 0.0
  %v2053 = vmax.f32 %v1989, 0.0
  %v2054 = vmax.f32 %v1990, 0.0
  %v2055 = vmax.f32 %v1991, 0.0
  %v2056 = vmax.f32 %v1992, 0.0
  %v2057 = vmax.f32 %v1993, 0.0
  %v2058 = vmax.f32 %v1994, 0.0
  %v2059 = vmax.f32 %v1995, 0.0
  %v2060 = vmax.f32 %v1996, 0.0
  %v2061 = vmax.f32 %v1997, 0.0
  %v2062 = vmax.f32 %v1998, 0.0
  %v2063 = vmax.f32 %v1999, 0.0
  %v2064 = vmax.f32 %v2000, 0.0
  %v2065 = vmax.f32 %v2001, 0.0
  %v2066 = vmax.f32 %v2002, 0.0
  %v2067 = vmax.f32 %v2003, 0.0
  %v2068 = vmax.f32 %v2004, 0.0
  %v2069 = vmax.f32 %v2005, 0.0
  %v2070 = vmax.f32 %v2006, 0.0
  %v2071 = vmax.f32 %v2007, 0.0
  %v2072 = vmax.f32 %v2008, 0.0
  %v2073 = vmax.f32 %v2009, 0.0
  %v2074 = vmax.f32 %v2010, 0.0
  %v2075 = vmax.f32 %v2011, 0.0
  %v2076 = vmax.f32 %v2012, 0.0
  %v2077 = vmax.f32 %v2013, 0.0
  %v2078 = vmax.f32 %v2014, 0.0
  %v2079 = vmax.f32 %v2015, 0.0
  %v2080 = vmax.f32 %v2016, 0.0
  %v2081 = vld [vmem:[%s9] sm:$0xff]
  %v2082 = vld [vmem:[%s9 + $0x8] sm:$0xff]
  %v2083 = vld [vmem:[%s9 + $0x10] sm:$0xff]
  %v2084 = vld [vmem:[%s9 + $0x18] sm:$0xff]
  %v2085 = vld [vmem:[%s9 + $0x20] sm:$0xff]
  %v2086 = vld [vmem:[%s9 + $0x28] sm:$0xff]
  %v2087 = vld [vmem:[%s9 + $0x30] sm:$0xff]
  %v2088 = vld [vmem:[%s9 + $0x38] sm:$0xff]
  %v2089 = vld [vmem:[%s10] sm:$0x1]
  %v2091 = vlaneseq
  %v2092 = vshrl.u32 %v2091, 7
  %v2093 = vsub.s32 0, %v2092
  %v2094 = vrot.slane %v2089, %v2093
  %v2097 = vsel %vm1043, %v2017, 0
  %v2100 = vsel %vm1043, %v2018, 0
  %v2103 = vsel %vm1043, %v2019, 0
  %v2106 = vsel %vm1043, %v2020, 0
  %v2109 = vsel %vm1043, %v2021, 0
  %v2112 = vsel %vm1043, %v2022, 0
  %v2115 = vsel %vm1043, %v2023, 0
  %v2118 = vsel %vm1043, %v2024, 0
  %v2121 = vsel %vm1043, %v2025, 0
  %v2124 = vsel %vm1043, %v2026, 0
  %v2127 = vsel %vm1043, %v2027, 0
  %v2130 = vsel %vm1043, %v2028, 0
  %v2133 = vsel %vm1043, %v2029, 0
  %v2136 = vsel %vm1043, %v2030, 0
  %v2139 = vsel %vm1043, %v2031, 0
  %v2142 = vsel %vm1043, %v2032, 0
  %v2145 = vsel %vm1043, %v2033, 0
  %v2148 = vsel %vm1043, %v2034, 0
  %v2151 = vsel %vm1043, %v2035, 0
  %v2154 = vsel %vm1043, %v2036, 0
  %v2157 = vsel %vm1043, %v2037, 0
  %v2160 = vsel %vm1043, %v2038, 0
  %v2163 = vsel %vm1043, %v2039, 0
  %v2166 = vsel %vm1043, %v2040, 0
  %v2169 = vsel %vm1043, %v2041, 0
  %v2172 = vsel %vm1043, %v2042, 0
  %v2175 = vsel %vm1043, %v2043, 0
  %v2178 = vsel %vm1043, %v2044, 0
  %v2181 = vsel %vm1043, %v2045, 0
  %v2184 = vsel %vm1043, %v2046, 0
  %v2187 = vsel %vm1043, %v2047, 0
  %v2190 = vsel %vm1043, %v2048, 0
  %v2193 = vsel %vm1043, %v2049, 0
  %v2196 = vsel %vm1043, %v2050, 0
  %v2199 = vsel %vm1043, %v2051, 0
  %v2202 = vsel %vm1043, %v2052, 0
  %v2205 = vsel %vm1043, %v2053, 0
  %v2208 = vsel %vm1043, %v2054, 0
  %v2211 = vsel %vm1043, %v2055, 0
  %v2214 = vsel %vm1043, %v2056, 0
  %v2217 = vsel %vm1043, %v2057, 0
  %v2220 = vsel %vm1043, %v2058, 0
  %v2223 = vsel %vm1043, %v2059, 0
  %v2226 = vsel %vm1043, %v2060, 0
  %v2229 = vsel %vm1043, %v2061, 0
  %v2232 = vsel %vm1043, %v2062, 0
  %v2235 = vsel %vm1043, %v2063, 0
  %v2238 = vsel %vm1043, %v2064, 0
  %v2241 = vsel %vm1043, %v2065, 0
  %v2244 = vsel %vm1043, %v2066, 0
  %v2247 = vsel %vm1043, %v2067, 0
  %v2250 = vsel %vm1043, %v2068, 0
  %v2253 = vsel %vm1043, %v2069, 0
  %v2256 = vsel %vm1043, %v2070, 0
  %v2259 = vsel %vm1043, %v2071, 0
  %v2262 = vsel %vm1043, %v2072, 0
  %v2265 = vsel %vm1043, %v2073, 0
  %v2268 = vsel %vm1043, %v2074, 0
  %v2271 = vsel %vm1043, %v2075, 0
  %v2274 = vsel %vm1043, %v2076, 0
  %v2277 = vsel %vm1043, %v2077, 0
  %v2280 = vsel %vm1043, %v2078, 0
  %v2283 = vsel %vm1043, %v2079, 0
  %v2286 = vsel %vm1043, %v2080, 0
  %2288 = vmatprep.subr.mxu0 0.0
  %2289 = vmatpush1.msra.mxu0 0.0
  %2290 = vmatprep.subr.mxu0 0.0
  %2291 = vmatpush1.msra.mxu0 0.0
  %2292 = vmatprep.subr.mxu0 0.0
  %2293 = vmatpush1.msra.mxu0 0.0
  %2294 = vmatprep.subr.mxu0 0.0
  %2295 = vmatpush1.msra.mxu0 0.0
  %2296 = vmatprep.subr.mxu0 0.0
  %2297 = vmatpush1.msra.mxu0 0.0
  %2298 = vmatprep.subr.mxu0 0.0
  %2299 = vmatpush1.msra.mxu0 0.0
  %2300 = vmatprep.subr.mxu0 0.0
  %2301 = vmatpush1.msra.mxu0 0.0
  %2302 = vmatprep.subr.mxu0 0.0
  %2303 = vmatpush1.msra.mxu0 0.0
  %2304 = vmatprep.subr.mxu0 0.0
  %2305 = vmatpush1.msra.mxu0 %v2088
  %2306 = vmatprep.subr.mxu0 0.0
  %2307 = vmatpush1.msra.mxu0 %v2087
  %2308 = vmatprep.subr.mxu0 0.0
  %2309 = vmatpush1.msra.mxu0 %v2086
  %2310 = vmatprep.subr.mxu0 0.0
  %2311 = vmatpush1.msra.mxu0 %v2085
  %2312 = vmatprep.subr.mxu0 0.0
  %2313 = vmatpush1.msra.mxu0 %v2084
  %2314 = vmatprep.subr.mxu0 0.0
  %2315 = vmatpush1.msra.mxu0 %v2083
  %2316 = vmatprep.subr.mxu0 0.0
  %2317 = vmatpush1.msra.mxu0 %v2082
  %2318 = vmatprep.subr.mxu0 0.0
  %2319 = vmatpush1.msra.mxu0 %v2081
  %2320 = vmatprep.subr.mxu0 0.0
  %2321 = vmatpush2.msra.mxu0 0.0
  %2322 = vmatprep.subr.mxu0 0.0
  %2323 = vmatpush2.msra.mxu0 0.0
  %2324 = vmatprep.subr.mxu0 0.0
  %2325 = vmatpush2.msra.mxu0 0.0
  %2326 = vmatprep.subr.mxu0 0.0
  %2327 = vmatpush2.msra.mxu0 0.0
  %2328 = vmatprep.subr.mxu0 0.0
  %2329 = vmatpush2.msra.mxu0 0.0
  %2330 = vmatprep.subr.mxu0 0.0
  %2331 = vmatpush2.msra.mxu0 0.0
  %2332 = vmatprep.subr.mxu0 0.0
  %2333 = vmatpush2.msra.mxu0 0.0
  %2334 = vmatprep.subr.mxu0 0.0
  %2335 = vmatpush2.msra.mxu0 0.0
  %2336 = vmatprep.subr.mxu0 0.0
  %2337 = vmatpush2.msra.mxu0 0.0
  %2338 = vmatprep.subr.mxu0 0.0
  %2339 = vmatpush2.msra.mxu0 0.0
  %2340 = vmatprep.subr.mxu0 0.0
  %2341 = vmatpush2.msra.mxu0 0.0
  %2342 = vmatprep.subr.mxu0 0.0
  %2343 = vmatpush2.msra.mxu0 0.0
  %2344 = vmatprep.subr.mxu0 0.0
  %2345 = vmatpush2.msra.mxu0 0.0
  %2346 = vmatprep.subr.mxu0 0.0
  %2347 = vmatpush2.msra.mxu0 0.0
  %2348 = vmatprep.subr.mxu0 0.0
  %2349 = vmatpush2.msra.mxu0 0.0
  %2350 = vmatprep.subr.mxu0 0.0
  %2351 = vmatpush2.msra.mxu0 0.0
  %2352 = vmatprep.mubr.f32.mxu0 0.0
  %2353 = vmatmul.mubr.f32.gmra.mxu0 %v2097
  %v2354 = vpop.f32.mrf.mxu0
  %v2355 = vadd.f32 %v2094, %v2354
  %v2356 = vpop.f32.mrf.mxu0
  %2357 = vmatprep.mubr.f32.mxu0 0.0
  %2358 = vmatmul.mubr.f32.gmra.mxu0 %v2100
  %v2359 = vpop.f32.mrf.mxu0
  %v2360 = vadd.f32 %v2094, %v2359
  %v2361 = vpop.f32.mrf.mxu0
  %2362 = vmatprep.mubr.f32.mxu0 0.0
  %2363 = vmatmul.mubr.f32.gmra.mxu0 %v2103
  %v2364 = vpop.f32.mrf.mxu0
  %v2365 = vadd.f32 %v2094, %v2364
  %v2366 = vpop.f32.mrf.mxu0
  %2367 = vmatprep.mubr.f32.mxu0 0.0
  %2368 = vmatmul.mubr.f32.gmra.mxu0 %v2106
  %v2369 = vpop.f32.mrf.mxu0
  %v2370 = vadd.f32 %v2094, %v2369
  %v2371 = vpop.f32.mrf.mxu0
  %2372 = vmatprep.mubr.f32.mxu0 0.0
  %2373 = vmatmul.mubr.f32.gmra.mxu0 %v2109
  %v2374 = vpop.f32.mrf.mxu0
  %v2375 = vadd.f32 %v2094, %v2374
  %v2376 = vpop.f32.mrf.mxu0
  %2377 = vmatprep.mubr.f32.mxu0 0.0
  %2378 = vmatmul.mubr.f32.gmra.mxu0 %v2112
  %v2379 = vpop.f32.mrf.mxu0
  %v2380 = vadd.f32 %v2094, %v2379
  %v2381 = vpop.f32.mrf.mxu0
  %2382 = vmatprep.mubr.f32.mxu0 0.0
  %2383 = vmatmul.mubr.f32.gmra.mxu0 %v2115
  %v2384 = vpop.f32.mrf.mxu0
  %v2385 = vadd.f32 %v2094, %v2384
  %v2386 = vpop.f32.mrf.mxu0
  %2387 = vmatprep.mubr.f32.mxu0 0.0
  %2388 = vmatmul.mubr.f32.gmra.mxu0 %v2118
  %v2389 = vpop.f32.mrf.mxu0
  %v2390 = vadd.f32 %v2094, %v2389
  %v2391 = vpop.f32.mrf.mxu0
  %2392 = vmatprep.mubr.f32.mxu0 0.0
  %2393 = vmatmul.mubr.f32.gmra.mxu0 %v2121
  %v2394 = vpop.f32.mrf.mxu0
  %v2395 = vadd.f32 %v2094, %v2394
  %v2396 = vpop.f32.mrf.mxu0
  %2397 = vmatprep.mubr.f32.mxu0 0.0
  %2398 = vmatmul.mubr.f32.gmra.mxu0 %v2124
  %v2399 = vpop.f32.mrf.mxu0
  %v2400 = vadd.f32 %v2094, %v2399
  %v2401 = vpop.f32.mrf.mxu0
  %2402 = vmatprep.mubr.f32.mxu0 0.0
  %2403 = vmatmul.mubr.f32.gmra.mxu0 %v2127
  %v2404 = vpop.f32.mrf.mxu0
  %v2405 = vadd.f32 %v2094, %v2404
  %v2406 = vpop.f32.mrf.mxu0
  %2407 = vmatprep.mubr.f32.mxu0 0.0
  %2408 = vmatmul.mubr.f32.gmra.mxu0 %v2130
  %v2409 = vpop.f32.mrf.mxu0
  %v2410 = vadd.f32 %v2094, %v2409
  %v2411 = vpop.f32.mrf.mxu0
  %2412 = vmatprep.mubr.f32.mxu0 0.0
  %2413 = vmatmul.mubr.f32.gmra.mxu0 %v2133
  %v2414 = vpop.f32.mrf.mxu0
  %v2415 = vadd.f32 %v2094, %v2414
  %v2416 = vpop.f32.mrf.mxu0
  %2417 = vmatprep.mubr.f32.mxu0 0.0
  %2418 = vmatmul.mubr.f32.gmra.mxu0 %v2136
  %v2419 = vpop.f32.mrf.mxu0
  %v2420 = vadd.f32 %v2094, %v2419
  %v2421 = vpop.f32.mrf.mxu0
  %2422 = vmatprep.mubr.f32.mxu0 0.0
  %2423 = vmatmul.mubr.f32.gmra.mxu0 %v2139
  %v2424 = vpop.f32.mrf.mxu0
  %v2425 = vadd.f32 %v2094, %v2424
  %v2426 = vpop.f32.mrf.mxu0
  %2427 = vmatprep.mubr.f32.mxu0 0.0
  %2428 = vmatmul.mubr.f32.gmra.mxu0 %v2142
  %v2429 = vpop.f32.mrf.mxu0
  %v2430 = vadd.f32 %v2094, %v2429
  %v2431 = vpop.f32.mrf.mxu0
  %2432 = vmatprep.mubr.f32.mxu0 0.0
  %2433 = vmatmul.mubr.f32.gmra.mxu0 %v2145
  %v2434 = vpop.f32.mrf.mxu0
  %v2435 = vadd.f32 %v2094, %v2434
  %v2436 = vpop.f32.mrf.mxu0
  %2437 = vmatprep.mubr.f32.mxu0 0.0
  %2438 = vmatmul.mubr.f32.gmra.mxu0 %v2148
  %v2439 = vpop.f32.mrf.mxu0
  %v2440 = vadd.f32 %v2094, %v2439
  %v2441 = vpop.f32.mrf.mxu0
  %2442 = vmatprep.mubr.f32.mxu0 0.0
  %2443 = vmatmul.mubr.f32.gmra.mxu0 %v2151
  %v2444 = vpop.f32.mrf.mxu0
  %v2445 = vadd.f32 %v2094, %v2444
  %v2446 = vpop.f32.mrf.mxu0
  %2447 = vmatprep.mubr.f32.mxu0 0.0
  %2448 = vmatmul.mubr.f32.gmra.mxu0 %v2154
  %v2449 = vpop.f32.mrf.mxu0
  %v2450 = vadd.f32 %v2094, %v2449
  %v2451 = vpop.f32.mrf.mxu0
  %2452 = vmatprep.mubr.f32.mxu0 0.0
  %2453 = vmatmul.mubr.f32.gmra.mxu0 %v2157
  %v2454 = vpop.f32.mrf.mxu0
  %v2455 = vadd.f32 %v2094, %v2454
  %v2456 = vpop.f32.mrf.mxu0
  %2457 = vmatprep.mubr.f32.mxu0 0.0
  %2458 = vmatmul.mubr.f32.gmra.mxu0 %v2160
  %v2459 = vpop.f32.mrf.mxu0
  %v2460 = vadd.f32 %v2094, %v2459
  %v2461 = vpop.f32.mrf.mxu0
  %2462 = vmatprep.mubr.f32.mxu0 0.0
  %2463 = vmatmul.mubr.f32.gmra.mxu0 %v2163
  %v2464 = vpop.f32.mrf.mxu0
  %v2465 = vadd.f32 %v2094, %v2464
  %v2466 = vpop.f32.mrf.mxu0
  %2467 = vmatprep.mubr.f32.mxu0 0.0
  %2468 = vmatmul.mubr.f32.gmra.mxu0 %v2166
  %v2469 = vpop.f32.mrf.mxu0
  %v2470 = vadd.f32 %v2094, %v2469
  %v2471 = vpop.f32.mrf.mxu0
  %2472 = vmatprep.mubr.f32.mxu0 0.0
  %2473 = vmatmul.mubr.f32.gmra.mxu0 %v2169
  %v2474 = vpop.f32.mrf.mxu0
  %v2475 = vadd.f32 %v2094, %v2474
  %v2476 = vpop.f32.mrf.mxu0
  %2477 = vmatprep.mubr.f32.mxu0 0.0
  %2478 = vmatmul.mubr.f32.gmra.mxu0 %v2172
  %v2479 = vpop.f32.mrf.mxu0
  %v2480 = vadd.f32 %v2094, %v2479
  %v2481 = vpop.f32.mrf.mxu0
  %2482 = vmatprep.mubr.f32.mxu0 0.0
  %2483 = vmatmul.mubr.f32.gmra.mxu0 %v2175
  %v2484 = vpop.f32.mrf.mxu0
  %v2485 = vadd.f32 %v2094, %v2484
  %v2486 = vpop.f32.mrf.mxu0
  %2487 = vmatprep.mubr.f32.mxu0 0.0
  %2488 = vmatmul.mubr.f32.gmra.mxu0 %v2178
  %v2489 = vpop.f32.mrf.mxu0
  %v2490 = vadd.f32 %v2094, %v2489
  %v2491 = vpop.f32.mrf.mxu0
  %2492 = vmatprep.mubr.f32.mxu0 0.0
  %2493 = vmatmul.mubr.f32.gmra.mxu0 %v2181
  %v2494 = vpop.f32.mrf.mxu0
  %v2495 = vadd.f32 %v2094, %v2494
  %v2496 = vpop.f32.mrf.mxu0
  %2497 = vmatprep.mubr.f32.mxu0 0.0
  %2498 = vmatmul.mubr.f32.gmra.mxu0 %v2184
  %v2499 = vpop.f32.mrf.mxu0
  %v2500 = vadd.f32 %v2094, %v2499
  %v2501 = vpop.f32.mrf.mxu0
  %2502 = vmatprep.mubr.f32.mxu0 0.0
  %2503 = vmatmul.mubr.f32.gmra.mxu0 %v2187
  %v2504 = vpop.f32.mrf.mxu0
  %v2505 = vadd.f32 %v2094, %v2504
  %v2506 = vpop.f32.mrf.mxu0
  %2507 = vmatprep.mubr.f32.mxu0 0.0
  %2508 = vmatmul.mubr.f32.gmra.mxu0 %v2190
  %v2509 = vpop.f32.mrf.mxu0
  %v2510 = vadd.f32 %v2094, %v2509
  %v2511 = vpop.f32.mrf.mxu0
  %2512 = vmatprep.mubr.f32.mxu0 0.0
  %2513 = vmatmul.mubr.f32.gmra.mxu0 %v2193
  %v2514 = vpop.f32.mrf.mxu0
  %v2515 = vadd.f32 %v2094, %v2514
  %v2516 = vpop.f32.mrf.mxu0
  %2517 = vmatprep.mubr.f32.mxu0 0.0
  %2518 = vmatmul.mubr.f32.gmra.mxu0 %v2196
  %v2519 = vpop.f32.mrf.mxu0
  %v2520 = vadd.f32 %v2094, %v2519
  %v2521 = vpop.f32.mrf.mxu0
  %2522 = vmatprep.mubr.f32.mxu0 0.0
  %2523 = vmatmul.mubr.f32.gmra.mxu0 %v2199
  %v2524 = vpop.f32.mrf.mxu0
  %v2525 = vadd.f32 %v2094, %v2524
  %v2526 = vpop.f32.mrf.mxu0
  %2527 = vmatprep.mubr.f32.mxu0 0.0
  %2528 = vmatmul.mubr.f32.gmra.mxu0 %v2202
  %v2529 = vpop.f32.mrf.mxu0
  %v2530 = vadd.f32 %v2094, %v2529
  %v2531 = vpop.f32.mrf.mxu0
  %2532 = vmatprep.mubr.f32.mxu0 0.0
  %2533 = vmatmul.mubr.f32.gmra.mxu0 %v2205
  %v2534 = vpop.f32.mrf.mxu0
  %v2535 = vadd.f32 %v2094, %v2534
  %v2536 = vpop.f32.mrf.mxu0
  %2537 = vmatprep.mubr.f32.mxu0 0.0
  %2538 = vmatmul.mubr.f32.gmra.mxu0 %v2208
  %v2539 = vpop.f32.mrf.mxu0
  %v2540 = vadd.f32 %v2094, %v2539
  %v2541 = vpop.f32.mrf.mxu0
  %2542 = vmatprep.mubr.f32.mxu0 0.0
  %2543 = vmatmul.mubr.f32.gmra.mxu0 %v2211
  %v2544 = vpop.f32.mrf.mxu0
  %v2545 = vadd.f32 %v2094, %v2544
  %v2546 = vpop.f32.mrf.mxu0
  %2547 = vmatprep.mubr.f32.mxu0 0.0
  %2548 = vmatmul.mubr.f32.gmra.mxu0 %v2214
  %v2549 = vpop.f32.mrf.mxu0
  %v2550 = vadd.f32 %v2094, %v2549
  %v2551 = vpop.f32.mrf.mxu0
  %2552 = vmatprep.mubr.f32.mxu0 0.0
  %2553 = vmatmul.mubr.f32.gmra.mxu0 %v2217
  %v2554 = vpop.f32.mrf.mxu0
  %v2555 = vadd.f32 %v2094, %v2554
  %v2556 = vpop.f32.mrf.mxu0
  %2557 = vmatprep.mubr.f32.mxu0 0.0
  %2558 = vmatmul.mubr.f32.gmra.mxu0 %v2220
  %v2559 = vpop.f32.mrf.mxu0
  %v2560 = vadd.f32 %v2094, %v2559
  %v2561 = vpop.f32.mrf.mxu0
  %2562 = vmatprep.mubr.f32.mxu0 0.0
  %2563 = vmatmul.mubr.f32.gmra.mxu0 %v2223
  %v2564 = vpop.f32.mrf.mxu0
  %v2565 = vadd.f32 %v2094, %v2564
  %v2566 = vpop.f32.mrf.mxu0
  %2567 = vmatprep.mubr.f32.mxu0 0.0
  %2568 = vmatmul.mubr.f32.gmra.mxu0 %v2226
  %v2569 = vpop.f32.mrf.mxu0
  %v2570 = vadd.f32 %v2094, %v2569
  %v2571 = vpop.f32.mrf.mxu0
  %2572 = vmatprep.mubr.f32.mxu0 0.0
  %2573 = vmatmul.mubr.f32.gmra.mxu0 %v2229
  %v2574 = vpop.f32.mrf.mxu0
  %v2575 = vadd.f32 %v2094, %v2574
  %v2576 = vpop.f32.mrf.mxu0
  %2577 = vmatprep.mubr.f32.mxu0 0.0
  %2578 = vmatmul.mubr.f32.gmra.mxu0 %v2232
  %v2579 = vpop.f32.mrf.mxu0
  %v2580 = vadd.f32 %v2094, %v2579
  %v2581 = vpop.f32.mrf.mxu0
  %2582 = vmatprep.mubr.f32.mxu0 0.0
  %2583 = vmatmul.mubr.f32.gmra.mxu0 %v2235
  %v2584 = vpop.f32.mrf.mxu0
  %v2585 = vadd.f32 %v2094, %v2584
  %v2586 = vpop.f32.mrf.mxu0
  %2587 = vmatprep.mubr.f32.mxu0 0.0
  %2588 = vmatmul.mubr.f32.gmra.mxu0 %v2238
  %v2589 = vpop.f32.mrf.mxu0
  %v2590 = vadd.f32 %v2094, %v2589
  %v2591 = vpop.f32.mrf.mxu0
  %2592 = vmatprep.mubr.f32.mxu0 0.0
  %2593 = vmatmul.mubr.f32.gmra.mxu0 %v2241
  %v2594 = vpop.f32.mrf.mxu0
  %v2595 = vadd.f32 %v2094, %v2594
  %v2596 = vpop.f32.mrf.mxu0
  %2597 = vmatprep.mubr.f32.mxu0 0.0
  %2598 = vmatmul.mubr.f32.gmra.mxu0 %v2244
  %v2599 = vpop.f32.mrf.mxu0
  %v2600 = vadd.f32 %v2094, %v2599
  %v2601 = vpop.f32.mrf.mxu0
  %2602 = vmatprep.mubr.f32.mxu0 0.0
  %2603 = vmatmul.mubr.f32.gmra.mxu0 %v2247
  %v2604 = vpop.f32.mrf.mxu0
  %v2605 = vadd.f32 %v2094, %v2604
  %v2606 = vpop.f32.mrf.mxu0
  %2607 = vmatprep.mubr.f32.mxu0 0.0
  %2608 = vmatmul.mubr.f32.gmra.mxu0 %v2250
  %v2609 = vpop.f32.mrf.mxu0
  %v2610 = vadd.f32 %v2094, %v2609
  %v2611 = vpop.f32.mrf.mxu0
  %2612 = vmatprep.mubr.f32.mxu0 0.0
  %2613 = vmatmul.mubr.f32.gmra.mxu0 %v2253
  %v2614 = vpop.f32.mrf.mxu0
  %v2615 = vadd.f32 %v2094, %v2614
  %v2616 = vpop.f32.mrf.mxu0
  %2617 = vmatprep.mubr.f32.mxu0 0.0
  %2618 = vmatmul.mubr.f32.gmra.mxu0 %v2256
  %v2619 = vpop.f32.mrf.mxu0
  %v2620 = vadd.f32 %v2094, %v2619
  %v2621 = vpop.f32.mrf.mxu0
  %2622 = vmatprep.mubr.f32.mxu0 0.0
  %2623 = vmatmul.mubr.f32.gmra.mxu0 %v2259
  %v2624 = vpop.f32.mrf.mxu0
  %v2625 = vadd.f32 %v2094, %v2624
  %v2626 = vpop.f32.mrf.mxu0
  %2627 = vmatprep.mubr.f32.mxu0 0.0
  %2628 = vmatmul.mubr.f32.gmra.mxu0 %v2262
  %v2629 = vpop.f32.mrf.mxu0
  %v2630 = vadd.f32 %v2094, %v2629
  %v2631 = vpop.f32.mrf.mxu0
  %2632 = vmatprep.mubr.f32.mxu0 0.0
  %2633 = vmatmul.mubr.f32.gmra.mxu0 %v2265
  %v2634 = vpop.f32.mrf.mxu0
  %v2635 = vadd.f32 %v2094, %v2634
  %v2636 = vpop.f32.mrf.mxu0
  %2637 = vmatprep.mubr.f32.mxu0 0.0
  %2638 = vmatmul.mubr.f32.gmra.mxu0 %v2268
  %v2639 = vpop.f32.mrf.mxu0
  %v2640 = vadd.f32 %v2094, %v2639
  %v2641 = vpop.f32.mrf.mxu0
  %2642 = vmatprep.mubr.f32.mxu0 0.0
  %2643 = vmatmul.mubr.f32.gmra.mxu0 %v2271
  %v2644 = vpop.f32.mrf.mxu0
  %v2645 = vadd.f32 %v2094, %v2644
  %v2646 = vpop.f32.mrf.mxu0
  %2647 = vmatprep.mubr.f32.mxu0 0.0
  %2648 = vmatmul.mubr.f32.gmra.mxu0 %v2274
  %v2649 = vpop.f32.mrf.mxu0
  %v2650 = vadd.f32 %v2094, %v2649
  %v2651 = vpop.f32.mrf.mxu0
  %2652 = vmatprep.mubr.f32.mxu0 0.0
  %2653 = vmatmul.mubr.f32.gmra.mxu0 %v2277
  %v2654 = vpop.f32.mrf.mxu0
  %v2655 = vadd.f32 %v2094, %v2654
  %v2656 = vpop.f32.mrf.mxu0
  %2657 = vmatprep.mubr.f32.mxu0 0.0
  %2658 = vmatmul.mubr.f32.gmra.mxu0 %v2280
  %v2659 = vpop.f32.mrf.mxu0
  %v2660 = vadd.f32 %v2094, %v2659
  %v2661 = vpop.f32.mrf.mxu0
  %2662 = vmatprep.mubr.f32.mxu0 0.0
  %2663 = vmatmul.mubr.f32.gmra.mxu0 %v2283
  %v2664 = vpop.f32.mrf.mxu0
  %v2665 = vadd.f32 %v2094, %v2664
  %v2666 = vpop.f32.mrf.mxu0
  %2667 = vmatprep.mubr.f32.mxu0 0.0
  %2668 = vmatmul.mubr.f32.gmra.mxu0 %v2286
  %v2669 = vpop.f32.mrf.mxu0
  %v2670 = vadd.f32 %v2094, %v2669
  %v2671 = vpop.f32.mrf.mxu0
  %2672 = vdwg.mxu0
  %2673 = vst.msk [vmem:[#allocation6] sm:$0xff] %vm1043, %v2355
  %2674 = vst.msk [vmem:[#allocation6 + $0x8] sm:$0xff] %vm1043, %v2360
  %2675 = vst.msk [vmem:[#allocation6 + $0x10] sm:$0xff] %vm1043, %v2365
  %2676 = vst.msk [vmem:[#allocation6 + $0x18] sm:$0xff] %vm1043, %v2370
  %2677 = vst.msk [vmem:[#allocation6 + $0x20] sm:$0xff] %vm1043, %v2375
  %2678 = vst.msk [vmem:[#allocation6 + $0x28] sm:$0xff] %vm1043, %v2380
  %2679 = vst.msk [vmem:[#allocation6 + $0x30] sm:$0xff] %vm1043, %v2385
  %2680 = vst.msk [vmem:[#allocation6 + $0x38] sm:$0xff] %vm1043, %v2390
  %2681 = vst.msk [vmem:[#allocation6 + $0x40] sm:$0xff] %vm1043, %v2395
  %2682 = vst.msk [vmem:[#allocation6 + $0x48] sm:$0xff] %vm1043, %v2400
  %2683 = vst.msk [vmem:[#allocation6 + $0x50] sm:$0xff] %vm1043, %v2405
  %2684 = vst.msk [vmem:[#allocation6 + $0x58] sm:$0xff] %vm1043, %v2410
  %2685 = vst.msk [vmem:[#allocation6 + $0x60] sm:$0xff] %vm1043, %v2415
  %2686 = vst.msk [vmem:[#allocation6 + $0x68] sm:$0xff] %vm1043, %v2420
  %2687 = vst.msk [vmem:[#allocation6 + $0x70] sm:$0xff] %vm1043, %v2425
  %2688 = vst.msk [vmem:[#allocation6 + $0x78] sm:$0xff] %vm1043, %v2430
  %2689 = vst.msk [vmem:[#allocation6 + $0x80] sm:$0xff] %vm1043, %v2435
  %2690 = vst.msk [vmem:[#allocation6 + $0x88] sm:$0xff] %vm1043, %v2440
  %2691 = vst.msk [vmem:[#allocation6 + $0x90] sm:$0xff] %vm1043, %v2445
  %2692 = vst.msk [vmem:[#allocation6 + $0x98] sm:$0xff] %vm1043, %v2450
  %2693 = vst.msk [vmem:[#allocation6 + $0xa0] sm:$0xff] %vm1043, %v2455
  %2694 = vst.msk [vmem:[#allocation6 + $0xa8] sm:$0xff] %vm1043, %v2460
  %2695 = vst.msk [vmem:[#allocation6 + $0xb0] sm:$0xff] %vm1043, %v2465
  %2696 = vst.msk [vmem:[#allocation6 + $0xb8] sm:$0xff] %vm1043, %v2470
  %2697 = vst.msk [vmem:[#allocation6 + $0xc0] sm:$0xff] %vm1043, %v2475
  %2698 = vst.msk [vmem:[#allocation6 + $0xc8] sm:$0xff] %vm1043, %v2480
  %2699 = vst.msk [vmem:[#allocation6 + $0xd0] sm:$0xff] %vm1043, %v2485
  %2700 = vst.msk [vmem:[#allocation6 + $0xd8] sm:$0xff] %vm1043, %v2490
  %2701 = vst.msk [vmem:[#allocation6 + $0xe0] sm:$0xff] %vm1043, %v2495
  %2702 = vst.msk [vmem:[#allocation6 + $0xe8] sm:$0xff] %vm1043, %v2500
  %2703 = vst.msk [vmem:[#allocation6 + $0xf0] sm:$0xff] %vm1043, %v2505
  %2704 = vst.msk [vmem:[#allocation6 + $0xf8] sm:$0xff] %vm1043, %v2510
  %2705 = vst.msk [vmem:[#allocation6 + $0x100] sm:$0xff] %vm1043, %v2515
  %2706 = vst.msk [vmem:[#allocation6 + $0x108] sm:$0xff] %vm1043, %v2520
  %2707 = vst.msk [vmem:[#allocation6 + $0x110] sm:$0xff] %vm1043, %v2525
  %2708 = vst.msk [vmem:[#allocation6 + $0x118] sm:$0xff] %vm1043, %v2530
  %2709 = vst.msk [vmem:[#allocation6 + $0x120] sm:$0xff] %vm1043, %v2535
  %2710 = vst.msk [vmem:[#allocation6 + $0x128] sm:$0xff] %vm1043, %v2540
  %2711 = vst.msk [vmem:[#allocation6 + $0x130] sm:$0xff] %vm1043, %v2545
  %2712 = vst.msk [vmem:[#allocation6 + $0x138] sm:$0xff] %vm1043, %v2550
  %2713 = vst.msk [vmem:[#allocation6 + $0x140] sm:$0xff] %vm1043, %v2555
  %2714 = vst.msk [vmem:[#allocation6 + $0x148] sm:$0xff] %vm1043, %v2560
  %2715 = vst.msk [vmem:[#allocation6 + $0x150] sm:$0xff] %vm1043, %v2565
  %2716 = vst.msk [vmem:[#allocation6 + $0x158] sm:$0xff] %vm1043, %v2570
  %2717 = vst.msk [vmem:[#allocation6 + $0x160] sm:$0xff] %vm1043, %v2575
  %2718 = vst.msk [vmem:[#allocation6 + $0x168] sm:$0xff] %vm1043, %v2580
  %2719 = vst.msk [vmem:[#allocation6 + $0x170] sm:$0xff] %vm1043, %v2585
  %2720 = vst.msk [vmem:[#allocation6 + $0x178] sm:$0xff] %vm1043, %v2590
  %2721 = vst.msk [vmem:[#allocation6 + $0x180] sm:$0xff] %vm1043, %v2595
  %2722 = vst.msk [vmem:[#allocation6 + $0x188] sm:$0xff] %vm1043, %v2600
  %2723 = vst.msk [vmem:[#allocation6 + $0x190] sm:$0xff] %vm1043, %v2605
  %2724 = vst.msk [vmem:[#allocation6 + $0x198] sm:$0xff] %vm1043, %v2610
  %2725 = vst.msk [vmem:[#allocation6 + $0x1a0] sm:$0xff] %vm1043, %v2615
  %2726 = vst.msk [vmem:[#allocation6 + $0x1a8] sm:$0xff] %vm1043, %v2620
  %2727 = vst.msk [vmem:[#allocation6 + $0x1b0] sm:$0xff] %vm1043, %v2625
  %2728 = vst.msk [vmem:[#allocation6 + $0x1b8] sm:$0xff] %vm1043, %v2630
  %2729 = vst.msk [vmem:[#allocation6 + $0x1c0] sm:$0xff] %vm1043, %v2635
  %2730 = vst.msk [vmem:[#allocation6 + $0x1c8] sm:$0xff] %vm1043, %v2640
  %2731 = vst.msk [vmem:[#allocation6 + $0x1d0] sm:$0xff] %vm1043, %v2645
  %2732 = vst.msk [vmem:[#allocation6 + $0x1d8] sm:$0xff] %vm1043, %v2650
  %2733 = vst.msk [vmem:[#allocation6 + $0x1e0] sm:$0xff] %vm1043, %v2655
  %2734 = vst.msk [vmem:[#allocation6 + $0x1e8] sm:$0xff] %vm1043, %v2660
  %2735 = vst.msk [vmem:[#allocation6 + $0x1f0] sm:$0xff] %vm1043, %v2665
  %2736 = vst.msk [vmem:[#allocation6 + $0x1f8] sm:$0xff] %vm1043, %v2670
  // While loop
  $region73: #{gnn_policy_forward.9} parent=0 // loop_pre_header
    _
  $region74: #{gnn_policy_forward.9} parent=0 // loop_header
    %s2738 = sphi 0, %s2740
    %p2739 = scmp.ge.s32.totalorder %s2738, %s959
  $region75: #{gnn_policy_forward.9} parent=0 // loop_header_branch
    %2742 = sbr.rel (%p2739) target = $region79
  $region76: #{gnn_policy_forward.9} parent=0 // loop_body
    %s2743 = sadd.s32 %s956, %s2738
    %s2744 = sld [smem:[#allocation9 + %s2743]]
    %s2745 = scalar_lea.vmem [#allocation4], %s2744
    %v2746 = vld [vmem:[%s2745] sm:$0x1]
    %s2747 = scalar_lea.vmem [#allocation6], %s2738
    %v2748 = vld [vmem:[%s2747] sm:$0x1]
    %v2749 = vadd.f32 %v2746, %v2748
    %vm2750 = vcmask 516096
    %2751 = vst.msk [vmem:[%s2745] sm:$0x1] %vm2750, %v2749
  $region77: #{gnn_policy_forward.9} parent=0 // loop_footer
    %s2740 = sadd.s32 %s2738, 1
  $region78: #{gnn_policy_forward.9} parent=0 // loop_footer_branch
    %2737 = sbr.rel target = $region74
  $region79: #{gnn_policy_forward.9} parent=0 // loop_exit
    _
  // Predicated region
  $region80: #{gnn_policy_forward.9} parent=0 // pred_check
    %p2752 = pneg %p62
  $region81: #{gnn_policy_forward.9} parent=0 // pred_check_branch
    %2754 = sbr.rel (%p2752) target = $region83
  $region82: #{gnn_policy_forward.9} parent=0 // pred_region
    %v2755 = vld [vmem:[#allocation4] sm:$0xff]
    %v2756 = vld [vmem:[#allocation4 + $0x8] sm:$0xff]
    %v2757 = vld [vmem:[#allocation4 + $0x10] sm:$0xff]
    %v2758 = vld [vmem:[#allocation4 + $0x18] sm:$0xff]
    %v2759 = vld [vmem:[#allocation4 + $0x20] sm:$0xff]
    %v2760 = vld [vmem:[#allocation4 + $0x28] sm:$0xff]
    %v2761 = vld [vmem:[#allocation4 + $0x30] sm:$0xff]
    %v2762 = vld [vmem:[#allocation4 + $0x38] sm:$0xff]
    %v2763 = vld [vmem:[#allocation4 + $0x40] sm:$0xff]
    %v2764 = vld [vmem:[#allocation4 + $0x48] sm:$0xff]
    %v2765 = vld [vmem:[#allocation4 + $0x50] sm:$0xff]
    %v2766 = vld [vmem:[#allocation4 + $0x58] sm:$0xff]
    %v2767 = vld [vmem:[#allocation4 + $0x60] sm:$0xff]
    %v2768 = vld [vmem:[#allocation4 + $0x68] sm:$0xff]
    %v2769 = vld [vmem:[#allocation4 + $0x70] sm:$0xff]
    %v2770 = vld [vmem:[#allocation4 + $0x78] sm:$0xff]
    %v2771 = vld [vmem:[#allocation4 + $0x80] sm:$0xff]
    %v2772 = vld [vmem:[#allocation4 + $0x88] sm:$0xff]
    %v2773 = vld [vmem:[#allocation4 + $0x90] sm:$0xff]
    %v2774 = vld [vmem:[#allocation4 + $0x98] sm:$0xff]
    %v2775 = vld [vmem:[#allocation4 + $0xa0] sm:$0xff]
    %v2776 = vld [vmem:[#allocation4 + $0xa8] sm:$0xff]
    %v2777 = vld [vmem:[#allocation4 + $0xb0] sm:$0xff]
    %v2778 = vld [vmem:[#allocation4 + $0xb8] sm:$0xff]
    %v2779 = vld [vmem:[#allocation4 + $0xc0] sm:$0xff]
    %v2780 = vld [vmem:[#allocation4 + $0xc8] sm:$0xff]
    %v2781 = vld [vmem:[#allocation4 + $0xd0] sm:$0xff]
    %v2782 = vld [vmem:[#allocation4 + $0xd8] sm:$0xff]
    %v2783 = vld [vmem:[#allocation4 + $0xe0] sm:$0xff]
    %v2784 = vld [vmem:[#allocation4 + $0xe8] sm:$0xff]
    %v2785 = vld [vmem:[#allocation4 + $0xf0] sm:$0xff]
    %v2786 = vld [vmem:[#allocation4 + $0xf8] sm:$0xff]
    %v2787 = vld [vmem:[%s11] sm:$0x1]
    %v2788 = vld [vmem:[%s12] sm:$0x1]
    %v2789 = vsel %vm1043, %v2755, 0.0
    %2790 = vadd.xlane.f32.xlu0 %v2789
    %v2791 = vpop.xlane.xlu0 %2790
    %v2792 = vsel %vm1043, %v2756, 0.0
    %2793 = vadd.xlane.f32.xlu0 %v2792
    %v2794 = vpop.xlane.xlu0 %2793
    %v2795 = vsel %vm1043, %v2757, 0.0
    %2796 = vadd.xlane.f32.xlu0 %v2795
    %v2797 = vpop.xlane.xlu0 %2796
    %v2798 = vsel %vm1043, %v2758, 0.0
    %2799 = vadd.xlane.f32.xlu0 %v2798
    %v2800 = vpop.xlane.xlu0 %2799
    %v2801 = vsel %vm1043, %v2759, 0.0
    %2802 = vadd.xlane.f32.xlu0 %v2801
    %v2803 = vpop.xlane.xlu0 %2802
    %v2804 = vsel %vm1043, %v2760, 0.0
    %2805 = vadd.xlane.f32.xlu0 %v2804
    %v2806 = vpop.xlane.xlu0 %2805
    %v2807 = vsel %vm1043, %v2761, 0.0
    %2808 = vadd.xlane.f32.xlu0 %v2807
    %v2809 = vpop.xlane.xlu0 %2808
    %v2810 = vsel %vm1043, %v2762, 0.0
    %2811 = vadd.xlane.f32.xlu0 %v2810
    %v2812 = vpop.xlane.xlu0 %2811
    %v2813 = vsel %vm1043, %v2763, 0.0
    %2814 = vadd.xlane.f32.xlu0 %v2813
    %v2815 = vpop.xlane.xlu0 %2814
    %v2816 = vsel %vm1043, %v2764, 0.0
    %2817 = vadd.xlane.f32.xlu0 %v2816
    %v2818 = vpop.xlane.xlu0 %2817
    %v2819 = vsel %vm1043, %v2765, 0.0
    %2820 = vadd.xlane.f32.xlu0 %v2819
    %v2821 = vpop.xlane.xlu0 %2820
    %v2822 = vsel %vm1043, %v2766, 0.0
    %2823 = vadd.xlane.f32.xlu0 %v2822
    %v2824 = vpop.xlane.xlu0 %2823
    %v2825 = vsel %vm1043, %v2767, 0.0
    %2826 = vadd.xlane.f32.xlu0 %v2825
    %v2827 = vpop.xlane.xlu0 %2826
    %v2828 = vsel %vm1043, %v2768, 0.0
    %2829 = vadd.xlane.f32.xlu0 %v2828
    %v2830 = vpop.xlane.xlu0 %2829
    %v2831 = vsel %vm1043, %v2769, 0.0
    %2832 = vadd.xlane.f32.xlu0 %v2831
    %v2833 = vpop.xlane.xlu0 %2832
    %v2834 = vsel %vm1043, %v2770, 0.0
    %2835 = vadd.xlane.f32.xlu0 %v2834
    %v2836 = vpop.xlane.xlu0 %2835
    %v2837 = vsel %vm1043, %v2771, 0.0
    %2838 = vadd.xlane.f32.xlu0 %v2837
    %v2839 = vpop.xlane.xlu0 %2838
    %v2840 = vsel %vm1043, %v2772, 0.0
    %2841 = vadd.xlane.f32.xlu0 %v2840
    %v2842 = vpop.xlane.xlu0 %2841
    %v2843 = vsel %vm1043, %v2773, 0.0
    %2844 = vadd.xlane.f32.xlu0 %v2843
    %v2845 = vpop.xlane.xlu0 %2844
    %v2846 = vsel %vm1043, %v2774, 0.0
    %2847 = vadd.xlane.f32.xlu0 %v2846
    %v2848 = vpop.xlane.xlu0 %2847
    %v2849 = vsel %vm1043, %v2775, 0.0
    %2850 = vadd.xlane.f32.xlu0 %v2849
    %v2851 = vpop.xlane.xlu0 %2850
    %v2852 = vsel %vm1043, %v2776, 0.0
    %2853 = vadd.xlane.f32.xlu0 %v2852
    %v2854 = vpop.xlane.xlu0 %2853
    %v2855 = vsel %vm1043, %v2777, 0.0
    %2856 = vadd.xlane.f32.xlu0 %v2855
    %v2857 = vpop.xlane.xlu0 %2856
    %v2858 = vsel %vm1043, %v2778, 0.0
    %2859 = vadd.xlane.f32.xlu0 %v2858
    %v2860 = vpop.xlane.xlu0 %2859
    %v2861 = vsel %vm1043, %v2779, 0.0
    %2862 = vadd.xlane.f32.xlu0 %v2861
    %v2863 = vpop.xlane.xlu0 %2862
    %v2864 = vsel %vm1043, %v2780, 0.0
    %2865 = vadd.xlane.f32.xlu0 %v2864
    %v2866 = vpop.xlane.xlu0 %2865
    %v2867 = vsel %vm1043, %v2781, 0.0
    %2868 = vadd.xlane.f32.xlu0 %v2867
    %v2869 = vpop.xlane.xlu0 %2868
    %v2870 = vsel %vm1043, %v2782, 0.0
    %2871 = vadd.xlane.f32.xlu0 %v2870
    %v2872 = vpop.xlane.xlu0 %2871
    %v2873 = vsel %vm1043, %v2783, 0.0
    %2874 = vadd.xlane.f32.xlu0 %v2873
    %v2875 = vpop.xlane.xlu0 %2874
    %v2876 = vsel %vm1043, %v2784, 0.0
    %2877 = vadd.xlane.f32.xlu0 %v2876
    %v2878 = vpop.xlane.xlu0 %2877
    %v2879 = vsel %vm1043, %v2785, 0.0
    %2880 = vadd.xlane.f32.xlu0 %v2879
    %v2881 = vpop.xlane.xlu0 %2880
    %v2882 = vsel %vm1043, %v2786, 0.0
    %2883 = vadd.xlane.f32.xlu0 %v2882
    %v2884 = vpop.xlane.xlu0 %2883
    %v2885 = vmul.f32 %v2791, %v1236
    %v2886 = vmul.f32 %v2794, %v1236
    %v2887 = vmul.f32 %v2797, %v1236
    %v2888 = vmul.f32 %v2800, %v1236
    %v2889 = vmul.f32 %v2803, %v1236
    %v2890 = vmul.f32 %v2806, %v1236
    %v2891 = vmul.f32 %v2809, %v1236
    %v2892 = vmul.f32 %v2812, %v1236
    %v2893 = vmul.f32 %v2815, %v1236
    %v2894 = vmul.f32 %v2818, %v1236
    %v2895 = vmul.f32 %v2821, %v1236
    %v2896 = vmul.f32 %v2824, %v1236
    %v2897 = vmul.f32 %v2827, %v1236
    %v2898 = vmul.f32 %v2830, %v1236
    %v2899 = vmul.f32 %v2833, %v1236
    %v2900 = vmul.f32 %v2836, %v1236
    %v2901 = vmul.f32 %v2839, %v1236
    %v2902 = vmul.f32 %v2842, %v1236
    %v2903 = vmul.f32 %v2845, %v1236
    %v2904 = vmul.f32 %v2848, %v1236
    %v2905 = vmul.f32 %v2851, %v1236
    %v2906 = vmul.f32 %v2854, %v1236
    %v2907 = vmul.f32 %v2857, %v1236
    %v2908 = vmul.f32 %v2860, %v1236
    %v2909 = vmul.f32 %v2863, %v1236
    %v2910 = vmul.f32 %v2866, %v1236
    %v2911 = vmul.f32 %v2869, %v1236
    %v2912 = vmul.f32 %v2872, %v1236
    %v2913 = vmul.f32 %v2875, %v1236
    %v2914 = vmul.f32 %v2878, %v1236
    %v2915 = vmul.f32 %v2881, %v1236
    %v2916 = vmul.f32 %v2884, %v1236
    %v2917 = vsub.f32 %v2755, %v2885
    %v2918 = vsub.f32 %v2756, %v2886
    %v2919 = vsub.f32 %v2757, %v2887
    %v2920 = vsub.f32 %v2758, %v2888
    %v2921 = vsub.f32 %v2759, %v2889
    %v2922 = vsub.f32 %v2760, %v2890
    %v2923 = vsub.f32 %v2761, %v2891
    %v2924 = vsub.f32 %v2762, %v2892
    %v2925 = vsub.f32 %v2763, %v2893
    %v2926 = vsub.f32 %v2764, %v2894
    %v2927 = vsub.f32 %v2765, %v2895
    %v2928 = vsub.f32 %v2766, %v2896
    %v2929 = vsub.f32 %v2767, %v2897
    %v2930 = vsub.f32 %v2768, %v2898
    %v2931 = vsub.f32 %v2769, %v2899
    %v2932 = vsub.f32 %v2770, %v2900
    %v2933 = vsub.f32 %v2771, %v2901
    %v2934 = vsub.f32 %v2772, %v2902
    %v2935 = vsub.f32 %v2773, %v2903
    %v2936 = vsub.f32 %v2774, %v2904
    %v2937 = vsub.f32 %v2775, %v2905
    %v2938 = vsub.f32 %v2776, %v2906
    %v2939 = vsub.f32 %v2777, %v2907
    %v2940 = vsub.f32 %v2778, %v2908
    %v2941 = vsub.f32 %v2779, %v2909
    %v2942 = vsub.f32 %v2780, %v2910
    %v2943 = vsub.f32 %v2781, %v2911
    %v2944 = vsub.f32 %v2782, %v2912
    %v2945 = vsub.f32 %v2783, %v2913
    %v2946 = vsub.f32 %v2784, %v2914
    %v2947 = vsub.f32 %v2785, %v2915
    %v2948 = vsub.f32 %v2786, %v2916
    %v2949 = vmul.f32 %v2917, %v2917
    %v2950 = vmul.f32 %v2918, %v2918
    %v2951 = vmul.f32 %v2919, %v2919
    %v2952 = vmul.f32 %v2920, %v2920
    %v2953 = vmul.f32 %v2921, %v2921
    %v2954 = vmul.f32 %v2922, %v2922
    %v2955 = vmul.f32 %v2923, %v2923
    %v2956 = vmul.f32 %v2924, %v2924
    %v2957 = vmul.f32 %v2925, %v2925
    %v2958 = vmul.f32 %v2926, %v2926
    %v2959 = vmul.f32 %v2927, %v2927
    %v2960 = vmul.f32 %v2928, %v2928
    %v2961 = vmul.f32 %v2929, %v2929
    %v2962 = vmul.f32 %v2930, %v2930
    %v2963 = vmul.f32 %v2931, %v2931
    %v2964 = vmul.f32 %v2932, %v2932
    %v2965 = vmul.f32 %v2933, %v2933
    %v2966 = vmul.f32 %v2934, %v2934
    %v2967 = vmul.f32 %v2935, %v2935
    %v2968 = vmul.f32 %v2936, %v2936
    %v2969 = vmul.f32 %v2937, %v2937
    %v2970 = vmul.f32 %v2938, %v2938
    %v2971 = vmul.f32 %v2939, %v2939
    %v2972 = vmul.f32 %v2940, %v2940
    %v2973 = vmul.f32 %v2941, %v2941
    %v2974 = vmul.f32 %v2942, %v2942
    %v2975 = vmul.f32 %v2943, %v2943
    %v2976 = vmul.f32 %v2944, %v2944
    %v2977 = vmul.f32 %v2945, %v2945
    %v2978 = vmul.f32 %v2946, %v2946
    %v2979 = vmul.f32 %v2947, %v2947
    %v2980 = vmul.f32 %v2948, %v2948
    %v2981 = vsel %vm1043, %v2949, 0.0
    %2982 = vadd.xlane.f32.xlu0 %v2981
    %v2983 = vpop.xlane.xlu0 %2982
    %v2984 = vsel %vm1043, %v2950, 0.0
    %2985 = vadd.xlane.f32.xlu0 %v2984
    %v2986 = vpop.xlane.xlu0 %2985
    %v2987 = vsel %vm1043, %v2951, 0.0
    %2988 = vadd.xlane.f32.xlu0 %v2987
    %v2989 = vpop.xlane.xlu0 %2988
    %v2990 = vsel %vm1043, %v2952, 0.0
    %2991 = vadd.xlane.f32.xlu0 %v2990
    %v2992 = vpop.xlane.xlu0 %2991
    %v2993 = vsel %vm1043, %v2953, 0.0
    %2994 = vadd.xlane.f32.xlu0 %v2993
    %v2995 = vpop.xlane.xlu0 %2994
    %v2996 = vsel %vm1043, %v2954, 0.0
    %2997 = vadd.xlane.f32.xlu0 %v2996
    %v2998 = vpop.xlane.xlu0 %2997
    %v2999 = vsel %vm1043, %v2955, 0.0
    %3000 = vadd.xlane.f32.xlu0 %v2999
    %v3001 = vpop.xlane.xlu0 %3000
    %v3002 = vsel %vm1043, %v2956, 0.0
    %3003 = vadd.xlane.f32.xlu0 %v3002
    %v3004 = vpop.xlane.xlu0 %3003
    %v3005 = vsel %vm1043, %v2957, 0.0
    %3006 = vadd.xlane.f32.xlu0 %v3005
    %v3007 = vpop.xlane.xlu0 %3006
    %v3008 = vsel %vm1043, %v2958, 0.0
    %3009 = vadd.xlane.f32.xlu0 %v3008
    %v3010 = vpop.xlane.xlu0 %3009
    %v3011 = vsel %vm1043, %v2959, 0.0
    %3012 = vadd.xlane.f32.xlu0 %v3011
    %v3013 = vpop.xlane.xlu0 %3012
    %v3014 = vsel %vm1043, %v2960, 0.0
    %3015 = vadd.xlane.f32.xlu0 %v3014
    %v3016 = vpop.xlane.xlu0 %3015
    %v3017 = vsel %vm1043, %v2961, 0.0
    %3018 = vadd.xlane.f32.xlu0 %v3017
    %v3019 = vpop.xlane.xlu0 %3018
    %v3020 = vsel %vm1043, %v2962, 0.0
    %3021 = vadd.xlane.f32.xlu0 %v3020
    %v3022 = vpop.xlane.xlu0 %3021
    %v3023 = vsel %vm1043, %v2963, 0.0
    %3024 = vadd.xlane.f32.xlu0 %v3023
    %v3025 = vpop.xlane.xlu0 %3024
    %v3026 = vsel %vm1043, %v2964, 0.0
    %3027 = vadd.xlane.f32.xlu0 %v3026
    %v3028 = vpop.xlane.xlu0 %3027
    %v3029 = vsel %vm1043, %v2965, 0.0
    %3030 = vadd.xlane.f32.xlu0 %v3029
    %v3031 = vpop.xlane.xlu0 %3030
    %v3032 = vsel %vm1043, %v2966, 0.0
    %3033 = vadd.xlane.f32.xlu0 %v3032
    %v3034 = vpop.xlane.xlu0 %3033
    %v3035 = vsel %vm1043, %v2967, 0.0
    %3036 = vadd.xlane.f32.xlu0 %v3035
    %v3037 = vpop.xlane.xlu0 %3036
    %v3038 = vsel %vm1043, %v2968, 0.0
    %3039 = vadd.xlane.f32.xlu0 %v3038
    %v3040 = vpop.xlane.xlu0 %3039
    %v3041 = vsel %vm1043, %v2969, 0.0
    %3042 = vadd.xlane.f32.xlu0 %v3041
    %v3043 = vpop.xlane.xlu0 %3042
    %v3044 = vsel %vm1043, %v2970, 0.0
    %3045 = vadd.xlane.f32.xlu0 %v3044
    %v3046 = vpop.xlane.xlu0 %3045
    %v3047 = vsel %vm1043, %v2971, 0.0
    %3048 = vadd.xlane.f32.xlu0 %v3047
    %v3049 = vpop.xlane.xlu0 %3048
    %v3050 = vsel %vm1043, %v2972, 0.0
    %3051 = vadd.xlane.f32.xlu0 %v3050
    %v3052 = vpop.xlane.xlu0 %3051
    %v3053 = vsel %vm1043, %v2973, 0.0
    %3054 = vadd.xlane.f32.xlu0 %v3053
    %v3055 = vpop.xlane.xlu0 %3054
    %v3056 = vsel %vm1043, %v2974, 0.0
    %3057 = vadd.xlane.f32.xlu0 %v3056
    %v3058 = vpop.xlane.xlu0 %3057
    %v3059 = vsel %vm1043, %v2975, 0.0
    %3060 = vadd.xlane.f32.xlu0 %v3059
    %v3061 = vpop.xlane.xlu0 %3060
    %v3062 = vsel %vm1043, %v2976, 0.0
    %3063 = vadd.xlane.f32.xlu0 %v3062
    %v3064 = vpop.xlane.xlu0 %3063
    %v3065 = vsel %vm1043, %v2977, 0.0
    %3066 = vadd.xlane.f32.xlu0 %v3065
    %v3067 = vpop.xlane.xlu0 %3066
    %v3068 = vsel %vm1043, %v2978, 0.0
    %3069 = vadd.xlane.f32.xlu0 %v3068
    %v3070 = vpop.xlane.xlu0 %3069
    %v3071 = vsel %vm1043, %v2979, 0.0
    %3072 = vadd.xlane.f32.xlu0 %v3071
    %v3073 = vpop.xlane.xlu0 %3072
    %v3074 = vsel %vm1043, %v2980, 0.0
    %3075 = vadd.xlane.f32.xlu0 %v3074
    %v3076 = vpop.xlane.xlu0 %3075
    %v3077 = vmul.f32 %v2983, %v1236
    %v3078 = vmul.f32 %v2986, %v1236
    %v3079 = vmul.f32 %v2989, %v1236
    %v3080 = vmul.f32 %v2992, %v1236
    %v3081 = vmul.f32 %v2995, %v1236
    %v3082 = vmul.f32 %v2998, %v1236
    %v3083 = vmul.f32 %v3001, %v1236
    %v3084 = vmul.f32 %v3004, %v1236
    %v3085 = vmul.f32 %v3007, %v1236
    %v3086 = vmul.f32 %v3010, %v1236
    %v3087 = vmul.f32 %v3013, %v1236
    %v3088 = vmul.f32 %v3016, %v1236
    %v3089 = vmul.f32 %v3019, %v1236
    %v3090 = vmul.f32 %v3022, %v1236
    %v3091 = vmul.f32 %v3025, %v1236
    %v3092 = vmul.f32 %v3028, %v1236
    %v3093 = vmul.f32 %v3031, %v1236
    %v3094 = vmul.f32 %v3034, %v1236
    %v3095 = vmul.f32 %v3037, %v1236
    %v3096 = vmul.f32 %v3040, %v1236
    %v3097 = vmul.f32 %v3043, %v1236
    %v3098 = vmul.f32 %v3046, %v1236
    %v3099 = vmul.f32 %v3049, %v1236
    %v3100 = vmul.f32 %v3052, %v1236
    %v3101 = vmul.f32 %v3055, %v1236
    %v3102 = vmul.f32 %v3058, %v1236
    %v3103 = vmul.f32 %v3061, %v1236
    %v3104 = vmul.f32 %v3064, %v1236
    %v3105 = vmul.f32 %v3067, %v1236
    %v3106 = vmul.f32 %v3070, %v1236
    %v3107 = vmul.f32 %v3073, %v1236
    %v3108 = vmul.f32 %v3076, %v1236
    %v3109 = vadd.f32 %v3077, 1e-05
    %v3110 = vadd.f32 %v3078, 1e-05
    %v3111 = vadd.f32 %v3079, 1e-05
    %v3112 = vadd.f32 %v3080, 1e-05
    %v3113 = vadd.f32 %v3081, 1e-05
    %v3114 = vadd.f32 %v3082, 1e-05
    %v3115 = vadd.f32 %v3083, 1e-05
    %v3116 = vadd.f32 %v3084, 1e-05
    %v3117 = vadd.f32 %v3085, 1e-05
    %v3118 = vadd.f32 %v3086, 1e-05
    %v3119 = vadd.f32 %v3087, 1e-05
    %v3120 = vadd.f32 %v3088, 1e-05
    %v3121 = vadd.f32 %v3089, 1e-05
    %v3122 = vadd.f32 %v3090, 1e-05
    %v3123 = vadd.f32 %v3091, 1e-05
    %v3124 = vadd.f32 %v3092, 1e-05
    %v3125 = vadd.f32 %v3093, 1e-05
    %v3126 = vadd.f32 %v3094, 1e-05
    %v3127 = vadd.f32 %v3095, 1e-05
    %v3128 = vadd.f32 %v3096, 1e-05
    %v3129 = vadd.f32 %v3097, 1e-05
    %v3130 = vadd.f32 %v3098, 1e-05
    %v3131 = vadd.f32 %v3099, 1e-05
    %v3132 = vadd.f32 %v3100, 1e-05
    %v3133 = vadd.f32 %v3101, 1e-05
    %v3134 = vadd.f32 %v3102, 1e-05
    %v3135 = vadd.f32 %v3103, 1e-05
    %v3136 = vadd.f32 %v3104, 1e-05
    %v3137 = vadd.f32 %v3105, 1e-05
    %v3138 = vadd.f32 %v3106, 1e-05
    %v3139 = vadd.f32 %v3107, 1e-05
    %v3140 = vadd.f32 %v3108, 1e-05
    %v3141 = vrsqrt.pop %v3109
    %v3142 = vrsqrt.pop %v3110
    %v3143 = vrsqrt.pop %v3111
    %v3144 = vrsqrt.pop %v3112
    %v3145 = vrsqrt.pop %v3113
    %v3146 = vrsqrt.pop %v3114
    %v3147 = vrsqrt.pop %v3115
    %v3148 = vrsqrt.pop %v3116
    %v3149 = vrsqrt.pop %v3117
    %v3150 = vrsqrt.pop %v3118
    %v3151 = vrsqrt.pop %v3119
    %v3152 = vrsqrt.pop %v3120
    %v3153 = vrsqrt.pop %v3121
    %v3154 = vrsqrt.pop %v3122
    %v3155 = vrsqrt.pop %v3123
    %v3156 = vrsqrt.pop %v3124
    %v3157 = vrsqrt.pop %v3125
    %v3158 = vrsqrt.pop %v3126
    %v3159 = vrsqrt.pop %v3127
    %v3160 = vrsqrt.pop %v3128
    %v3161 = vrsqrt.pop %v3129
    %v3162 = vrsqrt.pop %v3130
    %v3163 = vrsqrt.pop %v3131
    %v3164 = vrsqrt.pop %v3132
    %v3165 = vrsqrt.pop %v3133
    %v3166 = vrsqrt.pop %v3134
    %v3167 = vrsqrt.pop %v3135
    %v3168 = vrsqrt.pop %v3136
    %v3169 = vrsqrt.pop %v3137
    %v3170 = vrsqrt.pop %v3138
    %v3171 = vrsqrt.pop %v3139
    %v3172 = vrsqrt.pop %v3140
    %v3173 = vmul.f32 %v2917, %v3141
    %v3174 = vmul.f32 %v2918, %v3142
    %v3175 = vmul.f32 %v2919, %v3143
    %v3176 = vmul.f32 %v2920, %v3144
    %v3177 = vmul.f32 %v2921, %v3145
    %v3178 = vmul.f32 %v2922, %v3146
    %v3179 = vmul.f32 %v2923, %v3147
    %v3180 = vmul.f32 %v2924, %v3148
    %v3181 = vmul.f32 %v2925, %v3149
    %v3182 = vmul.f32 %v2926, %v3150
    %v3183 = vmul.f32 %v2927, %v3151
    %v3184 = vmul.f32 %v2928, %v3152
    %v3185 = vmul.f32 %v2929, %v3153
    %v3186 = vmul.f32 %v2930, %v3154
    %v3187 = vmul.f32 %v2931, %v3155
    %v3188 = vmul.f32 %v2932, %v3156
    %v3189 = vmul.f32 %v2933, %v3157
    %v3190 = vmul.f32 %v2934, %v3158
    %v3191 = vmul.f32 %v2935, %v3159
    %v3192 = vmul.f32 %v2936, %v3160
    %v3193 = vmul.f32 %v2937, %v3161
    %v3194 = vmul.f32 %v2938, %v3162
    %v3195 = vmul.f32 %v2939, %v3163
    %v3196 = vmul.f32 %v2940, %v3164
    %v3197 = vmul.f32 %v2941, %v3165
    %v3198 = vmul.f32 %v2942, %v3166
    %v3199 = vmul.f32 %v2943, %v3167
    %v3200 = vmul.f32 %v2944, %v3168
    %v3201 = vmul.f32 %v2945, %v3169
    %v3202 = vmul.f32 %v2946, %v3170
    %v3203 = vmul.f32 %v2947, %v3171
    %v3204 = vmul.f32 %v2948, %v3172
    %v3206 = vlaneseq
    %v3207 = vshrl.u32 %v3206, 7
    %v3208 = vsub.s32 0, %v3207
    %v3209 = vrot.slane %v2787, %v3208
    %v3211 = vmul.f32 %v3173, %v3209
    %v3212 = vmul.f32 %v3174, %v3209
    %v3213 = vmul.f32 %v3175, %v3209
    %v3214 = vmul.f32 %v3176, %v3209
    %v3215 = vmul.f32 %v3177, %v3209
    %v3216 = vmul.f32 %v3178, %v3209
    %v3217 = vmul.f32 %v3179, %v3209
    %v3218 = vmul.f32 %v3180, %v3209
    %v3219 = vmul.f32 %v3181, %v3209
    %v3220 = vmul.f32 %v3182, %v3209
    %v3221 = vmul.f32 %v3183, %v3209
    %v3222 = vmul.f32 %v3184, %v3209
    %v3223 = vmul.f32 %v3185, %v3209
    %v3224 = vmul.f32 %v3186, %v3209
    %v3225 = vmul.f32 %v3187, %v3209
    %v3226 = vmul.f32 %v3188, %v3209
    %v3227 = vmul.f32 %v3189, %v3209
    %v3228 = vmul.f32 %v3190, %v3209
    %v3229 = vmul.f32 %v3191, %v3209
    %v3230 = vmul.f32 %v3192, %v3209
    %v3231 = vmul.f32 %v3193, %v3209
    %v3232 = vmul.f32 %v3194, %v3209
    %v3233 = vmul.f32 %v3195, %v3209
    %v3234 = vmul.f32 %v3196, %v3209
    %v3235 = vmul.f32 %v3197, %v3209
    %v3236 = vmul.f32 %v3198, %v3209
    %v3237 = vmul.f32 %v3199, %v3209
    %v3238 = vmul.f32 %v3200, %v3209
    %v3239 = vmul.f32 %v3201, %v3209
    %v3240 = vmul.f32 %v3202, %v3209
    %v3241 = vmul.f32 %v3203, %v3209
    %v3242 = vmul.f32 %v3204, %v3209
    %v3244 = vlaneseq
    %v3245 = vshrl.u32 %v3244, 7
    %v3246 = vsub.s32 0, %v3245
    %v3247 = vrot.slane %v2788, %v3246
    %v3249 = vadd.f32 %v3211, %v3247
    %v3250 = vadd.f32 %v3212, %v3247
    %v3251 = vadd.f32 %v3213, %v3247
    %v3252 = vadd.f32 %v3214, %v3247
    %v3253 = vadd.f32 %v3215, %v3247
    %v3254 = vadd.f32 %v3216, %v3247
    %v3255 = vadd.f32 %v3217, %v3247
    %v3256 = vadd.f32 %v3218, %v3247
    %v3257 = vadd.f32 %v3219, %v3247
    %v3258 = vadd.f32 %v3220, %v3247
    %v3259 = vadd.f32 %v3221, %v3247
    %v3260 = vadd.f32 %v3222, %v3247
    %v3261 = vadd.f32 %v3223, %v3247
    %v3262 = vadd.f32 %v3224, %v3247
    %v3263 = vadd.f32 %v3225, %v3247
    %v3264 = vadd.f32 %v3226, %v3247
    %v3265 = vadd.f32 %v3227, %v3247
    %v3266 = vadd.f32 %v3228, %v3247
    %v3267 = vadd.f32 %v3229, %v3247
    %v3268 = vadd.f32 %v3230, %v3247
    %v3269 = vadd.f32 %v3231, %v3247
    %v3270 = vadd.f32 %v3232, %v3247
    %v3271 = vadd.f32 %v3233, %v3247
    %v3272 = vadd.f32 %v3234, %v3247
    %v3273 = vadd.f32 %v3235, %v3247
    %v3274 = vadd.f32 %v3236, %v3247
    %v3275 = vadd.f32 %v3237, %v3247
    %v3276 = vadd.f32 %v3238, %v3247
    %v3277 = vadd.f32 %v3239, %v3247
    %v3278 = vadd.f32 %v3240, %v3247
    %v3279 = vadd.f32 %v3241, %v3247
    %v3280 = vadd.f32 %v3242, %v3247
    %v3281 = vld [vmem:[%s3] sm:$0xff]
    %v3282 = vld [vmem:[%s3 + $0x8] sm:$0xff]
    %v3283 = vld [vmem:[%s3 + $0x10] sm:$0xff]
    %v3284 = vld [vmem:[%s3 + $0x18] sm:$0xff]
    %v3285 = vld [vmem:[%s3 + $0x20] sm:$0xff]
    %v3286 = vld [vmem:[%s3 + $0x28] sm:$0xff]
    %v3287 = vld [vmem:[%s3 + $0x30] sm:$0xff]
    %v3288 = vld [vmem:[%s3 + $0x38] sm:$0xff]
    %v3289 = vld [vmem:[%s3 + $0x40] sm:$0xff]
    %v3290 = vld [vmem:[%s3 + $0x48] sm:$0xff]
    %v3291 = vld [vmem:[%s3 + $0x50] sm:$0xff]
    %v3292 = vld [vmem:[%s3 + $0x58] sm:$0xff]
    %v3293 = vld [vmem:[%s3 + $0x60] sm:$0xff]
    %v3294 = vld [vmem:[%s3 + $0x68] sm:$0xff]
    %v3295 = vld [vmem:[%s3 + $0x70] sm:$0xff]
    %v3296 = vld [vmem:[%s3 + $0x78] sm:$0xff]
    %v3297 = vld [vmem:[%s3 + $0x80] sm:$0xff]
    %v3298 = vld [vmem:[%s3 + $0x88] sm:$0xff]
    %v3299 = vld [vmem:[%s3 + $0x90] sm:$0xff]
    %v3300 = vld [vmem:[%s3 + $0x98] sm:$0xff]
    %v3301 = vld [vmem:[%s3 + $0xa0] sm:$0xff]
    %v3302 = vld [vmem:[%s3 + $0xa8] sm:$0xff]
    %v3303 = vld [vmem:[%s3 + $0xb0] sm:$0xff]
    %v3304 = vld [vmem:[%s3 + $0xb8] sm:$0xff]
    %v3305 = vld [vmem:[%s3 + $0xc0] sm:$0xff]
    %v3306 = vld [vmem:[%s3 + $0xc8] sm:$0xff]
    %v3307 = vld [vmem:[%s3 + $0xd0] sm:$0xff]
    %v3308 = vld [vmem:[%s3 + $0xd8] sm:$0xff]
    %v3309 = vld [vmem:[%s3 + $0xe0] sm:$0xff]
    %v3310 = vld [vmem:[%s3 + $0xe8] sm:$0xff]
    %v3311 = vld [vmem:[%s3 + $0xf0] sm:$0xff]
    %v3312 = vld [vmem:[%s3 + $0xf8] sm:$0xff]
    %3345 = vrot.lane.b32.xlu0 %v3281, 64
    %v3346 = vpop.permute.xlu0 %3345
    %3347 = vrot.lane.b32.xlu0 %v3282, 64
    %v3348 = vpop.permute.xlu0 %3347
    %3349 = vrot.lane.b32.xlu0 %v3283, 64
    %v3350 = vpop.permute.xlu0 %3349
    %3351 = vrot.lane.b32.xlu0 %v3284, 64
    %v3352 = vpop.permute.xlu0 %3351
    %3353 = vrot.lane.b32.xlu0 %v3285, 64
    %v3354 = vpop.permute.xlu0 %3353
    %3355 = vrot.lane.b32.xlu0 %v3286, 64
    %v3356 = vpop.permute.xlu0 %3355
    %3357 = vrot.lane.b32.xlu0 %v3287, 64
    %v3358 = vpop.permute.xlu0 %3357
    %3359 = vrot.lane.b32.xlu0 %v3288, 64
    %v3360 = vpop.permute.xlu0 %3359
    %3361 = vrot.lane.b32.xlu0 %v3289, 64
    %v3362 = vpop.permute.xlu0 %3361
    %3363 = vrot.lane.b32.xlu0 %v3290, 64
    %v3364 = vpop.permute.xlu0 %3363
    %3365 = vrot.lane.b32.xlu0 %v3291, 64
    %v3366 = vpop.permute.xlu0 %3365
    %3367 = vrot.lane.b32.xlu0 %v3292, 64
    %v3368 = vpop.permute.xlu0 %3367
    %3369 = vrot.lane.b32.xlu0 %v3293, 64
    %v3370 = vpop.permute.xlu0 %3369
    %3371 = vrot.lane.b32.xlu0 %v3294, 64
    %v3372 = vpop.permute.xlu0 %3371
    %3373 = vrot.lane.b32.xlu0 %v3295, 64
    %v3374 = vpop.permute.xlu0 %3373
    %3375 = vrot.lane.b32.xlu0 %v3296, 64
    %v3376 = vpop.permute.xlu0 %3375
    %3377 = vrot.lane.b32.xlu0 %v3297, 64
    %v3378 = vpop.permute.xlu0 %3377
    %3379 = vrot.lane.b32.xlu0 %v3298, 64
    %v3380 = vpop.permute.xlu0 %3379
    %3381 = vrot.lane.b32.xlu0 %v3299, 64
    %v3382 = vpop.permute.xlu0 %3381
    %3383 = vrot.lane.b32.xlu0 %v3300, 64
    %v3384 = vpop.permute.xlu0 %3383
    %3385 = vrot.lane.b32.xlu0 %v3301, 64
    %v3386 = vpop.permute.xlu0 %3385
    %3387 = vrot.lane.b32.xlu0 %v3302, 64
    %v3388 = vpop.permute.xlu0 %3387
    %3389 = vrot.lane.b32.xlu0 %v3303, 64
    %v3390 = vpop.permute.xlu0 %3389
    %3391 = vrot.lane.b32.xlu0 %v3304, 64
    %v3392 = vpop.permute.xlu0 %3391
    %3393 = vrot.lane.b32.xlu0 %v3305, 64
    %v3394 = vpop.permute.xlu0 %3393
    %3395 = vrot.lane.b32.xlu0 %v3306, 64
    %v3396 = vpop.permute.xlu0 %3395
    %3397 = vrot.lane.b32.xlu0 %v3307, 64
    %v3398 = vpop.permute.xlu0 %3397
    %3399 = vrot.lane.b32.xlu0 %v3308, 64
    %v3400 = vpop.permute.xlu0 %3399
    %3401 = vrot.lane.b32.xlu0 %v3309, 64
    %v3402 = vpop.permute.xlu0 %3401
    %3403 = vrot.lane.b32.xlu0 %v3310, 64
    %v3404 = vpop.permute.xlu0 %3403
    %3405 = vrot.lane.b32.xlu0 %v3311, 64
    %v3406 = vpop.permute.xlu0 %3405
    %3407 = vrot.lane.b32.xlu0 %v3312, 64
    %v3408 = vpop.permute.xlu0 %3407
    %v3441 = vsel %vm1043, %v3249, %v3346
    %v3442 = vsel %vm1043, %v3250, %v3348
    %v3443 = vsel %vm1043, %v3251, %v3350
    %v3444 = vsel %vm1043, %v3252, %v3352
    %v3445 = vsel %vm1043, %v3253, %v3354
    %v3446 = vsel %vm1043, %v3254, %v3356
    %v3447 = vsel %vm1043, %v3255, %v3358
    %v3448 = vsel %vm1043, %v3256, %v3360
    %v3449 = vsel %vm1043, %v3257, %v3362
    %v3450 = vsel %vm1043, %v3258, %v3364
    %v3451 = vsel %vm1043, %v3259, %v3366
    %v3452 = vsel %vm1043, %v3260, %v3368
    %v3453 = vsel %vm1043, %v3261, %v3370
    %v3454 = vsel %vm1043, %v3262, %v3372
    %v3455 = vsel %vm1043, %v3263, %v3374
    %v3456 = vsel %vm1043, %v3264, %v3376
    %v3457 = vsel %vm1043, %v3265, %v3378
    %v3458 = vsel %vm1043, %v3266, %v3380
    %v3459 = vsel %vm1043, %v3267, %v3382
    %v3460 = vsel %vm1043, %v3268, %v3384
    %v3461 = vsel %vm1043, %v3269, %v3386
    %v3462 = vsel %vm1043, %v3270, %v3388
    %v3463 = vsel %vm1043, %v3271, %v3390
    %v3464 = vsel %vm1043, %v3272, %v3392
    %v3465 = vsel %vm1043, %v3273, %v3394
    %v3466 = vsel %vm1043, %v3274, %v3396
    %v3467 = vsel %vm1043, %v3275, %v3398
    %v3468 = vsel %vm1043, %v3276, %v3400
    %v3469 = vsel %vm1043, %v3277, %v3402
    %v3470 = vsel %vm1043, %v3278, %v3404
    %v3471 = vsel %vm1043, %v3279, %v3406
    %v3472 = vsel %vm1043, %v3280, %v3408
    %v3473 = vld [vmem:[%s13] sm:$0xff]
    %v3474 = vld [vmem:[%s13 + $0x8] sm:$0xff]
    %v3475 = vld [vmem:[%s13 + $0x10] sm:$0xff]
    %v3476 = vld [vmem:[%s13 + $0x18] sm:$0xff]
    %v3477 = vld [vmem:[%s13 + $0x20] sm:$0xff]
    %v3478 = vld [vmem:[%s13 + $0x28] sm:$0xff]
    %v3479 = vld [vmem:[%s13 + $0x30] sm:$0xff]
    %v3480 = vld [vmem:[%s13 + $0x38] sm:$0xff]
    %v3481 = vld [vmem:[%s13 + $0x40] sm:$0xff]
    %v3482 = vld [vmem:[%s13 + $0x48] sm:$0xff]
    %v3483 = vld [vmem:[%s13 + $0x50] sm:$0xff]
    %v3484 = vld [vmem:[%s13 + $0x58] sm:$0xff]
    %v3485 = vld [vmem:[%s13 + $0x60] sm:$0xff]
    %v3486 = vld [vmem:[%s13 + $0x68] sm:$0xff]
    %v3487 = vld [vmem:[%s13 + $0x70] sm:$0xff]
    %v3488 = vld [vmem:[%s13 + $0x78] sm:$0xff]
    %v3489 = vld [vmem:[%s14] sm:$0x1]
    %v3491 = vlaneseq
    %v3492 = vshrl.u32 %v3491, 7
    %v3493 = vsub.s32 0, %v3492
    %v3494 = vrot.slane %v3489, %v3493
    %3496 = vmatprep.subr.mxu0 0.0
    %3497 = vmatpush1.msra.mxu0 %v3488
    %3498 = vmatprep.subr.mxu0 0.0
    %3499 = vmatpush1.msra.mxu0 %v3487
    %3500 = vmatprep.subr.mxu0 0.0
    %3501 = vmatpush1.msra.mxu0 %v3486
    %3502 = vmatprep.subr.mxu0 0.0
    %3503 = vmatpush1.msra.mxu0 %v3485
    %3504 = vmatprep.subr.mxu0 0.0
    %3505 = vmatpush1.msra.mxu0 %v3484
    %3506 = vmatprep.subr.mxu0 0.0
    %3507 = vmatpush1.msra.mxu0 %v3483
    %3508 = vmatprep.subr.mxu0 0.0
    %3509 = vmatpush1.msra.mxu0 %v3482
    %3510 = vmatprep.subr.mxu0 0.0
    %3511 = vmatpush1.msra.mxu0 %v3481
    %3512 = vmatprep.subr.mxu0 0.0
    %3513 = vmatpush1.msra.mxu0 %v3480
    %3514 = vmatprep.subr.mxu0 0.0
    %3515 = vmatpush1.msra.mxu0 %v3479
    %3516 = vmatprep.subr.mxu0 0.0
    %3517 = vmatpush1.msra.mxu0 %v3478
    %3518 = vmatprep.subr.mxu0 0.0
    %3519 = vmatpush1.msra.mxu0 %v3477
    %3520 = vmatprep.subr.mxu0 0.0
    %3521 = vmatpush1.msra.mxu0 %v3476
    %3522 = vmatprep.subr.mxu0 0.0
    %3523 = vmatpush1.msra.mxu0 %v3475
    %3524 = vmatprep.subr.mxu0 0.0
    %3525 = vmatpush1.msra.mxu0 %v3474
    %3526 = vmatprep.subr.mxu0 0.0
    %3527 = vmatpush1.msra.mxu0 %v3473
    %3528 = vmatprep.subr.mxu0 0.0
    %3529 = vmatpush2.msra.mxu0 0.0
    %3530 = vmatprep.subr.mxu0 0.0
    %3531 = vmatpush2.msra.mxu0 0.0
    %3532 = vmatprep.subr.mxu0 0.0
    %3533 = vmatpush2.msra.mxu0 0.0
    %3534 = vmatprep.subr.mxu0 0.0
    %3535 = vmatpush2.msra.mxu0 0.0
    %3536 = vmatprep.subr.mxu0 0.0
    %3537 = vmatpush2.msra.mxu0 0.0
    %3538 = vmatprep.subr.mxu0 0.0
    %3539 = vmatpush2.msra.mxu0 0.0
    %3540 = vmatprep.subr.mxu0 0.0
    %3541 = vmatpush2.msra.mxu0 0.0
    %3542 = vmatprep.subr.mxu0 0.0
    %3543 = vmatpush2.msra.mxu0 0.0
    %3544 = vmatprep.subr.mxu0 0.0
    %3545 = vmatpush2.msra.mxu0 0.0
    %3546 = vmatprep.subr.mxu0 0.0
    %3547 = vmatpush2.msra.mxu0 0.0
    %3548 = vmatprep.subr.mxu0 0.0
    %3549 = vmatpush2.msra.mxu0 0.0
    %3550 = vmatprep.subr.mxu0 0.0
    %3551 = vmatpush2.msra.mxu0 0.0
    %3552 = vmatprep.subr.mxu0 0.0
    %3553 = vmatpush2.msra.mxu0 0.0
    %3554 = vmatprep.subr.mxu0 0.0
    %3555 = vmatpush2.msra.mxu0 0.0
    %3556 = vmatprep.subr.mxu0 0.0
    %3557 = vmatpush2.msra.mxu0 0.0
    %3558 = vmatprep.subr.mxu0 0.0
    %3559 = vmatpush2.msra.mxu0 0.0
    %3560 = vmatprep.mubr.f32.mxu0 0.0
    %3561 = vmatmul.mubr.f32.gmra.mxu0 %v3441
    %v3562 = vpop.f32.mrf.mxu0
    %v3563 = vadd.f32 %v3494, %v3562
    %v3564 = vpop.f32.mrf.mxu0
    %3565 = vmatprep.mubr.f32.mxu0 0.0
    %3566 = vmatmul.mubr.f32.gmra.mxu0 %v3442
    %v3567 = vpop.f32.mrf.mxu0
    %v3568 = vadd.f32 %v3494, %v3567
    %v3569 = vpop.f32.mrf.mxu0
    %3570 = vmatprep.mubr.f32.mxu0 0.0
    %3571 = vmatmul.mubr.f32.gmra.mxu0 %v3443
    %v3572 = vpop.f32.mrf.mxu0
    %v3573 = vadd.f32 %v3494, %v3572
    %v3574 = vpop.f32.mrf.mxu0
    %3575 = vmatprep.mubr.f32.mxu0 0.0
    %3576 = vmatmul.mubr.f32.gmra.mxu0 %v3444
    %v3577 = vpop.f32.mrf.mxu0
    %v3578 = vadd.f32 %v3494, %v3577
    %v3579 = vpop.f32.mrf.mxu0
    %3580 = vmatprep.mubr.f32.mxu0 0.0
    %3581 = vmatmul.mubr.f32.gmra.mxu0 %v3445
    %v3582 = vpop.f32.mrf.mxu0
    %v3583 = vadd.f32 %v3494, %v3582
    %v3584 = vpop.f32.mrf.mxu0
    %3585 = vmatprep.mubr.f32.mxu0 0.0
    %3586 = vmatmul.mubr.f32.gmra.mxu0 %v3446
    %v3587 = vpop.f32.mrf.mxu0
    %v3588 = vadd.f32 %v3494, %v3587
    %v3589 = vpop.f32.mrf.mxu0
    %3590 = vmatprep.mubr.f32.mxu0 0.0
    %3591 = vmatmul.mubr.f32.gmra.mxu0 %v3447
    %v3592 = vpop.f32.mrf.mxu0
    %v3593 = vadd.f32 %v3494, %v3592
    %v3594 = vpop.f32.mrf.mxu0
    %3595 = vmatprep.mubr.f32.mxu0 0.0
    %3596 = vmatmul.mubr.f32.gmra.mxu0 %v3448
    %v3597 = vpop.f32.mrf.mxu0
    %v3598 = vadd.f32 %v3494, %v3597
    %v3599 = vpop.f32.mrf.mxu0
    %3600 = vmatprep.mubr.f32.mxu0 0.0
    %3601 = vmatmul.mubr.f32.gmra.mxu0 %v3449
    %v3602 = vpop.f32.mrf.mxu0
    %v3603 = vadd.f32 %v3494, %v3602
    %v3604 = vpop.f32.mrf.mxu0
    %3605 = vmatprep.mubr.f32.mxu0 0.0
    %3606 = vmatmul.mubr.f32.gmra.mxu0 %v3450
    %v3607 = vpop.f32.mrf.mxu0
    %v3608 = vadd.f32 %v3494, %v3607
    %v3609 = vpop.f32.mrf.mxu0
    %3610 = vmatprep.mubr.f32.mxu0 0.0
    %3611 = vmatmul.mubr.f32.gmra.mxu0 %v3451
    %v3612 = vpop.f32.mrf.mxu0
    %v3613 = vadd.f32 %v3494, %v3612
    %v3614 = vpop.f32.mrf.mxu0
    %3615 = vmatprep.mubr.f32.mxu0 0.0
    %3616 = vmatmul.mubr.f32.gmra.mxu0 %v3452
    %v3617 = vpop.f32.mrf.mxu0
    %v3618 = vadd.f32 %v3494, %v3617
    %v3619 = vpop.f32.mrf.mxu0
    %3620 = vmatprep.mubr.f32.mxu0 0.0
    %3621 = vmatmul.mubr.f32.gmra.mxu0 %v3453
    %v3622 = vpop.f32.mrf.mxu0
    %v3623 = vadd.f32 %v3494, %v3622
    %v3624 = vpop.f32.mrf.mxu0
    %3625 = vmatprep.mubr.f32.mxu0 0.0
    %3626 = vmatmul.mubr.f32.gmra.mxu0 %v3454
    %v3627 = vpop.f32.mrf.mxu0
    %v3628 = vadd.f32 %v3494, %v3627
    %v3629 = vpop.f32.mrf.mxu0
    %3630 = vmatprep.mubr.f32.mxu0 0.0
    %3631 = vmatmul.mubr.f32.gmra.mxu0 %v3455
    %v3632 = vpop.f32.mrf.mxu0
    %v3633 = vadd.f32 %v3494, %v3632
    %v3634 = vpop.f32.mrf.mxu0
    %3635 = vmatprep.mubr.f32.mxu0 0.0
    %3636 = vmatmul.mubr.f32.gmra.mxu0 %v3456
    %v3637 = vpop.f32.mrf.mxu0
    %v3638 = vadd.f32 %v3494, %v3637
    %v3639 = vpop.f32.mrf.mxu0
    %3640 = vmatprep.mubr.f32.mxu0 0.0
    %3641 = vmatmul.mubr.f32.gmra.mxu0 %v3457
    %v3642 = vpop.f32.mrf.mxu0
    %v3643 = vadd.f32 %v3494, %v3642
    %v3644 = vpop.f32.mrf.mxu0
    %3645 = vmatprep.mubr.f32.mxu0 0.0
    %3646 = vmatmul.mubr.f32.gmra.mxu0 %v3458
    %v3647 = vpop.f32.mrf.mxu0
    %v3648 = vadd.f32 %v3494, %v3647
    %v3649 = vpop.f32.mrf.mxu0
    %3650 = vmatprep.mubr.f32.mxu0 0.0
    %3651 = vmatmul.mubr.f32.gmra.mxu0 %v3459
    %v3652 = vpop.f32.mrf.mxu0
    %v3653 = vadd.f32 %v3494, %v3652
    %v3654 = vpop.f32.mrf.mxu0
    %3655 = vmatprep.mubr.f32.mxu0 0.0
    %3656 = vmatmul.mubr.f32.gmra.mxu0 %v3460
    %v3657 = vpop.f32.mrf.mxu0
    %v3658 = vadd.f32 %v3494, %v3657
    %v3659 = vpop.f32.mrf.mxu0
    %3660 = vmatprep.mubr.f32.mxu0 0.0
    %3661 = vmatmul.mubr.f32.gmra.mxu0 %v3461
    %v3662 = vpop.f32.mrf.mxu0
    %v3663 = vadd.f32 %v3494, %v3662
    %v3664 = vpop.f32.mrf.mxu0
    %3665 = vmatprep.mubr.f32.mxu0 0.0
    %3666 = vmatmul.mubr.f32.gmra.mxu0 %v3462
    %v3667 = vpop.f32.mrf.mxu0
    %v3668 = vadd.f32 %v3494, %v3667
    %v3669 = vpop.f32.mrf.mxu0
    %3670 = vmatprep.mubr.f32.mxu0 0.0
    %3671 = vmatmul.mubr.f32.gmra.mxu0 %v3463
    %v3672 = vpop.f32.mrf.mxu0
    %v3673 = vadd.f32 %v3494, %v3672
    %v3674 = vpop.f32.mrf.mxu0
    %3675 = vmatprep.mubr.f32.mxu0 0.0
    %3676 = vmatmul.mubr.f32.gmra.mxu0 %v3464
    %v3677 = vpop.f32.mrf.mxu0
    %v3678 = vadd.f32 %v3494, %v3677
    %v3679 = vpop.f32.mrf.mxu0
    %3680 = vmatprep.mubr.f32.mxu0 0.0
    %3681 = vmatmul.mubr.f32.gmra.mxu0 %v3465
    %v3682 = vpop.f32.mrf.mxu0
    %v3683 = vadd.f32 %v3494, %v3682
    %v3684 = vpop.f32.mrf.mxu0
    %3685 = vmatprep.mubr.f32.mxu0 0.0
    %3686 = vmatmul.mubr.f32.gmra.mxu0 %v3466
    %v3687 = vpop.f32.mrf.mxu0
    %v3688 = vadd.f32 %v3494, %v3687
    %v3689 = vpop.f32.mrf.mxu0
    %3690 = vmatprep.mubr.f32.mxu0 0.0
    %3691 = vmatmul.mubr.f32.gmra.mxu0 %v3467
    %v3692 = vpop.f32.mrf.mxu0
    %v3693 = vadd.f32 %v3494, %v3692
    %v3694 = vpop.f32.mrf.mxu0
    %3695 = vmatprep.mubr.f32.mxu0 0.0
    %3696 = vmatmul.mubr.f32.gmra.mxu0 %v3468
    %v3697 = vpop.f32.mrf.mxu0
    %v3698 = vadd.f32 %v3494, %v3697
    %v3699 = vpop.f32.mrf.mxu0
    %3700 = vmatprep.mubr.f32.mxu0 0.0
    %3701 = vmatmul.mubr.f32.gmra.mxu0 %v3469
    %v3702 = vpop.f32.mrf.mxu0
    %v3703 = vadd.f32 %v3494, %v3702
    %v3704 = vpop.f32.mrf.mxu0
    %3705 = vmatprep.mubr.f32.mxu0 0.0
    %3706 = vmatmul.mubr.f32.gmra.mxu0 %v3470
    %v3707 = vpop.f32.mrf.mxu0
    %v3708 = vadd.f32 %v3494, %v3707
    %v3709 = vpop.f32.mrf.mxu0
    %3710 = vmatprep.mubr.f32.mxu0 0.0
    %3711 = vmatmul.mubr.f32.gmra.mxu0 %v3471
    %v3712 = vpop.f32.mrf.mxu0
    %v3713 = vadd.f32 %v3494, %v3712
    %v3714 = vpop.f32.mrf.mxu0
    %3715 = vmatprep.mubr.f32.mxu0 0.0
    %3716 = vmatmul.mubr.f32.gmra.mxu0 %v3472
    %v3717 = vpop.f32.mrf.mxu0
    %v3718 = vadd.f32 %v3494, %v3717
    %v3719 = vpop.f32.mrf.mxu0
    %3720 = vdwg.mxu0
    %v3721 = vmax.f32 %v3563, 0.0
    %v3722 = vmax.f32 %v3568, 0.0
    %v3723 = vmax.f32 %v3573, 0.0
    %v3724 = vmax.f32 %v3578, 0.0
    %v3725 = vmax.f32 %v3583, 0.0
    %v3726 = vmax.f32 %v3588, 0.0
    %v3727 = vmax.f32 %v3593, 0.0
    %v3728 = vmax.f32 %v3598, 0.0
    %v3729 = vmax.f32 %v3603, 0.0
    %v3730 = vmax.f32 %v3608, 0.0
    %v3731 = vmax.f32 %v3613, 0.0
    %v3732 = vmax.f32 %v3618, 0.0
    %v3733 = vmax.f32 %v3623, 0.0
    %v3734 = vmax.f32 %v3628, 0.0
    %v3735 = vmax.f32 %v3633, 0.0
    %v3736 = vmax.f32 %v3638, 0.0
    %v3737 = vmax.f32 %v3643, 0.0
    %v3738 = vmax.f32 %v3648, 0.0
    %v3739 = vmax.f32 %v3653, 0.0
    %v3740 = vmax.f32 %v3658, 0.0
    %v3741 = vmax.f32 %v3663, 0.0
    %v3742 = vmax.f32 %v3668, 0.0
    %v3743 = vmax.f32 %v3673, 0.0
    %v3744 = vmax.f32 %v3678, 0.0
    %v3745 = vmax.f32 %v3683, 0.0
    %v3746 = vmax.f32 %v3688, 0.0
    %v3747 = vmax.f32 %v3693, 0.0
    %v3748 = vmax.f32 %v3698, 0.0
    %v3749 = vmax.f32 %v3703, 0.0
    %v3750 = vmax.f32 %v3708, 0.0
    %v3751 = vmax.f32 %v3713, 0.0
    %v3752 = vmax.f32 %v3718, 0.0
    %v3753 = vld [vmem:[%s15] sm:$0xff]
    %v3754 = vld [vmem:[%s15 + $0x8] sm:$0xff]
    %v3755 = vld [vmem:[%s15 + $0x10] sm:$0xff]
    %v3756 = vld [vmem:[%s15 + $0x18] sm:$0xff]
    %v3757 = vld [vmem:[%s15 + $0x20] sm:$0xff]
    %v3758 = vld [vmem:[%s15 + $0x28] sm:$0xff]
    %v3759 = vld [vmem:[%s15 + $0x30] sm:$0xff]
    %v3760 = vld [vmem:[%s15 + $0x38] sm:$0xff]
    %v3761 = vld [vmem:[%s16] sm:$0x1]
    %v3763 = vlaneseq
    %v3764 = vshrl.u32 %v3763, 7
    %v3765 = vsub.s32 0, %v3764
    %v3766 = vrot.slane %v3761, %v3765
    %v3769 = vsel %vm1043, %v3721, 0
    %v3772 = vsel %vm1043, %v3722, 0
    %v3775 = vsel %vm1043, %v3723, 0
    %v3778 = vsel %vm1043, %v3724, 0
    %v3781 = vsel %vm1043, %v3725, 0
    %v3784 = vsel %vm1043, %v3726, 0
    %v3787 = vsel %vm1043, %v3727, 0
    %v3790 = vsel %vm1043, %v3728, 0
    %v3793 = vsel %vm1043, %v3729, 0
    %v3796 = vsel %vm1043, %v3730, 0
    %v3799 = vsel %vm1043, %v3731, 0
    %v3802 = vsel %vm1043, %v3732, 0
    %v3805 = vsel %vm1043, %v3733, 0
    %v3808 = vsel %vm1043, %v3734, 0
    %v3811 = vsel %vm1043, %v3735, 0
    %v3814 = vsel %vm1043, %v3736, 0
    %v3817 = vsel %vm1043, %v3737, 0
    %v3820 = vsel %vm1043, %v3738, 0
    %v3823 = vsel %vm1043, %v3739, 0
    %v3826 = vsel %vm1043, %v3740, 0
    %v3829 = vsel %vm1043, %v3741, 0
    %v3832 = vsel %vm1043, %v3742, 0
    %v3835 = vsel %vm1043, %v3743, 0
    %v3838 = vsel %vm1043, %v3744, 0
    %v3841 = vsel %vm1043, %v3745, 0
    %v3844 = vsel %vm1043, %v3746, 0
    %v3847 = vsel %vm1043, %v3747, 0
    %v3850 = vsel %vm1043, %v3748, 0
    %v3853 = vsel %vm1043, %v3749, 0
    %v3856 = vsel %vm1043, %v3750, 0
    %v3859 = vsel %vm1043, %v3751, 0
    %v3862 = vsel %vm1043, %v3752, 0
    %3864 = vmatprep.subr.mxu0 0.0
    %3865 = vmatpush1.msra.mxu0 0.0
    %3866 = vmatprep.subr.mxu0 0.0
    %3867 = vmatpush1.msra.mxu0 0.0
    %3868 = vmatprep.subr.mxu0 0.0
    %3869 = vmatpush1.msra.mxu0 0.0
    %3870 = vmatprep.subr.mxu0 0.0
    %3871 = vmatpush1.msra.mxu0 0.0
    %3872 = vmatprep.subr.mxu0 0.0
    %3873 = vmatpush1.msra.mxu0 0.0
    %3874 = vmatprep.subr.mxu0 0.0
    %3875 = vmatpush1.msra.mxu0 0.0
    %3876 = vmatprep.subr.mxu0 0.0
    %3877 = vmatpush1.msra.mxu0 0.0
    %3878 = vmatprep.subr.mxu0 0.0
    %3879 = vmatpush1.msra.mxu0 0.0
    %3880 = vmatprep.subr.mxu0 0.0
    %3881 = vmatpush1.msra.mxu0 %v3760
    %3882 = vmatprep.subr.mxu0 0.0
    %3883 = vmatpush1.msra.mxu0 %v3759
    %3884 = vmatprep.subr.mxu0 0.0
    %3885 = vmatpush1.msra.mxu0 %v3758
    %3886 = vmatprep.subr.mxu0 0.0
    %3887 = vmatpush1.msra.mxu0 %v3757
    %3888 = vmatprep.subr.mxu0 0.0
    %3889 = vmatpush1.msra.mxu0 %v3756
    %3890 = vmatprep.subr.mxu0 0.0
    %3891 = vmatpush1.msra.mxu0 %v3755
    %3892 = vmatprep.subr.mxu0 0.0
    %3893 = vmatpush1.msra.mxu0 %v3754
    %3894 = vmatprep.subr.mxu0 0.0
    %3895 = vmatpush1.msra.mxu0 %v3753
    %3896 = vmatprep.subr.mxu0 0.0
    %3897 = vmatpush2.msra.mxu0 0.0
    %3898 = vmatprep.subr.mxu0 0.0
    %3899 = vmatpush2.msra.mxu0 0.0
    %3900 = vmatprep.subr.mxu0 0.0
    %3901 = vmatpush2.msra.mxu0 0.0
    %3902 = vmatprep.subr.mxu0 0.0
    %3903 = vmatpush2.msra.mxu0 0.0
    %3904 = vmatprep.subr.mxu0 0.0
    %3905 = vmatpush2.msra.mxu0 0.0
    %3906 = vmatprep.subr.mxu0 0.0
    %3907 = vmatpush2.msra.mxu0 0.0
    %3908 = vmatprep.subr.mxu0 0.0
    %3909 = vmatpush2.msra.mxu0 0.0
    %3910 = vmatprep.subr.mxu0 0.0
    %3911 = vmatpush2.msra.mxu0 0.0
    %3912 = vmatprep.subr.mxu0 0.0
    %3913 = vmatpush2.msra.mxu0 0.0
    %3914 = vmatprep.subr.mxu0 0.0
    %3915 = vmatpush2.msra.mxu0 0.0
    %3916 = vmatprep.subr.mxu0 0.0
    %3917 = vmatpush2.msra.mxu0 0.0
    %3918 = vmatprep.subr.mxu0 0.0
    %3919 = vmatpush2.msra.mxu0 0.0
    %3920 = vmatprep.subr.mxu0 0.0
    %3921 = vmatpush2.msra.mxu0 0.0
    %3922 = vmatprep.subr.mxu0 0.0
    %3923 = vmatpush2.msra.mxu0 0.0
    %3924 = vmatprep.subr.mxu0 0.0
    %3925 = vmatpush2.msra.mxu0 0.0
    %3926 = vmatprep.subr.mxu0 0.0
    %3927 = vmatpush2.msra.mxu0 0.0
    %3928 = vmatprep.mubr.f32.mxu0 0.0
    %3929 = vmatmul.mubr.f32.gmra.mxu0 %v3769
    %v3930 = vpop.f32.mrf.mxu0
    %v3931 = vadd.f32 %v3766, %v3930
    %v3932 = vpop.f32.mrf.mxu0
    %3933 = vmatprep.mubr.f32.mxu0 0.0
    %3934 = vmatmul.mubr.f32.gmra.mxu0 %v3772
    %v3935 = vpop.f32.mrf.mxu0
    %v3936 = vadd.f32 %v3766, %v3935
    %v3937 = vpop.f32.mrf.mxu0
    %3938 = vmatprep.mubr.f32.mxu0 0.0
    %3939 = vmatmul.mubr.f32.gmra.mxu0 %v3775
    %v3940 = vpop.f32.mrf.mxu0
    %v3941 = vadd.f32 %v3766, %v3940
    %v3942 = vpop.f32.mrf.mxu0
    %3943 = vmatprep.mubr.f32.mxu0 0.0
    %3944 = vmatmul.mubr.f32.gmra.mxu0 %v3778
    %v3945 = vpop.f32.mrf.mxu0
    %v3946 = vadd.f32 %v3766, %v3945
    %v3947 = vpop.f32.mrf.mxu0
    %3948 = vmatprep.mubr.f32.mxu0 0.0
    %3949 = vmatmul.mubr.f32.gmra.mxu0 %v3781
    %v3950 = vpop.f32.mrf.mxu0
    %v3951 = vadd.f32 %v3766, %v3950
    %v3952 = vpop.f32.mrf.mxu0
    %3953 = vmatprep.mubr.f32.mxu0 0.0
    %3954 = vmatmul.mubr.f32.gmra.mxu0 %v3784
    %v3955 = vpop.f32.mrf.mxu0
    %v3956 = vadd.f32 %v3766, %v3955
    %v3957 = vpop.f32.mrf.mxu0
    %3958 = vmatprep.mubr.f32.mxu0 0.0
    %3959 = vmatmul.mubr.f32.gmra.mxu0 %v3787
    %v3960 = vpop.f32.mrf.mxu0
    %v3961 = vadd.f32 %v3766, %v3960
    %v3962 = vpop.f32.mrf.mxu0
    %3963 = vmatprep.mubr.f32.mxu0 0.0
    %3964 = vmatmul.mubr.f32.gmra.mxu0 %v3790
    %v3965 = vpop.f32.mrf.mxu0
    %v3966 = vadd.f32 %v3766, %v3965
    %v3967 = vpop.f32.mrf.mxu0
    %3968 = vmatprep.mubr.f32.mxu0 0.0
    %3969 = vmatmul.mubr.f32.gmra.mxu0 %v3793
    %v3970 = vpop.f32.mrf.mxu0
    %v3971 = vadd.f32 %v3766, %v3970
    %v3972 = vpop.f32.mrf.mxu0
    %3973 = vmatprep.mubr.f32.mxu0 0.0
    %3974 = vmatmul.mubr.f32.gmra.mxu0 %v3796
    %v3975 = vpop.f32.mrf.mxu0
    %v3976 = vadd.f32 %v3766, %v3975
    %v3977 = vpop.f32.mrf.mxu0
    %3978 = vmatprep.mubr.f32.mxu0 0.0
    %3979 = vmatmul.mubr.f32.gmra.mxu0 %v3799
    %v3980 = vpop.f32.mrf.mxu0
    %v3981 = vadd.f32 %v3766, %v3980
    %v3982 = vpop.f32.mrf.mxu0
    %3983 = vmatprep.mubr.f32.mxu0 0.0
    %3984 = vmatmul.mubr.f32.gmra.mxu0 %v3802
    %v3985 = vpop.f32.mrf.mxu0
    %v3986 = vadd.f32 %v3766, %v3985
    %v3987 = vpop.f32.mrf.mxu0
    %3988 = vmatprep.mubr.f32.mxu0 0.0
    %3989 = vmatmul.mubr.f32.gmra.mxu0 %v3805
    %v3990 = vpop.f32.mrf.mxu0
    %v3991 = vadd.f32 %v3766, %v3990
    %v3992 = vpop.f32.mrf.mxu0
    %3993 = vmatprep.mubr.f32.mxu0 0.0
    %3994 = vmatmul.mubr.f32.gmra.mxu0 %v3808
    %v3995 = vpop.f32.mrf.mxu0
    %v3996 = vadd.f32 %v3766, %v3995
    %v3997 = vpop.f32.mrf.mxu0
    %3998 = vmatprep.mubr.f32.mxu0 0.0
    %3999 = vmatmul.mubr.f32.gmra.mxu0 %v3811
    %v4000 = vpop.f32.mrf.mxu0
    %v4001 = vadd.f32 %v3766, %v4000
    %v4002 = vpop.f32.mrf.mxu0
    %4003 = vmatprep.mubr.f32.mxu0 0.0
    %4004 = vmatmul.mubr.f32.gmra.mxu0 %v3814
    %v4005 = vpop.f32.mrf.mxu0
    %v4006 = vadd.f32 %v3766, %v4005
    %v4007 = vpop.f32.mrf.mxu0
    %4008 = vmatprep.mubr.f32.mxu0 0.0
    %4009 = vmatmul.mubr.f32.gmra.mxu0 %v3817
    %v4010 = vpop.f32.mrf.mxu0
    %v4011 = vadd.f32 %v3766, %v4010
    %v4012 = vpop.f32.mrf.mxu0
    %4013 = vmatprep.mubr.f32.mxu0 0.0
    %4014 = vmatmul.mubr.f32.gmra.mxu0 %v3820
    %v4015 = vpop.f32.mrf.mxu0
    %v4016 = vadd.f32 %v3766, %v4015
    %v4017 = vpop.f32.mrf.mxu0
    %4018 = vmatprep.mubr.f32.mxu0 0.0
    %4019 = vmatmul.mubr.f32.gmra.mxu0 %v3823
    %v4020 = vpop.f32.mrf.mxu0
    %v4021 = vadd.f32 %v3766, %v4020
    %v4022 = vpop.f32.mrf.mxu0
    %4023 = vmatprep.mubr.f32.mxu0 0.0
    %4024 = vmatmul.mubr.f32.gmra.mxu0 %v3826
    %v4025 = vpop.f32.mrf.mxu0
    %v4026 = vadd.f32 %v3766, %v4025
    %v4027 = vpop.f32.mrf.mxu0
    %4028 = vmatprep.mubr.f32.mxu0 0.0
    %4029 = vmatmul.mubr.f32.gmra.mxu0 %v3829
    %v4030 = vpop.f32.mrf.mxu0
    %v4031 = vadd.f32 %v3766, %v4030
    %v4032 = vpop.f32.mrf.mxu0
    %4033 = vmatprep.mubr.f32.mxu0 0.0
    %4034 = vmatmul.mubr.f32.gmra.mxu0 %v3832
    %v4035 = vpop.f32.mrf.mxu0
    %v4036 = vadd.f32 %v3766, %v4035
    %v4037 = vpop.f32.mrf.mxu0
    %4038 = vmatprep.mubr.f32.mxu0 0.0
    %4039 = vmatmul.mubr.f32.gmra.mxu0 %v3835
    %v4040 = vpop.f32.mrf.mxu0
    %v4041 = vadd.f32 %v3766, %v4040
    %v4042 = vpop.f32.mrf.mxu0
    %4043 = vmatprep.mubr.f32.mxu0 0.0
    %4044 = vmatmul.mubr.f32.gmra.mxu0 %v3838
    %v4045 = vpop.f32.mrf.mxu0
    %v4046 = vadd.f32 %v3766, %v4045
    %v4047 = vpop.f32.mrf.mxu0
    %4048 = vmatprep.mubr.f32.mxu0 0.0
    %4049 = vmatmul.mubr.f32.gmra.mxu0 %v3841
    %v4050 = vpop.f32.mrf.mxu0
    %v4051 = vadd.f32 %v3766, %v4050
    %v4052 = vpop.f32.mrf.mxu0
    %4053 = vmatprep.mubr.f32.mxu0 0.0
    %4054 = vmatmul.mubr.f32.gmra.mxu0 %v3844
    %v4055 = vpop.f32.mrf.mxu0
    %v4056 = vadd.f32 %v3766, %v4055
    %v4057 = vpop.f32.mrf.mxu0
    %4058 = vmatprep.mubr.f32.mxu0 0.0
    %4059 = vmatmul.mubr.f32.gmra.mxu0 %v3847
    %v4060 = vpop.f32.mrf.mxu0
    %v4061 = vadd.f32 %v3766, %v4060
    %v4062 = vpop.f32.mrf.mxu0
    %4063 = vmatprep.mubr.f32.mxu0 0.0
    %4064 = vmatmul.mubr.f32.gmra.mxu0 %v3850
    %v4065 = vpop.f32.mrf.mxu0
    %v4066 = vadd.f32 %v3766, %v4065
    %v4067 = vpop.f32.mrf.mxu0
    %4068 = vmatprep.mubr.f32.mxu0 0.0
    %4069 = vmatmul.mubr.f32.gmra.mxu0 %v3853
    %v4070 = vpop.f32.mrf.mxu0
    %v4071 = vadd.f32 %v3766, %v4070
    %v4072 = vpop.f32.mrf.mxu0
    %4073 = vmatprep.mubr.f32.mxu0 0.0
    %4074 = vmatmul.mubr.f32.gmra.mxu0 %v3856
    %v4075 = vpop.f32.mrf.mxu0
    %v4076 = vadd.f32 %v3766, %v4075
    %v4077 = vpop.f32.mrf.mxu0
    %4078 = vmatprep.mubr.f32.mxu0 0.0
    %4079 = vmatmul.mubr.f32.gmra.mxu0 %v3859
    %v4080 = vpop.f32.mrf.mxu0
    %v4081 = vadd.f32 %v3766, %v4080
    %v4082 = vpop.f32.mrf.mxu0
    %4083 = vmatprep.mubr.f32.mxu0 0.0
    %4084 = vmatmul.mubr.f32.gmra.mxu0 %v3862
    %v4085 = vpop.f32.mrf.mxu0
    %v4086 = vadd.f32 %v3766, %v4085
    %v4087 = vpop.f32.mrf.mxu0
    %4088 = vdwg.mxu0
    %4089 = vst.msk [vmem:[%s17] sm:$0xff] %vm1043, %v3931
    %4090 = vst.msk [vmem:[%s17 + $0x8] sm:$0xff] %vm1043, %v3936
    %4091 = vst.msk [vmem:[%s17 + $0x10] sm:$0xff] %vm1043, %v3941
    %4092 = vst.msk [vmem:[%s17 + $0x18] sm:$0xff] %vm1043, %v3946
    %4093 = vst.msk [vmem:[%s17 + $0x20] sm:$0xff] %vm1043, %v3951
    %4094 = vst.msk [vmem:[%s17 + $0x28] sm:$0xff] %vm1043, %v3956
    %4095 = vst.msk [vmem:[%s17 + $0x30] sm:$0xff] %vm1043, %v3961
    %4096 = vst.msk [vmem:[%s17 + $0x38] sm:$0xff] %vm1043, %v3966
    %4097 = vst.msk [vmem:[%s17 + $0x40] sm:$0xff] %vm1043, %v3971
    %4098 = vst.msk [vmem:[%s17 + $0x48] sm:$0xff] %vm1043, %v3976
    %4099 = vst.msk [vmem:[%s17 + $0x50] sm:$0xff] %vm1043, %v3981
    %4100 = vst.msk [vmem:[%s17 + $0x58] sm:$0xff] %vm1043, %v3986
    %4101 = vst.msk [vmem:[%s17 + $0x60] sm:$0xff] %vm1043, %v3991
    %4102 = vst.msk [vmem:[%s17 + $0x68] sm:$0xff] %vm1043, %v3996
    %4103 = vst.msk [vmem:[%s17 + $0x70] sm:$0xff] %vm1043, %v4001
    %4104 = vst.msk [vmem:[%s17 + $0x78] sm:$0xff] %vm1043, %v4006
    %4105 = vst.msk [vmem:[%s17 + $0x80] sm:$0xff] %vm1043, %v4011
    %4106 = vst.msk [vmem:[%s17 + $0x88] sm:$0xff] %vm1043, %v4016
    %4107 = vst.msk [vmem:[%s17 + $0x90] sm:$0xff] %vm1043, %v4021
    %4108 = vst.msk [vmem:[%s17 + $0x98] sm:$0xff] %vm1043, %v4026
    %4109 = vst.msk [vmem:[%s17 + $0xa0] sm:$0xff] %vm1043, %v4031
    %4110 = vst.msk [vmem:[%s17 + $0xa8] sm:$0xff] %vm1043, %v4036
    %4111 = vst.msk [vmem:[%s17 + $0xb0] sm:$0xff] %vm1043, %v4041
    %4112 = vst.msk [vmem:[%s17 + $0xb8] sm:$0xff] %vm1043, %v4046
    %4113 = vst.msk [vmem:[%s17 + $0xc0] sm:$0xff] %vm1043, %v4051
    %4114 = vst.msk [vmem:[%s17 + $0xc8] sm:$0xff] %vm1043, %v4056
    %4115 = vst.msk [vmem:[%s17 + $0xd0] sm:$0xff] %vm1043, %v4061
    %4116 = vst.msk [vmem:[%s17 + $0xd8] sm:$0xff] %vm1043, %v4066
    %4117 = vst.msk [vmem:[%s17 + $0xe0] sm:$0xff] %vm1043, %v4071
    %4118 = vst.msk [vmem:[%s17 + $0xe8] sm:$0xff] %vm1043, %v4076
    %4119 = vst.msk [vmem:[%s17 + $0xf0] sm:$0xff] %vm1043, %v4081
    %4120 = vst.msk [vmem:[%s17 + $0xf8] sm:$0xff] %vm1043, %v4086
  $region83: #{gnn_policy_forward.9} parent=0 // pred_fallthru
    _
  // Predicated region
  $region84: #{gnn_policy_forward.9} parent=0 // pred_check
    _
  $region85: #{gnn_policy_forward.9} parent=0 // pred_check_branch
    %4122 = sbr.rel (0) target = $region87
  $region86: #{gnn_policy_forward.9} parent=0 // pred_region
    _
  $region87: #{gnn_policy_forward.9} parent=0 // pred_fallthru
    _
  // Predicated region
  $region88: #{gnn_policy_forward.9} parent=0 // pred_check
    _
  $region89: #{gnn_policy_forward.9} parent=0 // pred_check_branch
    %4124 = sbr.rel (0) target = $region91
  $region90: #{gnn_policy_forward.9} parent=0 // pred_region
    _
  $region91: #{gnn_policy_forward.9} parent=0 // pred_fallthru
    _

</llo_original>
